<compile_context>
chip_gen: v6e
topology: v6e:2x2x1
jax: 0.10.0
libtpu: 0.0.40
codegen_flags: <defaults>
</compile_context>

<pallas_src>
import functools

import jax
import jax.numpy as jnp
from jax.experimental import pallas as pl
from jax.experimental.pallas import tpu as pltpu

EPS = 1e-5
_VMEM_LIMIT = 64 * 1024 * 1024        # <= physical VMEM on v5e/v6e/v7x


# ---------------------------------------------------------------------------
# small helpers
# ---------------------------------------------------------------------------
def _round_up(x, m):
    return (x + m - 1) // m * m


def _bn_affine(bn):
    scale = bn["gamma"] / jnp.sqrt(bn["var"] + EPS)
    shift = bn["beta"] - bn["mean"] * scale
    return scale, shift


def _pad_last(a, n):
    pad = n - a.shape[-1]
    if pad == 0:
        return a
    widths = [(0, 0)] * (a.ndim - 1) + [(0, pad)]
    return jnp.pad(a, widths)


# ---------------------------------------------------------------------------
# in-kernel implicit im2col: yield the nine 3x3-tap windows of a padded NHWC
# activation block as (Ho*Wo, C) matrices.
#   stride == 1 : block shape (1, H+2, W+2, C)
#   stride == 2 : block shape (1, (H+2)//2, 2, (W+2)//2, 2*C)   (free
#                 polyphase reshape done by the caller), so every tap is a
#                 static, contiguous slice — no strided loads, no HBM buffer.
# ---------------------------------------------------------------------------
def _tap_windows(x_ref, Ho, Wo, stride, C):
    for kh in range(3):
        for kw in range(3):
            if stride == 1:
                v = x_ref[0:1, kh:kh + Ho, kw:kw + Wo, :]
            else:
                hoff, hph = kh // 2, kh % 2
                woff, wph = kw // 2, kw % 2
                v = x_ref[0:1, hoff:hoff + Ho, hph:hph + 1,
                          woff:woff + Wo, wph * C:(wph + 1) * C]
            yield v.reshape(Ho * Wo, C)


# ---------------------------------------------------------------------------
# kernel factories
# ---------------------------------------------------------------------------
def _make_conv1_kernel(H, W, Cin):
    """conv3x3(stride 1) + BN(shift) + PReLU; writes a zero-PADDED bf16 block
    so the next conv never needs an XLA pad pass."""
    Ho, Wo, M = H, W, H * W

    def kernel(x_ref, w_ref, sh_ref, al_ref, o_ref):
        tn = o_ref.shape[-1]
        acc = None
        for t, win in enumerate(_tap_windows(x_ref, Ho, Wo, 1, Cin)):
            d = jnp.dot(win, w_ref[t], preferred_element_type=jnp.float32)
            acc = d if acc is None else acc + d
        y = acc + sh_ref[...]
        y = jnp.where(y >= 0.0, y, y * al_ref[...])              # PReLU
        o_ref[...] = jnp.zeros_like(o_ref)                       # zero border
        o_ref[0:1, 1:H + 1, 1:W + 1, :] = (
            y.reshape(1, Ho, Wo, tn).astype(o_ref.dtype))

    return kernel


def _make_conv2_kernel(H, W, stride, Cmid, mode, Cin=0, Cres=0):
    """conv3x3(stride) + BN(shift) + {identity residual add | folded 1x1
    projection shortcut}; f32 output (no activation after the last BN)."""
    Ho = (H - 1) // stride + 1
    Wo = (W - 1) // stride + 1
    M = Ho * Wo

    def kernel(*refs):
        if mode == "identity":
            y_ref, w_ref, sh_ref, r_ref, o_ref = refs
        else:  # "project"
            y_ref, w_ref, sh_ref, x_ref, wsc_ref, o_ref = refs
        tn = o_ref.shape[-1]

        acc = None
        for t, win in enumerate(_tap_windows(y_ref, Ho, Wo, stride, Cmid)):
            d = jnp.dot(win, w_ref[t], preferred_element_type=jnp.float32)
            acc = d if acc is None else acc + d

        if mode == "project":
            # folded 1x1 projection shortcut: one more reduction on the MXU.
            if stride == 1:
                xs = x_ref[...].reshape(M, Cin)
            else:
                xs = x_ref[0:1, :, 0:1, :, 0:Cin].reshape(M, Cin)
            acc += jnp.dot(xs.astype(jnp.bfloat16), wsc_ref[...],
                           preferred_element_type=jnp.float32)

        out = acc + sh_ref[...]

        if mode == "identity":
            r = r_ref[...].reshape(M, Cres).astype(jnp.float32)   # f32 skip
            if tn > Cres:
                r = jnp.concatenate(
                    [r, jnp.zeros((M, tn - Cres), jnp.float32)], axis=1)
            out = out + r

        o_ref[...] = out.reshape(1, Ho, Wo, tn).astype(o_ref.dtype)

    return kernel


# ---------------------------------------------------------------------------
# pallas_call wrappers
# ---------------------------------------------------------------------------
def _conv1_call(xp, w9, shift, alpha, *, H, W):
    N, Hp, Wp, Cin = xp.shape
    Cmid_p = w9.shape[-1]
    tn = 256 if Cmid_p % 256 == 0 else 128
    gn = Cmid_p // tn

    return pl.pallas_call(
        _make_conv1_kernel(H, W, Cin),
        out_shape=jax.ShapeDtypeStruct((N, Hp, Wp, Cmid_p), jnp.bfloat16),
        grid=(gn, N),                                  # cout tiles outermost
        in_specs=[
            pl.BlockSpec((1, Hp, Wp, Cin), lambda j, n: (n, 0, 0, 0)),
            pl.BlockSpec((9, Cin, tn), lambda j, n: (0, 0, j)),
            pl.BlockSpec((1, tn), lambda j, n: (0, j)),
            pl.BlockSpec((1, tn), lambda j, n: (0, j)),
        ],
        out_specs=pl.BlockSpec((1, Hp, Wp, tn), lambda j, n: (n, 0, 0, j)),
        compiler_params=pltpu.CompilerParams(
            dimension_semantics=("parallel", "parallel"),
            vmem_limit_bytes=_VMEM_LIMIT),
    )(xp, w9, shift, alpha)


def _conv2_call(ypad, w9, shift, *, H, W, stride, mode, x, wsc=None):
    N = ypad.shape[0]
    Cmid_p = ypad.shape[-1]
    Cout_p = w9.shape[-1]
    Ho = (H - 1) // stride + 1
    Wo = (W - 1) // stride + 1
    tn = 256 if Cout_p % 256 == 0 else 128
    gn = Cout_p // tn

    if stride == 1:
        y_in = ypad
        y_spec = pl.BlockSpec((1, H + 2, W + 2, Cmid_p),
                              lambda j, n: (n, 0, 0, 0))
    else:
        assert stride == 2 and H % 2 == 0 and W % 2 == 0
        # free (row-major) polyphase reshape of the padded activation
        y_in = ypad.reshape(N, (H + 2) // 2, 2, (W + 2) // 2, 2 * Cmid_p)
        y_spec = pl.BlockSpec((1, (H + 2) // 2, 2, (W + 2) // 2, 2 * Cmid_p),
                              lambda j, n: (n, 0, 0, 0, 0))

    in_specs = [y_spec,
                pl.BlockSpec((9, Cmid_p, tn), lambda j, n: (0, 0, j)),
                pl.BlockSpec((1, tn), lambda j, n: (0, j))]
    args = [y_in, w9, shift]

    Cin = 0
    rc = 0
    if mode == "identity":
        cres = x.shape[-1]
        rc = cres if gn == 1 else tn
        assert gn == 1 or cres % tn == 0
        in_specs.append(pl.BlockSpec((1, Ho, Wo, rc),
                                     lambda j, n: (n, 0, 0, j)))
        args.append(x)                                  # native f32 stream
    else:  # "project"
        Cin = x.shape[-1]
        if stride == 1:
            xs_in = x
            x_spec = pl.BlockSpec((1, H, W, Cin), lambda j, n: (n, 0, 0, 0))
        else:
            xs_in = x.reshape(N, H // 2, 2, W // 2, 2 * Cin)   # free reshape
            x_spec = pl.BlockSpec((1, H // 2, 1, W // 2, 2 * Cin),
                                  lambda j, n: (n, 0, 0, 0, 0))
        in_specs += [x_spec,
                     pl.BlockSpec((Cin, tn), lambda j, n: (0, j))]
        args += [xs_in, wsc]

    return pl.pallas_call(
        _make_conv2_kernel(H, W, stride, Cmid_p, mode, Cin=Cin, Cres=rc),
        out_shape=jax.ShapeDtypeStruct((N, Ho, Wo, Cout_p), jnp.float32),
        grid=(gn, N),
        in_specs=in_specs,
        out_specs=pl.BlockSpec((1, Ho, Wo, tn), lambda j, n: (n, 0, 0, j)),
        compiler_params=pltpu.CompilerParams(
            dimension_semantics=("parallel", "parallel"),
            vmem_limit_bytes=_VMEM_LIMIT),
    )(*args)


# ---------------------------------------------------------------------------
# BottleNeck_IR forward
# ---------------------------------------------------------------------------
def bottleneck_ir_forward_nhwc(x, params, stride, dim_match):
    """x: [N,H,W,Cin] f32 (NHWC).  Returns [N,Ho,Wo,Cout_p] f32 with output
    channels zero-padded to a multiple of 128 (lane-dense stores); the NCHW
    wrapper slices them off (fused into its transpose)."""
    N, H, W, Cin = x.shape
    w1, w2 = params["w1"], params["w2"]
    Cmid, Cout = w1.shape[-1], w2.shape[-1]
    Cmid_p = _round_up(Cmid, 128)
    Cout_p = _round_up(Cout, 128)

    # BN1 applied in bf16 (fused by XLA into the pad producer).  It cannot be
    # folded into conv1 because conv1 zero-pads AFTER this BN.
    s1, b1 = _bn_affine(params["bn1"])
    xp1 = jnp.pad((x * s1 + b1).astype(jnp.bfloat16),
                  ((0, 0), (1, 1), (1, 1), (0, 0)))

    # conv1 (3x3, stride 1) + BN2 + PReLU, fused; writes padded bf16 y.
    s2, sh2 = _bn_affine(params["bn2"])
    w1m = _pad_last((w1 * s2).reshape(9, Cin, Cmid), Cmid_p).astype(jnp.bfloat16)
    sh2p = _pad_last(sh2.reshape(1, Cmid), Cmid_p)
    alphap = _pad_last(params["prelu"].reshape(1, Cmid), Cmid_p)
    ypad = _conv1_call(xp1, w1m, sh2p, alphap, H=H, W=W)

    # conv2 (3x3, stride) + BN3 + shortcut, fused.
    s3, sh3 = _bn_affine(params["bn3"])
    w2m = jnp.pad((w2 * s3).reshape(9, Cmid, Cout),
                  ((0, 0), (0, Cmid_p - Cmid), (0, Cout_p - Cout))
                  ).astype(jnp.bfloat16)
    shift = _pad_last(sh3.reshape(1, Cout), Cout_p)

    if dim_match:
        assert stride == 1 and Cin == Cout
        out = _conv2_call(ypad, w2m, shift, H=H, W=W, stride=stride,
                          mode="identity", x=x)
    else:
        ssc, shsc = _bn_affine(params["bn_sc"])
        wsc = _pad_last(params["w_sc"] * ssc, Cout_p).astype(jnp.bfloat16)
        shift = shift + _pad_last(shsc.reshape(1, Cout), Cout_p)
        out = _conv2_call(ypad, w2m, shift, H=H, W=W, stride=stride,
                          mode="project", x=x, wsc=wsc)
    return out


def bottleneck_ir_forward(x_nchw, params, stride, dim_match):
    # TODO(synk): at network level keep activations NHWC across consecutive
    # blocks and do the NCHW<->NHWC conversion once at the boundary.
    x = jnp.transpose(x_nchw, (0, 2, 3, 1)).astype(jnp.float32)
    out = bottleneck_ir_forward_nhwc(x, params, stride, dim_match)
    Cout = params["w2"].shape[-1]
    # channel un-pad is fused into the output transpose.
    return jnp.transpose(out, (0, 3, 1, 2))[:, :Cout]


# ---------------------------------------------------------------------------
# Parameters and a pure-JAX reference for verification.
# ---------------------------------------------------------------------------
def _rand_bn(key, c):
    k1, k2, k3, k4 = jax.random.split(key, 4)
    return dict(
        gamma=jax.random.uniform(k1, (c,), jnp.float32, 0.5, 1.5),
        beta=jax.random.normal(k2, (c,), jnp.float32) * 0.1,
        mean=jax.random.normal(k3, (c,), jnp.float32) * 0.1,
        var=jax.random.uniform(k4, (c,), jnp.float32, 0.5, 1.5),
    )


def make_params(key, in_c, out_c, dim_match):
    k = jax.random.split(key, 8)
    p = dict(
        bn1=_rand_bn(k[0], in_c),
        w1=jax.random.normal(k[1], (3, 3, in_c, out_c), jnp.float32) * 0.05,
        bn2=_rand_bn(k[2], out_c),
        prelu=jax.random.uniform(k[3], (out_c,), jnp.float32, 0.1, 0.4),
        w2=jax.random.normal(k[4], (3, 3, out_c, out_c), jnp.float32) * 0.05,
        bn3=_rand_bn(k[5], out_c),
    )
    if not dim_match:
        p["w_sc"] = jax.random.normal(k[6], (in_c, out_c), jnp.float32) * 0.05
        p["bn_sc"] = _rand_bn(k[7], out_c)
    return p


def _ref_bn(x, bn):
    return (x - bn["mean"]) / jnp.sqrt(bn["var"] + EPS) * bn["gamma"] + bn["beta"]


def _ref_conv(x, w_hwio, stride, padding):
    return jax.lax.conv_general_dilated(
        x, w_hwio, window_strides=(stride, stride), padding=padding,
        dimension_numbers=("NHWC", "HWIO", "NHWC"))


def bottleneck_ir_reference(x_nchw, params, stride, dim_match):
    x = jnp.transpose(x_nchw, (0, 2, 3, 1)).astype(jnp.float32)
    r = _ref_bn(x, params["bn1"])
    r = _ref_conv(r, params["w1"], 1, [(1, 1), (1, 1)])
    r = _ref_bn(r, params["bn2"])
    a = params["prelu"]
    r = jnp.where(r >= 0, r, r * a)
    r = _ref_conv(r, params["w2"], stride, [(1, 1), (1, 1)])
    r = _ref_bn(r, params["bn3"])
    if dim_match:
        s = x
    else:
        w = params["w_sc"].reshape(1, 1, *params["w_sc"].shape)
        s = _ref_bn(_ref_conv(x, w, stride, [(0, 0), (0, 0)]), params["bn_sc"])
    return jnp.transpose(s + r, (0, 3, 1, 2))


if __name__ == "__main__":
    root = jax.random.PRNGKey(0)
    kx, kp1, kp2 = jax.random.split(root, 3)

    x = jax.random.normal(kx, (2, 64, 16, 16), jnp.float32)

    # Case 1: projection shortcut (dim_match=False), stride 2, 64 -> 128 ch.
    p1 = make_params(kp1, 64, 128, dim_match=False)
    fwd1 = jax.jit(functools.partial(bottleneck_ir_forward,
                                     stride=2, dim_match=False))
    out1 = jax.block_until_ready(fwd1(x, p1))
    ref1 = bottleneck_ir_reference(x, p1, stride=2, dim_match=False)
    assert out1.shape == (2, 128, 8, 8), out1.shape
    assert bool(jnp.all(jnp.isfinite(out1)))
    err1 = float(jnp.max(jnp.abs(out1 - ref1)))
    tol1 = 5e-2 * (float(jnp.max(jnp.abs(ref1))) + 1.0)
    assert err1 <= tol1, ("case1 mismatch", err1, tol1)

    # Case 2: identity shortcut (dim_match=True), stride 1, 64 -> 64 ch.
    p2 = make_params(kp2, 64, 64, dim_match=True)
    fwd2 = jax.jit(functools.partial(bottleneck_ir_forward,
                                     stride=1, dim_match=True))
    out2 = jax.block_until_ready(fwd2(x, p2))
    ref2 = bottleneck_ir_reference(x, p2, stride=1, dim_match=True)
    assert out2.shape == (2, 64, 16, 16), out2.shape
    assert bool(jnp.all(jnp.isfinite(out2)))
    err2 = float(jnp.max(jnp.abs(out2 - ref2)))
    tol2 = 5e-2 * (float(jnp.max(jnp.abs(ref2))) + 1.0)
    assert err2 <= tol2, ("case2 mismatch", err2, tol2)

    print("KERNEL_OK")
</pallas_src>

<mosaic_0001>
module attributes {stable_mosaic.version = 11 : i64} {
  func.func @kernel(%arg0: i32, %arg1: i32, %arg2: memref<1x18x18x64xbf16, #tpu.memory_space<vmem>>, %arg3: memref<9x64x128xbf16, #tpu.memory_space<vmem>>, %arg4: memref<1x128xf32, #tpu.memory_space<vmem>>, %arg5: memref<1x128xf32, #tpu.memory_space<vmem>>, %arg6: memref<1x18x18x128xbf16, #tpu.memory_space<vmem>>) attributes {dimension_semantics = [#tpu.dimension_semantics<parallel>, #tpu.dimension_semantics<parallel>], iteration_bounds = array<i64: 1, 2>, scalar_prefetch = 0 : i64, scratch_operands = 0 : i64, tpu.core_type = #tpu.core_type<tc>, window_params = [{transform_indices = @transform_0, window_bounds = array<i64: 1, 18, 18, 64>}, {transform_indices = @transform_1, window_bounds = array<i64: 9, 64, 128>}, {transform_indices = @transform_2, window_bounds = array<i64: 1, 128>}, {transform_indices = @transform_3, window_bounds = array<i64: 1, 128>}, {transform_indices = @transform_4, window_bounds = array<i64: 1, 18, 18, 128>}]} {
    %c0 = arith.constant 0 : index
    %c0_0 = arith.constant 0 : index
    %c0_1 = arith.constant 0 : index
    %c0_2 = arith.constant 0 : index
    %0 = vector.load %arg2[%c0, %c0_0, %c0_1, %c0_2] : memref<1x18x18x64xbf16, #tpu.memory_space<vmem>>, vector<1x16x16x64xbf16>
    %1 = vector.shape_cast %0 : vector<1x16x16x64xbf16> to vector<256x64xbf16>
    %c0_3 = arith.constant 0 : index
    %c0_4 = arith.constant 0 : index
    %c0_5 = arith.constant 0 : index
    %2 = vector.load %arg3[%c0_3, %c0_4, %c0_5] : memref<9x64x128xbf16, #tpu.memory_space<vmem>>, vector<1x64x128xbf16>
    %3 = vector.shape_cast %2 : vector<1x64x128xbf16> to vector<64x128xbf16>
    %cst = arith.constant dense<0.000000e+00> : vector<256x128xf32>
    %4 = tpu.matmul %1, %3, %cst {dimension_numbers = #tpu.dot_dimension_numbers<[1], [0], [0], [1], [0, 0, 1, 1], [], []>} : vector<256x64xbf16>, vector<64x128xbf16>, vector<256x128xf32> -> vector<256x128xf32>
    %c0_6 = arith.constant 0 : index
    %c0_7 = arith.constant 0 : index
    %c1 = arith.constant 1 : index
    %c0_8 = arith.constant 0 : index
    %5 = vector.load %arg2[%c0_6, %c0_7, %c1, %c0_8] : memref<1x18x18x64xbf16, #tpu.memory_space<vmem>>, vector<1x16x16x64xbf16>
    %6 = vector.shape_cast %5 : vector<1x16x16x64xbf16> to vector<256x64xbf16>
    %c1_9 = arith.constant 1 : index
    %c0_10 = arith.constant 0 : index
    %c0_11 = arith.constant 0 : index
    %7 = vector.load %arg3[%c1_9, %c0_10, %c0_11] : memref<9x64x128xbf16, #tpu.memory_space<vmem>>, vector<1x64x128xbf16>
    %8 = vector.shape_cast %7 : vector<1x64x128xbf16> to vector<64x128xbf16>
    %cst_12 = arith.constant dense<0.000000e+00> : vector<256x128xf32>
    %9 = tpu.matmul %6, %8, %cst_12 {dimension_numbers = #tpu.dot_dimension_numbers<[1], [0], [0], [1], [0, 0, 1, 1], [], []>} : vector<256x64xbf16>, vector<64x128xbf16>, vector<256x128xf32> -> vector<256x128xf32>
    %10 = arith.addf %4, %9 : vector<256x128xf32>
    %c0_13 = arith.constant 0 : index
    %c0_14 = arith.constant 0 : index
    %c2 = arith.constant 2 : index
    %c0_15 = arith.constant 0 : index
    %11 = vector.load %arg2[%c0_13, %c0_14, %c2, %c0_15] : memref<1x18x18x64xbf16, #tpu.memory_space<vmem>>, vector<1x16x16x64xbf16>
    %12 = vector.shape_cast %11 : vector<1x16x16x64xbf16> to vector<256x64xbf16>
    %c2_16 = arith.constant 2 : index
    %c0_17 = arith.constant 0 : index
    %c0_18 = arith.constant 0 : index
    %13 = vector.load %arg3[%c2_16, %c0_17, %c0_18] : memref<9x64x128xbf16, #tpu.memory_space<vmem>>, vector<1x64x128xbf16>
    %14 = vector.shape_cast %13 : vector<1x64x128xbf16> to vector<64x128xbf16>
    %cst_19 = arith.constant dense<0.000000e+00> : vector<256x128xf32>
    %15 = tpu.matmul %12, %14, %cst_19 {dimension_numbers = #tpu.dot_dimension_numbers<[1], [0], [0], [1], [0, 0, 1, 1], [], []>} : vector<256x64xbf16>, vector<64x128xbf16>, vector<256x128xf32> -> vector<256x128xf32>
    %16 = arith.addf %10, %15 : vector<256x128xf32>
    %c0_20 = arith.constant 0 : index
    %c1_21 = arith.constant 1 : index
    %c0_22 = arith.constant 0 : index
    %c0_23 = arith.constant 0 : index
    %17 = vector.load %arg2[%c0_20, %c1_21, %c0_22, %c0_23] : memref<1x18x18x64xbf16, #tpu.memory_space<vmem>>, vector<1x16x16x64xbf16>
    %18 = vector.shape_cast %17 : vector<1x16x16x64xbf16> to vector<256x64xbf16>
    %c3 = arith.constant 3 : index
    %c0_24 = arith.constant 0 : index
    %c0_25 = arith.constant 0 : index
    %19 = vector.load %arg3[%c3, %c0_24, %c0_25] : memref<9x64x128xbf16, #tpu.memory_space<vmem>>, vector<1x64x128xbf16>
    %20 = vector.shape_cast %19 : vector<1x64x128xbf16> to vector<64x128xbf16>
    %cst_26 = arith.constant dense<0.000000e+00> : vector<256x128xf32>
    %21 = tpu.matmul %18, %20, %cst_26 {dimension_numbers = #tpu.dot_dimension_numbers<[1], [0], [0], [1], [0, 0, 1, 1], [], []>} : vector<256x64xbf16>, vector<64x128xbf16>, vector<256x128xf32> -> vector<256x128xf32>
    %22 = arith.addf %16, %21 : vector<256x128xf32>
    %c0_27 = arith.constant 0 : index
    %c1_28 = arith.constant 1 : index
    %c1_29 = arith.constant 1 : index
    %c0_30 = arith.constant 0 : index
    %23 = vector.load %arg2[%c0_27, %c1_28, %c1_29, %c0_30] : memref<1x18x18x64xbf16, #tpu.memory_space<vmem>>, vector<1x16x16x64xbf16>
    %24 = vector.shape_cast %23 : vector<1x16x16x64xbf16> to vector<256x64xbf16>
    %c4 = arith.constant 4 : index
    %c0_31 = arith.constant 0 : index
    %c0_32 = arith.constant 0 : index
    %25 = vector.load %arg3[%c4, %c0_31, %c0_32] : memref<9x64x128xbf16, #tpu.memory_space<vmem>>, vector<1x64x128xbf16>
    %26 = vector.shape_cast %25 : vector<1x64x128xbf16> to vector<64x128xbf16>
    %cst_33 = arith.constant dense<0.000000e+00> : vector<256x128xf32>
    %27 = tpu.matmul %24, %26, %cst_33 {dimension_numbers = #tpu.dot_dimension_numbers<[1], [0], [0], [1], [0, 0, 1, 1], [], []>} : vector<256x64xbf16>, vector<64x128xbf16>, vector<256x128xf32> -> vector<256x128xf32>
    %28 = arith.addf %22, %27 : vector<256x128xf32>
    %c0_34 = arith.constant 0 : index
    %c1_35 = arith.constant 1 : index
    %c2_36 = arith.constant 2 : index
    %c0_37 = arith.constant 0 : index
    %29 = vector.load %arg2[%c0_34, %c1_35, %c2_36, %c0_37] : memref<1x18x18x64xbf16, #tpu.memory_space<vmem>>, vector<1x16x16x64xbf16>
    %30 = vector.shape_cast %29 : vector<1x16x16x64xbf16> to vector<256x64xbf16>
    %c5 = arith.constant 5 : index
    %c0_38 = arith.constant 0 : index
    %c0_39 = arith.constant 0 : index
    %31 = vector.load %arg3[%c5, %c0_38, %c0_39] : memref<9x64x128xbf16, #tpu.memory_space<vmem>>, vector<1x64x128xbf16>
    %32 = vector.shape_cast %31 : vector<1x64x128xbf16> to vector<64x128xbf16>
    %cst_40 = arith.constant dense<0.000000e+00> : vector<256x128xf32>
    %33 = tpu.matmul %30, %32, %cst_40 {dimension_numbers = #tpu.dot_dimension_numbers<[1], [0], [0], [1], [0, 0, 1, 1], [], []>} : vector<256x64xbf16>, vector<64x128xbf16>, vector<256x128xf32> -> vector<256x128xf32>
    %34 = arith.addf %28, %33 : vector<256x128xf32>
    %c0_41 = arith.constant 0 : index
    %c2_42 = arith.constant 2 : index
    %c0_43 = arith.constant 0 : index
    %c0_44 = arith.constant 0 : index
    %35 = vector.load %arg2[%c0_41, %c2_42, %c0_43, %c0_44] : memref<1x18x18x64xbf16, #tpu.memory_space<vmem>>, vector<1x16x16x64xbf16>
    %36 = vector.shape_cast %35 : vector<1x16x16x64xbf16> to vector<256x64xbf16>
    %c6 = arith.constant 6 : index
    %c0_45 = arith.constant 0 : index
    %c0_46 = arith.constant 0 : index
    %37 = vector.load %arg3[%c6, %c0_45, %c0_46] : memref<9x64x128xbf16, #tpu.memory_space<vmem>>, vector<1x64x128xbf16>
    %38 = vector.shape_cast %37 : vector<1x64x128xbf16> to vector<64x128xbf16>
    %cst_47 = arith.constant dense<0.000000e+00> : vector<256x128xf32>
    %39 = tpu.matmul %36, %38, %cst_47 {dimension_numbers = #tpu.dot_dimension_numbers<[1], [0], [0], [1], [0, 0, 1, 1], [], []>} : vector<256x64xbf16>, vector<64x128xbf16>, vector<256x128xf32> -> vector<256x128xf32>
    %40 = arith.addf %34, %39 : vector<256x128xf32>
    %c0_48 = arith.constant 0 : index
    %c2_49 = arith.constant 2 : index
    %c1_50 = arith.constant 1 : index
    %c0_51 = arith.constant 0 : index
    %41 = vector.load %arg2[%c0_48, %c2_49, %c1_50, %c0_51] : memref<1x18x18x64xbf16, #tpu.memory_space<vmem>>, vector<1x16x16x64xbf16>
    %42 = vector.shape_cast %41 : vector<1x16x16x64xbf16> to vector<256x64xbf16>
    %c7 = arith.constant 7 : index
    %c0_52 = arith.constant 0 : index
    %c0_53 = arith.constant 0 : index
    %43 = vector.load %arg3[%c7, %c0_52, %c0_53] : memref<9x64x128xbf16, #tpu.memory_space<vmem>>, vector<1x64x128xbf16>
    %44 = vector.shape_cast %43 : vector<1x64x128xbf16> to vector<64x128xbf16>
    %cst_54 = arith.constant dense<0.000000e+00> : vector<256x128xf32>
    %45 = tpu.matmul %42, %44, %cst_54 {dimension_numbers = #tpu.dot_dimension_numbers<[1], [0], [0], [1], [0, 0, 1, 1], [], []>} : vector<256x64xbf16>, vector<64x128xbf16>, vector<256x128xf32> -> vector<256x128xf32>
    %46 = arith.addf %40, %45 : vector<256x128xf32>
    %c0_55 = arith.constant 0 : index
    %c2_56 = arith.constant 2 : index
    %c2_57 = arith.constant 2 : index
    %c0_58 = arith.constant 0 : index
    %47 = vector.load %arg2[%c0_55, %c2_56, %c2_57, %c0_58] : memref<1x18x18x64xbf16, #tpu.memory_space<vmem>>, vector<1x16x16x64xbf16>
    %48 = vector.shape_cast %47 : vector<1x16x16x64xbf16> to vector<256x64xbf16>
    %c8 = arith.constant 8 : index
    %c0_59 = arith.constant 0 : index
    %c0_60 = arith.constant 0 : index
    %49 = vector.load %arg3[%c8, %c0_59, %c0_60] : memref<9x64x128xbf16, #tpu.memory_space<vmem>>, vector<1x64x128xbf16>
    %50 = vector.shape_cast %49 : vector<1x64x128xbf16> to vector<64x128xbf16>
    %cst_61 = arith.constant dense<0.000000e+00> : vector<256x128xf32>
    %51 = tpu.matmul %48, %50, %cst_61 {dimension_numbers = #tpu.dot_dimension_numbers<[1], [0], [0], [1], [0, 0, 1, 1], [], []>} : vector<256x64xbf16>, vector<64x128xbf16>, vector<256x128xf32> -> vector<256x128xf32>
    %52 = arith.addf %46, %51 : vector<256x128xf32>
    %c0_62 = arith.constant 0 : index
    %c0_63 = arith.constant 0 : index
    %53 = vector.load %arg4[%c0_62, %c0_63] : memref<1x128xf32, #tpu.memory_space<vmem>>, vector<1x128xf32>
    %54 = vector.broadcast %53 : vector<1x128xf32> to vector<256x128xf32>
    %55 = arith.addf %52, %54 : vector<256x128xf32>
    %cst_64 = arith.constant 0.000000e+00 : f32
    %56 = vector.broadcast %cst_64 : f32 to vector<256x128xf32>
    %57 = arith.cmpf oge, %55, %56 : vector<256x128xf32>
    %c0_65 = arith.constant 0 : index
    %c0_66 = arith.constant 0 : index
    %58 = vector.load %arg5[%c0_65, %c0_66] : memref<1x128xf32, #tpu.memory_space<vmem>>, vector<1x128xf32>
    %59 = vector.broadcast %58 : vector<1x128xf32> to vector<256x128xf32>
    %60 = arith.mulf %55, %59 : vector<256x128xf32>
    %61 = arith.select %57, %55, %60 : vector<256x128xi1>, vector<256x128xf32>
    %cst_67 = arith.constant 0.000000e+00 : bf16
    %62 = vector.broadcast %cst_67 : bf16 to vector<1x18x18x128xbf16>
    %c0_68 = arith.constant 0 : index
    %c0_69 = arith.constant 0 : index
    %c0_70 = arith.constant 0 : index
    %c0_71 = arith.constant 0 : index
    %63 = vector.load %arg6[%c0_68, %c0_69, %c0_70, %c0_71] : memref<1x18x18x128xbf16, #tpu.memory_space<vmem>>, vector<1x18x18x128xbf16>
    tpu.vector_store %arg6[%c0_68, %c0_69, %c0_70, %c0_71], %62 {strides = array<i32>} : memref<1x18x18x128xbf16, #tpu.memory_space<vmem>>, vector<1x18x18x128xbf16>,
    %64 = vector.shape_cast %61 : vector<256x128xf32> to vector<1x16x16x128xf32>
    %65 = arith.truncf %64 : vector<1x16x16x128xf32> to vector<1x16x16x128xbf16>
    %c0_72 = arith.constant 0 : index
    %c1_73 = arith.constant 1 : index
    %c1_74 = arith.constant 1 : index
    %c0_75 = arith.constant 0 : index
    %66 = vector.load %arg6[%c0_72, %c1_73, %c1_74, %c0_75] : memref<1x18x18x128xbf16, #tpu.memory_space<vmem>>, vector<1x16x16x128xbf16>
    tpu.vector_store %arg6[%c0_72, %c1_73, %c1_74, %c0_75], %65 {strides = array<i32>} : memref<1x18x18x128xbf16, #tpu.memory_space<vmem>>, vector<1x16x16x128xbf16>,
    return
  }
  func.func @transform_0(%arg0: i32, %arg1: i32) -> (i32, i32, i32, i32) {
    %c0_i32 = arith.constant 0 : i32
    %c0_i32_0 = arith.constant 0 : i32
    %c0_i32_1 = arith.constant 0 : i32
    %c0_i32_2 = arith.constant 0 : i32
    return %arg1, %c0_i32, %c0_i32_0, %c0_i32_1 : i32, i32, i32, i32
  }
  func.func @transform_1(%arg0: i32, %arg1: i32) -> (i32, i32, i32) {
    %c0_i32 = arith.constant 0 : i32
    %c0_i32_0 = arith.constant 0 : i32
    %c0_i32_1 = arith.constant 0 : i32
    return %c0_i32, %c0_i32_0, %arg0 : i32, i32, i32
  }
  func.func @transform_2(%arg0: i32, %arg1: i32) -> (i32, i32) {
    %c0_i32 = arith.constant 0 : i32
    %c0_i32_0 = arith.constant 0 : i32
    return %c0_i32, %arg0 : i32, i32
  }
  func.func @transform_3(%arg0: i32, %arg1: i32) -> (i32, i32) {
    %c0_i32 = arith.constant 0 : i32
    %c0_i32_0 = arith.constant 0 : i32
    return %c0_i32, %arg0 : i32, i32
  }
  func.func @transform_4(%arg0: i32, %arg1: i32) -> (i32, i32, i32, i32) {
    %c0_i32 = arith.constant 0 : i32
    %c0_i32_0 = arith.constant 0 : i32
    %c0_i32_1 = arith.constant 0 : i32
    return %arg1, %c0_i32, %c0_i32_0, %arg0 : i32, i32, i32, i32
  }
}

module attributes {stable_mosaic.version = 11 : i64} {
  func.func @kernel(%arg0: i32, %arg1: i32, %arg2: memref<1x9x2x9x256xbf16, #tpu.memory_space<vmem>>, %arg3: memref<9x128x128xbf16, #tpu.memory_space<vmem>>, %arg4: memref<1x128xf32, #tpu.memory_space<vmem>>, %arg5: memref<1x8x1x8x128xf32, #tpu.memory_space<vmem>>, %arg6: memref<64x128xbf16, #tpu.memory_space<vmem>>, %arg7: memref<1x8x8x128xf32, #tpu.memory_space<vmem>>) attributes {dimension_semantics = [#tpu.dimension_semantics<parallel>, #tpu.dimension_semantics<parallel>], iteration_bounds = array<i64: 1, 2>, scalar_prefetch = 0 : i64, scratch_operands = 0 : i64, tpu.core_type = #tpu.core_type<tc>, window_params = [{transform_indices = @transform_0, window_bounds = array<i64: 1, 9, 2, 9, 256>}, {transform_indices = @transform_1, window_bounds = array<i64: 9, 128, 128>}, {transform_indices = @transform_2, window_bounds = array<i64: 1, 128>}, {transform_indices = @transform_3, window_bounds = array<i64: 1, 8, 1, 8, 128>}, {transform_indices = @transform_4, window_bounds = array<i64: 64, 128>}, {transform_indices = @transform_5, window_bounds = array<i64: 1, 8, 8, 128>}]} {
    %c0 = arith.constant 0 : index
    %c0_0 = arith.constant 0 : index
    %c0_1 = arith.constant 0 : index
    %c0_2 = arith.constant 0 : index
    %c0_3 = arith.constant 0 : index
    %0 = vector.load %arg2[%c0, %c0_0, %c0_1, %c0_2, %c0_3] : memref<1x9x2x9x256xbf16, #tpu.memory_space<vmem>>, vector<1x8x1x8x128xbf16>
    %1 = vector.shape_cast %0 : vector<1x8x1x8x128xbf16> to vector<64x128xbf16>
    %c0_4 = arith.constant 0 : index
    %c0_5 = arith.constant 0 : index
    %c0_6 = arith.constant 0 : index
    %2 = vector.load %arg3[%c0_4, %c0_5, %c0_6] : memref<9x128x128xbf16, #tpu.memory_space<vmem>>, vector<1x128x128xbf16>
    %3 = vector.shape_cast %2 : vector<1x128x128xbf16> to vector<128x128xbf16>
    %cst = arith.constant dense<0.000000e+00> : vector<64x128xf32>
    %4 = tpu.matmul %1, %3, %cst {dimension_numbers = #tpu.dot_dimension_numbers<[1], [0], [0], [1], [0, 0, 1, 1], [], []>} : vector<64x128xbf16>, vector<128x128xbf16>, vector<64x128xf32> -> vector<64x128xf32>
    %c0_7 = arith.constant 0 : index
    %c0_8 = arith.constant 0 : index
    %c0_9 = arith.constant 0 : index
    %c0_10 = arith.constant 0 : index
    %c128 = arith.constant 128 : index
    %5 = vector.load %arg2[%c0_7, %c0_8, %c0_9, %c0_10, %c128] : memref<1x9x2x9x256xbf16, #tpu.memory_space<vmem>>, vector<1x8x1x8x128xbf16>
    %6 = vector.shape_cast %5 : vector<1x8x1x8x128xbf16> to vector<64x128xbf16>
    %c1 = arith.constant 1 : index
    %c0_11 = arith.constant 0 : index
    %c0_12 = arith.constant 0 : index
    %7 = vector.load %arg3[%c1, %c0_11, %c0_12] : memref<9x128x128xbf16, #tpu.memory_space<vmem>>, vector<1x128x128xbf16>
    %8 = vector.shape_cast %7 : vector<1x128x128xbf16> to vector<128x128xbf16>
    %cst_13 = arith.constant dense<0.000000e+00> : vector<64x128xf32>
    %9 = tpu.matmul %6, %8, %cst_13 {dimension_numbers = #tpu.dot_dimension_numbers<[1], [0], [0], [1], [0, 0, 1, 1], [], []>} : vector<64x128xbf16>, vector<128x128xbf16>, vector<64x128xf32> -> vector<64x128xf32>
    %10 = arith.addf %4, %9 : vector<64x128xf32>
    %c0_14 = arith.constant 0 : index
    %c0_15 = arith.constant 0 : index
    %c0_16 = arith.constant 0 : index
    %c1_17 = arith.constant 1 : index
    %c0_18 = arith.constant 0 : index
    %11 = vector.load %arg2[%c0_14, %c0_15, %c0_16, %c1_17, %c0_18] : memref<1x9x2x9x256xbf16, #tpu.memory_space<vmem>>, vector<1x8x1x8x128xbf16>
    %12 = vector.shape_cast %11 : vector<1x8x1x8x128xbf16> to vector<64x128xbf16>
    %c2 = arith.constant 2 : index
    %c0_19 = arith.constant 0 : index
    %c0_20 = arith.constant 0 : index
    %13 = vector.load %arg3[%c2, %c0_19, %c0_20] : memref<9x128x128xbf16, #tpu.memory_space<vmem>>, vector<1x128x128xbf16>
    %14 = vector.shape_cast %13 : vector<1x128x128xbf16> to vector<128x128xbf16>
    %cst_21 = arith.constant dense<0.000000e+00> : vector<64x128xf32>
    %15 = tpu.matmul %12, %14, %cst_21 {dimension_numbers = #tpu.dot_dimension_numbers<[1], [0], [0], [1], [0, 0, 1, 1], [], []>} : vector<64x128xbf16>, vector<128x128xbf16>, vector<64x128xf32> -> vector<64x128xf32>
    %16 = arith.addf %10, %15 : vector<64x128xf32>
    %c0_22 = arith.constant 0 : index
    %c0_23 = arith.constant 0 : index
    %c1_24 = arith.constant 1 : index
    %c0_25 = arith.constant 0 : index
    %c0_26 = arith.constant 0 : index
    %17 = vector.load %arg2[%c0_22, %c0_23, %c1_24, %c0_25, %c0_26] : memref<1x9x2x9x256xbf16, #tpu.memory_space<vmem>>, vector<1x8x1x8x128xbf16>
    %18 = vector.shape_cast %17 : vector<1x8x1x8x128xbf16> to vector<64x128xbf16>
    %c3 = arith.constant 3 : index
    %c0_27 = arith.constant 0 : index
    %c0_28 = arith.constant 0 : index
    %19 = vector.load %arg3[%c3, %c0_27, %c0_28] : memref<9x128x128xbf16, #tpu.memory_space<vmem>>, vector<1x128x128xbf16>
    %20 = vector.shape_cast %19 : vector<1x128x128xbf16> to vector<128x128xbf16>
    %cst_29 = arith.constant dense<0.000000e+00> : vector<64x128xf32>
    %21 = tpu.matmul %18, %20, %cst_29 {dimension_numbers = #tpu.dot_dimension_numbers<[1], [0], [0], [1], [0, 0, 1, 1], [], []>} : vector<64x128xbf16>, vector<128x128xbf16>, vector<64x128xf32> -> vector<64x128xf32>
    %22 = arith.addf %16, %21 : vector<64x128xf32>
    %c0_30 = arith.constant 0 : index
    %c0_31 = arith.constant 0 : index
    %c1_32 = arith.constant 1 : index
    %c0_33 = arith.constant 0 : index
    %c128_34 = arith.constant 128 : index
    %23 = vector.load %arg2[%c0_30, %c0_31, %c1_32, %c0_33, %c128_34] : memref<1x9x2x9x256xbf16, #tpu.memory_space<vmem>>, vector<1x8x1x8x128xbf16>
    %24 = vector.shape_cast %23 : vector<1x8x1x8x128xbf16> to vector<64x128xbf16>
    %c4 = arith.constant 4 : index
    %c0_35 = arith.constant 0 : index
    %c0_36 = arith.constant 0 : index
    %25 = vector.load %arg3[%c4, %c0_35, %c0_36] : memref<9x128x128xbf16, #tpu.memory_space<vmem>>, vector<1x128x128xbf16>
    %26 = vector.shape_cast %25 : vector<1x128x128xbf16> to vector<128x128xbf16>
    %cst_37 = arith.constant dense<0.000000e+00> : vector<64x128xf32>
    %27 = tpu.matmul %24, %26, %cst_37 {dimension_numbers = #tpu.dot_dimension_numbers<[1], [0], [0], [1], [0, 0, 1, 1], [], []>} : vector<64x128xbf16>, vector<128x128xbf16>, vector<64x128xf32> -> vector<64x128xf32>
    %28 = arith.addf %22, %27 : vector<64x128xf32>
    %c0_38 = arith.constant 0 : index
    %c0_39 = arith.constant 0 : index
    %c1_40 = arith.constant 1 : index
    %c1_41 = arith.constant 1 : index
    %c0_42 = arith.constant 0 : index
    %29 = vector.load %arg2[%c0_38, %c0_39, %c1_40, %c1_41, %c0_42] : memref<1x9x2x9x256xbf16, #tpu.memory_space<vmem>>, vector<1x8x1x8x128xbf16>
    %30 = vector.shape_cast %29 : vector<1x8x1x8x128xbf16> to vector<64x128xbf16>
    %c5 = arith.constant 5 : index
    %c0_43 = arith.constant 0 : index
    %c0_44 = arith.constant 0 : index
    %31 = vector.load %arg3[%c5, %c0_43, %c0_44] : memref<9x128x128xbf16, #tpu.memory_space<vmem>>, vector<1x128x128xbf16>
    %32 = vector.shape_cast %31 : vector<1x128x128xbf16> to vector<128x128xbf16>
    %cst_45 = arith.constant dense<0.000000e+00> : vector<64x128xf32>
    %33 = tpu.matmul %30, %32, %cst_45 {dimension_numbers = #tpu.dot_dimension_numbers<[1], [0], [0], [1], [0, 0, 1, 1], [], []>} : vector<64x128xbf16>, vector<128x128xbf16>, vector<64x128xf32> -> vector<64x128xf32>
    %34 = arith.addf %28, %33 : vector<64x128xf32>
    %c0_46 = arith.constant 0 : index
    %c1_47 = arith.constant 1 : index
    %c0_48 = arith.constant 0 : index
    %c0_49 = arith.constant 0 : index
    %c0_50 = arith.constant 0 : index
    %35 = vector.load %arg2[%c0_46, %c1_47, %c0_48, %c0_49, %c0_50] : memref<1x9x2x9x256xbf16, #tpu.memory_space<vmem>>, vector<1x8x1x8x128xbf16>
    %36 = vector.shape_cast %35 : vector<1x8x1x8x128xbf16> to vector<64x128xbf16>
    %c6 = arith.constant 6 : index
    %c0_51 = arith.constant 0 : index
    %c0_52 = arith.constant 0 : index
    %37 = vector.load %arg3[%c6, %c0_51, %c0_52] : memref<9x128x128xbf16, #tpu.memory_space<vmem>>, vector<1x128x128xbf16>
    %38 = vector.shape_cast %37 : vector<1x128x128xbf16> to vector<128x128xbf16>
    %cst_53 = arith.constant dense<0.000000e+00> : vector<64x128xf32>
    %39 = tpu.matmul %36, %38, %cst_53 {dimension_numbers = #tpu.dot_dimension_numbers<[1], [0], [0], [1], [0, 0, 1, 1], [], []>} : vector<64x128xbf16>, vector<128x128xbf16>, vector<64x128xf32> -> vector<64x128xf32>
    %40 = arith.addf %34, %39 : vector<64x128xf32>
    %c0_54 = arith.constant 0 : index
    %c1_55 = arith.constant 1 : index
    %c0_56 = arith.constant 0 : index
    %c0_57 = arith.constant 0 : index
    %c128_58 = arith.constant 128 : index
    %41 = vector.load %arg2[%c0_54, %c1_55, %c0_56, %c0_57, %c128_58] : memref<1x9x2x9x256xbf16, #tpu.memory_space<vmem>>, vector<1x8x1x8x128xbf16>
    %42 = vector.shape_cast %41 : vector<1x8x1x8x128xbf16> to vector<64x128xbf16>
    %c7 = arith.constant 7 : index
    %c0_59 = arith.constant 0 : index
    %c0_60 = arith.constant 0 : index
    %43 = vector.load %arg3[%c7, %c0_59, %c0_60] : memref<9x128x128xbf16, #tpu.memory_space<vmem>>, vector<1x128x128xbf16>
    %44 = vector.shape_cast %43 : vector<1x128x128xbf16> to vector<128x128xbf16>
    %cst_61 = arith.constant dense<0.000000e+00> : vector<64x128xf32>
    %45 = tpu.matmul %42, %44, %cst_61 {dimension_numbers = #tpu.dot_dimension_numbers<[1], [0], [0], [1], [0, 0, 1, 1], [], []>} : vector<64x128xbf16>, vector<128x128xbf16>, vector<64x128xf32> -> vector<64x128xf32>
    %46 = arith.addf %40, %45 : vector<64x128xf32>
    %c0_62 = arith.constant 0 : index
    %c1_63 = arith.constant 1 : index
    %c0_64 = arith.constant 0 : index
    %c1_65 = arith.constant 1 : index
    %c0_66 = arith.constant 0 : index
    %47 = vector.load %arg2[%c0_62, %c1_63, %c0_64, %c1_65, %c0_66] : memref<1x9x2x9x256xbf16, #tpu.memory_space<vmem>>, vector<1x8x1x8x128xbf16>
    %48 = vector.shape_cast %47 : vector<1x8x1x8x128xbf16> to vector<64x128xbf16>
    %c8 = arith.constant 8 : index
    %c0_67 = arith.constant 0 : index
    %c0_68 = arith.constant 0 : index
    %49 = vector.load %arg3[%c8, %c0_67, %c0_68] : memref<9x128x128xbf16, #tpu.memory_space<vmem>>, vector<1x128x128xbf16>
    %50 = vector.shape_cast %49 : vector<1x128x128xbf16> to vector<128x128xbf16>
    %cst_69 = arith.constant dense<0.000000e+00> : vector<64x128xf32>
    %51 = tpu.matmul %48, %50, %cst_69 {dimension_numbers = #tpu.dot_dimension_numbers<[1], [0], [0], [1], [0, 0, 1, 1], [], []>} : vector<64x128xbf16>, vector<128x128xbf16>, vector<64x128xf32> -> vector<64x128xf32>
    %52 = arith.addf %46, %51 : vector<64x128xf32>
    %c0_70 = arith.constant 0 : index
    %c0_71 = arith.constant 0 : index
    %c0_72 = arith.constant 0 : index
    %c0_73 = arith.constant 0 : index
    %c0_74 = arith.constant 0 : index
    %53 = vector.load %arg5[%c0_70, %c0_71, %c0_72, %c0_73, %c0_74] : memref<1x8x1x8x128xf32, #tpu.memory_space<vmem>>, vector<1x8x1x8x64xf32>
    %54 = vector.shape_cast %53 : vector<1x8x1x8x64xf32> to vector<64x64xf32>
    %55 = arith.truncf %54 : vector<64x64xf32> to vector<64x64xbf16>
    %c0_75 = arith.constant 0 : index
    %c0_76 = arith.constant 0 : index
    %56 = vector.load %arg6[%c0_75, %c0_76] : memref<64x128xbf16, #tpu.memory_space<vmem>>, vector<64x128xbf16>
    %cst_77 = arith.constant dense<0.000000e+00> : vector<64x128xf32>
    %57 = tpu.matmul %55, %56, %cst_77 {dimension_numbers = #tpu.dot_dimension_numbers<[1], [0], [0], [1], [0, 0, 1, 1], [], []>} : vector<64x64xbf16>, vector<64x128xbf16>, vector<64x128xf32> -> vector<64x128xf32>
    %58 = arith.addf %52, %57 : vector<64x128xf32>
    %c0_78 = arith.constant 0 : index
    %c0_79 = arith.constant 0 : index
    %59 = vector.load %arg4[%c0_78, %c0_79] : memref<1x128xf32, #tpu.memory_space<vmem>>, vector<1x128xf32>
    %60 = vector.broadcast %59 : vector<1x128xf32> to vector<64x128xf32>
    %61 = arith.addf %58, %60 : vector<64x128xf32>
    %62 = vector.shape_cast %61 : vector<64x128xf32> to vector<1x8x8x128xf32>
    %c0_80 = arith.constant 0 : index
    %c0_81 = arith.constant 0 : index
    %c0_82 = arith.constant 0 : index
    %c0_83 = arith.constant 0 : index
    %63 = vector.load %arg7[%c0_80, %c0_81, %c0_82, %c0_83] : memref<1x8x8x128xf32, #tpu.memory_space<vmem>>, vector<1x8x8x128xf32>
    tpu.vector_store %arg7[%c0_80, %c0_81, %c0_82, %c0_83], %62 {strides = array<i32>} : memref<1x8x8x128xf32, #tpu.memory_space<vmem>>, vector<1x8x8x128xf32>,
    return
  }
  func.func @transform_0(%arg0: i32, %arg1: i32) -> (i32, i32, i32, i32, i32) {
    %c0_i32 = arith.constant 0 : i32
    %c0_i32_0 = arith.constant 0 : i32
    %c0_i32_1 = arith.constant 0 : i32
    %c0_i32_2 = arith.constant 0 : i32
    %c0_i32_3 = arith.constant 0 : i32
    return %arg1, %c0_i32, %c0_i32_0, %c0_i32_1, %c0_i32_2 : i32, i32, i32, i32, i32
  }
  func.func @transform_1(%arg0: i32, %arg1: i32) -> (i32, i32, i32) {
    %c0_i32 = arith.constant 0 : i32
    %c0_i32_0 = arith.constant 0 : i32
    %c0_i32_1 = arith.constant 0 : i32
    return %c0_i32, %c0_i32_0, %arg0 : i32, i32, i32
  }
  func.func @transform_2(%arg0: i32, %arg1: i32) -> (i32, i32) {
    %c0_i32 = arith.constant 0 : i32
    %c0_i32_0 = arith.constant 0 : i32
    return %c0_i32, %arg0 : i32, i32
  }
  func.func @transform_3(%arg0: i32, %arg1: i32) -> (i32, i32, i32, i32, i32) {
    %c0_i32 = arith.constant 0 : i32
    %c0_i32_0 = arith.constant 0 : i32
    %c0_i32_1 = arith.constant 0 : i32
    %c0_i32_2 = arith.constant 0 : i32
    %c0_i32_3 = arith.constant 0 : i32
    return %arg1, %c0_i32, %c0_i32_0, %c0_i32_1, %c0_i32_2 : i32, i32, i32, i32, i32
  }
  func.func @transform_4(%arg0: i32, %arg1: i32) -> (i32, i32) {
    %c0_i32 = arith.constant 0 : i32
    %c0_i32_0 = arith.constant 0 : i32
    return %c0_i32, %arg0 : i32, i32
  }
  func.func @transform_5(%arg0: i32, %arg1: i32) -> (i32, i32, i32, i32) {
    %c0_i32 = arith.constant 0 : i32
    %c0_i32_0 = arith.constant 0 : i32
    %c0_i32_1 = arith.constant 0 : i32
    return %arg1, %c0_i32, %c0_i32_0, %arg0 : i32, i32, i32, i32
  }
}

</mosaic_0001>

<llo_original>
// kernel: bottleneck_ir_forward.3
$region0: #{bottleneck_ir_forward.3}
  #allocation0 [shape = 'u32[]', space=smem, size = 0x4, offset = 0x4, fixed_abs, tag = 'smem constant byte address 0x4 - core index']
  #allocation1 [shape = 'u32[144,128]{1,0:T(1,128)}', space=vmem, size = 0x12000, scoped, tag = 'internal scratch']
  %s0 = inlined_call_operand.vmem [shape: bf16[2,9,2,9,256], index: 0, kind: input, shape index: {}]
  %s1 = inlined_call_operand.vmem [shape: bf16[9,128,128], index: 1, kind: input, shape index: {}]
  %s2 = inlined_call_operand.vmem [shape: f32[1,128], index: 2, kind: input, shape index: {}]
  %s3 = inlined_call_operand.vmem [shape: f32[2,8,2,8,128], index: 3, kind: input, shape index: {}]
  %s4 = inlined_call_operand.vmem [shape: bf16[64,128], index: 4, kind: input, shape index: {}]
  %s5 = inlined_call_operand.hbm [shape: f32[2,8,8,128], index: 5, kind: output, shape index: {}]
  %s6 = sld [smem:[#allocation0]]
  $region91: #{bottleneck_ir_forward.3} parent=0
    _
  %s8 = ssub.s32 1, %s6
  %s9 = scalar_select 0, %s8, %s6
  $region1: #{bottleneck_ir_forward.3} parent=0
    #allocation2 [shape = 'u8[65536]{0}', space=vmem, size = 0x10000, scoped, tag = 'input window, operand 3']
    #allocation3 [shape = 'u8[65536]{0}', space=vmem, size = 0x10000, scoped, tag = 'output window, operand 0']
    #allocation4 [shape = 's32[2]{0}', space=sflag, size = 0x8, scoped, tag = 'scoped memory for bottleneck_ir_forward.3']
    %10 = vsyncpa [#allocation4], 0
    %s11 = scalar_lea.sflag [#allocation4], 1
    %12 = vsyncpa %s11, 0
    loop: start=0, step=1, limit=4
    $region2: #{bottleneck_ir_forward.3} parent=1 // loop_pre_header
      _
    $region3: #{bottleneck_ir_forward.3} parent=1 // loop_header
      %s14 = sphi 0, %s18
      %p15 = scmp.ge.s32.totalorder %s14, 4
      %s21 = sphi 0, %s33
      %s22 = sphi 0, %s29
      %s23 = sphi 0, %s21
      %s24 = sphi 0, %s22
      %s25 = sphi 0, %s23
      %s26 = sphi 0, %s24
      %s36 = sphi 0, %s38
      %s39 = sphi 0, %s36
      %s40 = sphi 0, %s39
      %s56 = sphi 0, %s40
      %s62 = sphi 0, %s64
      %s65 = sphi 0, %s62
      %s66 = sphi 0, %s65
      %s82 = sphi 0, %s66
      %s88 = sphi 0, %s90
      %s91 = sphi 0, %s88
      %s92 = sphi 0, %s91
      %s108 = sphi 0, %s92
      %s114 = sphi 0, %s116
      %s117 = sphi 0, %s114
      %s118 = sphi 0, %s117
      %s134 = sphi 0, %s118
      %s140 = sphi 0, %s142
      %s143 = sphi 0, %s140
      %s144 = sphi 0, %s143
      %s160 = sphi 0, %s144
      %s168 = sphi 0, %s170
      %s171 = sphi 0, %s168
      %s172 = sphi 0, %s171
      %s188 = sphi 0, %s172
    $region4: #{bottleneck_ir_forward.3} parent=1 // loop_header_branch
      %17 = sbr.rel (%p15) target = $region8
    $region5: #{bottleneck_ir_forward.3} parent=1 // loop_body
      %s19 = ssub.s32 %s14, 1
      %s20 = ssub.s32 %s14, 2
      %s27 = sadd.s32 1, %s22
      %p28 = scmp.ge.s32.totalorder %s27, 2
      %s29 = scalar_select %p28, 0, %s27
      %s30 = sadd.s32 1, %s21
      %s31 = scalar_select %p28, %s30, %s21
      %p32 = scmp.ge.s32.totalorder %s31, 1
      %s33 = scalar_select %p32, 0, %s31
      %s34 = ssub.s32 %s22, %s29
      %p35 = scmp.eq.s32.totalorder %s34, 0
      %s37 = sadd.s32 %s36, 1
      %s38 = scalar_select %p35, %s36, %s37
      %p41 = pneg %p35
      %p42 = scmp.eq.s32.totalorder %s14, 1
      %p43 = por %p41, %p42
      %p44 = scmp.ne.s32.totalorder %s36, %s39
      %p45 = scmp.eq.s32.totalorder %s14, 0
      %p46 = por %p44, %p45
      %p47 = scmp.ne.s32.totalorder %s36, %s39
      %p48 = scmp.eq.s32.totalorder %s19, 1
      %p49 = por %p47, %p48
      %p50 = scmp.ne.s32.totalorder %s39, %s40
      %p51 = scmp.eq.s32.totalorder %s19, 0
      %p52 = por %p50, %p51
      %p53 = scmp.ne.s32.totalorder %s39, %s40
      %p54 = scmp.eq.s32.totalorder %s20, 1
      %p55 = por %p53, %p54
      %p57 = scmp.ne.s32.totalorder %s40, %s56
      %p58 = scmp.eq.s32.totalorder %s20, 0
      %p59 = por %p57, %p58
      %s60 = ssub.s32 %s21, %s33
      %p61 = scmp.eq.s32.totalorder %s60, 0
      %s63 = sadd.s32 %s62, 1
      %s64 = scalar_select %p61, %s62, %s63
      %p67 = pneg %p61
      %p68 = scmp.eq.s32.totalorder %s14, 1
      %p69 = por %p67, %p68
      %p70 = scmp.ne.s32.totalorder %s62, %s65
      %p71 = scmp.eq.s32.totalorder %s14, 0
      %p72 = por %p70, %p71
      %p73 = scmp.ne.s32.totalorder %s62, %s65
      %p74 = scmp.eq.s32.totalorder %s19, 1
      %p75 = por %p73, %p74
      %p76 = scmp.ne.s32.totalorder %s65, %s66
      %p77 = scmp.eq.s32.totalorder %s19, 0
      %p78 = por %p76, %p77
      %p79 = scmp.ne.s32.totalorder %s65, %s66
      %p80 = scmp.eq.s32.totalorder %s20, 1
      %p81 = por %p79, %p80
      %p83 = scmp.ne.s32.totalorder %s66, %s82
      %p84 = scmp.eq.s32.totalorder %s20, 0
      %p85 = por %p83, %p84
      %s86 = ssub.s32 %s21, %s33
      %p87 = scmp.eq.s32.totalorder %s86, 0
      %s89 = sadd.s32 %s88, 1
      %s90 = scalar_select %p87, %s88, %s89
      %p93 = pneg %p87
      %p94 = scmp.eq.s32.totalorder %s14, 1
      %p95 = por %p93, %p94
      %p96 = scmp.ne.s32.totalorder %s88, %s91
      %p97 = scmp.eq.s32.totalorder %s14, 0
      %p98 = por %p96, %p97
      %p99 = scmp.ne.s32.totalorder %s88, %s91
      %p100 = scmp.eq.s32.totalorder %s19, 1
      %p101 = por %p99, %p100
      %p102 = scmp.ne.s32.totalorder %s91, %s92
      %p103 = scmp.eq.s32.totalorder %s19, 0
      %p104 = por %p102, %p103
      %p105 = scmp.ne.s32.totalorder %s91, %s92
      %p106 = scmp.eq.s32.totalorder %s20, 1
      %p107 = por %p105, %p106
      %p109 = scmp.ne.s32.totalorder %s92, %s108
      %p110 = scmp.eq.s32.totalorder %s20, 0
      %p111 = por %p109, %p110
      %s112 = ssub.s32 %s22, %s29
      %p113 = scmp.eq.s32.totalorder %s112, 0
      %s115 = sadd.s32 %s114, 1
      %s116 = scalar_select %p113, %s114, %s115
      %p119 = pneg %p113
      %p120 = scmp.eq.s32.totalorder %s14, 1
      %p121 = por %p119, %p120
      %p122 = scmp.ne.s32.totalorder %s114, %s117
      %p123 = scmp.eq.s32.totalorder %s14, 0
      %p124 = por %p122, %p123
      %p125 = scmp.ne.s32.totalorder %s114, %s117
      %p126 = scmp.eq.s32.totalorder %s19, 1
      %p127 = por %p125, %p126
      %p128 = scmp.ne.s32.totalorder %s117, %s118
      %p129 = scmp.eq.s32.totalorder %s19, 0
      %p130 = por %p128, %p129
      %p131 = scmp.ne.s32.totalorder %s117, %s118
      %p132 = scmp.eq.s32.totalorder %s20, 1
      %p133 = por %p131, %p132
      %p135 = scmp.ne.s32.totalorder %s118, %s134
      %p136 = scmp.eq.s32.totalorder %s20, 0
      %p137 = por %p135, %p136
      %s138 = ssub.s32 %s21, %s33
      %p139 = scmp.eq.s32.totalorder %s138, 0
      %s141 = sadd.s32 %s140, 1
      %s142 = scalar_select %p139, %s140, %s141
      %p145 = pneg %p139
      %p146 = scmp.eq.s32.totalorder %s14, 1
      %p147 = por %p145, %p146
      %p148 = scmp.ne.s32.totalorder %s140, %s143
      %p149 = scmp.eq.s32.totalorder %s14, 0
      %p150 = por %p148, %p149
      %p151 = scmp.ne.s32.totalorder %s140, %s143
      %p152 = scmp.eq.s32.totalorder %s19, 1
      %p153 = por %p151, %p152
      %p154 = scmp.ne.s32.totalorder %s143, %s144
      %p155 = scmp.eq.s32.totalorder %s19, 0
      %p156 = por %p154, %p155
      %p157 = scmp.ne.s32.totalorder %s143, %s144
      %p158 = scmp.eq.s32.totalorder %s20, 1
      %p159 = por %p157, %p158
      %p161 = scmp.ne.s32.totalorder %s144, %s160
      %p162 = scmp.eq.s32.totalorder %s20, 0
      %p163 = por %p161, %p162
      %s164 = ssub.s32 %s22, %s29
      %s165 = ssub.s32 %s21, %s33
      %s166 = sor.u32 %s164, %s165
      %p167 = scmp.eq.s32.totalorder %s166, 0
      %s169 = sadd.s32 %s168, 1
      %s170 = scalar_select %p167, %s168, %s169
      %p173 = pneg %p167
      %p174 = scmp.eq.s32.totalorder %s14, 1
      %p175 = por %p173, %p174
      %p176 = scmp.ne.s32.totalorder %s168, %s171
      %p177 = scmp.eq.s32.totalorder %s14, 0
      %p178 = por %p176, %p177
      %p179 = scmp.ne.s32.totalorder %s168, %s171
      %p180 = scmp.eq.s32.totalorder %s19, 1
      %p181 = por %p179, %p180
      %p182 = scmp.ne.s32.totalorder %s171, %s172
      %p183 = scmp.eq.s32.totalorder %s19, 0
      %p184 = por %p182, %p183
      %p185 = scmp.ne.s32.totalorder %s171, %s172
      %p186 = scmp.eq.s32.totalorder %s20, 1
      %p187 = por %p185, %p186
      %p189 = scmp.ne.s32.totalorder %s172, %s188
      %p190 = scmp.eq.s32.totalorder %s20, 0
      %p191 = por %p189, %p190
      %p192 = scmp.le.s32.totalorder 1, %s14
      %p193 = scmp.lt.s32.totalorder %s14, 3
      %p194 = pnand %p192, %p193
      %p195 = pneg %p194
      // Predicated region
      $region9: #{bottleneck_ir_forward.3} parent=5 // pred_check
        _
      $region10: #{bottleneck_ir_forward.3} parent=5 // pred_check_branch
        %197 = sbr.rel (%p194) target = $region12
      $region11: #{bottleneck_ir_forward.3} parent=5 // pred_region
        %s198 = ssub.s32 %s14, 1
        // Predicated region
        $region13: #{bottleneck_ir_forward.3} parent=11 // pred_check
          %p199 = pneg %p78
        $region14: #{bottleneck_ir_forward.3} parent=11 // pred_check_branch
          %201 = sbr.rel (%p199) target = $region16
        $region15: #{bottleneck_ir_forward.3} parent=11 // pred_region
          %p202 = scmp.lt.s32.totalorder %s23, 0
          %s203 = scalar_select %p202, %s23, 0
          %s204 = smul.addr %s203, 4
          %s205 = scalar_lea.vmem %s1, %s204
        $region16: #{bottleneck_ir_forward.3} parent=11 // pred_fallthru
          _
        // Predicated region
        $region17: #{bottleneck_ir_forward.3} parent=11 // pred_check
          %p206 = pneg %p104
        $region18: #{bottleneck_ir_forward.3} parent=11 // pred_check_branch
          %208 = sbr.rel (%p206) target = $region20
        $region19: #{bottleneck_ir_forward.3} parent=11 // pred_region
          %p209 = scmp.lt.s32.totalorder %s23, 0
          %s210 = scalar_select %p209, %s23, 0
          %s211 = scalar_lea.vmem %s2, %s210
        $region20: #{bottleneck_ir_forward.3} parent=11 // pred_fallthru
          _
        // Predicated region
        $region21: #{bottleneck_ir_forward.3} parent=11 // pred_check
          %p212 = pneg %p156
        $region22: #{bottleneck_ir_forward.3} parent=11 // pred_check_branch
          %214 = sbr.rel (%p212) target = $region24
        $region23: #{bottleneck_ir_forward.3} parent=11 // pred_region
          %p215 = scmp.lt.s32.totalorder %s23, 0
          %s216 = scalar_select %p215, %s23, 0
          %s217 = smul.addr %s216, 4
          %s218 = scalar_lea.vmem %s4, %s217
        $region24: #{bottleneck_ir_forward.3} parent=11 // pred_fallthru
          _
      $region12: #{bottleneck_ir_forward.3} parent=5 // pred_fallthru
        _
      %p219 = scmp.lt.s32.totalorder %s14, 2
      // Predicated region
      $region25: #{bottleneck_ir_forward.3} parent=5 // pred_check
        %p220 = pneg %p219
      $region26: #{bottleneck_ir_forward.3} parent=5 // pred_check_branch
        %222 = sbr.rel (%p220) target = $region28
      $region27: #{bottleneck_ir_forward.3} parent=5 // pred_region
        // Predicated region
        $region29: #{bottleneck_ir_forward.3} parent=27 // pred_check
          %p223 = pneg %p46
        $region30: #{bottleneck_ir_forward.3} parent=27 // pred_check_branch
          %225 = sbr.rel (%p223) target = $region32
        $region31: #{bottleneck_ir_forward.3} parent=27 // pred_region
          %p226 = scmp.lt.s32.totalorder %s22, 1
          %s227 = scalar_select %p226, %s22, 1
          %s228 = smul.addr %s227, 72
          %s229 = smul.addr %s228, 4
          %s230 = scalar_lea.vmem %s0, %s229
        $region32: #{bottleneck_ir_forward.3} parent=27 // pred_fallthru
          _
        // Predicated region
        $region33: #{bottleneck_ir_forward.3} parent=27 // pred_check
          %p231 = pneg %p124
        $region34: #{bottleneck_ir_forward.3} parent=27 // pred_check_branch
          %233 = sbr.rel (%p231) target = $region36
        $region35: #{bottleneck_ir_forward.3} parent=27 // pred_region
          %s234 = sand.u32 %s114, 1
          %s235 = sand.u32 %s114, 1
          %s236 = smul.addr %s235, 64
          %s237 = scalar_lea.vmem [#allocation2], %s236
          %s238 = smul.addr %s22, 16
          %s239 = smul.addr %s238, 8
          %s240 = scalar_lea.vmem %s3, %s239
          // Predicated region
          $region37: #{bottleneck_ir_forward.3} parent=35 // pred_check
            _
          $region38: #{bottleneck_ir_forward.3} parent=35 // pred_check_branch
            %242 = sbr.rel (0) target = $region40
          $region39: #{bottleneck_ir_forward.3} parent=35 // pred_region
            // Predicated region
            $region41: #{bottleneck_ir_forward.3} parent=39 // pred_check
              _
            $region42: #{bottleneck_ir_forward.3} parent=39 // pred_check_branch
              %244 = sbr.rel (0) target = $region44
            $region43: #{bottleneck_ir_forward.3} parent=39 // pred_region
              // Predicated region
              $region56: #{bottleneck_ir_forward.3} parent=43 // pred_check
                _
              $region57: #{bottleneck_ir_forward.3} parent=43 // pred_check_branch
                %274 = sbr.rel (0) target = $region59
              $region58: #{bottleneck_ir_forward.3} parent=43 // pred_region
                loop: start=0, step=1, limit=1
                $region60: #{bottleneck_ir_forward.3} parent=58 // loop_pre_header
                  _
                $region61: #{bottleneck_ir_forward.3} parent=58 // loop_header
                  %s276 = sphi 0, %s280
                  %p277 = scmp.ge.s32.totalorder %s276, 1
                  %s281 = sphi %s240, %s240
                  %s282 = sphi %s237, %s237
                $region62: #{bottleneck_ir_forward.3} parent=58 // loop_header_branch
                  %279 = sbr.rel (%p277) target = $region66
                $region63: #{bottleneck_ir_forward.3} parent=58 // loop_body
                  %v283 = vld [vmem:[%s281] sm:$0xff]
                  %284 = vst [vmem:[%s282] sm:$0xff] %v283
                  %v285 = vld [vmem:[%s281 + $0x10] sm:$0xff]
                  %286 = vst [vmem:[%s282 + $0x8] sm:$0xff] %v285
                  %v287 = vld [vmem:[%s281 + $0x20] sm:$0xff]
                  %288 = vst [vmem:[%s282 + $0x10] sm:$0xff] %v287
                  %v289 = vld [vmem:[%s281 + $0x30] sm:$0xff]
                  %290 = vst [vmem:[%s282 + $0x18] sm:$0xff] %v289
                  %v291 = vld [vmem:[%s281 + $0x40] sm:$0xff]
                  %292 = vst [vmem:[%s282 + $0x20] sm:$0xff] %v291
                  %v293 = vld [vmem:[%s281 + $0x50] sm:$0xff]
                  %294 = vst [vmem:[%s282 + $0x28] sm:$0xff] %v293
                  %v295 = vld [vmem:[%s281 + $0x60] sm:$0xff]
                  %296 = vst [vmem:[%s282 + $0x30] sm:$0xff] %v295
                  %v297 = vld [vmem:[%s281 + $0x70] sm:$0xff]
                  %298 = vst [vmem:[%s282 + $0x38] sm:$0xff] %v297
                $region64: #{bottleneck_ir_forward.3} parent=58 // loop_footer
                  %s280 = sadd.s32 1, %s276
                $region65: #{bottleneck_ir_forward.3} parent=58 // loop_footer_branch
                  %275 = sbr.rel target = $region61
                $region66: #{bottleneck_ir_forward.3} parent=58 // loop_exit
                  _
              $region59: #{bottleneck_ir_forward.3} parent=43 // pred_fallthru
                _
              // Predicated region
              $region67: #{bottleneck_ir_forward.3} parent=43 // pred_check
                _
              $region68: #{bottleneck_ir_forward.3} parent=43 // pred_check_branch
                %300 = sbr.rel target = $region70
              $region69: #{bottleneck_ir_forward.3} parent=43 // pred_region
                _
              $region70: #{bottleneck_ir_forward.3} parent=43 // pred_fallthru
                _
            $region44: #{bottleneck_ir_forward.3} parent=39 // pred_fallthru
              _
            // Predicated region
            $region45: #{bottleneck_ir_forward.3} parent=39 // pred_check
              _
            $region46: #{bottleneck_ir_forward.3} parent=39 // pred_check_branch
              %246 = sbr.rel target = $region48
            $region47: #{bottleneck_ir_forward.3} parent=39 // pred_region
              %s248 = ssub.s32 256, 1
              loop: start=0, step=1, limit=1
              $region49: #{bottleneck_ir_forward.3} parent=47 // loop_pre_header
                _
              $region50: #{bottleneck_ir_forward.3} parent=47 // loop_header
                %s250 = sphi 0, %s254
                %p251 = scmp.ge.s32.totalorder %s250, 1
                %s255 = sphi %s240, %s240
                %s256 = sphi %s237, %s237
              $region51: #{bottleneck_ir_forward.3} parent=47 // loop_header_branch
                %253 = sbr.rel (%p251) target = $region55
              $region52: #{bottleneck_ir_forward.3} parent=47 // loop_body
                %v257 = vld [vmem:[%s255] sm:%s248]
                %258 = vst [vmem:[%s256] sm:%s248] %v257
                %v259 = vld [vmem:[%s255 + $0x10] sm:%s248]
                %260 = vst [vmem:[%s256 + $0x8] sm:%s248] %v259
                %v261 = vld [vmem:[%s255 + $0x20] sm:%s248]
                %262 = vst [vmem:[%s256 + $0x10] sm:%s248] %v261
                %v263 = vld [vmem:[%s255 + $0x30] sm:%s248]
                %264 = vst [vmem:[%s256 + $0x18] sm:%s248] %v263
                %v265 = vld [vmem:[%s255 + $0x40] sm:%s248]
                %266 = vst [vmem:[%s256 + $0x20] sm:%s248] %v265
                %v267 = vld [vmem:[%s255 + $0x50] sm:%s248]
                %268 = vst [vmem:[%s256 + $0x28] sm:%s248] %v267
                %v269 = vld [vmem:[%s255 + $0x60] sm:%s248]
                %270 = vst [vmem:[%s256 + $0x30] sm:%s248] %v269
                %v271 = vld [vmem:[%s255 + $0x70] sm:%s248]
                %272 = vst [vmem:[%s256 + $0x38] sm:%s248] %v271
              $region53: #{bottleneck_ir_forward.3} parent=47 // loop_footer
                %s254 = sadd.s32 1, %s250
              $region54: #{bottleneck_ir_forward.3} parent=47 // loop_footer_branch
                %249 = sbr.rel target = $region50
              $region55: #{bottleneck_ir_forward.3} parent=47 // loop_exit
                _
            $region48: #{bottleneck_ir_forward.3} parent=39 // pred_fallthru
              _
          $region40: #{bottleneck_ir_forward.3} parent=35 // pred_fallthru
            _
          %301 = vnop
        $region36: #{bottleneck_ir_forward.3} parent=27 // pred_fallthru
          _
      $region28: #{bottleneck_ir_forward.3} parent=5 // pred_fallthru
        _
      %p302 = scmp.le.s32.totalorder 1, %s14
      %p303 = scmp.lt.s32.totalorder %s14, 3
      %p304 = pnand %p302, %p303
      %p305 = pneg %p304
      // Predicated region
      $region71: #{bottleneck_ir_forward.3} parent=5 // pred_check
        _
      $region72: #{bottleneck_ir_forward.3} parent=5 // pred_check_branch
        %307 = sbr.rel (%p304) target = $region74
      $region73: #{bottleneck_ir_forward.3} parent=5 // pred_region
        %s308 = ssub.s32 %s14, 1
        %s309 = sand.u32 %s117, 1
        %s310 = sand.u32 %s117, 1
        %s311 = smul.addr %s310, 64
        %s312 = scalar_lea.vmem [#allocation2], %s311
        // Predicated region
        $region75: #{bottleneck_ir_forward.3} parent=73 // pred_check
          %p313 = pneg %p130
        $region76: #{bottleneck_ir_forward.3} parent=73 // pred_check_branch
          %315 = sbr.rel (%p313) target = $region78
        $region77: #{bottleneck_ir_forward.3} parent=73 // pred_region
          _
        $region78: #{bottleneck_ir_forward.3} parent=73 // pred_fallthru
          _
        %p316 = scmp.lt.s32.totalorder %s24, 1
        %s317 = scalar_select %p316, %s24, 1
        %s318 = smul.addr %s317, 72
        %s319 = smul.addr %s318, 4
        %s320 = scalar_lea.vmem %s0, %s319
        %p321 = pneg %p52
        %p322 = pneg %p49
        %p323 = scmp.lt.s32.totalorder %s23, 0
        %s324 = scalar_select %p323, %s23, 0
        %s325 = smul.addr %s324, 4
        %s326 = scalar_lea.vmem %s1, %s325
        %p327 = pneg %p78
        %p328 = pneg %p75
        %p329 = scmp.lt.s32.totalorder %s23, 0
        %s330 = scalar_select %p329, %s23, 0
        %s331 = scalar_lea.vmem %s2, %s330
        %p332 = pneg %p104
        %p333 = pneg %p101
        %s334 = sand.u32 %s117, 1
        %s335 = sand.u32 %s117, 1
        %s336 = smul.addr %s335, 64
        %s337 = scalar_lea.vmem [#allocation2], %s336
        %p338 = pneg %p130
        %p339 = pneg %p127
        %p340 = scmp.lt.s32.totalorder %s23, 0
        %s341 = scalar_select %p340, %s23, 0
        %s342 = smul.addr %s341, 4
        %s343 = scalar_lea.vmem %s4, %s342
        %p344 = pneg %p156
        %p345 = pneg %p153
        %p346 = pneg %p184
        %p347 = pneg %p181
        %s348 = sand.u32 %s171, 1
        %s349 = scalar_lea.sflag [#allocation4], %s348
        %s350 = sand.u32 %s171, 1
        %s351 = smul.addr %s350, 64
        %s352 = scalar_lea.vmem [#allocation3], %s351
        %p353 = scmp.lt.s32.totalorder %s24, 1
        %s354 = scalar_select %p353, %s24, 1
        %s355 = smul.addr %s354, 72
        %s356 = smul.addr %s355, 4
        %s357 = scalar_lea.vmem %s0, %s356
        %p358 = scmp.lt.s32.totalorder %s23, 0
        %s359 = scalar_select %p358, %s23, 0
        %s360 = smul.addr %s359, 4
        %s361 = scalar_lea.vmem %s1, %s360
        %p362 = scmp.lt.s32.totalorder %s23, 0
        %s363 = scalar_select %p362, %s23, 0
        %s364 = scalar_lea.vmem %s2, %s363
        %p365 = scmp.lt.s32.totalorder %s23, 0
        %s366 = scalar_select %p365, %s23, 0
        %s367 = smul.addr %s366, 4
        %s368 = scalar_lea.vmem %s4, %s367
        %v370 = vld [vmem:[%s357] sm:$0xf]
        %v371 = vld [vmem:[%s357 + $0x20] sm:$0xf]
        %v372 = vld [vmem:[%s357 + $0x40] sm:$0xf]
        %v373 = vld [vmem:[%s357 + $0x60] sm:$0xf]
        %v374 = vld [vmem:[%s357 + $0x80] sm:$0xf]
        %v375 = vld [vmem:[%s357 + $0xa0] sm:$0xf]
        %v376 = vld [vmem:[%s357 + $0xc0] sm:$0xf]
        %v377 = vld [vmem:[%s357 + $0xe0] sm:$0xf]
        %v378 = vld [vmem:[%s361] sm:$0xf]
        %v379 = vld [vmem:[%s361 + $0x4] sm:$0xf]
        %v380 = vld [vmem:[%s361 + $0x8] sm:$0xf]
        %v381 = vld [vmem:[%s361 + $0xc] sm:$0xf]
        %v382 = vld [vmem:[%s361 + $0x10] sm:$0xf]
        %v383 = vld [vmem:[%s361 + $0x14] sm:$0xf]
        %v384 = vld [vmem:[%s361 + $0x18] sm:$0xf]
        %v385 = vld [vmem:[%s361 + $0x1c] sm:$0xf]
        %v386 = vld [vmem:[%s361 + $0x20] sm:$0xf]
        %v387 = vld [vmem:[%s361 + $0x24] sm:$0xf]
        %v388 = vld [vmem:[%s361 + $0x28] sm:$0xf]
        %v389 = vld [vmem:[%s361 + $0x2c] sm:$0xf]
        %v390 = vld [vmem:[%s361 + $0x30] sm:$0xf]
        %v391 = vld [vmem:[%s361 + $0x34] sm:$0xf]
        %v392 = vld [vmem:[%s361 + $0x38] sm:$0xf]
        %v393 = vld [vmem:[%s361 + $0x3c] sm:$0xf]
        %v394 = vld [vmem:[%s357 + $0x4] sm:$0xf]
        %v395 = vld [vmem:[%s357 + $0x24] sm:$0xf]
        %v396 = vld [vmem:[%s357 + $0x44] sm:$0xf]
        %v397 = vld [vmem:[%s357 + $0x64] sm:$0xf]
        %v398 = vld [vmem:[%s357 + $0x84] sm:$0xf]
        %v399 = vld [vmem:[%s357 + $0xa4] sm:$0xf]
        %v400 = vld [vmem:[%s357 + $0xc4] sm:$0xf]
        %v401 = vld [vmem:[%s357 + $0xe4] sm:$0xf]
        %s402 = scalar_lea.vmem %s361, 64
        %v403 = vld [vmem:[%s402] sm:$0xf]
        %v404 = vld [vmem:[%s402 + $0x4] sm:$0xf]
        %v405 = vld [vmem:[%s402 + $0x8] sm:$0xf]
        %v406 = vld [vmem:[%s402 + $0xc] sm:$0xf]
        %v407 = vld [vmem:[%s402 + $0x10] sm:$0xf]
        %v408 = vld [vmem:[%s402 + $0x14] sm:$0xf]
        %v409 = vld [vmem:[%s402 + $0x18] sm:$0xf]
        %v410 = vld [vmem:[%s402 + $0x1c] sm:$0xf]
        %v411 = vld [vmem:[%s402 + $0x20] sm:$0xf]
        %v412 = vld [vmem:[%s402 + $0x24] sm:$0xf]
        %v413 = vld [vmem:[%s402 + $0x28] sm:$0xf]
        %v414 = vld [vmem:[%s402 + $0x2c] sm:$0xf]
        %v415 = vld [vmem:[%s402 + $0x30] sm:$0xf]
        %v416 = vld [vmem:[%s402 + $0x34] sm:$0xf]
        %v417 = vld [vmem:[%s402 + $0x38] sm:$0xf]
        %v418 = vld [vmem:[%s402 + $0x3c] sm:$0xf]
        %v427 = vunpack.c.l.b16 %v394
        %v428 = vunpack.c.l.b16 %v395
        %v429 = vunpack.c.l.b16 %v396
        %v430 = vunpack.c.l.b16 %v397
        %v431 = vunpack.c.l.b16 %v398
        %v432 = vunpack.c.l.b16 %v399
        %v433 = vunpack.c.l.b16 %v400
        %v434 = vunpack.c.l.b16 %v401
        %v435 = vpack.c.b16 %v428, %v427
        %v436 = vpack.c.b16 %v430, %v429
        %v437 = vpack.c.b16 %v432, %v431
        %v438 = vpack.c.b16 %v434, %v433
        %v459 = vunpack.c.l.b16 %v403
        %v460 = vunpack.c.l.b16 %v404
        %v461 = vunpack.c.l.b16 %v405
        %v462 = vunpack.c.l.b16 %v406
        %v463 = vunpack.c.l.b16 %v407
        %v464 = vunpack.c.l.b16 %v408
        %v465 = vunpack.c.l.b16 %v409
        %v466 = vunpack.c.l.b16 %v410
        %v467 = vunpack.c.l.b16 %v411
        %v468 = vunpack.c.l.b16 %v412
        %v469 = vunpack.c.l.b16 %v413
        %v470 = vunpack.c.l.b16 %v414
        %v471 = vunpack.c.l.b16 %v415
        %v472 = vunpack.c.l.b16 %v416
        %v473 = vunpack.c.l.b16 %v417
        %v474 = vunpack.c.l.b16 %v418
        %v475 = vpack.c.b16 %v460, %v459
        %v476 = vpack.c.b16 %v462, %v461
        %v477 = vpack.c.b16 %v464, %v463
        %v478 = vpack.c.b16 %v466, %v465
        %v479 = vpack.c.b16 %v468, %v467
        %v480 = vpack.c.b16 %v470, %v469
        %v481 = vpack.c.b16 %v472, %v471
        %v482 = vpack.c.b16 %v474, %v473
        %491 = vmatprep.subr.bf16.mxu0 0
        %492 = vmatpush1.bf16.msra.mxu0 %v482
        %493 = vmatprep.subr.bf16.mxu0 0
        %494 = vmatpush1.bf16.msra.mxu0 %v481
        %495 = vmatprep.subr.bf16.mxu0 0
        %496 = vmatpush1.bf16.msra.mxu0 %v480
        %497 = vmatprep.subr.bf16.mxu0 0
        %498 = vmatpush1.bf16.msra.mxu0 %v479
        %499 = vmatprep.subr.bf16.mxu0 0
        %500 = vmatpush1.bf16.msra.mxu0 %v478
        %501 = vmatprep.subr.bf16.mxu0 0
        %502 = vmatpush1.bf16.msra.mxu0 %v477
        %503 = vmatprep.subr.bf16.mxu0 0
        %504 = vmatpush1.bf16.msra.mxu0 %v476
        %505 = vmatprep.subr.bf16.mxu0 0
        %506 = vmatpush1.bf16.msra.mxu0 %v475
        %507 = vmatprep.subr.bf16.mxu0 0
        %508 = vmatpush2.bf16.msra.mxu0 0
        %509 = vmatprep.subr.bf16.mxu0 0
        %510 = vmatpush2.bf16.msra.mxu0 0
        %511 = vmatprep.subr.bf16.mxu0 0
        %512 = vmatpush2.bf16.msra.mxu0 0
        %513 = vmatprep.subr.bf16.mxu0 0
        %514 = vmatpush2.bf16.msra.mxu0 0
        %515 = vmatprep.subr.bf16.mxu0 0
        %516 = vmatpush2.bf16.msra.mxu0 0
        %517 = vmatprep.subr.bf16.mxu0 0
        %518 = vmatpush2.bf16.msra.mxu0 0
        %519 = vmatprep.subr.bf16.mxu0 0
        %520 = vmatpush2.bf16.msra.mxu0 0
        %521 = vmatprep.subr.bf16.mxu0 0
        %522 = vmatpush2.bf16.msra.mxu0 0
        %523 = vmatprep.mubr.bf16.mxu0 0
        %524 = vmatmul.mubr.bf16.gmra.mxu0 %v435
        %v525 = vpop.f32.mrf.mxu0
        %v526 = vadd.f32 0.0, %v525
        %v527 = vpop.f32.mrf.mxu0
        %v528 = vpop.f32.mrf.mxu0
        %v529 = vadd.f32 0.0, %v528
        %v530 = vpop.f32.mrf.mxu0
        %531 = vmatprep.mubr.bf16.mxu0 0
        %532 = vmatmul.mubr.bf16.gmra.mxu0 %v436
        %v533 = vpop.f32.mrf.mxu0
        %v534 = vadd.f32 0.0, %v533
        %v535 = vpop.f32.mrf.mxu0
        %v536 = vpop.f32.mrf.mxu0
        %v537 = vadd.f32 0.0, %v536
        %v538 = vpop.f32.mrf.mxu0
        %539 = vmatprep.mubr.bf16.mxu0 0
        %540 = vmatmul.mubr.bf16.gmra.mxu0 %v437
        %v541 = vpop.f32.mrf.mxu0
        %v542 = vadd.f32 0.0, %v541
        %v543 = vpop.f32.mrf.mxu0
        %v544 = vpop.f32.mrf.mxu0
        %v545 = vadd.f32 0.0, %v544
        %v546 = vpop.f32.mrf.mxu0
        %547 = vmatprep.mubr.bf16.mxu0 0
        %548 = vmatmul.mubr.bf16.gmra.mxu0 %v438
        %v549 = vpop.f32.mrf.mxu0
        %v550 = vadd.f32 0.0, %v549
        %v551 = vpop.f32.mrf.mxu0
        %v552 = vpop.f32.mrf.mxu0
        %v553 = vadd.f32 0.0, %v552
        %v554 = vpop.f32.mrf.mxu0
        %555 = vdwg.mxu0
        %v564 = vunpack.c.l.b16 %v370
        %v565 = vunpack.c.l.b16 %v371
        %v566 = vunpack.c.l.b16 %v372
        %v567 = vunpack.c.l.b16 %v373
        %v568 = vunpack.c.l.b16 %v374
        %v569 = vunpack.c.l.b16 %v375
        %v570 = vunpack.c.l.b16 %v376
        %v571 = vunpack.c.l.b16 %v377
        %v572 = vpack.c.b16 %v565, %v564
        %v573 = vpack.c.b16 %v567, %v566
        %v574 = vpack.c.b16 %v569, %v568
        %v575 = vpack.c.b16 %v571, %v570
        %v596 = vunpack.c.l.b16 %v378
        %v597 = vunpack.c.l.b16 %v379
        %v598 = vunpack.c.l.b16 %v380
        %v599 = vunpack.c.l.b16 %v381
        %v600 = vunpack.c.l.b16 %v382
        %v601 = vunpack.c.l.b16 %v383
        %v602 = vunpack.c.l.b16 %v384
        %v603 = vunpack.c.l.b16 %v385
        %v604 = vunpack.c.l.b16 %v386
        %v605 = vunpack.c.l.b16 %v387
        %v606 = vunpack.c.l.b16 %v388
        %v607 = vunpack.c.l.b16 %v389
        %v608 = vunpack.c.l.b16 %v390
        %v609 = vunpack.c.l.b16 %v391
        %v610 = vunpack.c.l.b16 %v392
        %v611 = vunpack.c.l.b16 %v393
        %v612 = vpack.c.b16 %v597, %v596
        %v613 = vpack.c.b16 %v599, %v598
        %v614 = vpack.c.b16 %v601, %v600
        %v615 = vpack.c.b16 %v603, %v602
        %v616 = vpack.c.b16 %v605, %v604
        %v617 = vpack.c.b16 %v607, %v606
        %v618 = vpack.c.b16 %v609, %v608
        %v619 = vpack.c.b16 %v611, %v610
        %628 = vmatprep.subr.bf16.mxu0 0
        %629 = vmatpush1.bf16.msra.mxu0 %v619
        %630 = vmatprep.subr.bf16.mxu0 0
        %631 = vmatpush1.bf16.msra.mxu0 %v618
        %632 = vmatprep.subr.bf16.mxu0 0
        %633 = vmatpush1.bf16.msra.mxu0 %v617
        %634 = vmatprep.subr.bf16.mxu0 0
        %635 = vmatpush1.bf16.msra.mxu0 %v616
        %636 = vmatprep.subr.bf16.mxu0 0
        %637 = vmatpush1.bf16.msra.mxu0 %v615
        %638 = vmatprep.subr.bf16.mxu0 0
        %639 = vmatpush1.bf16.msra.mxu0 %v614
        %640 = vmatprep.subr.bf16.mxu0 0
        %641 = vmatpush1.bf16.msra.mxu0 %v613
        %642 = vmatprep.subr.bf16.mxu0 0
        %643 = vmatpush1.bf16.msra.mxu0 %v612
        %644 = vmatprep.subr.bf16.mxu0 0
        %645 = vmatpush2.bf16.msra.mxu0 0
        %646 = vmatprep.subr.bf16.mxu0 0
        %647 = vmatpush2.bf16.msra.mxu0 0
        %648 = vmatprep.subr.bf16.mxu0 0
        %649 = vmatpush2.bf16.msra.mxu0 0
        %650 = vmatprep.subr.bf16.mxu0 0
        %651 = vmatpush2.bf16.msra.mxu0 0
        %652 = vmatprep.subr.bf16.mxu0 0
        %653 = vmatpush2.bf16.msra.mxu0 0
        %654 = vmatprep.subr.bf16.mxu0 0
        %655 = vmatpush2.bf16.msra.mxu0 0
        %656 = vmatprep.subr.bf16.mxu0 0
        %657 = vmatpush2.bf16.msra.mxu0 0
        %658 = vmatprep.subr.bf16.mxu0 0
        %659 = vmatpush2.bf16.msra.mxu0 0
        %660 = vmatprep.mubr.bf16.mxu0 0
        %661 = vmatmul.mubr.bf16.gmra.mxu0 %v572
        %v662 = vpop.f32.mrf.mxu0
        %v663 = vadd.f32 %v526, %v662
        %v664 = vpop.f32.mrf.mxu0
        %v665 = vpop.f32.mrf.mxu0
        %v666 = vadd.f32 %v529, %v665
        %v667 = vpop.f32.mrf.mxu0
        %668 = vmatprep.mubr.bf16.mxu0 0
        %669 = vmatmul.mubr.bf16.gmra.mxu0 %v573
        %v670 = vpop.f32.mrf.mxu0
        %v671 = vadd.f32 %v534, %v670
        %v672 = vpop.f32.mrf.mxu0
        %v673 = vpop.f32.mrf.mxu0
        %v674 = vadd.f32 %v537, %v673
        %v675 = vpop.f32.mrf.mxu0
        %676 = vmatprep.mubr.bf16.mxu0 0
        %677 = vmatmul.mubr.bf16.gmra.mxu0 %v574
        %v678 = vpop.f32.mrf.mxu0
        %v679 = vadd.f32 %v542, %v678
        %v680 = vpop.f32.mrf.mxu0
        %v681 = vpop.f32.mrf.mxu0
        %v682 = vadd.f32 %v545, %v681
        %v683 = vpop.f32.mrf.mxu0
        %684 = vmatprep.mubr.bf16.mxu0 0
        %685 = vmatmul.mubr.bf16.gmra.mxu0 %v575
        %v686 = vpop.f32.mrf.mxu0
        %v687 = vadd.f32 %v550, %v686
        %v688 = vpop.f32.mrf.mxu0
        %v689 = vpop.f32.mrf.mxu0
        %v690 = vadd.f32 %v553, %v689
        %v691 = vpop.f32.mrf.mxu0
        %692 = vdwg.mxu0
        %v693 = vld [vmem:[%s357] sm:$0xf]
        %v694 = vld [vmem:[%s357 + $0x8] sm:$0x1]
        %v695 = vld [vmem:[%s357 + $0x20] sm:$0xf]
        %v696 = vld [vmem:[%s357 + $0x28] sm:$0x1]
        %v697 = vld [vmem:[%s357 + $0x40] sm:$0xf]
        %v698 = vld [vmem:[%s357 + $0x48] sm:$0x1]
        %v699 = vld [vmem:[%s357 + $0x60] sm:$0xf]
        %v700 = vld [vmem:[%s357 + $0x68] sm:$0x1]
        %v701 = vld [vmem:[%s357 + $0x80] sm:$0xf]
        %v702 = vld [vmem:[%s357 + $0x88] sm:$0x1]
        %v703 = vld [vmem:[%s357 + $0xa0] sm:$0xf]
        %v704 = vld [vmem:[%s357 + $0xa8] sm:$0x1]
        %v705 = vld [vmem:[%s357 + $0xc0] sm:$0xf]
        %v706 = vld [vmem:[%s357 + $0xc8] sm:$0x1]
        %v707 = vld [vmem:[%s357 + $0xe0] sm:$0xf]
        %v708 = vld [vmem:[%s357 + $0xe8] sm:$0x1]
        %vm709 = vsmask.f32 3328
        %vm710 = vsmask.f32 7440
        %vm711 = vmor %vm709, %vm710
        %v713 = vshrl.u32 %v693, 16
        %v715 = vrot.slane %v713, 4
        %v716 = vshll.u32 %v693, 16
        %v718 = vrot.slane %v716, 5
        %v719 = vor.u32 %v715, %v718
        %v720 = vrot.slane %v719, 4
        %v722 = vshll.u32 %v694, 16
        %v724 = vrot.slane %v722, 5
        %v725 = vsel %vm711, %v720, %v724
        %v727 = vshrl.u32 %v695, 16
        %v729 = vrot.slane %v727, 4
        %v730 = vshll.u32 %v695, 16
        %v732 = vrot.slane %v730, 5
        %v733 = vor.u32 %v729, %v732
        %v734 = vrot.slane %v733, 4
        %v736 = vshll.u32 %v696, 16
        %v738 = vrot.slane %v736, 5
        %v739 = vsel %vm711, %v734, %v738
        %v741 = vshrl.u32 %v697, 16
        %v743 = vrot.slane %v741, 4
        %v744 = vshll.u32 %v697, 16
        %v746 = vrot.slane %v744, 5
        %v747 = vor.u32 %v743, %v746
        %v748 = vrot.slane %v747, 4
        %v750 = vshll.u32 %v698, 16
        %v752 = vrot.slane %v750, 5
        %v753 = vsel %vm711, %v748, %v752
        %v755 = vshrl.u32 %v699, 16
        %v757 = vrot.slane %v755, 4
        %v758 = vshll.u32 %v699, 16
        %v760 = vrot.slane %v758, 5
        %v761 = vor.u32 %v757, %v760
        %v762 = vrot.slane %v761, 4
        %v764 = vshll.u32 %v700, 16
        %v766 = vrot.slane %v764, 5
        %v767 = vsel %vm711, %v762, %v766
        %v769 = vshrl.u32 %v701, 16
        %v771 = vrot.slane %v769, 4
        %v772 = vshll.u32 %v701, 16
        %v774 = vrot.slane %v772, 5
        %v775 = vor.u32 %v771, %v774
        %v776 = vrot.slane %v775, 4
        %v778 = vshll.u32 %v702, 16
        %v780 = vrot.slane %v778, 5
        %v781 = vsel %vm711, %v776, %v780
        %v783 = vshrl.u32 %v703, 16
        %v785 = vrot.slane %v783, 4
        %v786 = vshll.u32 %v703, 16
        %v788 = vrot.slane %v786, 5
        %v789 = vor.u32 %v785, %v788
        %v790 = vrot.slane %v789, 4
        %v792 = vshll.u32 %v704, 16
        %v794 = vrot.slane %v792, 5
        %v795 = vsel %vm711, %v790, %v794
        %v797 = vshrl.u32 %v705, 16
        %v799 = vrot.slane %v797, 4
        %v800 = vshll.u32 %v705, 16
        %v802 = vrot.slane %v800, 5
        %v803 = vor.u32 %v799, %v802
        %v804 = vrot.slane %v803, 4
        %v806 = vshll.u32 %v706, 16
        %v808 = vrot.slane %v806, 5
        %v809 = vsel %vm711, %v804, %v808
        %v811 = vshrl.u32 %v707, 16
        %v813 = vrot.slane %v811, 4
        %v814 = vshll.u32 %v707, 16
        %v816 = vrot.slane %v814, 5
        %v817 = vor.u32 %v813, %v816
        %v818 = vrot.slane %v817, 4
        %v820 = vshll.u32 %v708, 16
        %v822 = vrot.slane %v820, 5
        %v823 = vsel %vm711, %v818, %v822
        %s824 = scalar_lea.vmem %s361, 128
        %v825 = vld [vmem:[%s824] sm:$0xf]
        %v826 = vld [vmem:[%s824 + $0x4] sm:$0xf]
        %v827 = vld [vmem:[%s824 + $0x8] sm:$0xf]
        %v828 = vld [vmem:[%s824 + $0xc] sm:$0xf]
        %v829 = vld [vmem:[%s824 + $0x10] sm:$0xf]
        %v830 = vld [vmem:[%s824 + $0x14] sm:$0xf]
        %v831 = vld [vmem:[%s824 + $0x18] sm:$0xf]
        %v832 = vld [vmem:[%s824 + $0x1c] sm:$0xf]
        %v833 = vld [vmem:[%s824 + $0x20] sm:$0xf]
        %v834 = vld [vmem:[%s824 + $0x24] sm:$0xf]
        %v835 = vld [vmem:[%s824 + $0x28] sm:$0xf]
        %v836 = vld [vmem:[%s824 + $0x2c] sm:$0xf]
        %v837 = vld [vmem:[%s824 + $0x30] sm:$0xf]
        %v838 = vld [vmem:[%s824 + $0x34] sm:$0xf]
        %v839 = vld [vmem:[%s824 + $0x38] sm:$0xf]
        %v840 = vld [vmem:[%s824 + $0x3c] sm:$0xf]
        %v841 = vunpack.c.l.b16 %v725
        %v842 = vunpack.c.l.b16 %v739
        %v843 = vunpack.c.l.b16 %v753
        %v844 = vunpack.c.l.b16 %v767
        %v845 = vunpack.c.l.b16 %v781
        %v846 = vunpack.c.l.b16 %v795
        %v847 = vunpack.c.l.b16 %v809
        %v848 = vunpack.c.l.b16 %v823
        %v849 = vpack.c.b16 %v842, %v841
        %v850 = vpack.c.b16 %v844, %v843
        %v851 = vpack.c.b16 %v846, %v845
        %v852 = vpack.c.b16 %v848, %v847
        %v873 = vunpack.c.l.b16 %v825
        %v874 = vunpack.c.l.b16 %v826
        %v875 = vunpack.c.l.b16 %v827
        %v876 = vunpack.c.l.b16 %v828
        %v877 = vunpack.c.l.b16 %v829
        %v878 = vunpack.c.l.b16 %v830
        %v879 = vunpack.c.l.b16 %v831
        %v880 = vunpack.c.l.b16 %v832
        %v881 = vunpack.c.l.b16 %v833
        %v882 = vunpack.c.l.b16 %v834
        %v883 = vunpack.c.l.b16 %v835
        %v884 = vunpack.c.l.b16 %v836
        %v885 = vunpack.c.l.b16 %v837
        %v886 = vunpack.c.l.b16 %v838
        %v887 = vunpack.c.l.b16 %v839
        %v888 = vunpack.c.l.b16 %v840
        %v889 = vpack.c.b16 %v874, %v873
        %v890 = vpack.c.b16 %v876, %v875
        %v891 = vpack.c.b16 %v878, %v877
        %v892 = vpack.c.b16 %v880, %v879
        %v893 = vpack.c.b16 %v882, %v881
        %v894 = vpack.c.b16 %v884, %v883
        %v895 = vpack.c.b16 %v886, %v885
        %v896 = vpack.c.b16 %v888, %v887
        %905 = vmatprep.subr.bf16.mxu0 0
        %906 = vmatpush1.bf16.msra.mxu0 %v896
        %907 = vmatprep.subr.bf16.mxu0 0
        %908 = vmatpush1.bf16.msra.mxu0 %v895
        %909 = vmatprep.subr.bf16.mxu0 0
        %910 = vmatpush1.bf16.msra.mxu0 %v894
        %911 = vmatprep.subr.bf16.mxu0 0
        %912 = vmatpush1.bf16.msra.mxu0 %v893
        %913 = vmatprep.subr.bf16.mxu0 0
        %914 = vmatpush1.bf16.msra.mxu0 %v892
        %915 = vmatprep.subr.bf16.mxu0 0
        %916 = vmatpush1.bf16.msra.mxu0 %v891
        %917 = vmatprep.subr.bf16.mxu0 0
        %918 = vmatpush1.bf16.msra.mxu0 %v890
        %919 = vmatprep.subr.bf16.mxu0 0
        %920 = vmatpush1.bf16.msra.mxu0 %v889
        %921 = vmatprep.subr.bf16.mxu0 0
        %922 = vmatpush2.bf16.msra.mxu0 0
        %923 = vmatprep.subr.bf16.mxu0 0
        %924 = vmatpush2.bf16.msra.mxu0 0
        %925 = vmatprep.subr.bf16.mxu0 0
        %926 = vmatpush2.bf16.msra.mxu0 0
        %927 = vmatprep.subr.bf16.mxu0 0
        %928 = vmatpush2.bf16.msra.mxu0 0
        %929 = vmatprep.subr.bf16.mxu0 0
        %930 = vmatpush2.bf16.msra.mxu0 0
        %931 = vmatprep.subr.bf16.mxu0 0
        %932 = vmatpush2.bf16.msra.mxu0 0
        %933 = vmatprep.subr.bf16.mxu0 0
        %934 = vmatpush2.bf16.msra.mxu0 0
        %935 = vmatprep.subr.bf16.mxu0 0
        %936 = vmatpush2.bf16.msra.mxu0 0
        %937 = vmatprep.mubr.bf16.mxu0 0
        %938 = vmatmul.mubr.bf16.gmra.mxu0 %v849
        %v939 = vpop.f32.mrf.mxu0
        %v940 = vadd.f32 0.0, %v939
        %v941 = vpop.f32.mrf.mxu0
        %v942 = vpop.f32.mrf.mxu0
        %v943 = vadd.f32 0.0, %v942
        %v944 = vpop.f32.mrf.mxu0
        %945 = vmatprep.mubr.bf16.mxu0 0
        %946 = vmatmul.mubr.bf16.gmra.mxu0 %v850
        %v947 = vpop.f32.mrf.mxu0
        %v948 = vadd.f32 0.0, %v947
        %v949 = vpop.f32.mrf.mxu0
        %v950 = vpop.f32.mrf.mxu0
        %v951 = vadd.f32 0.0, %v950
        %v952 = vpop.f32.mrf.mxu0
        %953 = vmatprep.mubr.bf16.mxu0 0
        %954 = vmatmul.mubr.bf16.gmra.mxu0 %v851
        %v955 = vpop.f32.mrf.mxu0
        %v956 = vadd.f32 0.0, %v955
        %v957 = vpop.f32.mrf.mxu0
        %v958 = vpop.f32.mrf.mxu0
        %v959 = vadd.f32 0.0, %v958
        %v960 = vpop.f32.mrf.mxu0
        %961 = vmatprep.mubr.bf16.mxu0 0
        %962 = vmatmul.mubr.bf16.gmra.mxu0 %v852
        %v963 = vpop.f32.mrf.mxu0
        %v964 = vadd.f32 0.0, %v963
        %v965 = vpop.f32.mrf.mxu0
        %v966 = vpop.f32.mrf.mxu0
        %v967 = vadd.f32 0.0, %v966
        %v968 = vpop.f32.mrf.mxu0
        %969 = vdwg.mxu0
        %v970 = vadd.f32 %v663, %v940
        %v971 = vadd.f32 %v666, %v943
        %v972 = vadd.f32 %v671, %v948
        %v973 = vadd.f32 %v674, %v951
        %v974 = vadd.f32 %v679, %v956
        %v975 = vadd.f32 %v682, %v959
        %v976 = vadd.f32 %v687, %v964
        %v977 = vadd.f32 %v690, %v967
        %s978 = scalar_lea.vmem %s357, 16
        %v979 = vld [vmem:[%s978] sm:$0xf]
        %v980 = vld [vmem:[%s978 + $0x20] sm:$0xf]
        %v981 = vld [vmem:[%s978 + $0x40] sm:$0xf]
        %v982 = vld [vmem:[%s978 + $0x60] sm:$0xf]
        %v983 = vld [vmem:[%s978 + $0x80] sm:$0xf]
        %v984 = vld [vmem:[%s978 + $0xa0] sm:$0xf]
        %v985 = vld [vmem:[%s978 + $0xc0] sm:$0xf]
        %v986 = vld [vmem:[%s978 + $0xe0] sm:$0xf]
        %s987 = scalar_lea.vmem %s361, 192
        %v988 = vld [vmem:[%s987] sm:$0xf]
        %v989 = vld [vmem:[%s987 + $0x4] sm:$0xf]
        %v990 = vld [vmem:[%s987 + $0x8] sm:$0xf]
        %v991 = vld [vmem:[%s987 + $0xc] sm:$0xf]
        %v992 = vld [vmem:[%s987 + $0x10] sm:$0xf]
        %v993 = vld [vmem:[%s987 + $0x14] sm:$0xf]
        %v994 = vld [vmem:[%s987 + $0x18] sm:$0xf]
        %v995 = vld [vmem:[%s987 + $0x1c] sm:$0xf]
        %v996 = vld [vmem:[%s987 + $0x20] sm:$0xf]
        %v997 = vld [vmem:[%s987 + $0x24] sm:$0xf]
        %v998 = vld [vmem:[%s987 + $0x28] sm:$0xf]
        %v999 = vld [vmem:[%s987 + $0x2c] sm:$0xf]
        %v1000 = vld [vmem:[%s987 + $0x30] sm:$0xf]
        %v1001 = vld [vmem:[%s987 + $0x34] sm:$0xf]
        %v1002 = vld [vmem:[%s987 + $0x38] sm:$0xf]
        %v1003 = vld [vmem:[%s987 + $0x3c] sm:$0xf]
        %v1012 = vunpack.c.l.b16 %v979
        %v1013 = vunpack.c.l.b16 %v980
        %v1014 = vunpack.c.l.b16 %v981
        %v1015 = vunpack.c.l.b16 %v982
        %v1016 = vunpack.c.l.b16 %v983
        %v1017 = vunpack.c.l.b16 %v984
        %v1018 = vunpack.c.l.b16 %v985
        %v1019 = vunpack.c.l.b16 %v986
        %v1020 = vpack.c.b16 %v1013, %v1012
        %v1021 = vpack.c.b16 %v1015, %v1014
        %v1022 = vpack.c.b16 %v1017, %v1016
        %v1023 = vpack.c.b16 %v1019, %v1018
        %v1044 = vunpack.c.l.b16 %v988
        %v1045 = vunpack.c.l.b16 %v989
        %v1046 = vunpack.c.l.b16 %v990
        %v1047 = vunpack.c.l.b16 %v991
        %v1048 = vunpack.c.l.b16 %v992
        %v1049 = vunpack.c.l.b16 %v993
        %v1050 = vunpack.c.l.b16 %v994
        %v1051 = vunpack.c.l.b16 %v995
        %v1052 = vunpack.c.l.b16 %v996
        %v1053 = vunpack.c.l.b16 %v997
        %v1054 = vunpack.c.l.b16 %v998
        %v1055 = vunpack.c.l.b16 %v999
        %v1056 = vunpack.c.l.b16 %v1000
        %v1057 = vunpack.c.l.b16 %v1001
        %v1058 = vunpack.c.l.b16 %v1002
        %v1059 = vunpack.c.l.b16 %v1003
        %v1060 = vpack.c.b16 %v1045, %v1044
        %v1061 = vpack.c.b16 %v1047, %v1046
        %v1062 = vpack.c.b16 %v1049, %v1048
        %v1063 = vpack.c.b16 %v1051, %v1050
        %v1064 = vpack.c.b16 %v1053, %v1052
        %v1065 = vpack.c.b16 %v1055, %v1054
        %v1066 = vpack.c.b16 %v1057, %v1056
        %v1067 = vpack.c.b16 %v1059, %v1058
        %1076 = vmatprep.subr.bf16.mxu0 0
        %1077 = vmatpush1.bf16.msra.mxu0 %v1067
        %1078 = vmatprep.subr.bf16.mxu0 0
        %1079 = vmatpush1.bf16.msra.mxu0 %v1066
        %1080 = vmatprep.subr.bf16.mxu0 0
        %1081 = vmatpush1.bf16.msra.mxu0 %v1065
        %1082 = vmatprep.subr.bf16.mxu0 0
        %1083 = vmatpush1.bf16.msra.mxu0 %v1064
        %1084 = vmatprep.subr.bf16.mxu0 0
        %1085 = vmatpush1.bf16.msra.mxu0 %v1063
        %1086 = vmatprep.subr.bf16.mxu0 0
        %1087 = vmatpush1.bf16.msra.mxu0 %v1062
        %1088 = vmatprep.subr.bf16.mxu0 0
        %1089 = vmatpush1.bf16.msra.mxu0 %v1061
        %1090 = vmatprep.subr.bf16.mxu0 0
        %1091 = vmatpush1.bf16.msra.mxu0 %v1060
        %1092 = vmatprep.subr.bf16.mxu0 0
        %1093 = vmatpush2.bf16.msra.mxu0 0
        %1094 = vmatprep.subr.bf16.mxu0 0
        %1095 = vmatpush2.bf16.msra.mxu0 0
        %1096 = vmatprep.subr.bf16.mxu0 0
        %1097 = vmatpush2.bf16.msra.mxu0 0
        %1098 = vmatprep.subr.bf16.mxu0 0
        %1099 = vmatpush2.bf16.msra.mxu0 0
        %1100 = vmatprep.subr.bf16.mxu0 0
        %1101 = vmatpush2.bf16.msra.mxu0 0
        %1102 = vmatprep.subr.bf16.mxu0 0
        %1103 = vmatpush2.bf16.msra.mxu0 0
        %1104 = vmatprep.subr.bf16.mxu0 0
        %1105 = vmatpush2.bf16.msra.mxu0 0
        %1106 = vmatprep.subr.bf16.mxu0 0
        %1107 = vmatpush2.bf16.msra.mxu0 0
        %1108 = vmatprep.mubr.bf16.mxu0 0
        %1109 = vmatmul.mubr.bf16.gmra.mxu0 %v1020
        %v1110 = vpop.f32.mrf.mxu0
        %v1111 = vadd.f32 0.0, %v1110
        %v1112 = vpop.f32.mrf.mxu0
        %v1113 = vpop.f32.mrf.mxu0
        %v1114 = vadd.f32 0.0, %v1113
        %v1115 = vpop.f32.mrf.mxu0
        %1116 = vmatprep.mubr.bf16.mxu0 0
        %1117 = vmatmul.mubr.bf16.gmra.mxu0 %v1021
        %v1118 = vpop.f32.mrf.mxu0
        %v1119 = vadd.f32 0.0, %v1118
        %v1120 = vpop.f32.mrf.mxu0
        %v1121 = vpop.f32.mrf.mxu0
        %v1122 = vadd.f32 0.0, %v1121
        %v1123 = vpop.f32.mrf.mxu0
        %1124 = vmatprep.mubr.bf16.mxu0 0
        %1125 = vmatmul.mubr.bf16.gmra.mxu0 %v1022
        %v1126 = vpop.f32.mrf.mxu0
        %v1127 = vadd.f32 0.0, %v1126
        %v1128 = vpop.f32.mrf.mxu0
        %v1129 = vpop.f32.mrf.mxu0
        %v1130 = vadd.f32 0.0, %v1129
        %v1131 = vpop.f32.mrf.mxu0
        %1132 = vmatprep.mubr.bf16.mxu0 0
        %1133 = vmatmul.mubr.bf16.gmra.mxu0 %v1023
        %v1134 = vpop.f32.mrf.mxu0
        %v1135 = vadd.f32 0.0, %v1134
        %v1136 = vpop.f32.mrf.mxu0
        %v1137 = vpop.f32.mrf.mxu0
        %v1138 = vadd.f32 0.0, %v1137
        %v1139 = vpop.f32.mrf.mxu0
        %1140 = vdwg.mxu0
        %v1141 = vadd.f32 %v970, %v1111
        %v1142 = vadd.f32 %v971, %v1114
        %v1143 = vadd.f32 %v972, %v1119
        %v1144 = vadd.f32 %v973, %v1122
        %v1145 = vadd.f32 %v974, %v1127
        %v1146 = vadd.f32 %v975, %v1130
        %v1147 = vadd.f32 %v976, %v1135
        %v1148 = vadd.f32 %v977, %v1138
        %v1149 = vld [vmem:[%s978 + $0x4] sm:$0xf]
        %v1150 = vld [vmem:[%s978 + $0x24] sm:$0xf]
        %v1151 = vld [vmem:[%s978 + $0x44] sm:$0xf]
        %v1152 = vld [vmem:[%s978 + $0x64] sm:$0xf]
        %v1153 = vld [vmem:[%s978 + $0x84] sm:$0xf]
        %v1154 = vld [vmem:[%s978 + $0xa4] sm:$0xf]
        %v1155 = vld [vmem:[%s978 + $0xc4] sm:$0xf]
        %v1156 = vld [vmem:[%s978 + $0xe4] sm:$0xf]
        %s1157 = scalar_lea.vmem %s361, 256
        %v1158 = vld [vmem:[%s1157] sm:$0xf]
        %v1159 = vld [vmem:[%s1157 + $0x4] sm:$0xf]
        %v1160 = vld [vmem:[%s1157 + $0x8] sm:$0xf]
        %v1161 = vld [vmem:[%s1157 + $0xc] sm:$0xf]
        %v1162 = vld [vmem:[%s1157 + $0x10] sm:$0xf]
        %v1163 = vld [vmem:[%s1157 + $0x14] sm:$0xf]
        %v1164 = vld [vmem:[%s1157 + $0x18] sm:$0xf]
        %v1165 = vld [vmem:[%s1157 + $0x1c] sm:$0xf]
        %v1166 = vld [vmem:[%s1157 + $0x20] sm:$0xf]
        %v1167 = vld [vmem:[%s1157 + $0x24] sm:$0xf]
        %v1168 = vld [vmem:[%s1157 + $0x28] sm:$0xf]
        %v1169 = vld [vmem:[%s1157 + $0x2c] sm:$0xf]
        %v1170 = vld [vmem:[%s1157 + $0x30] sm:$0xf]
        %v1171 = vld [vmem:[%s1157 + $0x34] sm:$0xf]
        %v1172 = vld [vmem:[%s1157 + $0x38] sm:$0xf]
        %v1173 = vld [vmem:[%s1157 + $0x3c] sm:$0xf]
        %v1182 = vunpack.c.l.b16 %v1149
        %v1183 = vunpack.c.l.b16 %v1150
        %v1184 = vunpack.c.l.b16 %v1151
        %v1185 = vunpack.c.l.b16 %v1152
        %v1186 = vunpack.c.l.b16 %v1153
        %v1187 = vunpack.c.l.b16 %v1154
        %v1188 = vunpack.c.l.b16 %v1155
        %v1189 = vunpack.c.l.b16 %v1156
        %v1190 = vpack.c.b16 %v1183, %v1182
        %v1191 = vpack.c.b16 %v1185, %v1184
        %v1192 = vpack.c.b16 %v1187, %v1186
        %v1193 = vpack.c.b16 %v1189, %v1188
        %v1214 = vunpack.c.l.b16 %v1158
        %v1215 = vunpack.c.l.b16 %v1159
        %v1216 = vunpack.c.l.b16 %v1160
        %v1217 = vunpack.c.l.b16 %v1161
        %v1218 = vunpack.c.l.b16 %v1162
        %v1219 = vunpack.c.l.b16 %v1163
        %v1220 = vunpack.c.l.b16 %v1164
        %v1221 = vunpack.c.l.b16 %v1165
        %v1222 = vunpack.c.l.b16 %v1166
        %v1223 = vunpack.c.l.b16 %v1167
        %v1224 = vunpack.c.l.b16 %v1168
        %v1225 = vunpack.c.l.b16 %v1169
        %v1226 = vunpack.c.l.b16 %v1170
        %v1227 = vunpack.c.l.b16 %v1171
        %v1228 = vunpack.c.l.b16 %v1172
        %v1229 = vunpack.c.l.b16 %v1173
        %v1230 = vpack.c.b16 %v1215, %v1214
        %v1231 = vpack.c.b16 %v1217, %v1216
        %v1232 = vpack.c.b16 %v1219, %v1218
        %v1233 = vpack.c.b16 %v1221, %v1220
        %v1234 = vpack.c.b16 %v1223, %v1222
        %v1235 = vpack.c.b16 %v1225, %v1224
        %v1236 = vpack.c.b16 %v1227, %v1226
        %v1237 = vpack.c.b16 %v1229, %v1228
        %1246 = vmatprep.subr.bf16.mxu0 0
        %1247 = vmatpush1.bf16.msra.mxu0 %v1237
        %1248 = vmatprep.subr.bf16.mxu0 0
        %1249 = vmatpush1.bf16.msra.mxu0 %v1236
        %1250 = vmatprep.subr.bf16.mxu0 0
        %1251 = vmatpush1.bf16.msra.mxu0 %v1235
        %1252 = vmatprep.subr.bf16.mxu0 0
        %1253 = vmatpush1.bf16.msra.mxu0 %v1234
        %1254 = vmatprep.subr.bf16.mxu0 0
        %1255 = vmatpush1.bf16.msra.mxu0 %v1233
        %1256 = vmatprep.subr.bf16.mxu0 0
        %1257 = vmatpush1.bf16.msra.mxu0 %v1232
        %1258 = vmatprep.subr.bf16.mxu0 0
        %1259 = vmatpush1.bf16.msra.mxu0 %v1231
        %1260 = vmatprep.subr.bf16.mxu0 0
        %1261 = vmatpush1.bf16.msra.mxu0 %v1230
        %1262 = vmatprep.subr.bf16.mxu0 0
        %1263 = vmatpush2.bf16.msra.mxu0 0
        %1264 = vmatprep.subr.bf16.mxu0 0
        %1265 = vmatpush2.bf16.msra.mxu0 0
        %1266 = vmatprep.subr.bf16.mxu0 0
        %1267 = vmatpush2.bf16.msra.mxu0 0
        %1268 = vmatprep.subr.bf16.mxu0 0
        %1269 = vmatpush2.bf16.msra.mxu0 0
        %1270 = vmatprep.subr.bf16.mxu0 0
        %1271 = vmatpush2.bf16.msra.mxu0 0
        %1272 = vmatprep.subr.bf16.mxu0 0
        %1273 = vmatpush2.bf16.msra.mxu0 0
        %1274 = vmatprep.subr.bf16.mxu0 0
        %1275 = vmatpush2.bf16.msra.mxu0 0
        %1276 = vmatprep.subr.bf16.mxu0 0
        %1277 = vmatpush2.bf16.msra.mxu0 0
        %1278 = vmatprep.mubr.bf16.mxu0 0
        %1279 = vmatmul.mubr.bf16.gmra.mxu0 %v1190
        %v1280 = vpop.f32.mrf.mxu0
        %v1281 = vadd.f32 0.0, %v1280
        %v1282 = vpop.f32.mrf.mxu0
        %v1283 = vpop.f32.mrf.mxu0
        %v1284 = vadd.f32 0.0, %v1283
        %v1285 = vpop.f32.mrf.mxu0
        %1286 = vmatprep.mubr.bf16.mxu0 0
        %1287 = vmatmul.mubr.bf16.gmra.mxu0 %v1191
        %v1288 = vpop.f32.mrf.mxu0
        %v1289 = vadd.f32 0.0, %v1288
        %v1290 = vpop.f32.mrf.mxu0
        %v1291 = vpop.f32.mrf.mxu0
        %v1292 = vadd.f32 0.0, %v1291
        %v1293 = vpop.f32.mrf.mxu0
        %1294 = vmatprep.mubr.bf16.mxu0 0
        %1295 = vmatmul.mubr.bf16.gmra.mxu0 %v1192
        %v1296 = vpop.f32.mrf.mxu0
        %v1297 = vadd.f32 0.0, %v1296
        %v1298 = vpop.f32.mrf.mxu0
        %v1299 = vpop.f32.mrf.mxu0
        %v1300 = vadd.f32 0.0, %v1299
        %v1301 = vpop.f32.mrf.mxu0
        %1302 = vmatprep.mubr.bf16.mxu0 0
        %1303 = vmatmul.mubr.bf16.gmra.mxu0 %v1193
        %v1304 = vpop.f32.mrf.mxu0
        %v1305 = vadd.f32 0.0, %v1304
        %v1306 = vpop.f32.mrf.mxu0
        %v1307 = vpop.f32.mrf.mxu0
        %v1308 = vadd.f32 0.0, %v1307
        %v1309 = vpop.f32.mrf.mxu0
        %1310 = vdwg.mxu0
        %v1311 = vadd.f32 %v1141, %v1281
        %v1312 = vadd.f32 %v1142, %v1284
        %v1313 = vadd.f32 %v1143, %v1289
        %v1314 = vadd.f32 %v1144, %v1292
        %v1315 = vadd.f32 %v1145, %v1297
        %v1316 = vadd.f32 %v1146, %v1300
        %v1317 = vadd.f32 %v1147, %v1305
        %v1318 = vadd.f32 %v1148, %v1308
        %v1319 = vld [vmem:[%s978] sm:$0xf]
        %v1320 = vld [vmem:[%s978 + $0x8] sm:$0x1]
        %v1321 = vld [vmem:[%s978 + $0x20] sm:$0xf]
        %v1322 = vld [vmem:[%s978 + $0x28] sm:$0x1]
        %v1323 = vld [vmem:[%s978 + $0x40] sm:$0xf]
        %v1324 = vld [vmem:[%s978 + $0x48] sm:$0x1]
        %v1325 = vld [vmem:[%s978 + $0x60] sm:$0xf]
        %v1326 = vld [vmem:[%s978 + $0x68] sm:$0x1]
        %v1327 = vld [vmem:[%s978 + $0x80] sm:$0xf]
        %v1328 = vld [vmem:[%s978 + $0x88] sm:$0x1]
        %v1329 = vld [vmem:[%s978 + $0xa0] sm:$0xf]
        %v1330 = vld [vmem:[%s978 + $0xa8] sm:$0x1]
        %v1331 = vld [vmem:[%s978 + $0xc0] sm:$0xf]
        %v1332 = vld [vmem:[%s978 + $0xc8] sm:$0x1]
        %v1333 = vld [vmem:[%s978 + $0xe0] sm:$0xf]
        %v1334 = vld [vmem:[%s978 + $0xe8] sm:$0x1]
        %v1336 = vshrl.u32 %v1319, 16
        %v1338 = vrot.slane %v1336, 4
        %v1339 = vshll.u32 %v1319, 16
        %v1341 = vrot.slane %v1339, 5
        %v1342 = vor.u32 %v1338, %v1341
        %v1343 = vrot.slane %v1342, 4
        %v1345 = vshll.u32 %v1320, 16
        %v1347 = vrot.slane %v1345, 5
        %v1348 = vsel %vm711, %v1343, %v1347
        %v1350 = vshrl.u32 %v1321, 16
        %v1352 = vrot.slane %v1350, 4
        %v1353 = vshll.u32 %v1321, 16
        %v1355 = vrot.slane %v1353, 5
        %v1356 = vor.u32 %v1352, %v1355
        %v1357 = vrot.slane %v1356, 4
        %v1359 = vshll.u32 %v1322, 16
        %v1361 = vrot.slane %v1359, 5
        %v1362 = vsel %vm711, %v1357, %v1361
        %v1364 = vshrl.u32 %v1323, 16
        %v1366 = vrot.slane %v1364, 4
        %v1367 = vshll.u32 %v1323, 16
        %v1369 = vrot.slane %v1367, 5
        %v1370 = vor.u32 %v1366, %v1369
        %v1371 = vrot.slane %v1370, 4
        %v1373 = vshll.u32 %v1324, 16
        %v1375 = vrot.slane %v1373, 5
        %v1376 = vsel %vm711, %v1371, %v1375
        %v1378 = vshrl.u32 %v1325, 16
        %v1380 = vrot.slane %v1378, 4
        %v1381 = vshll.u32 %v1325, 16
        %v1383 = vrot.slane %v1381, 5
        %v1384 = vor.u32 %v1380, %v1383
        %v1385 = vrot.slane %v1384, 4
        %v1387 = vshll.u32 %v1326, 16
        %v1389 = vrot.slane %v1387, 5
        %v1390 = vsel %vm711, %v1385, %v1389
        %v1392 = vshrl.u32 %v1327, 16
        %v1394 = vrot.slane %v1392, 4
        %v1395 = vshll.u32 %v1327, 16
        %v1397 = vrot.slane %v1395, 5
        %v1398 = vor.u32 %v1394, %v1397
        %v1399 = vrot.slane %v1398, 4
        %v1401 = vshll.u32 %v1328, 16
        %v1403 = vrot.slane %v1401, 5
        %v1404 = vsel %vm711, %v1399, %v1403
        %v1406 = vshrl.u32 %v1329, 16
        %v1408 = vrot.slane %v1406, 4
        %v1409 = vshll.u32 %v1329, 16
        %v1411 = vrot.slane %v1409, 5
        %v1412 = vor.u32 %v1408, %v1411
        %v1413 = vrot.slane %v1412, 4
        %v1415 = vshll.u32 %v1330, 16
        %v1417 = vrot.slane %v1415, 5
        %v1418 = vsel %vm711, %v1413, %v1417
        %v1420 = vshrl.u32 %v1331, 16
        %v1422 = vrot.slane %v1420, 4
        %v1423 = vshll.u32 %v1331, 16
        %v1425 = vrot.slane %v1423, 5
        %v1426 = vor.u32 %v1422, %v1425
        %v1427 = vrot.slane %v1426, 4
        %v1429 = vshll.u32 %v1332, 16
        %v1431 = vrot.slane %v1429, 5
        %v1432 = vsel %vm711, %v1427, %v1431
        %v1434 = vshrl.u32 %v1333, 16
        %v1436 = vrot.slane %v1434, 4
        %v1437 = vshll.u32 %v1333, 16
        %v1439 = vrot.slane %v1437, 5
        %v1440 = vor.u32 %v1436, %v1439
        %v1441 = vrot.slane %v1440, 4
        %v1443 = vshll.u32 %v1334, 16
        %v1445 = vrot.slane %v1443, 5
        %v1446 = vsel %vm711, %v1441, %v1445
        %s1447 = scalar_lea.vmem %s361, 320
        %v1448 = vld [vmem:[%s1447] sm:$0xf]
        %v1449 = vld [vmem:[%s1447 + $0x4] sm:$0xf]
        %v1450 = vld [vmem:[%s1447 + $0x8] sm:$0xf]
        %v1451 = vld [vmem:[%s1447 + $0xc] sm:$0xf]
        %v1452 = vld [vmem:[%s1447 + $0x10] sm:$0xf]
        %v1453 = vld [vmem:[%s1447 + $0x14] sm:$0xf]
        %v1454 = vld [vmem:[%s1447 + $0x18] sm:$0xf]
        %v1455 = vld [vmem:[%s1447 + $0x1c] sm:$0xf]
        %v1456 = vld [vmem:[%s1447 + $0x20] sm:$0xf]
        %v1457 = vld [vmem:[%s1447 + $0x24] sm:$0xf]
        %v1458 = vld [vmem:[%s1447 + $0x28] sm:$0xf]
        %v1459 = vld [vmem:[%s1447 + $0x2c] sm:$0xf]
        %v1460 = vld [vmem:[%s1447 + $0x30] sm:$0xf]
        %v1461 = vld [vmem:[%s1447 + $0x34] sm:$0xf]
        %v1462 = vld [vmem:[%s1447 + $0x38] sm:$0xf]
        %v1463 = vld [vmem:[%s1447 + $0x3c] sm:$0xf]
        %v1464 = vunpack.c.l.b16 %v1348
        %v1465 = vunpack.c.l.b16 %v1362
        %v1466 = vunpack.c.l.b16 %v1376
        %v1467 = vunpack.c.l.b16 %v1390
        %v1468 = vunpack.c.l.b16 %v1404
        %v1469 = vunpack.c.l.b16 %v1418
        %v1470 = vunpack.c.l.b16 %v1432
        %v1471 = vunpack.c.l.b16 %v1446
        %v1472 = vpack.c.b16 %v1465, %v1464
        %v1473 = vpack.c.b16 %v1467, %v1466
        %v1474 = vpack.c.b16 %v1469, %v1468
        %v1475 = vpack.c.b16 %v1471, %v1470
        %v1496 = vunpack.c.l.b16 %v1448
        %v1497 = vunpack.c.l.b16 %v1449
        %v1498 = vunpack.c.l.b16 %v1450
        %v1499 = vunpack.c.l.b16 %v1451
        %v1500 = vunpack.c.l.b16 %v1452
        %v1501 = vunpack.c.l.b16 %v1453
        %v1502 = vunpack.c.l.b16 %v1454
        %v1503 = vunpack.c.l.b16 %v1455
        %v1504 = vunpack.c.l.b16 %v1456
        %v1505 = vunpack.c.l.b16 %v1457
        %v1506 = vunpack.c.l.b16 %v1458
        %v1507 = vunpack.c.l.b16 %v1459
        %v1508 = vunpack.c.l.b16 %v1460
        %v1509 = vunpack.c.l.b16 %v1461
        %v1510 = vunpack.c.l.b16 %v1462
        %v1511 = vunpack.c.l.b16 %v1463
        %v1512 = vpack.c.b16 %v1497, %v1496
        %v1513 = vpack.c.b16 %v1499, %v1498
        %v1514 = vpack.c.b16 %v1501, %v1500
        %v1515 = vpack.c.b16 %v1503, %v1502
        %v1516 = vpack.c.b16 %v1505, %v1504
        %v1517 = vpack.c.b16 %v1507, %v1506
        %v1518 = vpack.c.b16 %v1509, %v1508
        %v1519 = vpack.c.b16 %v1511, %v1510
        %1528 = vmatprep.subr.bf16.mxu0 0
        %1529 = vmatpush1.bf16.msra.mxu0 %v1519
        %1530 = vmatprep.subr.bf16.mxu0 0
        %1531 = vmatpush1.bf16.msra.mxu0 %v1518
        %1532 = vmatprep.subr.bf16.mxu0 0
        %1533 = vmatpush1.bf16.msra.mxu0 %v1517
        %1534 = vmatprep.subr.bf16.mxu0 0
        %1535 = vmatpush1.bf16.msra.mxu0 %v1516
        %1536 = vmatprep.subr.bf16.mxu0 0
        %1537 = vmatpush1.bf16.msra.mxu0 %v1515
        %1538 = vmatprep.subr.bf16.mxu0 0
        %1539 = vmatpush1.bf16.msra.mxu0 %v1514
        %1540 = vmatprep.subr.bf16.mxu0 0
        %1541 = vmatpush1.bf16.msra.mxu0 %v1513
        %1542 = vmatprep.subr.bf16.mxu0 0
        %1543 = vmatpush1.bf16.msra.mxu0 %v1512
        %1544 = vmatprep.subr.bf16.mxu0 0
        %1545 = vmatpush2.bf16.msra.mxu0 0
        %1546 = vmatprep.subr.bf16.mxu0 0
        %1547 = vmatpush2.bf16.msra.mxu0 0
        %1548 = vmatprep.subr.bf16.mxu0 0
        %1549 = vmatpush2.bf16.msra.mxu0 0
        %1550 = vmatprep.subr.bf16.mxu0 0
        %1551 = vmatpush2.bf16.msra.mxu0 0
        %1552 = vmatprep.subr.bf16.mxu0 0
        %1553 = vmatpush2.bf16.msra.mxu0 0
        %1554 = vmatprep.subr.bf16.mxu0 0
        %1555 = vmatpush2.bf16.msra.mxu0 0
        %1556 = vmatprep.subr.bf16.mxu0 0
        %1557 = vmatpush2.bf16.msra.mxu0 0
        %1558 = vmatprep.subr.bf16.mxu0 0
        %1559 = vmatpush2.bf16.msra.mxu0 0
        %1560 = vmatprep.mubr.bf16.mxu0 0
        %1561 = vmatmul.mubr.bf16.gmra.mxu0 %v1472
        %v1562 = vpop.f32.mrf.mxu0
        %v1563 = vadd.f32 0.0, %v1562
        %v1564 = vpop.f32.mrf.mxu0
        %v1565 = vpop.f32.mrf.mxu0
        %v1566 = vadd.f32 0.0, %v1565
        %v1567 = vpop.f32.mrf.mxu0
        %1568 = vmatprep.mubr.bf16.mxu0 0
        %1569 = vmatmul.mubr.bf16.gmra.mxu0 %v1473
        %v1570 = vpop.f32.mrf.mxu0
        %v1571 = vadd.f32 0.0, %v1570
        %v1572 = vpop.f32.mrf.mxu0
        %v1573 = vpop.f32.mrf.mxu0
        %v1574 = vadd.f32 0.0, %v1573
        %v1575 = vpop.f32.mrf.mxu0
        %1576 = vmatprep.mubr.bf16.mxu0 0
        %1577 = vmatmul.mubr.bf16.gmra.mxu0 %v1474
        %v1578 = vpop.f32.mrf.mxu0
        %v1579 = vadd.f32 0.0, %v1578
        %v1580 = vpop.f32.mrf.mxu0
        %v1581 = vpop.f32.mrf.mxu0
        %v1582 = vadd.f32 0.0, %v1581
        %v1583 = vpop.f32.mrf.mxu0
        %1584 = vmatprep.mubr.bf16.mxu0 0
        %1585 = vmatmul.mubr.bf16.gmra.mxu0 %v1475
        %v1586 = vpop.f32.mrf.mxu0
        %v1587 = vadd.f32 0.0, %v1586
        %v1588 = vpop.f32.mrf.mxu0
        %v1589 = vpop.f32.mrf.mxu0
        %v1590 = vadd.f32 0.0, %v1589
        %v1591 = vpop.f32.mrf.mxu0
        %1592 = vdwg.mxu0
        %v1593 = vadd.f32 %v1311, %v1563
        %v1594 = vadd.f32 %v1312, %v1566
        %v1595 = vadd.f32 %v1313, %v1571
        %v1596 = vadd.f32 %v1314, %v1574
        %v1597 = vadd.f32 %v1315, %v1579
        %v1598 = vadd.f32 %v1316, %v1582
        %v1599 = vadd.f32 %v1317, %v1587
        %v1600 = vadd.f32 %v1318, %v1590
        %s1601 = scalar_lea.vmem %s357, 32
        %v1602 = vld [vmem:[%s1601] sm:$0xf]
        %v1603 = vld [vmem:[%s1601 + $0x20] sm:$0xf]
        %v1604 = vld [vmem:[%s1601 + $0x40] sm:$0xf]
        %v1605 = vld [vmem:[%s1601 + $0x60] sm:$0xf]
        %v1606 = vld [vmem:[%s1601 + $0x80] sm:$0xf]
        %v1607 = vld [vmem:[%s1601 + $0xa0] sm:$0xf]
        %v1608 = vld [vmem:[%s1601 + $0xc0] sm:$0xf]
        %v1609 = vld [vmem:[%s1601 + $0xe0] sm:$0xf]
        %s1610 = scalar_lea.vmem %s361, 384
        %v1611 = vld [vmem:[%s1610] sm:$0xf]
        %v1612 = vld [vmem:[%s1610 + $0x4] sm:$0xf]
        %v1613 = vld [vmem:[%s1610 + $0x8] sm:$0xf]
        %v1614 = vld [vmem:[%s1610 + $0xc] sm:$0xf]
        %v1615 = vld [vmem:[%s1610 + $0x10] sm:$0xf]
        %v1616 = vld [vmem:[%s1610 + $0x14] sm:$0xf]
        %v1617 = vld [vmem:[%s1610 + $0x18] sm:$0xf]
        %v1618 = vld [vmem:[%s1610 + $0x1c] sm:$0xf]
        %v1619 = vld [vmem:[%s1610 + $0x20] sm:$0xf]
        %v1620 = vld [vmem:[%s1610 + $0x24] sm:$0xf]
        %v1621 = vld [vmem:[%s1610 + $0x28] sm:$0xf]
        %v1622 = vld [vmem:[%s1610 + $0x2c] sm:$0xf]
        %v1623 = vld [vmem:[%s1610 + $0x30] sm:$0xf]
        %v1624 = vld [vmem:[%s1610 + $0x34] sm:$0xf]
        %v1625 = vld [vmem:[%s1610 + $0x38] sm:$0xf]
        %v1626 = vld [vmem:[%s1610 + $0x3c] sm:$0xf]
        %v1635 = vunpack.c.l.b16 %v1602
        %v1636 = vunpack.c.l.b16 %v1603
        %v1637 = vunpack.c.l.b16 %v1604
        %v1638 = vunpack.c.l.b16 %v1605
        %v1639 = vunpack.c.l.b16 %v1606
        %v1640 = vunpack.c.l.b16 %v1607
        %v1641 = vunpack.c.l.b16 %v1608
        %v1642 = vunpack.c.l.b16 %v1609
        %v1643 = vpack.c.b16 %v1636, %v1635
        %v1644 = vpack.c.b16 %v1638, %v1637
        %v1645 = vpack.c.b16 %v1640, %v1639
        %v1646 = vpack.c.b16 %v1642, %v1641
        %v1667 = vunpack.c.l.b16 %v1611
        %v1668 = vunpack.c.l.b16 %v1612
        %v1669 = vunpack.c.l.b16 %v1613
        %v1670 = vunpack.c.l.b16 %v1614
        %v1671 = vunpack.c.l.b16 %v1615
        %v1672 = vunpack.c.l.b16 %v1616
        %v1673 = vunpack.c.l.b16 %v1617
        %v1674 = vunpack.c.l.b16 %v1618
        %v1675 = vunpack.c.l.b16 %v1619
        %v1676 = vunpack.c.l.b16 %v1620
        %v1677 = vunpack.c.l.b16 %v1621
        %v1678 = vunpack.c.l.b16 %v1622
        %v1679 = vunpack.c.l.b16 %v1623
        %v1680 = vunpack.c.l.b16 %v1624
        %v1681 = vunpack.c.l.b16 %v1625
        %v1682 = vunpack.c.l.b16 %v1626
        %v1683 = vpack.c.b16 %v1668, %v1667
        %v1684 = vpack.c.b16 %v1670, %v1669
        %v1685 = vpack.c.b16 %v1672, %v1671
        %v1686 = vpack.c.b16 %v1674, %v1673
        %v1687 = vpack.c.b16 %v1676, %v1675
        %v1688 = vpack.c.b16 %v1678, %v1677
        %v1689 = vpack.c.b16 %v1680, %v1679
        %v1690 = vpack.c.b16 %v1682, %v1681
        %1699 = vmatprep.subr.bf16.mxu0 0
        %1700 = vmatpush1.bf16.msra.mxu0 %v1690
        %1701 = vmatprep.subr.bf16.mxu0 0
        %1702 = vmatpush1.bf16.msra.mxu0 %v1689
        %1703 = vmatprep.subr.bf16.mxu0 0
        %1704 = vmatpush1.bf16.msra.mxu0 %v1688
        %1705 = vmatprep.subr.bf16.mxu0 0
        %1706 = vmatpush1.bf16.msra.mxu0 %v1687
        %1707 = vmatprep.subr.bf16.mxu0 0
        %1708 = vmatpush1.bf16.msra.mxu0 %v1686
        %1709 = vmatprep.subr.bf16.mxu0 0
        %1710 = vmatpush1.bf16.msra.mxu0 %v1685
        %1711 = vmatprep.subr.bf16.mxu0 0
        %1712 = vmatpush1.bf16.msra.mxu0 %v1684
        %1713 = vmatprep.subr.bf16.mxu0 0
        %1714 = vmatpush1.bf16.msra.mxu0 %v1683
        %1715 = vmatprep.subr.bf16.mxu0 0
        %1716 = vmatpush2.bf16.msra.mxu0 0
        %1717 = vmatprep.subr.bf16.mxu0 0
        %1718 = vmatpush2.bf16.msra.mxu0 0
        %1719 = vmatprep.subr.bf16.mxu0 0
        %1720 = vmatpush2.bf16.msra.mxu0 0
        %1721 = vmatprep.subr.bf16.mxu0 0
        %1722 = vmatpush2.bf16.msra.mxu0 0
        %1723 = vmatprep.subr.bf16.mxu0 0
        %1724 = vmatpush2.bf16.msra.mxu0 0
        %1725 = vmatprep.subr.bf16.mxu0 0
        %1726 = vmatpush2.bf16.msra.mxu0 0
        %1727 = vmatprep.subr.bf16.mxu0 0
        %1728 = vmatpush2.bf16.msra.mxu0 0
        %1729 = vmatprep.subr.bf16.mxu0 0
        %1730 = vmatpush2.bf16.msra.mxu0 0
        %1731 = vmatprep.mubr.bf16.mxu0 0
        %1732 = vmatmul.mubr.bf16.gmra.mxu0 %v1643
        %v1733 = vpop.f32.mrf.mxu0
        %v1734 = vadd.f32 0.0, %v1733
        %v1735 = vpop.f32.mrf.mxu0
        %v1736 = vpop.f32.mrf.mxu0
        %v1737 = vadd.f32 0.0, %v1736
        %v1738 = vpop.f32.mrf.mxu0
        %1739 = vmatprep.mubr.bf16.mxu0 0
        %1740 = vmatmul.mubr.bf16.gmra.mxu0 %v1644
        %v1741 = vpop.f32.mrf.mxu0
        %v1742 = vadd.f32 0.0, %v1741
        %v1743 = vpop.f32.mrf.mxu0
        %v1744 = vpop.f32.mrf.mxu0
        %v1745 = vadd.f32 0.0, %v1744
        %v1746 = vpop.f32.mrf.mxu0
        %1747 = vmatprep.mubr.bf16.mxu0 0
        %1748 = vmatmul.mubr.bf16.gmra.mxu0 %v1645
        %v1749 = vpop.f32.mrf.mxu0
        %v1750 = vadd.f32 0.0, %v1749
        %v1751 = vpop.f32.mrf.mxu0
        %v1752 = vpop.f32.mrf.mxu0
        %v1753 = vadd.f32 0.0, %v1752
        %v1754 = vpop.f32.mrf.mxu0
        %1755 = vmatprep.mubr.bf16.mxu0 0
        %1756 = vmatmul.mubr.bf16.gmra.mxu0 %v1646
        %v1757 = vpop.f32.mrf.mxu0
        %v1758 = vadd.f32 0.0, %v1757
        %v1759 = vpop.f32.mrf.mxu0
        %v1760 = vpop.f32.mrf.mxu0
        %v1761 = vadd.f32 0.0, %v1760
        %v1762 = vpop.f32.mrf.mxu0
        %1763 = vdwg.mxu0
        %v1764 = vadd.f32 %v1593, %v1734
        %v1765 = vadd.f32 %v1594, %v1737
        %v1766 = vadd.f32 %v1595, %v1742
        %v1767 = vadd.f32 %v1596, %v1745
        %v1768 = vadd.f32 %v1597, %v1750
        %v1769 = vadd.f32 %v1598, %v1753
        %v1770 = vadd.f32 %v1599, %v1758
        %v1771 = vadd.f32 %v1600, %v1761
        %v1772 = vld [vmem:[%s1601 + $0x4] sm:$0xf]
        %v1773 = vld [vmem:[%s1601 + $0x24] sm:$0xf]
        %v1774 = vld [vmem:[%s1601 + $0x44] sm:$0xf]
        %v1775 = vld [vmem:[%s1601 + $0x64] sm:$0xf]
        %v1776 = vld [vmem:[%s1601 + $0x84] sm:$0xf]
        %v1777 = vld [vmem:[%s1601 + $0xa4] sm:$0xf]
        %v1778 = vld [vmem:[%s1601 + $0xc4] sm:$0xf]
        %v1779 = vld [vmem:[%s1601 + $0xe4] sm:$0xf]
        %s1780 = scalar_lea.vmem %s361, 448
        %v1781 = vld [vmem:[%s1780] sm:$0xf]
        %v1782 = vld [vmem:[%s1780 + $0x4] sm:$0xf]
        %v1783 = vld [vmem:[%s1780 + $0x8] sm:$0xf]
        %v1784 = vld [vmem:[%s1780 + $0xc] sm:$0xf]
        %v1785 = vld [vmem:[%s1780 + $0x10] sm:$0xf]
        %v1786 = vld [vmem:[%s1780 + $0x14] sm:$0xf]
        %v1787 = vld [vmem:[%s1780 + $0x18] sm:$0xf]
        %v1788 = vld [vmem:[%s1780 + $0x1c] sm:$0xf]
        %v1789 = vld [vmem:[%s1780 + $0x20] sm:$0xf]
        %v1790 = vld [vmem:[%s1780 + $0x24] sm:$0xf]
        %v1791 = vld [vmem:[%s1780 + $0x28] sm:$0xf]
        %v1792 = vld [vmem:[%s1780 + $0x2c] sm:$0xf]
        %v1793 = vld [vmem:[%s1780 + $0x30] sm:$0xf]
        %v1794 = vld [vmem:[%s1780 + $0x34] sm:$0xf]
        %v1795 = vld [vmem:[%s1780 + $0x38] sm:$0xf]
        %v1796 = vld [vmem:[%s1780 + $0x3c] sm:$0xf]
        %v1805 = vunpack.c.l.b16 %v1772
        %v1806 = vunpack.c.l.b16 %v1773
        %v1807 = vunpack.c.l.b16 %v1774
        %v1808 = vunpack.c.l.b16 %v1775
        %v1809 = vunpack.c.l.b16 %v1776
        %v1810 = vunpack.c.l.b16 %v1777
        %v1811 = vunpack.c.l.b16 %v1778
        %v1812 = vunpack.c.l.b16 %v1779
        %v1813 = vpack.c.b16 %v1806, %v1805
        %v1814 = vpack.c.b16 %v1808, %v1807
        %v1815 = vpack.c.b16 %v1810, %v1809
        %v1816 = vpack.c.b16 %v1812, %v1811
        %v1837 = vunpack.c.l.b16 %v1781
        %v1838 = vunpack.c.l.b16 %v1782
        %v1839 = vunpack.c.l.b16 %v1783
        %v1840 = vunpack.c.l.b16 %v1784
        %v1841 = vunpack.c.l.b16 %v1785
        %v1842 = vunpack.c.l.b16 %v1786
        %v1843 = vunpack.c.l.b16 %v1787
        %v1844 = vunpack.c.l.b16 %v1788
        %v1845 = vunpack.c.l.b16 %v1789
        %v1846 = vunpack.c.l.b16 %v1790
        %v1847 = vunpack.c.l.b16 %v1791
        %v1848 = vunpack.c.l.b16 %v1792
        %v1849 = vunpack.c.l.b16 %v1793
        %v1850 = vunpack.c.l.b16 %v1794
        %v1851 = vunpack.c.l.b16 %v1795
        %v1852 = vunpack.c.l.b16 %v1796
        %v1853 = vpack.c.b16 %v1838, %v1837
        %v1854 = vpack.c.b16 %v1840, %v1839
        %v1855 = vpack.c.b16 %v1842, %v1841
        %v1856 = vpack.c.b16 %v1844, %v1843
        %v1857 = vpack.c.b16 %v1846, %v1845
        %v1858 = vpack.c.b16 %v1848, %v1847
        %v1859 = vpack.c.b16 %v1850, %v1849
        %v1860 = vpack.c.b16 %v1852, %v1851
        %1869 = vmatprep.subr.bf16.mxu0 0
        %1870 = vmatpush1.bf16.msra.mxu0 %v1860
        %1871 = vmatprep.subr.bf16.mxu0 0
        %1872 = vmatpush1.bf16.msra.mxu0 %v1859
        %1873 = vmatprep.subr.bf16.mxu0 0
        %1874 = vmatpush1.bf16.msra.mxu0 %v1858
        %1875 = vmatprep.subr.bf16.mxu0 0
        %1876 = vmatpush1.bf16.msra.mxu0 %v1857
        %1877 = vmatprep.subr.bf16.mxu0 0
        %1878 = vmatpush1.bf16.msra.mxu0 %v1856
        %1879 = vmatprep.subr.bf16.mxu0 0
        %1880 = vmatpush1.bf16.msra.mxu0 %v1855
        %1881 = vmatprep.subr.bf16.mxu0 0
        %1882 = vmatpush1.bf16.msra.mxu0 %v1854
        %1883 = vmatprep.subr.bf16.mxu0 0
        %1884 = vmatpush1.bf16.msra.mxu0 %v1853
        %1885 = vmatprep.subr.bf16.mxu0 0
        %1886 = vmatpush2.bf16.msra.mxu0 0
        %1887 = vmatprep.subr.bf16.mxu0 0
        %1888 = vmatpush2.bf16.msra.mxu0 0
        %1889 = vmatprep.subr.bf16.mxu0 0
        %1890 = vmatpush2.bf16.msra.mxu0 0
        %1891 = vmatprep.subr.bf16.mxu0 0
        %1892 = vmatpush2.bf16.msra.mxu0 0
        %1893 = vmatprep.subr.bf16.mxu0 0
        %1894 = vmatpush2.bf16.msra.mxu0 0
        %1895 = vmatprep.subr.bf16.mxu0 0
        %1896 = vmatpush2.bf16.msra.mxu0 0
        %1897 = vmatprep.subr.bf16.mxu0 0
        %1898 = vmatpush2.bf16.msra.mxu0 0
        %1899 = vmatprep.subr.bf16.mxu0 0
        %1900 = vmatpush2.bf16.msra.mxu0 0
        %1901 = vmatprep.mubr.bf16.mxu0 0
        %1902 = vmatmul.mubr.bf16.gmra.mxu0 %v1813
        %v1903 = vpop.f32.mrf.mxu0
        %v1904 = vadd.f32 0.0, %v1903
        %v1905 = vpop.f32.mrf.mxu0
        %v1906 = vpop.f32.mrf.mxu0
        %v1907 = vadd.f32 0.0, %v1906
        %v1908 = vpop.f32.mrf.mxu0
        %1909 = vmatprep.mubr.bf16.mxu0 0
        %1910 = vmatmul.mubr.bf16.gmra.mxu0 %v1814
        %v1911 = vpop.f32.mrf.mxu0
        %v1912 = vadd.f32 0.0, %v1911
        %v1913 = vpop.f32.mrf.mxu0
        %v1914 = vpop.f32.mrf.mxu0
        %v1915 = vadd.f32 0.0, %v1914
        %v1916 = vpop.f32.mrf.mxu0
        %1917 = vmatprep.mubr.bf16.mxu0 0
        %1918 = vmatmul.mubr.bf16.gmra.mxu0 %v1815
        %v1919 = vpop.f32.mrf.mxu0
        %v1920 = vadd.f32 0.0, %v1919
        %v1921 = vpop.f32.mrf.mxu0
        %v1922 = vpop.f32.mrf.mxu0
        %v1923 = vadd.f32 0.0, %v1922
        %v1924 = vpop.f32.mrf.mxu0
        %1925 = vmatprep.mubr.bf16.mxu0 0
        %1926 = vmatmul.mubr.bf16.gmra.mxu0 %v1816
        %v1927 = vpop.f32.mrf.mxu0
        %v1928 = vadd.f32 0.0, %v1927
        %v1929 = vpop.f32.mrf.mxu0
        %v1930 = vpop.f32.mrf.mxu0
        %v1931 = vadd.f32 0.0, %v1930
        %v1932 = vpop.f32.mrf.mxu0
        %1933 = vdwg.mxu0
        %v1934 = vadd.f32 %v1764, %v1904
        %v1935 = vadd.f32 %v1765, %v1907
        %v1936 = vadd.f32 %v1766, %v1912
        %v1937 = vadd.f32 %v1767, %v1915
        %v1938 = vadd.f32 %v1768, %v1920
        %v1939 = vadd.f32 %v1769, %v1923
        %v1940 = vadd.f32 %v1770, %v1928
        %v1941 = vadd.f32 %v1771, %v1931
        %v1942 = vld [vmem:[%s1601] sm:$0xf]
        %v1943 = vld [vmem:[%s1601 + $0x8] sm:$0x1]
        %v1944 = vld [vmem:[%s1601 + $0x20] sm:$0xf]
        %v1945 = vld [vmem:[%s1601 + $0x28] sm:$0x1]
        %v1946 = vld [vmem:[%s1601 + $0x40] sm:$0xf]
        %v1947 = vld [vmem:[%s1601 + $0x48] sm:$0x1]
        %v1948 = vld [vmem:[%s1601 + $0x60] sm:$0xf]
        %v1949 = vld [vmem:[%s1601 + $0x68] sm:$0x1]
        %v1950 = vld [vmem:[%s1601 + $0x80] sm:$0xf]
        %v1951 = vld [vmem:[%s1601 + $0x88] sm:$0x1]
        %v1952 = vld [vmem:[%s1601 + $0xa0] sm:$0xf]
        %v1953 = vld [vmem:[%s1601 + $0xa8] sm:$0x1]
        %v1954 = vld [vmem:[%s1601 + $0xc0] sm:$0xf]
        %v1955 = vld [vmem:[%s1601 + $0xc8] sm:$0x1]
        %v1956 = vld [vmem:[%s1601 + $0xe0] sm:$0xf]
        %v1957 = vld [vmem:[%s1601 + $0xe8] sm:$0x1]
        %v1959 = vshrl.u32 %v1942, 16
        %v1961 = vrot.slane %v1959, 4
        %v1962 = vshll.u32 %v1942, 16
        %v1964 = vrot.slane %v1962, 5
        %v1965 = vor.u32 %v1961, %v1964
        %v1966 = vrot.slane %v1965, 4
        %v1968 = vshll.u32 %v1943, 16
        %v1970 = vrot.slane %v1968, 5
        %v1971 = vsel %vm711, %v1966, %v1970
        %v1973 = vshrl.u32 %v1944, 16
        %v1975 = vrot.slane %v1973, 4
        %v1976 = vshll.u32 %v1944, 16
        %v1978 = vrot.slane %v1976, 5
        %v1979 = vor.u32 %v1975, %v1978
        %v1980 = vrot.slane %v1979, 4
        %v1982 = vshll.u32 %v1945, 16
        %v1984 = vrot.slane %v1982, 5
        %v1985 = vsel %vm711, %v1980, %v1984
        %v1987 = vshrl.u32 %v1946, 16
        %v1989 = vrot.slane %v1987, 4
        %v1990 = vshll.u32 %v1946, 16
        %v1992 = vrot.slane %v1990, 5
        %v1993 = vor.u32 %v1989, %v1992
        %v1994 = vrot.slane %v1993, 4
        %v1996 = vshll.u32 %v1947, 16
        %v1998 = vrot.slane %v1996, 5
        %v1999 = vsel %vm711, %v1994, %v1998
        %v2001 = vshrl.u32 %v1948, 16
        %v2003 = vrot.slane %v2001, 4
        %v2004 = vshll.u32 %v1948, 16
        %v2006 = vrot.slane %v2004, 5
        %v2007 = vor.u32 %v2003, %v2006
        %v2008 = vrot.slane %v2007, 4
        %v2010 = vshll.u32 %v1949, 16
        %v2012 = vrot.slane %v2010, 5
        %v2013 = vsel %vm711, %v2008, %v2012
        %v2015 = vshrl.u32 %v1950, 16
        %v2017 = vrot.slane %v2015, 4
        %v2018 = vshll.u32 %v1950, 16
        %v2020 = vrot.slane %v2018, 5
        %v2021 = vor.u32 %v2017, %v2020
        %v2022 = vrot.slane %v2021, 4
        %v2024 = vshll.u32 %v1951, 16
        %v2026 = vrot.slane %v2024, 5
        %v2027 = vsel %vm711, %v2022, %v2026
        %v2029 = vshrl.u32 %v1952, 16
        %v2031 = vrot.slane %v2029, 4
        %v2032 = vshll.u32 %v1952, 16
        %v2034 = vrot.slane %v2032, 5
        %v2035 = vor.u32 %v2031, %v2034
        %v2036 = vrot.slane %v2035, 4
        %v2038 = vshll.u32 %v1953, 16
        %v2040 = vrot.slane %v2038, 5
        %v2041 = vsel %vm711, %v2036, %v2040
        %v2043 = vshrl.u32 %v1954, 16
        %v2045 = vrot.slane %v2043, 4
        %v2046 = vshll.u32 %v1954, 16
        %v2048 = vrot.slane %v2046, 5
        %v2049 = vor.u32 %v2045, %v2048
        %v2050 = vrot.slane %v2049, 4
        %v2052 = vshll.u32 %v1955, 16
        %v2054 = vrot.slane %v2052, 5
        %v2055 = vsel %vm711, %v2050, %v2054
        %v2057 = vshrl.u32 %v1956, 16
        %v2059 = vrot.slane %v2057, 4
        %v2060 = vshll.u32 %v1956, 16
        %v2062 = vrot.slane %v2060, 5
        %v2063 = vor.u32 %v2059, %v2062
        %v2064 = vrot.slane %v2063, 4
        %v2066 = vshll.u32 %v1957, 16
        %v2068 = vrot.slane %v2066, 5
        %v2069 = vsel %vm711, %v2064, %v2068
        %s2070 = scalar_lea.vmem %s361, 512
        %v2071 = vld [vmem:[%s2070] sm:$0xf]
        %v2072 = vld [vmem:[%s2070 + $0x4] sm:$0xf]
        %v2073 = vld [vmem:[%s2070 + $0x8] sm:$0xf]
        %v2074 = vld [vmem:[%s2070 + $0xc] sm:$0xf]
        %v2075 = vld [vmem:[%s2070 + $0x10] sm:$0xf]
        %v2076 = vld [vmem:[%s2070 + $0x14] sm:$0xf]
        %v2077 = vld [vmem:[%s2070 + $0x18] sm:$0xf]
        %v2078 = vld [vmem:[%s2070 + $0x1c] sm:$0xf]
        %v2079 = vld [vmem:[%s2070 + $0x20] sm:$0xf]
        %v2080 = vld [vmem:[%s2070 + $0x24] sm:$0xf]
        %v2081 = vld [vmem:[%s2070 + $0x28] sm:$0xf]
        %v2082 = vld [vmem:[%s2070 + $0x2c] sm:$0xf]
        %v2083 = vld [vmem:[%s2070 + $0x30] sm:$0xf]
        %v2084 = vld [vmem:[%s2070 + $0x34] sm:$0xf]
        %v2085 = vld [vmem:[%s2070 + $0x38] sm:$0xf]
        %v2086 = vld [vmem:[%s2070 + $0x3c] sm:$0xf]
        %v2087 = vunpack.c.l.b16 %v1971
        %v2088 = vunpack.c.l.b16 %v1985
        %v2089 = vunpack.c.l.b16 %v1999
        %v2090 = vunpack.c.l.b16 %v2013
        %v2091 = vunpack.c.l.b16 %v2027
        %v2092 = vunpack.c.l.b16 %v2041
        %v2093 = vunpack.c.l.b16 %v2055
        %v2094 = vunpack.c.l.b16 %v2069
        %v2095 = vpack.c.b16 %v2088, %v2087
        %v2096 = vpack.c.b16 %v2090, %v2089
        %v2097 = vpack.c.b16 %v2092, %v2091
        %v2098 = vpack.c.b16 %v2094, %v2093
        %v2119 = vunpack.c.l.b16 %v2071
        %v2120 = vunpack.c.l.b16 %v2072
        %v2121 = vunpack.c.l.b16 %v2073
        %v2122 = vunpack.c.l.b16 %v2074
        %v2123 = vunpack.c.l.b16 %v2075
        %v2124 = vunpack.c.l.b16 %v2076
        %v2125 = vunpack.c.l.b16 %v2077
        %v2126 = vunpack.c.l.b16 %v2078
        %v2127 = vunpack.c.l.b16 %v2079
        %v2128 = vunpack.c.l.b16 %v2080
        %v2129 = vunpack.c.l.b16 %v2081
        %v2130 = vunpack.c.l.b16 %v2082
        %v2131 = vunpack.c.l.b16 %v2083
        %v2132 = vunpack.c.l.b16 %v2084
        %v2133 = vunpack.c.l.b16 %v2085
        %v2134 = vunpack.c.l.b16 %v2086
        %v2135 = vpack.c.b16 %v2120, %v2119
        %v2136 = vpack.c.b16 %v2122, %v2121
        %v2137 = vpack.c.b16 %v2124, %v2123
        %v2138 = vpack.c.b16 %v2126, %v2125
        %v2139 = vpack.c.b16 %v2128, %v2127
        %v2140 = vpack.c.b16 %v2130, %v2129
        %v2141 = vpack.c.b16 %v2132, %v2131
        %v2142 = vpack.c.b16 %v2134, %v2133
        %2151 = vmatprep.subr.bf16.mxu0 0
        %2152 = vmatpush1.bf16.msra.mxu0 %v2142
        %2153 = vmatprep.subr.bf16.mxu0 0
        %2154 = vmatpush1.bf16.msra.mxu0 %v2141
        %2155 = vmatprep.subr.bf16.mxu0 0
        %2156 = vmatpush1.bf16.msra.mxu0 %v2140
        %2157 = vmatprep.subr.bf16.mxu0 0
        %2158 = vmatpush1.bf16.msra.mxu0 %v2139
        %2159 = vmatprep.subr.bf16.mxu0 0
        %2160 = vmatpush1.bf16.msra.mxu0 %v2138
        %2161 = vmatprep.subr.bf16.mxu0 0
        %2162 = vmatpush1.bf16.msra.mxu0 %v2137
        %2163 = vmatprep.subr.bf16.mxu0 0
        %2164 = vmatpush1.bf16.msra.mxu0 %v2136
        %2165 = vmatprep.subr.bf16.mxu0 0
        %2166 = vmatpush1.bf16.msra.mxu0 %v2135
        %2167 = vmatprep.subr.bf16.mxu0 0
        %2168 = vmatpush2.bf16.msra.mxu0 0
        %2169 = vmatprep.subr.bf16.mxu0 0
        %2170 = vmatpush2.bf16.msra.mxu0 0
        %2171 = vmatprep.subr.bf16.mxu0 0
        %2172 = vmatpush2.bf16.msra.mxu0 0
        %2173 = vmatprep.subr.bf16.mxu0 0
        %2174 = vmatpush2.bf16.msra.mxu0 0
        %2175 = vmatprep.subr.bf16.mxu0 0
        %2176 = vmatpush2.bf16.msra.mxu0 0
        %2177 = vmatprep.subr.bf16.mxu0 0
        %2178 = vmatpush2.bf16.msra.mxu0 0
        %2179 = vmatprep.subr.bf16.mxu0 0
        %2180 = vmatpush2.bf16.msra.mxu0 0
        %2181 = vmatprep.subr.bf16.mxu0 0
        %2182 = vmatpush2.bf16.msra.mxu0 0
        %2183 = vmatprep.mubr.bf16.mxu0 0
        %2184 = vmatmul.mubr.bf16.gmra.mxu0 %v2095
        %v2185 = vpop.f32.mrf.mxu0
        %v2186 = vadd.f32 0.0, %v2185
        %v2187 = vpop.f32.mrf.mxu0
        %v2188 = vpop.f32.mrf.mxu0
        %v2189 = vadd.f32 0.0, %v2188
        %v2190 = vpop.f32.mrf.mxu0
        %2191 = vmatprep.mubr.bf16.mxu0 0
        %2192 = vmatmul.mubr.bf16.gmra.mxu0 %v2096
        %v2193 = vpop.f32.mrf.mxu0
        %v2194 = vadd.f32 0.0, %v2193
        %v2195 = vpop.f32.mrf.mxu0
        %v2196 = vpop.f32.mrf.mxu0
        %v2197 = vadd.f32 0.0, %v2196
        %v2198 = vpop.f32.mrf.mxu0
        %2199 = vmatprep.mubr.bf16.mxu0 0
        %2200 = vmatmul.mubr.bf16.gmra.mxu0 %v2097
        %v2201 = vpop.f32.mrf.mxu0
        %v2202 = vadd.f32 0.0, %v2201
        %v2203 = vpop.f32.mrf.mxu0
        %v2204 = vpop.f32.mrf.mxu0
        %v2205 = vadd.f32 0.0, %v2204
        %v2206 = vpop.f32.mrf.mxu0
        %2207 = vmatprep.mubr.bf16.mxu0 0
        %2208 = vmatmul.mubr.bf16.gmra.mxu0 %v2098
        %v2209 = vpop.f32.mrf.mxu0
        %v2210 = vadd.f32 0.0, %v2209
        %v2211 = vpop.f32.mrf.mxu0
        %v2212 = vpop.f32.mrf.mxu0
        %v2213 = vadd.f32 0.0, %v2212
        %v2214 = vpop.f32.mrf.mxu0
        %2215 = vdwg.mxu0
        %v2216 = vadd.f32 %v1934, %v2186
        %v2217 = vadd.f32 %v1935, %v2189
        %v2218 = vadd.f32 %v1936, %v2194
        %v2219 = vadd.f32 %v1937, %v2197
        %v2220 = vadd.f32 %v1938, %v2202
        %v2221 = vadd.f32 %v1939, %v2205
        %v2222 = vadd.f32 %v1940, %v2210
        %v2223 = vadd.f32 %v1941, %v2213
        %v2224 = vld [vmem:[%s312] sm:$0xff]
        %v2225 = vld [vmem:[%s312 + $0x8] sm:$0xff]
        %v2226 = vld [vmem:[%s312 + $0x10] sm:$0xff]
        %v2227 = vld [vmem:[%s312 + $0x18] sm:$0xff]
        %v2228 = vld [vmem:[%s312 + $0x20] sm:$0xff]
        %v2229 = vld [vmem:[%s312 + $0x28] sm:$0xff]
        %v2230 = vld [vmem:[%s312 + $0x30] sm:$0xff]
        %v2231 = vld [vmem:[%s312 + $0x38] sm:$0xff]
        %v2232 = vpack.c.bf16 %v2225, %v2224
        %v2233 = vpack.c.bf16 %v2227, %v2226
        %v2234 = vpack.c.bf16 %v2229, %v2228
        %v2235 = vpack.c.bf16 %v2231, %v2230
        %v2236 = vld [vmem:[%s368] sm:$0xf]
        %v2237 = vld [vmem:[%s368 + $0x4] sm:$0xf]
        %v2238 = vld [vmem:[%s368 + $0x8] sm:$0xf]
        %v2239 = vld [vmem:[%s368 + $0xc] sm:$0xf]
        %v2240 = vld [vmem:[%s368 + $0x10] sm:$0xf]
        %v2241 = vld [vmem:[%s368 + $0x14] sm:$0xf]
        %v2242 = vld [vmem:[%s368 + $0x18] sm:$0xf]
        %v2243 = vld [vmem:[%s368 + $0x1c] sm:$0xf]
        %v2252 = vunpack.c.l.b16 %v2236
        %v2253 = vunpack.c.l.b16 %v2237
        %v2254 = vunpack.c.l.b16 %v2238
        %v2255 = vunpack.c.l.b16 %v2239
        %v2256 = vunpack.c.l.b16 %v2240
        %v2257 = vunpack.c.l.b16 %v2241
        %v2258 = vunpack.c.l.b16 %v2242
        %v2259 = vunpack.c.l.b16 %v2243
        %v2260 = vpack.c.b16 %v2253, %v2252
        %v2261 = vpack.c.b16 %v2255, %v2254
        %v2262 = vpack.c.b16 %v2257, %v2256
        %v2263 = vpack.c.b16 %v2259, %v2258
        %vm2268 = vcmask 523264
        %v2270 = vsel %vm2268, %v2232, 0
        %v2273 = vsel %vm2268, %v2233, 0
        %v2276 = vsel %vm2268, %v2234, 0
        %v2279 = vsel %vm2268, %v2235, 0
        %2281 = vmatprep.subr.bf16.mxu0 0
        %2282 = vmatpush1.bf16.msra.mxu0 0
        %2283 = vmatprep.subr.bf16.mxu0 0
        %2284 = vmatpush1.bf16.msra.mxu0 0
        %2285 = vmatprep.subr.bf16.mxu0 0
        %2286 = vmatpush1.bf16.msra.mxu0 0
        %2287 = vmatprep.subr.bf16.mxu0 0
        %2288 = vmatpush1.bf16.msra.mxu0 0
        %2289 = vmatprep.subr.bf16.mxu0 0
        %2290 = vmatpush1.bf16.msra.mxu0 %v2263
        %2291 = vmatprep.subr.bf16.mxu0 0
        %2292 = vmatpush1.bf16.msra.mxu0 %v2262
        %2293 = vmatprep.subr.bf16.mxu0 0
        %2294 = vmatpush1.bf16.msra.mxu0 %v2261
        %2295 = vmatprep.subr.bf16.mxu0 0
        %2296 = vmatpush1.bf16.msra.mxu0 %v2260
        %2297 = vmatprep.subr.bf16.mxu0 0
        %2298 = vmatpush2.bf16.msra.mxu0 0
        %2299 = vmatprep.subr.bf16.mxu0 0
        %2300 = vmatpush2.bf16.msra.mxu0 0
        %2301 = vmatprep.subr.bf16.mxu0 0
        %2302 = vmatpush2.bf16.msra.mxu0 0
        %2303 = vmatprep.subr.bf16.mxu0 0
        %2304 = vmatpush2.bf16.msra.mxu0 0
        %2305 = vmatprep.subr.bf16.mxu0 0
        %2306 = vmatpush2.bf16.msra.mxu0 0
        %2307 = vmatprep.subr.bf16.mxu0 0
        %2308 = vmatpush2.bf16.msra.mxu0 0
        %2309 = vmatprep.subr.bf16.mxu0 0
        %2310 = vmatpush2.bf16.msra.mxu0 0
        %2311 = vmatprep.subr.bf16.mxu0 0
        %2312 = vmatpush2.bf16.msra.mxu0 0
        %2313 = vmatprep.mubr.bf16.mxu0 0
        %2314 = vmatmul.mubr.bf16.gmra.mxu0 %v2270
        %v2315 = vpop.f32.mrf.mxu0
        %v2316 = vadd.f32 0.0, %v2315
        %v2317 = vpop.f32.mrf.mxu0
        %v2318 = vpop.f32.mrf.mxu0
        %v2319 = vadd.f32 0.0, %v2318
        %v2320 = vpop.f32.mrf.mxu0
        %2321 = vmatprep.mubr.bf16.mxu0 0
        %2322 = vmatmul.mubr.bf16.gmra.mxu0 %v2273
        %v2323 = vpop.f32.mrf.mxu0
        %v2324 = vadd.f32 0.0, %v2323
        %v2325 = vpop.f32.mrf.mxu0
        %v2326 = vpop.f32.mrf.mxu0
        %v2327 = vadd.f32 0.0, %v2326
        %v2328 = vpop.f32.mrf.mxu0
        %2329 = vmatprep.mubr.bf16.mxu0 0
        %2330 = vmatmul.mubr.bf16.gmra.mxu0 %v2276
        %v2331 = vpop.f32.mrf.mxu0
        %v2332 = vadd.f32 0.0, %v2331
        %v2333 = vpop.f32.mrf.mxu0
        %v2334 = vpop.f32.mrf.mxu0
        %v2335 = vadd.f32 0.0, %v2334
        %v2336 = vpop.f32.mrf.mxu0
        %2337 = vmatprep.mubr.bf16.mxu0 0
        %2338 = vmatmul.mubr.bf16.gmra.mxu0 %v2279
        %v2339 = vpop.f32.mrf.mxu0
        %v2340 = vadd.f32 0.0, %v2339
        %v2341 = vpop.f32.mrf.mxu0
        %v2342 = vpop.f32.mrf.mxu0
        %v2343 = vadd.f32 0.0, %v2342
        %v2344 = vpop.f32.mrf.mxu0
        %2345 = vdwg.mxu0
        %v2346 = vadd.f32 %v2216, %v2316
        %v2347 = vadd.f32 %v2217, %v2319
        %v2348 = vadd.f32 %v2218, %v2324
        %v2349 = vadd.f32 %v2219, %v2327
        %v2350 = vadd.f32 %v2220, %v2332
        %v2351 = vadd.f32 %v2221, %v2335
        %v2352 = vadd.f32 %v2222, %v2340
        %v2353 = vadd.f32 %v2223, %v2343
        %v2354 = vld [vmem:[%s364] sm:$0x1]
        %v2356 = vlaneseq
        %v2357 = vshrl.u32 %v2356, 7
        %v2358 = vsub.s32 0, %v2357
        %v2359 = vrot.slane %v2354, %v2358
        %v2361 = vadd.f32 %v2346, %v2359
        %v2362 = vadd.f32 %v2347, %v2359
        %v2363 = vadd.f32 %v2348, %v2359
        %v2364 = vadd.f32 %v2349, %v2359
        %v2365 = vadd.f32 %v2350, %v2359
        %v2366 = vadd.f32 %v2351, %v2359
        %v2367 = vadd.f32 %v2352, %v2359
        %v2368 = vadd.f32 %v2353, %v2359
        %2369 = vst [vmem:[%s352] sm:$0xff] %v2361
        %2370 = vst [vmem:[%s352 + $0x8] sm:$0xff] %v2362
        %2371 = vst [vmem:[%s352 + $0x10] sm:$0xff] %v2363
        %2372 = vst [vmem:[%s352 + $0x18] sm:$0xff] %v2364
        %2373 = vst [vmem:[%s352 + $0x20] sm:$0xff] %v2365
        %2374 = vst [vmem:[%s352 + $0x28] sm:$0xff] %v2366
        %2375 = vst [vmem:[%s352 + $0x30] sm:$0xff] %v2367
        %2376 = vst [vmem:[%s352 + $0x38] sm:$0xff] %v2368
        %s2377 = sand.u32 %s171, 1
        %s2378 = scalar_lea.sflag [#allocation4], %s2377
        %s2379 = sand.u32 %s171, 1
        %s2380 = smul.addr %s2379, 64
        %s2381 = scalar_lea.vmem [#allocation3], %s2380
        // Predicated region
        $region79: #{bottleneck_ir_forward.3} parent=73 // pred_check
          %p2382 = pneg %p181
        $region80: #{bottleneck_ir_forward.3} parent=73 // pred_check_branch
          %2384 = sbr.rel (%p2382) target = $region82
        $region81: #{bottleneck_ir_forward.3} parent=73 // pred_region
          %s2386 = ssub.s32 1024, 1024
          %2387 = vsyncadd %s2378, %s2386
          %s2388 = smul.addr %s24, 8
          %s2389 = sadd.s32 %s23, %s2388
          %s2390 = smul.addr %s2389, 128
          %s2391 = scalar_lea.hbm %s5, %s2390
          %s2392 = sshll.u32 %s2381, 4
          %s2393 = int_to_ptr.vmem [resolvable:$true] %s2392
          %2398 = dma.vmem_to_hbm [thread:$0]  %s2393, 1024, %s2391, %s2378, 128, 128, 8
        $region82: #{bottleneck_ir_forward.3} parent=73 // pred_fallthru
          _
      $region74: #{bottleneck_ir_forward.3} parent=5 // pred_fallthru
        _
      %p2399 = scmp.le.s32.totalorder 2, %s14
      // Predicated region
      $region83: #{bottleneck_ir_forward.3} parent=5 // pred_check
        %p2400 = pneg %p2399
      $region84: #{bottleneck_ir_forward.3} parent=5 // pred_check_branch
        %2402 = sbr.rel (%p2400) target = $region86
      $region85: #{bottleneck_ir_forward.3} parent=5 // pred_region
        %s2403 = ssub.s32 %s14, 2
        // Predicated region
        $region87: #{bottleneck_ir_forward.3} parent=85 // pred_check
          %p2404 = pneg %p187
        $region88: #{bottleneck_ir_forward.3} parent=85 // pred_check_branch
          %2406 = sbr.rel (%p2404) target = $region90
        $region89: #{bottleneck_ir_forward.3} parent=85 // pred_region
          %s2407 = sand.u32 %s172, 1
          %s2408 = scalar_lea.sflag [#allocation4], %s2407
          %s2409 = sand.u32 %s172, 1
          %s2410 = smul.addr %s2409, 64
          %s2411 = scalar_lea.vmem [#allocation3], %s2410
          %2412 = dma.done %s2408, 1024
        $region90: #{bottleneck_ir_forward.3} parent=85 // pred_fallthru
          _
      $region86: #{bottleneck_ir_forward.3} parent=5 // pred_fallthru
        _
    $region6: #{bottleneck_ir_forward.3} parent=1 // loop_footer
      %s18 = sadd.s32 1, %s14
    $region7: #{bottleneck_ir_forward.3} parent=1 // loop_footer_branch
      %13 = sbr.rel target = $region3
    $region8: #{bottleneck_ir_forward.3} parent=1 // loop_exit
      _
    %2413 = vsyncpa [#allocation4], 1
    %s2414 = scalar_lea.sflag [#allocation4], 1
    %2415 = vsyncpa %s2414, 1

// kernel: bottleneck_ir_forward.2
$region0: #{bottleneck_ir_forward.2}
  #allocation0 [shape = 'u32[]', space=smem, size = 0x4, offset = 0x4, fixed_abs, tag = 'smem constant byte address 0x4 - core index']
  #allocation1 [shape = 'u32[144,128]{1,0:T(1,128)}', space=vmem, size = 0x12000, scoped, tag = 'internal scratch']
  %s0 = inlined_call_operand.vmem [shape: bf16[2,18,18,64], index: 0, kind: input, shape index: {}]
  %s1 = inlined_call_operand.vmem [shape: bf16[9,64,128], index: 1, kind: input, shape index: {}]
  %s2 = inlined_call_operand.vmem [shape: f32[1,128], index: 2, kind: input, shape index: {}]
  %s3 = inlined_call_operand.vmem [shape: f32[1,128], index: 3, kind: input, shape index: {}]
  %s4 = inlined_call_operand.vmem [shape: bf16[2,18,18,128], index: 4, kind: output, shape index: {}]
  %s5 = sld [smem:[#allocation0]]
  $region49: #{bottleneck_ir_forward.2} parent=0
    _
  %s7 = ssub.s32 1, %s5
  %s8 = scalar_select 0, %s7, %s5
  loop: start=0, step=1, limit=4
  $region2: #{bottleneck_ir_forward.2} parent=0 // loop_pre_header
    _
  $region3: #{bottleneck_ir_forward.2} parent=0 // loop_header
    %s10 = sphi 0, %s14
    %p11 = scmp.ge.s32.totalorder %s10, 4
    %s17 = sphi 0, %s29
    %s18 = sphi 0, %s25
    %s19 = sphi 0, %s17
    %s20 = sphi 0, %s18
    %s21 = sphi 0, %s19
    %s22 = sphi 0, %s20
    %s32 = sphi 0, %s34
    %s35 = sphi 0, %s32
    %s36 = sphi 0, %s35
    %s52 = sphi 0, %s36
    %s58 = sphi 0, %s60
    %s61 = sphi 0, %s58
    %s62 = sphi 0, %s61
    %s78 = sphi 0, %s62
    %s84 = sphi 0, %s86
    %s87 = sphi 0, %s84
    %s88 = sphi 0, %s87
    %s104 = sphi 0, %s88
    %s110 = sphi 0, %s112
    %s113 = sphi 0, %s110
    %s114 = sphi 0, %s113
    %s130 = sphi 0, %s114
    %s138 = sphi 0, %s140
    %s141 = sphi 0, %s138
    %s142 = sphi 0, %s141
    %s158 = sphi 0, %s142
  $region4: #{bottleneck_ir_forward.2} parent=0 // loop_header_branch
    %13 = sbr.rel (%p11) target = $region8
  $region5: #{bottleneck_ir_forward.2} parent=0 // loop_body
    %s15 = ssub.s32 %s10, 1
    %s16 = ssub.s32 %s10, 2
    %s23 = sadd.s32 1, %s18
    %p24 = scmp.ge.s32.totalorder %s23, 2
    %s25 = scalar_select %p24, 0, %s23
    %s26 = sadd.s32 1, %s17
    %s27 = scalar_select %p24, %s26, %s17
    %p28 = scmp.ge.s32.totalorder %s27, 1
    %s29 = scalar_select %p28, 0, %s27
    %s30 = ssub.s32 %s18, %s25
    %p31 = scmp.eq.s32.totalorder %s30, 0
    %s33 = sadd.s32 %s32, 1
    %s34 = scalar_select %p31, %s32, %s33
    %p37 = pneg %p31
    %p38 = scmp.eq.s32.totalorder %s10, 1
    %p39 = por %p37, %p38
    %p40 = scmp.ne.s32.totalorder %s32, %s35
    %p41 = scmp.eq.s32.totalorder %s10, 0
    %p42 = por %p40, %p41
    %p43 = scmp.ne.s32.totalorder %s32, %s35
    %p44 = scmp.eq.s32.totalorder %s15, 1
    %p45 = por %p43, %p44
    %p46 = scmp.ne.s32.totalorder %s35, %s36
    %p47 = scmp.eq.s32.totalorder %s15, 0
    %p48 = por %p46, %p47
    %p49 = scmp.ne.s32.totalorder %s35, %s36
    %p50 = scmp.eq.s32.totalorder %s16, 1
    %p51 = por %p49, %p50
    %p53 = scmp.ne.s32.totalorder %s36, %s52
    %p54 = scmp.eq.s32.totalorder %s16, 0
    %p55 = por %p53, %p54
    %s56 = ssub.s32 %s17, %s29
    %p57 = scmp.eq.s32.totalorder %s56, 0
    %s59 = sadd.s32 %s58, 1
    %s60 = scalar_select %p57, %s58, %s59
    %p63 = pneg %p57
    %p64 = scmp.eq.s32.totalorder %s10, 1
    %p65 = por %p63, %p64
    %p66 = scmp.ne.s32.totalorder %s58, %s61
    %p67 = scmp.eq.s32.totalorder %s10, 0
    %p68 = por %p66, %p67
    %p69 = scmp.ne.s32.totalorder %s58, %s61
    %p70 = scmp.eq.s32.totalorder %s15, 1
    %p71 = por %p69, %p70
    %p72 = scmp.ne.s32.totalorder %s61, %s62
    %p73 = scmp.eq.s32.totalorder %s15, 0
    %p74 = por %p72, %p73
    %p75 = scmp.ne.s32.totalorder %s61, %s62
    %p76 = scmp.eq.s32.totalorder %s16, 1
    %p77 = por %p75, %p76
    %p79 = scmp.ne.s32.totalorder %s62, %s78
    %p80 = scmp.eq.s32.totalorder %s16, 0
    %p81 = por %p79, %p80
    %s82 = ssub.s32 %s17, %s29
    %p83 = scmp.eq.s32.totalorder %s82, 0
    %s85 = sadd.s32 %s84, 1
    %s86 = scalar_select %p83, %s84, %s85
    %p89 = pneg %p83
    %p90 = scmp.eq.s32.totalorder %s10, 1
    %p91 = por %p89, %p90
    %p92 = scmp.ne.s32.totalorder %s84, %s87
    %p93 = scmp.eq.s32.totalorder %s10, 0
    %p94 = por %p92, %p93
    %p95 = scmp.ne.s32.totalorder %s84, %s87
    %p96 = scmp.eq.s32.totalorder %s15, 1
    %p97 = por %p95, %p96
    %p98 = scmp.ne.s32.totalorder %s87, %s88
    %p99 = scmp.eq.s32.totalorder %s15, 0
    %p100 = por %p98, %p99
    %p101 = scmp.ne.s32.totalorder %s87, %s88
    %p102 = scmp.eq.s32.totalorder %s16, 1
    %p103 = por %p101, %p102
    %p105 = scmp.ne.s32.totalorder %s88, %s104
    %p106 = scmp.eq.s32.totalorder %s16, 0
    %p107 = por %p105, %p106
    %s108 = ssub.s32 %s17, %s29
    %p109 = scmp.eq.s32.totalorder %s108, 0
    %s111 = sadd.s32 %s110, 1
    %s112 = scalar_select %p109, %s110, %s111
    %p115 = pneg %p109
    %p116 = scmp.eq.s32.totalorder %s10, 1
    %p117 = por %p115, %p116
    %p118 = scmp.ne.s32.totalorder %s110, %s113
    %p119 = scmp.eq.s32.totalorder %s10, 0
    %p120 = por %p118, %p119
    %p121 = scmp.ne.s32.totalorder %s110, %s113
    %p122 = scmp.eq.s32.totalorder %s15, 1
    %p123 = por %p121, %p122
    %p124 = scmp.ne.s32.totalorder %s113, %s114
    %p125 = scmp.eq.s32.totalorder %s15, 0
    %p126 = por %p124, %p125
    %p127 = scmp.ne.s32.totalorder %s113, %s114
    %p128 = scmp.eq.s32.totalorder %s16, 1
    %p129 = por %p127, %p128
    %p131 = scmp.ne.s32.totalorder %s114, %s130
    %p132 = scmp.eq.s32.totalorder %s16, 0
    %p133 = por %p131, %p132
    %s134 = ssub.s32 %s18, %s25
    %s135 = ssub.s32 %s17, %s29
    %s136 = sor.u32 %s134, %s135
    %p137 = scmp.eq.s32.totalorder %s136, 0
    %s139 = sadd.s32 %s138, 1
    %s140 = scalar_select %p137, %s138, %s139
    %p143 = pneg %p137
    %p144 = scmp.eq.s32.totalorder %s10, 1
    %p145 = por %p143, %p144
    %p146 = scmp.ne.s32.totalorder %s138, %s141
    %p147 = scmp.eq.s32.totalorder %s10, 0
    %p148 = por %p146, %p147
    %p149 = scmp.ne.s32.totalorder %s138, %s141
    %p150 = scmp.eq.s32.totalorder %s15, 1
    %p151 = por %p149, %p150
    %p152 = scmp.ne.s32.totalorder %s141, %s142
    %p153 = scmp.eq.s32.totalorder %s15, 0
    %p154 = por %p152, %p153
    %p155 = scmp.ne.s32.totalorder %s141, %s142
    %p156 = scmp.eq.s32.totalorder %s16, 1
    %p157 = por %p155, %p156
    %p159 = scmp.ne.s32.totalorder %s142, %s158
    %p160 = scmp.eq.s32.totalorder %s16, 0
    %p161 = por %p159, %p160
    %p162 = scmp.le.s32.totalorder 1, %s10
    %p163 = scmp.lt.s32.totalorder %s10, 3
    %p164 = pnand %p162, %p163
    %p165 = pneg %p164
    // Predicated region
    $region9: #{bottleneck_ir_forward.2} parent=5 // pred_check
      _
    $region10: #{bottleneck_ir_forward.2} parent=5 // pred_check_branch
      %167 = sbr.rel (%p164) target = $region12
    $region11: #{bottleneck_ir_forward.2} parent=5 // pred_region
      %s168 = ssub.s32 %s10, 1
      // Predicated region
      $region13: #{bottleneck_ir_forward.2} parent=11 // pred_check
        %p169 = pneg %p74
      $region14: #{bottleneck_ir_forward.2} parent=11 // pred_check_branch
        %171 = sbr.rel (%p169) target = $region16
      $region15: #{bottleneck_ir_forward.2} parent=11 // pred_region
        %p172 = scmp.lt.s32.totalorder %s19, 0
        %s173 = scalar_select %p172, %s19, 0
        %s174 = smul.addr %s173, 4
        %s175 = scalar_lea.vmem %s1, %s174
      $region16: #{bottleneck_ir_forward.2} parent=11 // pred_fallthru
        _
      // Predicated region
      $region17: #{bottleneck_ir_forward.2} parent=11 // pred_check
        %p176 = pneg %p100
      $region18: #{bottleneck_ir_forward.2} parent=11 // pred_check_branch
        %178 = sbr.rel (%p176) target = $region20
      $region19: #{bottleneck_ir_forward.2} parent=11 // pred_region
        %p179 = scmp.lt.s32.totalorder %s19, 0
        %s180 = scalar_select %p179, %s19, 0
        %s181 = scalar_lea.vmem %s2, %s180
      $region20: #{bottleneck_ir_forward.2} parent=11 // pred_fallthru
        _
      // Predicated region
      $region21: #{bottleneck_ir_forward.2} parent=11 // pred_check
        %p182 = pneg %p126
      $region22: #{bottleneck_ir_forward.2} parent=11 // pred_check_branch
        %184 = sbr.rel (%p182) target = $region24
      $region23: #{bottleneck_ir_forward.2} parent=11 // pred_region
        %p185 = scmp.lt.s32.totalorder %s19, 0
        %s186 = scalar_select %p185, %s19, 0
        %s187 = scalar_lea.vmem %s3, %s186
      $region24: #{bottleneck_ir_forward.2} parent=11 // pred_fallthru
        _
    $region12: #{bottleneck_ir_forward.2} parent=5 // pred_fallthru
      _
    %p188 = scmp.lt.s32.totalorder %s10, 2
    // Predicated region
    $region25: #{bottleneck_ir_forward.2} parent=5 // pred_check
      %p189 = pneg %p188
    $region26: #{bottleneck_ir_forward.2} parent=5 // pred_check_branch
      %191 = sbr.rel (%p189) target = $region28
    $region27: #{bottleneck_ir_forward.2} parent=5 // pred_region
      // Predicated region
      $region29: #{bottleneck_ir_forward.2} parent=27 // pred_check
        %p192 = pneg %p42
      $region30: #{bottleneck_ir_forward.2} parent=27 // pred_check_branch
        %194 = sbr.rel (%p192) target = $region32
      $region31: #{bottleneck_ir_forward.2} parent=27 // pred_region
        %p195 = scmp.lt.s32.totalorder %s18, 1
        %s196 = scalar_select %p195, %s18, 1
        %s197 = smul.addr %s196, 54
        %s198 = smul.addr %s197, 4
        %s199 = scalar_lea.vmem %s0, %s198
      $region32: #{bottleneck_ir_forward.2} parent=27 // pred_fallthru
        _
    $region28: #{bottleneck_ir_forward.2} parent=5 // pred_fallthru
      _
    %p200 = scmp.le.s32.totalorder 1, %s10
    %p201 = scmp.lt.s32.totalorder %s10, 3
    %p202 = pnand %p200, %p201
    %p203 = pneg %p202
    // Predicated region
    $region33: #{bottleneck_ir_forward.2} parent=5 // pred_check
      _
    $region34: #{bottleneck_ir_forward.2} parent=5 // pred_check_branch
      %205 = sbr.rel (%p202) target = $region36
    $region35: #{bottleneck_ir_forward.2} parent=5 // pred_region
      %s206 = ssub.s32 %s10, 1
      %p207 = scmp.lt.s32.totalorder %s20, 1
      %s208 = scalar_select %p207, %s20, 1
      %s209 = smul.addr %s208, 54
      %s210 = smul.addr %s209, 4
      %s211 = scalar_lea.vmem %s0, %s210
      %p212 = pneg %p48
      %p213 = pneg %p45
      %p214 = scmp.lt.s32.totalorder %s19, 0
      %s215 = scalar_select %p214, %s19, 0
      %s216 = smul.addr %s215, 4
      %s217 = scalar_lea.vmem %s1, %s216
      %p218 = pneg %p74
      %p219 = pneg %p71
      %p220 = scmp.lt.s32.totalorder %s19, 0
      %s221 = scalar_select %p220, %s19, 0
      %s222 = scalar_lea.vmem %s2, %s221
      %p223 = pneg %p100
      %p224 = pneg %p97
      %p225 = scmp.lt.s32.totalorder %s19, 0
      %s226 = scalar_select %p225, %s19, 0
      %s227 = scalar_lea.vmem %s3, %s226
      %p228 = pneg %p126
      %p229 = pneg %p123
      %p230 = pneg %p154
      %p231 = pneg %p151
      %p232 = scmp.lt.s32.totalorder %s20, 1
      %s233 = scalar_select %p232, %s20, 1
      %p234 = scmp.lt.s32.totalorder %s19, 0
      %s235 = scalar_select %p234, %s19, 0
      %s236 = smul.addr %s233, 54
      %s237 = sadd.s32 %s235, %s236
      %s238 = smul.addr %s237, 4
      %s239 = scalar_lea.vmem %s4, %s238
      %p240 = scmp.lt.s32.totalorder %s20, 1
      %s241 = scalar_select %p240, %s20, 1
      %s242 = smul.addr %s241, 54
      %s243 = smul.addr %s242, 4
      %s244 = scalar_lea.vmem %s0, %s243
      %p245 = scmp.lt.s32.totalorder %s19, 0
      %s246 = scalar_select %p245, %s19, 0
      %s247 = smul.addr %s246, 4
      %s248 = scalar_lea.vmem %s1, %s247
      %p249 = scmp.lt.s32.totalorder %s19, 0
      %s250 = scalar_select %p249, %s19, 0
      %s251 = scalar_lea.vmem %s2, %s250
      %p252 = scmp.lt.s32.totalorder %s19, 0
      %s253 = scalar_select %p252, %s19, 0
      %s254 = scalar_lea.vmem %s3, %s253
      %p255 = scmp.lt.s32.totalorder %s20, 1
      %s256 = scalar_select %p255, %s20, 1
      %p257 = scmp.lt.s32.totalorder %s19, 0
      %s258 = scalar_select %p257, %s19, 0
      %s259 = smul.addr %s256, 54
      %s260 = sadd.s32 %s258, %s259
      %s261 = smul.addr %s260, 4
      %s262 = scalar_lea.vmem %s4, %s261
      %v264 = vld [vmem:[%s244] sm:$0xf]
      %v265 = vld [vmem:[%s244 + $0x4] sm:$0xf]
      %v266 = vld [vmem:[%s244 + $0xc] sm:$0xf]
      %v267 = vld [vmem:[%s244 + $0x10] sm:$0xf]
      %v268 = vld [vmem:[%s244 + $0x18] sm:$0xf]
      %v269 = vld [vmem:[%s244 + $0x1c] sm:$0xf]
      %v270 = vld [vmem:[%s244 + $0x24] sm:$0xf]
      %v271 = vld [vmem:[%s244 + $0x28] sm:$0xf]
      %v272 = vld [vmem:[%s244 + $0x30] sm:$0xf]
      %v273 = vld [vmem:[%s244 + $0x34] sm:$0xf]
      %v274 = vld [vmem:[%s244 + $0x3c] sm:$0xf]
      %v275 = vld [vmem:[%s244 + $0x40] sm:$0xf]
      %v276 = vld [vmem:[%s244 + $0x48] sm:$0xf]
      %v277 = vld [vmem:[%s244 + $0x4c] sm:$0xf]
      %v278 = vld [vmem:[%s244 + $0x54] sm:$0xf]
      %v279 = vld [vmem:[%s244 + $0x58] sm:$0xf]
      %v280 = vld [vmem:[%s244 + $0x60] sm:$0xf]
      %v281 = vld [vmem:[%s244 + $0x64] sm:$0xf]
      %v282 = vld [vmem:[%s244 + $0x6c] sm:$0xf]
      %v283 = vld [vmem:[%s244 + $0x70] sm:$0xf]
      %v284 = vld [vmem:[%s244 + $0x78] sm:$0xf]
      %v285 = vld [vmem:[%s244 + $0x7c] sm:$0xf]
      %v286 = vld [vmem:[%s244 + $0x84] sm:$0xf]
      %v287 = vld [vmem:[%s244 + $0x88] sm:$0xf]
      %v288 = vld [vmem:[%s244 + $0x90] sm:$0xf]
      %v289 = vld [vmem:[%s244 + $0x94] sm:$0xf]
      %v290 = vld [vmem:[%s244 + $0x9c] sm:$0xf]
      %v291 = vld [vmem:[%s244 + $0xa0] sm:$0xf]
      %v292 = vld [vmem:[%s244 + $0xa8] sm:$0xf]
      %v293 = vld [vmem:[%s244 + $0xac] sm:$0xf]
      %v294 = vld [vmem:[%s244 + $0xb4] sm:$0xf]
      %v295 = vld [vmem:[%s244 + $0xb8] sm:$0xf]
      %v296 = vld [vmem:[%s248] sm:$0xf]
      %v297 = vld [vmem:[%s248 + $0x4] sm:$0xf]
      %v298 = vld [vmem:[%s248 + $0x8] sm:$0xf]
      %v299 = vld [vmem:[%s248 + $0xc] sm:$0xf]
      %v300 = vld [vmem:[%s248 + $0x10] sm:$0xf]
      %v301 = vld [vmem:[%s248 + $0x14] sm:$0xf]
      %v302 = vld [vmem:[%s248 + $0x18] sm:$0xf]
      %v303 = vld [vmem:[%s248 + $0x1c] sm:$0xf]
      %v304 = vld [vmem:[%s244 + $0x8] sm:$0x1]
      %v305 = vld [vmem:[%s244 + $0x14] sm:$0x1]
      %v306 = vld [vmem:[%s244 + $0x20] sm:$0x1]
      %v307 = vld [vmem:[%s244 + $0x2c] sm:$0x1]
      %v308 = vld [vmem:[%s244 + $0x38] sm:$0x1]
      %v309 = vld [vmem:[%s244 + $0x44] sm:$0x1]
      %v310 = vld [vmem:[%s244 + $0x50] sm:$0x1]
      %v311 = vld [vmem:[%s244 + $0x5c] sm:$0x1]
      %v312 = vld [vmem:[%s244 + $0x68] sm:$0x1]
      %v313 = vld [vmem:[%s244 + $0x74] sm:$0x1]
      %v314 = vld [vmem:[%s244 + $0x80] sm:$0x1]
      %v315 = vld [vmem:[%s244 + $0x8c] sm:$0x1]
      %v316 = vld [vmem:[%s244 + $0x98] sm:$0x1]
      %v317 = vld [vmem:[%s244 + $0xa4] sm:$0x1]
      %v318 = vld [vmem:[%s244 + $0xb0] sm:$0x1]
      %v319 = vld [vmem:[%s244 + $0xbc] sm:$0x1]
      %vm320 = vsmask.f32 3328
      %vm321 = vsmask.f32 7440
      %vm322 = vmor %vm320, %vm321
      %v324 = vshrl.u32 %v264, 16
      %v326 = vrot.slane %v324, 4
      %v327 = vshll.u32 %v264, 16
      %v329 = vrot.slane %v327, 5
      %v330 = vor.u32 %v326, %v329
      %v331 = vrot.slane %v330, 4
      %v333 = vshll.u32 %v265, 16
      %v335 = vrot.slane %v333, 5
      %v336 = vsel %vm322, %v331, %v335
      %v337 = vshrl.u32 %v265, 16
      %v339 = vrot.slane %v337, 4
      %v340 = vor.u32 %v339, %v335
      %v341 = vrot.slane %v340, 4
      %v343 = vshll.u32 %v304, 16
      %v345 = vrot.slane %v343, 5
      %v346 = vsel %vm322, %v341, %v345
      %v348 = vshrl.u32 %v266, 16
      %v350 = vrot.slane %v348, 4
      %v351 = vshll.u32 %v266, 16
      %v353 = vrot.slane %v351, 5
      %v354 = vor.u32 %v350, %v353
      %v355 = vrot.slane %v354, 4
      %v357 = vshll.u32 %v267, 16
      %v359 = vrot.slane %v357, 5
      %v360 = vsel %vm322, %v355, %v359
      %v361 = vshrl.u32 %v267, 16
      %v363 = vrot.slane %v361, 4
      %v364 = vor.u32 %v363, %v359
      %v365 = vrot.slane %v364, 4
      %v367 = vshll.u32 %v305, 16
      %v369 = vrot.slane %v367, 5
      %v370 = vsel %vm322, %v365, %v369
      %v372 = vshrl.u32 %v268, 16
      %v374 = vrot.slane %v372, 4
      %v375 = vshll.u32 %v268, 16
      %v377 = vrot.slane %v375, 5
      %v378 = vor.u32 %v374, %v377
      %v379 = vrot.slane %v378, 4
      %v381 = vshll.u32 %v269, 16
      %v383 = vrot.slane %v381, 5
      %v384 = vsel %vm322, %v379, %v383
      %v385 = vshrl.u32 %v269, 16
      %v387 = vrot.slane %v385, 4
      %v388 = vor.u32 %v387, %v383
      %v389 = vrot.slane %v388, 4
      %v391 = vshll.u32 %v306, 16
      %v393 = vrot.slane %v391, 5
      %v394 = vsel %vm322, %v389, %v393
      %v396 = vshrl.u32 %v270, 16
      %v398 = vrot.slane %v396, 4
      %v399 = vshll.u32 %v270, 16
      %v401 = vrot.slane %v399, 5
      %v402 = vor.u32 %v398, %v401
      %v403 = vrot.slane %v402, 4
      %v405 = vshll.u32 %v271, 16
      %v407 = vrot.slane %v405, 5
      %v408 = vsel %vm322, %v403, %v407
      %v409 = vshrl.u32 %v271, 16
      %v411 = vrot.slane %v409, 4
      %v412 = vor.u32 %v411, %v407
      %v413 = vrot.slane %v412, 4
      %v415 = vshll.u32 %v307, 16
      %v417 = vrot.slane %v415, 5
      %v418 = vsel %vm322, %v413, %v417
      %v420 = vshrl.u32 %v272, 16
      %v422 = vrot.slane %v420, 4
      %v423 = vshll.u32 %v272, 16
      %v425 = vrot.slane %v423, 5
      %v426 = vor.u32 %v422, %v425
      %v427 = vrot.slane %v426, 4
      %v429 = vshll.u32 %v273, 16
      %v431 = vrot.slane %v429, 5
      %v432 = vsel %vm322, %v427, %v431
      %v433 = vshrl.u32 %v273, 16
      %v435 = vrot.slane %v433, 4
      %v436 = vor.u32 %v435, %v431
      %v437 = vrot.slane %v436, 4
      %v439 = vshll.u32 %v308, 16
      %v441 = vrot.slane %v439, 5
      %v442 = vsel %vm322, %v437, %v441
      %v444 = vshrl.u32 %v274, 16
      %v446 = vrot.slane %v444, 4
      %v447 = vshll.u32 %v274, 16
      %v449 = vrot.slane %v447, 5
      %v450 = vor.u32 %v446, %v449
      %v451 = vrot.slane %v450, 4
      %v453 = vshll.u32 %v275, 16
      %v455 = vrot.slane %v453, 5
      %v456 = vsel %vm322, %v451, %v455
      %v457 = vshrl.u32 %v275, 16
      %v459 = vrot.slane %v457, 4
      %v460 = vor.u32 %v459, %v455
      %v461 = vrot.slane %v460, 4
      %v463 = vshll.u32 %v309, 16
      %v465 = vrot.slane %v463, 5
      %v466 = vsel %vm322, %v461, %v465
      %v468 = vshrl.u32 %v276, 16
      %v470 = vrot.slane %v468, 4
      %v471 = vshll.u32 %v276, 16
      %v473 = vrot.slane %v471, 5
      %v474 = vor.u32 %v470, %v473
      %v475 = vrot.slane %v474, 4
      %v477 = vshll.u32 %v277, 16
      %v479 = vrot.slane %v477, 5
      %v480 = vsel %vm322, %v475, %v479
      %v481 = vshrl.u32 %v277, 16
      %v483 = vrot.slane %v481, 4
      %v484 = vor.u32 %v483, %v479
      %v485 = vrot.slane %v484, 4
      %v487 = vshll.u32 %v310, 16
      %v489 = vrot.slane %v487, 5
      %v490 = vsel %vm322, %v485, %v489
      %v492 = vshrl.u32 %v278, 16
      %v494 = vrot.slane %v492, 4
      %v495 = vshll.u32 %v278, 16
      %v497 = vrot.slane %v495, 5
      %v498 = vor.u32 %v494, %v497
      %v499 = vrot.slane %v498, 4
      %v501 = vshll.u32 %v279, 16
      %v503 = vrot.slane %v501, 5
      %v504 = vsel %vm322, %v499, %v503
      %v505 = vshrl.u32 %v279, 16
      %v507 = vrot.slane %v505, 4
      %v508 = vor.u32 %v507, %v503
      %v509 = vrot.slane %v508, 4
      %v511 = vshll.u32 %v311, 16
      %v513 = vrot.slane %v511, 5
      %v514 = vsel %vm322, %v509, %v513
      %v516 = vshrl.u32 %v280, 16
      %v518 = vrot.slane %v516, 4
      %v519 = vshll.u32 %v280, 16
      %v521 = vrot.slane %v519, 5
      %v522 = vor.u32 %v518, %v521
      %v523 = vrot.slane %v522, 4
      %v525 = vshll.u32 %v281, 16
      %v527 = vrot.slane %v525, 5
      %v528 = vsel %vm322, %v523, %v527
      %v529 = vshrl.u32 %v281, 16
      %v531 = vrot.slane %v529, 4
      %v532 = vor.u32 %v531, %v527
      %v533 = vrot.slane %v532, 4
      %v535 = vshll.u32 %v312, 16
      %v537 = vrot.slane %v535, 5
      %v538 = vsel %vm322, %v533, %v537
      %v540 = vshrl.u32 %v282, 16
      %v542 = vrot.slane %v540, 4
      %v543 = vshll.u32 %v282, 16
      %v545 = vrot.slane %v543, 5
      %v546 = vor.u32 %v542, %v545
      %v547 = vrot.slane %v546, 4
      %v549 = vshll.u32 %v283, 16
      %v551 = vrot.slane %v549, 5
      %v552 = vsel %vm322, %v547, %v551
      %v553 = vshrl.u32 %v283, 16
      %v555 = vrot.slane %v553, 4
      %v556 = vor.u32 %v555, %v551
      %v557 = vrot.slane %v556, 4
      %v559 = vshll.u32 %v313, 16
      %v561 = vrot.slane %v559, 5
      %v562 = vsel %vm322, %v557, %v561
      %v564 = vshrl.u32 %v284, 16
      %v566 = vrot.slane %v564, 4
      %v567 = vshll.u32 %v284, 16
      %v569 = vrot.slane %v567, 5
      %v570 = vor.u32 %v566, %v569
      %v571 = vrot.slane %v570, 4
      %v573 = vshll.u32 %v285, 16
      %v575 = vrot.slane %v573, 5
      %v576 = vsel %vm322, %v571, %v575
      %v577 = vshrl.u32 %v285, 16
      %v579 = vrot.slane %v577, 4
      %v580 = vor.u32 %v579, %v575
      %v581 = vrot.slane %v580, 4
      %v583 = vshll.u32 %v314, 16
      %v585 = vrot.slane %v583, 5
      %v586 = vsel %vm322, %v581, %v585
      %v588 = vshrl.u32 %v286, 16
      %v590 = vrot.slane %v588, 4
      %v591 = vshll.u32 %v286, 16
      %v593 = vrot.slane %v591, 5
      %v594 = vor.u32 %v590, %v593
      %v595 = vrot.slane %v594, 4
      %v597 = vshll.u32 %v287, 16
      %v599 = vrot.slane %v597, 5
      %v600 = vsel %vm322, %v595, %v599
      %v601 = vshrl.u32 %v287, 16
      %v603 = vrot.slane %v601, 4
      %v604 = vor.u32 %v603, %v599
      %v605 = vrot.slane %v604, 4
      %v607 = vshll.u32 %v315, 16
      %v609 = vrot.slane %v607, 5
      %v610 = vsel %vm322, %v605, %v609
      %v612 = vshrl.u32 %v288, 16
      %v614 = vrot.slane %v612, 4
      %v615 = vshll.u32 %v288, 16
      %v617 = vrot.slane %v615, 5
      %v618 = vor.u32 %v614, %v617
      %v619 = vrot.slane %v618, 4
      %v621 = vshll.u32 %v289, 16
      %v623 = vrot.slane %v621, 5
      %v624 = vsel %vm322, %v619, %v623
      %v625 = vshrl.u32 %v289, 16
      %v627 = vrot.slane %v625, 4
      %v628 = vor.u32 %v627, %v623
      %v629 = vrot.slane %v628, 4
      %v631 = vshll.u32 %v316, 16
      %v633 = vrot.slane %v631, 5
      %v634 = vsel %vm322, %v629, %v633
      %v636 = vshrl.u32 %v290, 16
      %v638 = vrot.slane %v636, 4
      %v639 = vshll.u32 %v290, 16
      %v641 = vrot.slane %v639, 5
      %v642 = vor.u32 %v638, %v641
      %v643 = vrot.slane %v642, 4
      %v645 = vshll.u32 %v291, 16
      %v647 = vrot.slane %v645, 5
      %v648 = vsel %vm322, %v643, %v647
      %v649 = vshrl.u32 %v291, 16
      %v651 = vrot.slane %v649, 4
      %v652 = vor.u32 %v651, %v647
      %v653 = vrot.slane %v652, 4
      %v655 = vshll.u32 %v317, 16
      %v657 = vrot.slane %v655, 5
      %v658 = vsel %vm322, %v653, %v657
      %v660 = vshrl.u32 %v292, 16
      %v662 = vrot.slane %v660, 4
      %v663 = vshll.u32 %v292, 16
      %v665 = vrot.slane %v663, 5
      %v666 = vor.u32 %v662, %v665
      %v667 = vrot.slane %v666, 4
      %v669 = vshll.u32 %v293, 16
      %v671 = vrot.slane %v669, 5
      %v672 = vsel %vm322, %v667, %v671
      %v673 = vshrl.u32 %v293, 16
      %v675 = vrot.slane %v673, 4
      %v676 = vor.u32 %v675, %v671
      %v677 = vrot.slane %v676, 4
      %v679 = vshll.u32 %v318, 16
      %v681 = vrot.slane %v679, 5
      %v682 = vsel %vm322, %v677, %v681
      %v684 = vshrl.u32 %v294, 16
      %v686 = vrot.slane %v684, 4
      %v687 = vshll.u32 %v294, 16
      %v689 = vrot.slane %v687, 5
      %v690 = vor.u32 %v686, %v689
      %v691 = vrot.slane %v690, 4
      %v693 = vshll.u32 %v295, 16
      %v695 = vrot.slane %v693, 5
      %v696 = vsel %vm322, %v691, %v695
      %v697 = vshrl.u32 %v295, 16
      %v699 = vrot.slane %v697, 4
      %v700 = vor.u32 %v699, %v695
      %v701 = vrot.slane %v700, 4
      %v703 = vshll.u32 %v319, 16
      %v705 = vrot.slane %v703, 5
      %v706 = vsel %vm322, %v701, %v705
      %s707 = scalar_lea.vmem %s248, 32
      %v708 = vld [vmem:[%s707] sm:$0xf]
      %v709 = vld [vmem:[%s707 + $0x4] sm:$0xf]
      %v710 = vld [vmem:[%s707 + $0x8] sm:$0xf]
      %v711 = vld [vmem:[%s707 + $0xc] sm:$0xf]
      %v712 = vld [vmem:[%s707 + $0x10] sm:$0xf]
      %v713 = vld [vmem:[%s707 + $0x14] sm:$0xf]
      %v714 = vld [vmem:[%s707 + $0x18] sm:$0xf]
      %v715 = vld [vmem:[%s707 + $0x1c] sm:$0xf]
      %v716 = vunpack.c.l.b16 %v336
      %v717 = vunpack.c.l.b16 %v346
      %v718 = vunpack.c.l.b16 %v360
      %v719 = vunpack.c.l.b16 %v370
      %v720 = vunpack.c.l.b16 %v384
      %v721 = vunpack.c.l.b16 %v394
      %v722 = vunpack.c.l.b16 %v408
      %v723 = vunpack.c.l.b16 %v418
      %v724 = vunpack.c.l.b16 %v432
      %v725 = vunpack.c.l.b16 %v442
      %v726 = vunpack.c.l.b16 %v456
      %v727 = vunpack.c.l.b16 %v466
      %v728 = vunpack.c.l.b16 %v480
      %v729 = vunpack.c.l.b16 %v490
      %v730 = vunpack.c.l.b16 %v504
      %v731 = vunpack.c.l.b16 %v514
      %v732 = vunpack.c.l.b16 %v528
      %v733 = vunpack.c.l.b16 %v538
      %v734 = vunpack.c.l.b16 %v552
      %v735 = vunpack.c.l.b16 %v562
      %v736 = vunpack.c.l.b16 %v576
      %v737 = vunpack.c.l.b16 %v586
      %v738 = vunpack.c.l.b16 %v600
      %v739 = vunpack.c.l.b16 %v610
      %v740 = vunpack.c.l.b16 %v624
      %v741 = vunpack.c.l.b16 %v634
      %v742 = vunpack.c.l.b16 %v648
      %v743 = vunpack.c.l.b16 %v658
      %v744 = vunpack.c.l.b16 %v672
      %v745 = vunpack.c.l.b16 %v682
      %v746 = vunpack.c.l.b16 %v696
      %v747 = vunpack.c.l.b16 %v706
      %v748 = vpack.c.b16 %v717, %v716
      %v749 = vpack.c.b16 %v719, %v718
      %v750 = vpack.c.b16 %v721, %v720
      %v751 = vpack.c.b16 %v723, %v722
      %v752 = vpack.c.b16 %v725, %v724
      %v753 = vpack.c.b16 %v727, %v726
      %v754 = vpack.c.b16 %v729, %v728
      %v755 = vpack.c.b16 %v731, %v730
      %v756 = vpack.c.b16 %v733, %v732
      %v757 = vpack.c.b16 %v735, %v734
      %v758 = vpack.c.b16 %v737, %v736
      %v759 = vpack.c.b16 %v739, %v738
      %v760 = vpack.c.b16 %v741, %v740
      %v761 = vpack.c.b16 %v743, %v742
      %v762 = vpack.c.b16 %v745, %v744
      %v763 = vpack.c.b16 %v747, %v746
      %v772 = vunpack.c.l.b16 %v708
      %v773 = vunpack.c.l.b16 %v709
      %v774 = vunpack.c.l.b16 %v710
      %v775 = vunpack.c.l.b16 %v711
      %v776 = vunpack.c.l.b16 %v712
      %v777 = vunpack.c.l.b16 %v713
      %v778 = vunpack.c.l.b16 %v714
      %v779 = vunpack.c.l.b16 %v715
      %v780 = vpack.c.b16 %v773, %v772
      %v781 = vpack.c.b16 %v775, %v774
      %v782 = vpack.c.b16 %v777, %v776
      %v783 = vpack.c.b16 %v779, %v778
      %vm788 = vcmask 523264
      %v790 = vsel %vm788, %v748, 0
      %v793 = vsel %vm788, %v749, 0
      %v796 = vsel %vm788, %v750, 0
      %v799 = vsel %vm788, %v751, 0
      %v802 = vsel %vm788, %v752, 0
      %v805 = vsel %vm788, %v753, 0
      %v808 = vsel %vm788, %v754, 0
      %v811 = vsel %vm788, %v755, 0
      %v814 = vsel %vm788, %v756, 0
      %v817 = vsel %vm788, %v757, 0
      %v820 = vsel %vm788, %v758, 0
      %v823 = vsel %vm788, %v759, 0
      %v826 = vsel %vm788, %v760, 0
      %v829 = vsel %vm788, %v761, 0
      %v832 = vsel %vm788, %v762, 0
      %v835 = vsel %vm788, %v763, 0
      %837 = vmatprep.subr.bf16.mxu0 0
      %838 = vmatpush1.bf16.msra.mxu0 0
      %839 = vmatprep.subr.bf16.mxu0 0
      %840 = vmatpush1.bf16.msra.mxu0 0
      %841 = vmatprep.subr.bf16.mxu0 0
      %842 = vmatpush1.bf16.msra.mxu0 0
      %843 = vmatprep.subr.bf16.mxu0 0
      %844 = vmatpush1.bf16.msra.mxu0 0
      %845 = vmatprep.subr.bf16.mxu0 0
      %846 = vmatpush1.bf16.msra.mxu0 %v783
      %847 = vmatprep.subr.bf16.mxu0 0
      %848 = vmatpush1.bf16.msra.mxu0 %v782
      %849 = vmatprep.subr.bf16.mxu0 0
      %850 = vmatpush1.bf16.msra.mxu0 %v781
      %851 = vmatprep.subr.bf16.mxu0 0
      %852 = vmatpush1.bf16.msra.mxu0 %v780
      %853 = vmatprep.subr.bf16.mxu0 0
      %854 = vmatpush2.bf16.msra.mxu0 0
      %855 = vmatprep.subr.bf16.mxu0 0
      %856 = vmatpush2.bf16.msra.mxu0 0
      %857 = vmatprep.subr.bf16.mxu0 0
      %858 = vmatpush2.bf16.msra.mxu0 0
      %859 = vmatprep.subr.bf16.mxu0 0
      %860 = vmatpush2.bf16.msra.mxu0 0
      %861 = vmatprep.subr.bf16.mxu0 0
      %862 = vmatpush2.bf16.msra.mxu0 0
      %863 = vmatprep.subr.bf16.mxu0 0
      %864 = vmatpush2.bf16.msra.mxu0 0
      %865 = vmatprep.subr.bf16.mxu0 0
      %866 = vmatpush2.bf16.msra.mxu0 0
      %867 = vmatprep.subr.bf16.mxu0 0
      %868 = vmatpush2.bf16.msra.mxu0 0
      %869 = vmatprep.mubr.bf16.mxu0 0
      %870 = vmatmul.mubr.bf16.gmra.mxu0 %v790
      %v871 = vpop.f32.mrf.mxu0
      %v872 = vadd.f32 0.0, %v871
      %v873 = vpop.f32.mrf.mxu0
      %v874 = vpop.f32.mrf.mxu0
      %v875 = vadd.f32 0.0, %v874
      %v876 = vpop.f32.mrf.mxu0
      %877 = vmatprep.mubr.bf16.mxu0 0
      %878 = vmatmul.mubr.bf16.gmra.mxu0 %v793
      %v879 = vpop.f32.mrf.mxu0
      %v880 = vadd.f32 0.0, %v879
      %v881 = vpop.f32.mrf.mxu0
      %v882 = vpop.f32.mrf.mxu0
      %v883 = vadd.f32 0.0, %v882
      %v884 = vpop.f32.mrf.mxu0
      %885 = vmatprep.mubr.bf16.mxu0 0
      %886 = vmatmul.mubr.bf16.gmra.mxu0 %v796
      %v887 = vpop.f32.mrf.mxu0
      %v888 = vadd.f32 0.0, %v887
      %v889 = vpop.f32.mrf.mxu0
      %v890 = vpop.f32.mrf.mxu0
      %v891 = vadd.f32 0.0, %v890
      %v892 = vpop.f32.mrf.mxu0
      %893 = vmatprep.mubr.bf16.mxu0 0
      %894 = vmatmul.mubr.bf16.gmra.mxu0 %v799
      %v895 = vpop.f32.mrf.mxu0
      %v896 = vadd.f32 0.0, %v895
      %v897 = vpop.f32.mrf.mxu0
      %v898 = vpop.f32.mrf.mxu0
      %v899 = vadd.f32 0.0, %v898
      %v900 = vpop.f32.mrf.mxu0
      %901 = vmatprep.mubr.bf16.mxu0 0
      %902 = vmatmul.mubr.bf16.gmra.mxu0 %v802
      %v903 = vpop.f32.mrf.mxu0
      %v904 = vadd.f32 0.0, %v903
      %v905 = vpop.f32.mrf.mxu0
      %v906 = vpop.f32.mrf.mxu0
      %v907 = vadd.f32 0.0, %v906
      %v908 = vpop.f32.mrf.mxu0
      %909 = vmatprep.mubr.bf16.mxu0 0
      %910 = vmatmul.mubr.bf16.gmra.mxu0 %v805
      %v911 = vpop.f32.mrf.mxu0
      %v912 = vadd.f32 0.0, %v911
      %v913 = vpop.f32.mrf.mxu0
      %v914 = vpop.f32.mrf.mxu0
      %v915 = vadd.f32 0.0, %v914
      %v916 = vpop.f32.mrf.mxu0
      %917 = vmatprep.mubr.bf16.mxu0 0
      %918 = vmatmul.mubr.bf16.gmra.mxu0 %v808
      %v919 = vpop.f32.mrf.mxu0
      %v920 = vadd.f32 0.0, %v919
      %v921 = vpop.f32.mrf.mxu0
      %v922 = vpop.f32.mrf.mxu0
      %v923 = vadd.f32 0.0, %v922
      %v924 = vpop.f32.mrf.mxu0
      %925 = vmatprep.mubr.bf16.mxu0 0
      %926 = vmatmul.mubr.bf16.gmra.mxu0 %v811
      %v927 = vpop.f32.mrf.mxu0
      %v928 = vadd.f32 0.0, %v927
      %v929 = vpop.f32.mrf.mxu0
      %v930 = vpop.f32.mrf.mxu0
      %v931 = vadd.f32 0.0, %v930
      %v932 = vpop.f32.mrf.mxu0
      %933 = vmatprep.mubr.bf16.mxu0 0
      %934 = vmatmul.mubr.bf16.gmra.mxu0 %v814
      %v935 = vpop.f32.mrf.mxu0
      %v936 = vadd.f32 0.0, %v935
      %v937 = vpop.f32.mrf.mxu0
      %v938 = vpop.f32.mrf.mxu0
      %v939 = vadd.f32 0.0, %v938
      %v940 = vpop.f32.mrf.mxu0
      %941 = vmatprep.mubr.bf16.mxu0 0
      %942 = vmatmul.mubr.bf16.gmra.mxu0 %v817
      %v943 = vpop.f32.mrf.mxu0
      %v944 = vadd.f32 0.0, %v943
      %v945 = vpop.f32.mrf.mxu0
      %v946 = vpop.f32.mrf.mxu0
      %v947 = vadd.f32 0.0, %v946
      %v948 = vpop.f32.mrf.mxu0
      %949 = vmatprep.mubr.bf16.mxu0 0
      %950 = vmatmul.mubr.bf16.gmra.mxu0 %v820
      %v951 = vpop.f32.mrf.mxu0
      %v952 = vadd.f32 0.0, %v951
      %v953 = vpop.f32.mrf.mxu0
      %v954 = vpop.f32.mrf.mxu0
      %v955 = vadd.f32 0.0, %v954
      %v956 = vpop.f32.mrf.mxu0
      %957 = vmatprep.mubr.bf16.mxu0 0
      %958 = vmatmul.mubr.bf16.gmra.mxu0 %v823
      %v959 = vpop.f32.mrf.mxu0
      %v960 = vadd.f32 0.0, %v959
      %v961 = vpop.f32.mrf.mxu0
      %v962 = vpop.f32.mrf.mxu0
      %v963 = vadd.f32 0.0, %v962
      %v964 = vpop.f32.mrf.mxu0
      %965 = vmatprep.mubr.bf16.mxu0 0
      %966 = vmatmul.mubr.bf16.gmra.mxu0 %v826
      %v967 = vpop.f32.mrf.mxu0
      %v968 = vadd.f32 0.0, %v967
      %v969 = vpop.f32.mrf.mxu0
      %v970 = vpop.f32.mrf.mxu0
      %v971 = vadd.f32 0.0, %v970
      %v972 = vpop.f32.mrf.mxu0
      %973 = vmatprep.mubr.bf16.mxu0 0
      %974 = vmatmul.mubr.bf16.gmra.mxu0 %v829
      %v975 = vpop.f32.mrf.mxu0
      %v976 = vadd.f32 0.0, %v975
      %v977 = vpop.f32.mrf.mxu0
      %v978 = vpop.f32.mrf.mxu0
      %v979 = vadd.f32 0.0, %v978
      %v980 = vpop.f32.mrf.mxu0
      %981 = vmatprep.mubr.bf16.mxu0 0
      %982 = vmatmul.mubr.bf16.gmra.mxu0 %v832
      %v983 = vpop.f32.mrf.mxu0
      %v984 = vadd.f32 0.0, %v983
      %v985 = vpop.f32.mrf.mxu0
      %v986 = vpop.f32.mrf.mxu0
      %v987 = vadd.f32 0.0, %v986
      %v988 = vpop.f32.mrf.mxu0
      %989 = vmatprep.mubr.bf16.mxu0 0
      %990 = vmatmul.mubr.bf16.gmra.mxu0 %v835
      %v991 = vpop.f32.mrf.mxu0
      %v992 = vadd.f32 0.0, %v991
      %v993 = vpop.f32.mrf.mxu0
      %v994 = vpop.f32.mrf.mxu0
      %v995 = vadd.f32 0.0, %v994
      %v996 = vpop.f32.mrf.mxu0
      %997 = vdwg.mxu0
      %v1030 = vunpack.c.l.b16 %v264
      %v1031 = vunpack.c.l.b16 %v265
      %v1032 = vunpack.c.l.b16 %v266
      %v1033 = vunpack.c.l.b16 %v267
      %v1034 = vunpack.c.l.b16 %v268
      %v1035 = vunpack.c.l.b16 %v269
      %v1036 = vunpack.c.l.b16 %v270
      %v1037 = vunpack.c.l.b16 %v271
      %v1038 = vunpack.c.l.b16 %v272
      %v1039 = vunpack.c.l.b16 %v273
      %v1040 = vunpack.c.l.b16 %v274
      %v1041 = vunpack.c.l.b16 %v275
      %v1042 = vunpack.c.l.b16 %v276
      %v1043 = vunpack.c.l.b16 %v277
      %v1044 = vunpack.c.l.b16 %v278
      %v1045 = vunpack.c.l.b16 %v279
      %v1046 = vunpack.c.l.b16 %v280
      %v1047 = vunpack.c.l.b16 %v281
      %v1048 = vunpack.c.l.b16 %v282
      %v1049 = vunpack.c.l.b16 %v283
      %v1050 = vunpack.c.l.b16 %v284
      %v1051 = vunpack.c.l.b16 %v285
      %v1052 = vunpack.c.l.b16 %v286
      %v1053 = vunpack.c.l.b16 %v287
      %v1054 = vunpack.c.l.b16 %v288
      %v1055 = vunpack.c.l.b16 %v289
      %v1056 = vunpack.c.l.b16 %v290
      %v1057 = vunpack.c.l.b16 %v291
      %v1058 = vunpack.c.l.b16 %v292
      %v1059 = vunpack.c.l.b16 %v293
      %v1060 = vunpack.c.l.b16 %v294
      %v1061 = vunpack.c.l.b16 %v295
      %v1062 = vpack.c.b16 %v1031, %v1030
      %v1063 = vpack.c.b16 %v1033, %v1032
      %v1064 = vpack.c.b16 %v1035, %v1034
      %v1065 = vpack.c.b16 %v1037, %v1036
      %v1066 = vpack.c.b16 %v1039, %v1038
      %v1067 = vpack.c.b16 %v1041, %v1040
      %v1068 = vpack.c.b16 %v1043, %v1042
      %v1069 = vpack.c.b16 %v1045, %v1044
      %v1070 = vpack.c.b16 %v1047, %v1046
      %v1071 = vpack.c.b16 %v1049, %v1048
      %v1072 = vpack.c.b16 %v1051, %v1050
      %v1073 = vpack.c.b16 %v1053, %v1052
      %v1074 = vpack.c.b16 %v1055, %v1054
      %v1075 = vpack.c.b16 %v1057, %v1056
      %v1076 = vpack.c.b16 %v1059, %v1058
      %v1077 = vpack.c.b16 %v1061, %v1060
      %v1086 = vunpack.c.l.b16 %v296
      %v1087 = vunpack.c.l.b16 %v297
      %v1088 = vunpack.c.l.b16 %v298
      %v1089 = vunpack.c.l.b16 %v299
      %v1090 = vunpack.c.l.b16 %v300
      %v1091 = vunpack.c.l.b16 %v301
      %v1092 = vunpack.c.l.b16 %v302
      %v1093 = vunpack.c.l.b16 %v303
      %v1094 = vpack.c.b16 %v1087, %v1086
      %v1095 = vpack.c.b16 %v1089, %v1088
      %v1096 = vpack.c.b16 %v1091, %v1090
      %v1097 = vpack.c.b16 %v1093, %v1092
      %v1103 = vsel %vm788, %v1062, 0
      %v1106 = vsel %vm788, %v1063, 0
      %v1109 = vsel %vm788, %v1064, 0
      %v1112 = vsel %vm788, %v1065, 0
      %v1115 = vsel %vm788, %v1066, 0
      %v1118 = vsel %vm788, %v1067, 0
      %v1121 = vsel %vm788, %v1068, 0
      %v1124 = vsel %vm788, %v1069, 0
      %v1127 = vsel %vm788, %v1070, 0
      %v1130 = vsel %vm788, %v1071, 0
      %v1133 = vsel %vm788, %v1072, 0
      %v1136 = vsel %vm788, %v1073, 0
      %v1139 = vsel %vm788, %v1074, 0
      %v1142 = vsel %vm788, %v1075, 0
      %v1145 = vsel %vm788, %v1076, 0
      %v1148 = vsel %vm788, %v1077, 0
      %1150 = vmatprep.subr.bf16.mxu0 0
      %1151 = vmatpush1.bf16.msra.mxu0 0
      %1152 = vmatprep.subr.bf16.mxu0 0
      %1153 = vmatpush1.bf16.msra.mxu0 0
      %1154 = vmatprep.subr.bf16.mxu0 0
      %1155 = vmatpush1.bf16.msra.mxu0 0
      %1156 = vmatprep.subr.bf16.mxu0 0
      %1157 = vmatpush1.bf16.msra.mxu0 0
      %1158 = vmatprep.subr.bf16.mxu0 0
      %1159 = vmatpush1.bf16.msra.mxu0 %v1097
      %1160 = vmatprep.subr.bf16.mxu0 0
      %1161 = vmatpush1.bf16.msra.mxu0 %v1096
      %1162 = vmatprep.subr.bf16.mxu0 0
      %1163 = vmatpush1.bf16.msra.mxu0 %v1095
      %1164 = vmatprep.subr.bf16.mxu0 0
      %1165 = vmatpush1.bf16.msra.mxu0 %v1094
      %1166 = vmatprep.subr.bf16.mxu0 0
      %1167 = vmatpush2.bf16.msra.mxu0 0
      %1168 = vmatprep.subr.bf16.mxu0 0
      %1169 = vmatpush2.bf16.msra.mxu0 0
      %1170 = vmatprep.subr.bf16.mxu0 0
      %1171 = vmatpush2.bf16.msra.mxu0 0
      %1172 = vmatprep.subr.bf16.mxu0 0
      %1173 = vmatpush2.bf16.msra.mxu0 0
      %1174 = vmatprep.subr.bf16.mxu0 0
      %1175 = vmatpush2.bf16.msra.mxu0 0
      %1176 = vmatprep.subr.bf16.mxu0 0
      %1177 = vmatpush2.bf16.msra.mxu0 0
      %1178 = vmatprep.subr.bf16.mxu0 0
      %1179 = vmatpush2.bf16.msra.mxu0 0
      %1180 = vmatprep.subr.bf16.mxu0 0
      %1181 = vmatpush2.bf16.msra.mxu0 0
      %1182 = vmatprep.mubr.bf16.mxu0 0
      %1183 = vmatmul.mubr.bf16.gmra.mxu0 %v1103
      %v1184 = vpop.f32.mrf.mxu0
      %v1185 = vadd.f32 %v872, %v1184
      %v1186 = vpop.f32.mrf.mxu0
      %v1187 = vpop.f32.mrf.mxu0
      %v1188 = vadd.f32 %v875, %v1187
      %v1189 = vpop.f32.mrf.mxu0
      %1190 = vmatprep.mubr.bf16.mxu0 0
      %1191 = vmatmul.mubr.bf16.gmra.mxu0 %v1106
      %v1192 = vpop.f32.mrf.mxu0
      %v1193 = vadd.f32 %v880, %v1192
      %v1194 = vpop.f32.mrf.mxu0
      %v1195 = vpop.f32.mrf.mxu0
      %v1196 = vadd.f32 %v883, %v1195
      %v1197 = vpop.f32.mrf.mxu0
      %1198 = vmatprep.mubr.bf16.mxu0 0
      %1199 = vmatmul.mubr.bf16.gmra.mxu0 %v1109
      %v1200 = vpop.f32.mrf.mxu0
      %v1201 = vadd.f32 %v888, %v1200
      %v1202 = vpop.f32.mrf.mxu0
      %v1203 = vpop.f32.mrf.mxu0
      %v1204 = vadd.f32 %v891, %v1203
      %v1205 = vpop.f32.mrf.mxu0
      %1206 = vmatprep.mubr.bf16.mxu0 0
      %1207 = vmatmul.mubr.bf16.gmra.mxu0 %v1112
      %v1208 = vpop.f32.mrf.mxu0
      %v1209 = vadd.f32 %v896, %v1208
      %v1210 = vpop.f32.mrf.mxu0
      %v1211 = vpop.f32.mrf.mxu0
      %v1212 = vadd.f32 %v899, %v1211
      %v1213 = vpop.f32.mrf.mxu0
      %1214 = vmatprep.mubr.bf16.mxu0 0
      %1215 = vmatmul.mubr.bf16.gmra.mxu0 %v1115
      %v1216 = vpop.f32.mrf.mxu0
      %v1217 = vadd.f32 %v904, %v1216
      %v1218 = vpop.f32.mrf.mxu0
      %v1219 = vpop.f32.mrf.mxu0
      %v1220 = vadd.f32 %v907, %v1219
      %v1221 = vpop.f32.mrf.mxu0
      %1222 = vmatprep.mubr.bf16.mxu0 0
      %1223 = vmatmul.mubr.bf16.gmra.mxu0 %v1118
      %v1224 = vpop.f32.mrf.mxu0
      %v1225 = vadd.f32 %v912, %v1224
      %v1226 = vpop.f32.mrf.mxu0
      %v1227 = vpop.f32.mrf.mxu0
      %v1228 = vadd.f32 %v915, %v1227
      %v1229 = vpop.f32.mrf.mxu0
      %1230 = vmatprep.mubr.bf16.mxu0 0
      %1231 = vmatmul.mubr.bf16.gmra.mxu0 %v1121
      %v1232 = vpop.f32.mrf.mxu0
      %v1233 = vadd.f32 %v920, %v1232
      %v1234 = vpop.f32.mrf.mxu0
      %v1235 = vpop.f32.mrf.mxu0
      %v1236 = vadd.f32 %v923, %v1235
      %v1237 = vpop.f32.mrf.mxu0
      %1238 = vmatprep.mubr.bf16.mxu0 0
      %1239 = vmatmul.mubr.bf16.gmra.mxu0 %v1124
      %v1240 = vpop.f32.mrf.mxu0
      %v1241 = vadd.f32 %v928, %v1240
      %v1242 = vpop.f32.mrf.mxu0
      %v1243 = vpop.f32.mrf.mxu0
      %v1244 = vadd.f32 %v931, %v1243
      %v1245 = vpop.f32.mrf.mxu0
      %1246 = vmatprep.mubr.bf16.mxu0 0
      %1247 = vmatmul.mubr.bf16.gmra.mxu0 %v1127
      %v1248 = vpop.f32.mrf.mxu0
      %v1249 = vadd.f32 %v936, %v1248
      %v1250 = vpop.f32.mrf.mxu0
      %v1251 = vpop.f32.mrf.mxu0
      %v1252 = vadd.f32 %v939, %v1251
      %v1253 = vpop.f32.mrf.mxu0
      %1254 = vmatprep.mubr.bf16.mxu0 0
      %1255 = vmatmul.mubr.bf16.gmra.mxu0 %v1130
      %v1256 = vpop.f32.mrf.mxu0
      %v1257 = vadd.f32 %v944, %v1256
      %v1258 = vpop.f32.mrf.mxu0
      %v1259 = vpop.f32.mrf.mxu0
      %v1260 = vadd.f32 %v947, %v1259
      %v1261 = vpop.f32.mrf.mxu0
      %1262 = vmatprep.mubr.bf16.mxu0 0
      %1263 = vmatmul.mubr.bf16.gmra.mxu0 %v1133
      %v1264 = vpop.f32.mrf.mxu0
      %v1265 = vadd.f32 %v952, %v1264
      %v1266 = vpop.f32.mrf.mxu0
      %v1267 = vpop.f32.mrf.mxu0
      %v1268 = vadd.f32 %v955, %v1267
      %v1269 = vpop.f32.mrf.mxu0
      %1270 = vmatprep.mubr.bf16.mxu0 0
      %1271 = vmatmul.mubr.bf16.gmra.mxu0 %v1136
      %v1272 = vpop.f32.mrf.mxu0
      %v1273 = vadd.f32 %v960, %v1272
      %v1274 = vpop.f32.mrf.mxu0
      %v1275 = vpop.f32.mrf.mxu0
      %v1276 = vadd.f32 %v963, %v1275
      %v1277 = vpop.f32.mrf.mxu0
      %1278 = vmatprep.mubr.bf16.mxu0 0
      %1279 = vmatmul.mubr.bf16.gmra.mxu0 %v1139
      %v1280 = vpop.f32.mrf.mxu0
      %v1281 = vadd.f32 %v968, %v1280
      %v1282 = vpop.f32.mrf.mxu0
      %v1283 = vpop.f32.mrf.mxu0
      %v1284 = vadd.f32 %v971, %v1283
      %v1285 = vpop.f32.mrf.mxu0
      %1286 = vmatprep.mubr.bf16.mxu0 0
      %1287 = vmatmul.mubr.bf16.gmra.mxu0 %v1142
      %v1288 = vpop.f32.mrf.mxu0
      %v1289 = vadd.f32 %v976, %v1288
      %v1290 = vpop.f32.mrf.mxu0
      %v1291 = vpop.f32.mrf.mxu0
      %v1292 = vadd.f32 %v979, %v1291
      %v1293 = vpop.f32.mrf.mxu0
      %1294 = vmatprep.mubr.bf16.mxu0 0
      %1295 = vmatmul.mubr.bf16.gmra.mxu0 %v1145
      %v1296 = vpop.f32.mrf.mxu0
      %v1297 = vadd.f32 %v984, %v1296
      %v1298 = vpop.f32.mrf.mxu0
      %v1299 = vpop.f32.mrf.mxu0
      %v1300 = vadd.f32 %v987, %v1299
      %v1301 = vpop.f32.mrf.mxu0
      %1302 = vmatprep.mubr.bf16.mxu0 0
      %1303 = vmatmul.mubr.bf16.gmra.mxu0 %v1148
      %v1304 = vpop.f32.mrf.mxu0
      %v1305 = vadd.f32 %v992, %v1304
      %v1306 = vpop.f32.mrf.mxu0
      %v1307 = vpop.f32.mrf.mxu0
      %v1308 = vadd.f32 %v995, %v1307
      %v1309 = vpop.f32.mrf.mxu0
      %1310 = vdwg.mxu0
      %v1311 = vld [vmem:[%s244] sm:$0xe]
      %v1312 = vld [vmem:[%s244 + $0xc] sm:$0xe]
      %v1313 = vld [vmem:[%s244 + $0x18] sm:$0xe]
      %v1314 = vld [vmem:[%s244 + $0x24] sm:$0xe]
      %v1315 = vld [vmem:[%s244 + $0x30] sm:$0xe]
      %v1316 = vld [vmem:[%s244 + $0x3c] sm:$0xe]
      %v1317 = vld [vmem:[%s244 + $0x48] sm:$0xe]
      %v1318 = vld [vmem:[%s244 + $0x54] sm:$0xe]
      %v1319 = vld [vmem:[%s244 + $0x60] sm:$0xe]
      %v1320 = vld [vmem:[%s244 + $0x6c] sm:$0xe]
      %v1321 = vld [vmem:[%s244 + $0x78] sm:$0xe]
      %v1322 = vld [vmem:[%s244 + $0x84] sm:$0xe]
      %v1323 = vld [vmem:[%s244 + $0x90] sm:$0xe]
      %v1324 = vld [vmem:[%s244 + $0x9c] sm:$0xe]
      %v1325 = vld [vmem:[%s244 + $0xa8] sm:$0xe]
      %v1326 = vld [vmem:[%s244 + $0xb4] sm:$0xe]
      %vm1359 = vcmask 1042432
      %vm1360 = vcmask 1046532
      %vm1361 = vmor %vm1359, %vm1360
      %v1362 = vrot.slane %v1311, 5
      %v1363 = vrot.slane %v1362, 4
      %v1364 = vrot.slane %v265, 5
      %v1365 = vsel %vm1361, %v1363, %v1364
      %v1366 = vrot.slane %v1364, 4
      %v1367 = vrot.slane %v304, 5
      %v1368 = vsel %vm1361, %v1366, %v1367
      %v1369 = vrot.slane %v1312, 5
      %v1370 = vrot.slane %v1369, 4
      %v1371 = vrot.slane %v267, 5
      %v1372 = vsel %vm1361, %v1370, %v1371
      %v1373 = vrot.slane %v1371, 4
      %v1374 = vrot.slane %v305, 5
      %v1375 = vsel %vm1361, %v1373, %v1374
      %v1376 = vrot.slane %v1313, 5
      %v1377 = vrot.slane %v1376, 4
      %v1378 = vrot.slane %v269, 5
      %v1379 = vsel %vm1361, %v1377, %v1378
      %v1380 = vrot.slane %v1378, 4
      %v1381 = vrot.slane %v306, 5
      %v1382 = vsel %vm1361, %v1380, %v1381
      %v1383 = vrot.slane %v1314, 5
      %v1384 = vrot.slane %v1383, 4
      %v1385 = vrot.slane %v271, 5
      %v1386 = vsel %vm1361, %v1384, %v1385
      %v1387 = vrot.slane %v1385, 4
      %v1388 = vrot.slane %v307, 5
      %v1389 = vsel %vm1361, %v1387, %v1388
      %v1390 = vrot.slane %v1315, 5
      %v1391 = vrot.slane %v1390, 4
      %v1392 = vrot.slane %v273, 5
      %v1393 = vsel %vm1361, %v1391, %v1392
      %v1394 = vrot.slane %v1392, 4
      %v1395 = vrot.slane %v308, 5
      %v1396 = vsel %vm1361, %v1394, %v1395
      %v1397 = vrot.slane %v1316, 5
      %v1398 = vrot.slane %v1397, 4
      %v1399 = vrot.slane %v275, 5
      %v1400 = vsel %vm1361, %v1398, %v1399
      %v1401 = vrot.slane %v1399, 4
      %v1402 = vrot.slane %v309, 5
      %v1403 = vsel %vm1361, %v1401, %v1402
      %v1404 = vrot.slane %v1317, 5
      %v1405 = vrot.slane %v1404, 4
      %v1406 = vrot.slane %v277, 5
      %v1407 = vsel %vm1361, %v1405, %v1406
      %v1408 = vrot.slane %v1406, 4
      %v1409 = vrot.slane %v310, 5
      %v1410 = vsel %vm1361, %v1408, %v1409
      %v1411 = vrot.slane %v1318, 5
      %v1412 = vrot.slane %v1411, 4
      %v1413 = vrot.slane %v279, 5
      %v1414 = vsel %vm1361, %v1412, %v1413
      %v1415 = vrot.slane %v1413, 4
      %v1416 = vrot.slane %v311, 5
      %v1417 = vsel %vm1361, %v1415, %v1416
      %v1418 = vrot.slane %v1319, 5
      %v1419 = vrot.slane %v1418, 4
      %v1420 = vrot.slane %v281, 5
      %v1421 = vsel %vm1361, %v1419, %v1420
      %v1422 = vrot.slane %v1420, 4
      %v1423 = vrot.slane %v312, 5
      %v1424 = vsel %vm1361, %v1422, %v1423
      %v1425 = vrot.slane %v1320, 5
      %v1426 = vrot.slane %v1425, 4
      %v1427 = vrot.slane %v283, 5
      %v1428 = vsel %vm1361, %v1426, %v1427
      %v1429 = vrot.slane %v1427, 4
      %v1430 = vrot.slane %v313, 5
      %v1431 = vsel %vm1361, %v1429, %v1430
      %v1432 = vrot.slane %v1321, 5
      %v1433 = vrot.slane %v1432, 4
      %v1434 = vrot.slane %v285, 5
      %v1435 = vsel %vm1361, %v1433, %v1434
      %v1436 = vrot.slane %v1434, 4
      %v1437 = vrot.slane %v314, 5
      %v1438 = vsel %vm1361, %v1436, %v1437
      %v1439 = vrot.slane %v1322, 5
      %v1440 = vrot.slane %v1439, 4
      %v1441 = vrot.slane %v287, 5
      %v1442 = vsel %vm1361, %v1440, %v1441
      %v1443 = vrot.slane %v1441, 4
      %v1444 = vrot.slane %v315, 5
      %v1445 = vsel %vm1361, %v1443, %v1444
      %v1446 = vrot.slane %v1323, 5
      %v1447 = vrot.slane %v1446, 4
      %v1448 = vrot.slane %v289, 5
      %v1449 = vsel %vm1361, %v1447, %v1448
      %v1450 = vrot.slane %v1448, 4
      %v1451 = vrot.slane %v316, 5
      %v1452 = vsel %vm1361, %v1450, %v1451
      %v1453 = vrot.slane %v1324, 5
      %v1454 = vrot.slane %v1453, 4
      %v1455 = vrot.slane %v291, 5
      %v1456 = vsel %vm1361, %v1454, %v1455
      %v1457 = vrot.slane %v1455, 4
      %v1458 = vrot.slane %v317, 5
      %v1459 = vsel %vm1361, %v1457, %v1458
      %v1460 = vrot.slane %v1325, 5
      %v1461 = vrot.slane %v1460, 4
      %v1462 = vrot.slane %v293, 5
      %v1463 = vsel %vm1361, %v1461, %v1462
      %v1464 = vrot.slane %v1462, 4
      %v1465 = vrot.slane %v318, 5
      %v1466 = vsel %vm1361, %v1464, %v1465
      %v1467 = vrot.slane %v1326, 5
      %v1468 = vrot.slane %v1467, 4
      %v1469 = vrot.slane %v295, 5
      %v1470 = vsel %vm1361, %v1468, %v1469
      %v1471 = vrot.slane %v1469, 4
      %v1472 = vrot.slane %v319, 5
      %v1473 = vsel %vm1361, %v1471, %v1472
      %s1474 = scalar_lea.vmem %s248, 64
      %v1475 = vld [vmem:[%s1474] sm:$0xf]
      %v1476 = vld [vmem:[%s1474 + $0x4] sm:$0xf]
      %v1477 = vld [vmem:[%s1474 + $0x8] sm:$0xf]
      %v1478 = vld [vmem:[%s1474 + $0xc] sm:$0xf]
      %v1479 = vld [vmem:[%s1474 + $0x10] sm:$0xf]
      %v1480 = vld [vmem:[%s1474 + $0x14] sm:$0xf]
      %v1481 = vld [vmem:[%s1474 + $0x18] sm:$0xf]
      %v1482 = vld [vmem:[%s1474 + $0x1c] sm:$0xf]
      %v1483 = vunpack.c.l.b16 %v1365
      %v1484 = vunpack.c.l.b16 %v1368
      %v1485 = vunpack.c.l.b16 %v1372
      %v1486 = vunpack.c.l.b16 %v1375
      %v1487 = vunpack.c.l.b16 %v1379
      %v1488 = vunpack.c.l.b16 %v1382
      %v1489 = vunpack.c.l.b16 %v1386
      %v1490 = vunpack.c.l.b16 %v1389
      %v1491 = vunpack.c.l.b16 %v1393
      %v1492 = vunpack.c.l.b16 %v1396
      %v1493 = vunpack.c.l.b16 %v1400
      %v1494 = vunpack.c.l.b16 %v1403
      %v1495 = vunpack.c.l.b16 %v1407
      %v1496 = vunpack.c.l.b16 %v1410
      %v1497 = vunpack.c.l.b16 %v1414
      %v1498 = vunpack.c.l.b16 %v1417
      %v1499 = vunpack.c.l.b16 %v1421
      %v1500 = vunpack.c.l.b16 %v1424
      %v1501 = vunpack.c.l.b16 %v1428
      %v1502 = vunpack.c.l.b16 %v1431
      %v1503 = vunpack.c.l.b16 %v1435
      %v1504 = vunpack.c.l.b16 %v1438
      %v1505 = vunpack.c.l.b16 %v1442
      %v1506 = vunpack.c.l.b16 %v1445
      %v1507 = vunpack.c.l.b16 %v1449
      %v1508 = vunpack.c.l.b16 %v1452
      %v1509 = vunpack.c.l.b16 %v1456
      %v1510 = vunpack.c.l.b16 %v1459
      %v1511 = vunpack.c.l.b16 %v1463
      %v1512 = vunpack.c.l.b16 %v1466
      %v1513 = vunpack.c.l.b16 %v1470
      %v1514 = vunpack.c.l.b16 %v1473
      %v1515 = vpack.c.b16 %v1484, %v1483
      %v1516 = vpack.c.b16 %v1486, %v1485
      %v1517 = vpack.c.b16 %v1488, %v1487
      %v1518 = vpack.c.b16 %v1490, %v1489
      %v1519 = vpack.c.b16 %v1492, %v1491
      %v1520 = vpack.c.b16 %v1494, %v1493
      %v1521 = vpack.c.b16 %v1496, %v1495
      %v1522 = vpack.c.b16 %v1498, %v1497
      %v1523 = vpack.c.b16 %v1500, %v1499
      %v1524 = vpack.c.b16 %v1502, %v1501
      %v1525 = vpack.c.b16 %v1504, %v1503
      %v1526 = vpack.c.b16 %v1506, %v1505
      %v1527 = vpack.c.b16 %v1508, %v1507
      %v1528 = vpack.c.b16 %v1510, %v1509
      %v1529 = vpack.c.b16 %v1512, %v1511
      %v1530 = vpack.c.b16 %v1514, %v1513
      %v1539 = vunpack.c.l.b16 %v1475
      %v1540 = vunpack.c.l.b16 %v1476
      %v1541 = vunpack.c.l.b16 %v1477
      %v1542 = vunpack.c.l.b16 %v1478
      %v1543 = vunpack.c.l.b16 %v1479
      %v1544 = vunpack.c.l.b16 %v1480
      %v1545 = vunpack.c.l.b16 %v1481
      %v1546 = vunpack.c.l.b16 %v1482
      %v1547 = vpack.c.b16 %v1540, %v1539
      %v1548 = vpack.c.b16 %v1542, %v1541
      %v1549 = vpack.c.b16 %v1544, %v1543
      %v1550 = vpack.c.b16 %v1546, %v1545
      %v1556 = vsel %vm788, %v1515, 0
      %v1559 = vsel %vm788, %v1516, 0
      %v1562 = vsel %vm788, %v1517, 0
      %v1565 = vsel %vm788, %v1518, 0
      %v1568 = vsel %vm788, %v1519, 0
      %v1571 = vsel %vm788, %v1520, 0
      %v1574 = vsel %vm788, %v1521, 0
      %v1577 = vsel %vm788, %v1522, 0
      %v1580 = vsel %vm788, %v1523, 0
      %v1583 = vsel %vm788, %v1524, 0
      %v1586 = vsel %vm788, %v1525, 0
      %v1589 = vsel %vm788, %v1526, 0
      %v1592 = vsel %vm788, %v1527, 0
      %v1595 = vsel %vm788, %v1528, 0
      %v1598 = vsel %vm788, %v1529, 0
      %v1601 = vsel %vm788, %v1530, 0
      %1603 = vmatprep.subr.bf16.mxu0 0
      %1604 = vmatpush1.bf16.msra.mxu0 0
      %1605 = vmatprep.subr.bf16.mxu0 0
      %1606 = vmatpush1.bf16.msra.mxu0 0
      %1607 = vmatprep.subr.bf16.mxu0 0
      %1608 = vmatpush1.bf16.msra.mxu0 0
      %1609 = vmatprep.subr.bf16.mxu0 0
      %1610 = vmatpush1.bf16.msra.mxu0 0
      %1611 = vmatprep.subr.bf16.mxu0 0
      %1612 = vmatpush1.bf16.msra.mxu0 %v1550
      %1613 = vmatprep.subr.bf16.mxu0 0
      %1614 = vmatpush1.bf16.msra.mxu0 %v1549
      %1615 = vmatprep.subr.bf16.mxu0 0
      %1616 = vmatpush1.bf16.msra.mxu0 %v1548
      %1617 = vmatprep.subr.bf16.mxu0 0
      %1618 = vmatpush1.bf16.msra.mxu0 %v1547
      %1619 = vmatprep.subr.bf16.mxu0 0
      %1620 = vmatpush2.bf16.msra.mxu0 0
      %1621 = vmatprep.subr.bf16.mxu0 0
      %1622 = vmatpush2.bf16.msra.mxu0 0
      %1623 = vmatprep.subr.bf16.mxu0 0
      %1624 = vmatpush2.bf16.msra.mxu0 0
      %1625 = vmatprep.subr.bf16.mxu0 0
      %1626 = vmatpush2.bf16.msra.mxu0 0
      %1627 = vmatprep.subr.bf16.mxu0 0
      %1628 = vmatpush2.bf16.msra.mxu0 0
      %1629 = vmatprep.subr.bf16.mxu0 0
      %1630 = vmatpush2.bf16.msra.mxu0 0
      %1631 = vmatprep.subr.bf16.mxu0 0
      %1632 = vmatpush2.bf16.msra.mxu0 0
      %1633 = vmatprep.subr.bf16.mxu0 0
      %1634 = vmatpush2.bf16.msra.mxu0 0
      %1635 = vmatprep.mubr.bf16.mxu0 0
      %1636 = vmatmul.mubr.bf16.gmra.mxu0 %v1556
      %v1637 = vpop.f32.mrf.mxu0
      %v1638 = vadd.f32 0.0, %v1637
      %v1639 = vpop.f32.mrf.mxu0
      %v1640 = vpop.f32.mrf.mxu0
      %v1641 = vadd.f32 0.0, %v1640
      %v1642 = vpop.f32.mrf.mxu0
      %1643 = vmatprep.mubr.bf16.mxu0 0
      %1644 = vmatmul.mubr.bf16.gmra.mxu0 %v1559
      %v1645 = vpop.f32.mrf.mxu0
      %v1646 = vadd.f32 0.0, %v1645
      %v1647 = vpop.f32.mrf.mxu0
      %v1648 = vpop.f32.mrf.mxu0
      %v1649 = vadd.f32 0.0, %v1648
      %v1650 = vpop.f32.mrf.mxu0
      %1651 = vmatprep.mubr.bf16.mxu0 0
      %1652 = vmatmul.mubr.bf16.gmra.mxu0 %v1562
      %v1653 = vpop.f32.mrf.mxu0
      %v1654 = vadd.f32 0.0, %v1653
      %v1655 = vpop.f32.mrf.mxu0
      %v1656 = vpop.f32.mrf.mxu0
      %v1657 = vadd.f32 0.0, %v1656
      %v1658 = vpop.f32.mrf.mxu0
      %1659 = vmatprep.mubr.bf16.mxu0 0
      %1660 = vmatmul.mubr.bf16.gmra.mxu0 %v1565
      %v1661 = vpop.f32.mrf.mxu0
      %v1662 = vadd.f32 0.0, %v1661
      %v1663 = vpop.f32.mrf.mxu0
      %v1664 = vpop.f32.mrf.mxu0
      %v1665 = vadd.f32 0.0, %v1664
      %v1666 = vpop.f32.mrf.mxu0
      %1667 = vmatprep.mubr.bf16.mxu0 0
      %1668 = vmatmul.mubr.bf16.gmra.mxu0 %v1568
      %v1669 = vpop.f32.mrf.mxu0
      %v1670 = vadd.f32 0.0, %v1669
      %v1671 = vpop.f32.mrf.mxu0
      %v1672 = vpop.f32.mrf.mxu0
      %v1673 = vadd.f32 0.0, %v1672
      %v1674 = vpop.f32.mrf.mxu0
      %1675 = vmatprep.mubr.bf16.mxu0 0
      %1676 = vmatmul.mubr.bf16.gmra.mxu0 %v1571
      %v1677 = vpop.f32.mrf.mxu0
      %v1678 = vadd.f32 0.0, %v1677
      %v1679 = vpop.f32.mrf.mxu0
      %v1680 = vpop.f32.mrf.mxu0
      %v1681 = vadd.f32 0.0, %v1680
      %v1682 = vpop.f32.mrf.mxu0
      %1683 = vmatprep.mubr.bf16.mxu0 0
      %1684 = vmatmul.mubr.bf16.gmra.mxu0 %v1574
      %v1685 = vpop.f32.mrf.mxu0
      %v1686 = vadd.f32 0.0, %v1685
      %v1687 = vpop.f32.mrf.mxu0
      %v1688 = vpop.f32.mrf.mxu0
      %v1689 = vadd.f32 0.0, %v1688
      %v1690 = vpop.f32.mrf.mxu0
      %1691 = vmatprep.mubr.bf16.mxu0 0
      %1692 = vmatmul.mubr.bf16.gmra.mxu0 %v1577
      %v1693 = vpop.f32.mrf.mxu0
      %v1694 = vadd.f32 0.0, %v1693
      %v1695 = vpop.f32.mrf.mxu0
      %v1696 = vpop.f32.mrf.mxu0
      %v1697 = vadd.f32 0.0, %v1696
      %v1698 = vpop.f32.mrf.mxu0
      %1699 = vmatprep.mubr.bf16.mxu0 0
      %1700 = vmatmul.mubr.bf16.gmra.mxu0 %v1580
      %v1701 = vpop.f32.mrf.mxu0
      %v1702 = vadd.f32 0.0, %v1701
      %v1703 = vpop.f32.mrf.mxu0
      %v1704 = vpop.f32.mrf.mxu0
      %v1705 = vadd.f32 0.0, %v1704
      %v1706 = vpop.f32.mrf.mxu0
      %1707 = vmatprep.mubr.bf16.mxu0 0
      %1708 = vmatmul.mubr.bf16.gmra.mxu0 %v1583
      %v1709 = vpop.f32.mrf.mxu0
      %v1710 = vadd.f32 0.0, %v1709
      %v1711 = vpop.f32.mrf.mxu0
      %v1712 = vpop.f32.mrf.mxu0
      %v1713 = vadd.f32 0.0, %v1712
      %v1714 = vpop.f32.mrf.mxu0
      %1715 = vmatprep.mubr.bf16.mxu0 0
      %1716 = vmatmul.mubr.bf16.gmra.mxu0 %v1586
      %v1717 = vpop.f32.mrf.mxu0
      %v1718 = vadd.f32 0.0, %v1717
      %v1719 = vpop.f32.mrf.mxu0
      %v1720 = vpop.f32.mrf.mxu0
      %v1721 = vadd.f32 0.0, %v1720
      %v1722 = vpop.f32.mrf.mxu0
      %1723 = vmatprep.mubr.bf16.mxu0 0
      %1724 = vmatmul.mubr.bf16.gmra.mxu0 %v1589
      %v1725 = vpop.f32.mrf.mxu0
      %v1726 = vadd.f32 0.0, %v1725
      %v1727 = vpop.f32.mrf.mxu0
      %v1728 = vpop.f32.mrf.mxu0
      %v1729 = vadd.f32 0.0, %v1728
      %v1730 = vpop.f32.mrf.mxu0
      %1731 = vmatprep.mubr.bf16.mxu0 0
      %1732 = vmatmul.mubr.bf16.gmra.mxu0 %v1592
      %v1733 = vpop.f32.mrf.mxu0
      %v1734 = vadd.f32 0.0, %v1733
      %v1735 = vpop.f32.mrf.mxu0
      %v1736 = vpop.f32.mrf.mxu0
      %v1737 = vadd.f32 0.0, %v1736
      %v1738 = vpop.f32.mrf.mxu0
      %1739 = vmatprep.mubr.bf16.mxu0 0
      %1740 = vmatmul.mubr.bf16.gmra.mxu0 %v1595
      %v1741 = vpop.f32.mrf.mxu0
      %v1742 = vadd.f32 0.0, %v1741
      %v1743 = vpop.f32.mrf.mxu0
      %v1744 = vpop.f32.mrf.mxu0
      %v1745 = vadd.f32 0.0, %v1744
      %v1746 = vpop.f32.mrf.mxu0
      %1747 = vmatprep.mubr.bf16.mxu0 0
      %1748 = vmatmul.mubr.bf16.gmra.mxu0 %v1598
      %v1749 = vpop.f32.mrf.mxu0
      %v1750 = vadd.f32 0.0, %v1749
      %v1751 = vpop.f32.mrf.mxu0
      %v1752 = vpop.f32.mrf.mxu0
      %v1753 = vadd.f32 0.0, %v1752
      %v1754 = vpop.f32.mrf.mxu0
      %1755 = vmatprep.mubr.bf16.mxu0 0
      %1756 = vmatmul.mubr.bf16.gmra.mxu0 %v1601
      %v1757 = vpop.f32.mrf.mxu0
      %v1758 = vadd.f32 0.0, %v1757
      %v1759 = vpop.f32.mrf.mxu0
      %v1760 = vpop.f32.mrf.mxu0
      %v1761 = vadd.f32 0.0, %v1760
      %v1762 = vpop.f32.mrf.mxu0
      %1763 = vdwg.mxu0
      %v1764 = vadd.f32 %v1185, %v1638
      %v1765 = vadd.f32 %v1188, %v1641
      %v1766 = vadd.f32 %v1193, %v1646
      %v1767 = vadd.f32 %v1196, %v1649
      %v1768 = vadd.f32 %v1201, %v1654
      %v1769 = vadd.f32 %v1204, %v1657
      %v1770 = vadd.f32 %v1209, %v1662
      %v1771 = vadd.f32 %v1212, %v1665
      %v1772 = vadd.f32 %v1217, %v1670
      %v1773 = vadd.f32 %v1220, %v1673
      %v1774 = vadd.f32 %v1225, %v1678
      %v1775 = vadd.f32 %v1228, %v1681
      %v1776 = vadd.f32 %v1233, %v1686
      %v1777 = vadd.f32 %v1236, %v1689
      %v1778 = vadd.f32 %v1241, %v1694
      %v1779 = vadd.f32 %v1244, %v1697
      %v1780 = vadd.f32 %v1249, %v1702
      %v1781 = vadd.f32 %v1252, %v1705
      %v1782 = vadd.f32 %v1257, %v1710
      %v1783 = vadd.f32 %v1260, %v1713
      %v1784 = vadd.f32 %v1265, %v1718
      %v1785 = vadd.f32 %v1268, %v1721
      %v1786 = vadd.f32 %v1273, %v1726
      %v1787 = vadd.f32 %v1276, %v1729
      %v1788 = vadd.f32 %v1281, %v1734
      %v1789 = vadd.f32 %v1284, %v1737
      %v1790 = vadd.f32 %v1289, %v1742
      %v1791 = vadd.f32 %v1292, %v1745
      %v1792 = vadd.f32 %v1297, %v1750
      %v1793 = vadd.f32 %v1300, %v1753
      %v1794 = vadd.f32 %v1305, %v1758
      %v1795 = vadd.f32 %v1308, %v1761
      %s1796 = scalar_lea.vmem %s244, 12
      %v1797 = vld [vmem:[%s1796] sm:$0xf]
      %v1798 = vld [vmem:[%s1796 + $0x4] sm:$0xf]
      %v1799 = vld [vmem:[%s1796 + $0xc] sm:$0xf]
      %v1800 = vld [vmem:[%s1796 + $0x10] sm:$0xf]
      %v1801 = vld [vmem:[%s1796 + $0x18] sm:$0xf]
      %v1802 = vld [vmem:[%s1796 + $0x1c] sm:$0xf]
      %v1803 = vld [vmem:[%s1796 + $0x24] sm:$0xf]
      %v1804 = vld [vmem:[%s1796 + $0x28] sm:$0xf]
      %v1805 = vld [vmem:[%s1796 + $0x30] sm:$0xf]
      %v1806 = vld [vmem:[%s1796 + $0x34] sm:$0xf]
      %v1807 = vld [vmem:[%s1796 + $0x3c] sm:$0xf]
      %v1808 = vld [vmem:[%s1796 + $0x40] sm:$0xf]
      %v1809 = vld [vmem:[%s1796 + $0x48] sm:$0xf]
      %v1810 = vld [vmem:[%s1796 + $0x4c] sm:$0xf]
      %v1811 = vld [vmem:[%s1796 + $0x54] sm:$0xf]
      %v1812 = vld [vmem:[%s1796 + $0x58] sm:$0xf]
      %v1813 = vld [vmem:[%s1796 + $0x60] sm:$0xf]
      %v1814 = vld [vmem:[%s1796 + $0x64] sm:$0xf]
      %v1815 = vld [vmem:[%s1796 + $0x6c] sm:$0xf]
      %v1816 = vld [vmem:[%s1796 + $0x70] sm:$0xf]
      %v1817 = vld [vmem:[%s1796 + $0x78] sm:$0xf]
      %v1818 = vld [vmem:[%s1796 + $0x7c] sm:$0xf]
      %v1819 = vld [vmem:[%s1796 + $0x84] sm:$0xf]
      %v1820 = vld [vmem:[%s1796 + $0x88] sm:$0xf]
      %v1821 = vld [vmem:[%s1796 + $0x90] sm:$0xf]
      %v1822 = vld [vmem:[%s1796 + $0x94] sm:$0xf]
      %v1823 = vld [vmem:[%s1796 + $0x9c] sm:$0xf]
      %v1824 = vld [vmem:[%s1796 + $0xa0] sm:$0xf]
      %v1825 = vld [vmem:[%s1796 + $0xa8] sm:$0xf]
      %v1826 = vld [vmem:[%s1796 + $0xac] sm:$0xf]
      %v1827 = vld [vmem:[%s1796 + $0xb4] sm:$0xf]
      %v1828 = vld [vmem:[%s1796 + $0xb8] sm:$0xf]
      %s1829 = scalar_lea.vmem %s248, 96
      %v1830 = vld [vmem:[%s1829] sm:$0xf]
      %v1831 = vld [vmem:[%s1829 + $0x4] sm:$0xf]
      %v1832 = vld [vmem:[%s1829 + $0x8] sm:$0xf]
      %v1833 = vld [vmem:[%s1829 + $0xc] sm:$0xf]
      %v1834 = vld [vmem:[%s1829 + $0x10] sm:$0xf]
      %v1835 = vld [vmem:[%s1829 + $0x14] sm:$0xf]
      %v1836 = vld [vmem:[%s1829 + $0x18] sm:$0xf]
      %v1837 = vld [vmem:[%s1829 + $0x1c] sm:$0xf]
      %v1870 = vunpack.c.l.b16 %v1797
      %v1871 = vunpack.c.l.b16 %v1798
      %v1872 = vunpack.c.l.b16 %v1799
      %v1873 = vunpack.c.l.b16 %v1800
      %v1874 = vunpack.c.l.b16 %v1801
      %v1875 = vunpack.c.l.b16 %v1802
      %v1876 = vunpack.c.l.b16 %v1803
      %v1877 = vunpack.c.l.b16 %v1804
      %v1878 = vunpack.c.l.b16 %v1805
      %v1879 = vunpack.c.l.b16 %v1806
      %v1880 = vunpack.c.l.b16 %v1807
      %v1881 = vunpack.c.l.b16 %v1808
      %v1882 = vunpack.c.l.b16 %v1809
      %v1883 = vunpack.c.l.b16 %v1810
      %v1884 = vunpack.c.l.b16 %v1811
      %v1885 = vunpack.c.l.b16 %v1812
      %v1886 = vunpack.c.l.b16 %v1813
      %v1887 = vunpack.c.l.b16 %v1814
      %v1888 = vunpack.c.l.b16 %v1815
      %v1889 = vunpack.c.l.b16 %v1816
      %v1890 = vunpack.c.l.b16 %v1817
      %v1891 = vunpack.c.l.b16 %v1818
      %v1892 = vunpack.c.l.b16 %v1819
      %v1893 = vunpack.c.l.b16 %v1820
      %v1894 = vunpack.c.l.b16 %v1821
      %v1895 = vunpack.c.l.b16 %v1822
      %v1896 = vunpack.c.l.b16 %v1823
      %v1897 = vunpack.c.l.b16 %v1824
      %v1898 = vunpack.c.l.b16 %v1825
      %v1899 = vunpack.c.l.b16 %v1826
      %v1900 = vunpack.c.l.b16 %v1827
      %v1901 = vunpack.c.l.b16 %v1828
      %v1902 = vpack.c.b16 %v1871, %v1870
      %v1903 = vpack.c.b16 %v1873, %v1872
      %v1904 = vpack.c.b16 %v1875, %v1874
      %v1905 = vpack.c.b16 %v1877, %v1876
      %v1906 = vpack.c.b16 %v1879, %v1878
      %v1907 = vpack.c.b16 %v1881, %v1880
      %v1908 = vpack.c.b16 %v1883, %v1882
      %v1909 = vpack.c.b16 %v1885, %v1884
      %v1910 = vpack.c.b16 %v1887, %v1886
      %v1911 = vpack.c.b16 %v1889, %v1888
      %v1912 = vpack.c.b16 %v1891, %v1890
      %v1913 = vpack.c.b16 %v1893, %v1892
      %v1914 = vpack.c.b16 %v1895, %v1894
      %v1915 = vpack.c.b16 %v1897, %v1896
      %v1916 = vpack.c.b16 %v1899, %v1898
      %v1917 = vpack.c.b16 %v1901, %v1900
      %v1926 = vunpack.c.l.b16 %v1830
      %v1927 = vunpack.c.l.b16 %v1831
      %v1928 = vunpack.c.l.b16 %v1832
      %v1929 = vunpack.c.l.b16 %v1833
      %v1930 = vunpack.c.l.b16 %v1834
      %v1931 = vunpack.c.l.b16 %v1835
      %v1932 = vunpack.c.l.b16 %v1836
      %v1933 = vunpack.c.l.b16 %v1837
      %v1934 = vpack.c.b16 %v1927, %v1926
      %v1935 = vpack.c.b16 %v1929, %v1928
      %v1936 = vpack.c.b16 %v1931, %v1930
      %v1937 = vpack.c.b16 %v1933, %v1932
      %v1943 = vsel %vm788, %v1902, 0
      %v1946 = vsel %vm788, %v1903, 0
      %v1949 = vsel %vm788, %v1904, 0
      %v1952 = vsel %vm788, %v1905, 0
      %v1955 = vsel %vm788, %v1906, 0
      %v1958 = vsel %vm788, %v1907, 0
      %v1961 = vsel %vm788, %v1908, 0
      %v1964 = vsel %vm788, %v1909, 0
      %v1967 = vsel %vm788, %v1910, 0
      %v1970 = vsel %vm788, %v1911, 0
      %v1973 = vsel %vm788, %v1912, 0
      %v1976 = vsel %vm788, %v1913, 0
      %v1979 = vsel %vm788, %v1914, 0
      %v1982 = vsel %vm788, %v1915, 0
      %v1985 = vsel %vm788, %v1916, 0
      %v1988 = vsel %vm788, %v1917, 0
      %1990 = vmatprep.subr.bf16.mxu0 0
      %1991 = vmatpush1.bf16.msra.mxu0 0
      %1992 = vmatprep.subr.bf16.mxu0 0
      %1993 = vmatpush1.bf16.msra.mxu0 0
      %1994 = vmatprep.subr.bf16.mxu0 0
      %1995 = vmatpush1.bf16.msra.mxu0 0
      %1996 = vmatprep.subr.bf16.mxu0 0
      %1997 = vmatpush1.bf16.msra.mxu0 0
      %1998 = vmatprep.subr.bf16.mxu0 0
      %1999 = vmatpush1.bf16.msra.mxu0 %v1937
      %2000 = vmatprep.subr.bf16.mxu0 0
      %2001 = vmatpush1.bf16.msra.mxu0 %v1936
      %2002 = vmatprep.subr.bf16.mxu0 0
      %2003 = vmatpush1.bf16.msra.mxu0 %v1935
      %2004 = vmatprep.subr.bf16.mxu0 0
      %2005 = vmatpush1.bf16.msra.mxu0 %v1934
      %2006 = vmatprep.subr.bf16.mxu0 0
      %2007 = vmatpush2.bf16.msra.mxu0 0
      %2008 = vmatprep.subr.bf16.mxu0 0
      %2009 = vmatpush2.bf16.msra.mxu0 0
      %2010 = vmatprep.subr.bf16.mxu0 0
      %2011 = vmatpush2.bf16.msra.mxu0 0
      %2012 = vmatprep.subr.bf16.mxu0 0
      %2013 = vmatpush2.bf16.msra.mxu0 0
      %2014 = vmatprep.subr.bf16.mxu0 0
      %2015 = vmatpush2.bf16.msra.mxu0 0
      %2016 = vmatprep.subr.bf16.mxu0 0
      %2017 = vmatpush2.bf16.msra.mxu0 0
      %2018 = vmatprep.subr.bf16.mxu0 0
      %2019 = vmatpush2.bf16.msra.mxu0 0
      %2020 = vmatprep.subr.bf16.mxu0 0
      %2021 = vmatpush2.bf16.msra.mxu0 0
      %2022 = vmatprep.mubr.bf16.mxu0 0
      %2023 = vmatmul.mubr.bf16.gmra.mxu0 %v1943
      %v2024 = vpop.f32.mrf.mxu0
      %v2025 = vadd.f32 0.0, %v2024
      %v2026 = vpop.f32.mrf.mxu0
      %v2027 = vpop.f32.mrf.mxu0
      %v2028 = vadd.f32 0.0, %v2027
      %v2029 = vpop.f32.mrf.mxu0
      %2030 = vmatprep.mubr.bf16.mxu0 0
      %2031 = vmatmul.mubr.bf16.gmra.mxu0 %v1946
      %v2032 = vpop.f32.mrf.mxu0
      %v2033 = vadd.f32 0.0, %v2032
      %v2034 = vpop.f32.mrf.mxu0
      %v2035 = vpop.f32.mrf.mxu0
      %v2036 = vadd.f32 0.0, %v2035
      %v2037 = vpop.f32.mrf.mxu0
      %2038 = vmatprep.mubr.bf16.mxu0 0
      %2039 = vmatmul.mubr.bf16.gmra.mxu0 %v1949
      %v2040 = vpop.f32.mrf.mxu0
      %v2041 = vadd.f32 0.0, %v2040
      %v2042 = vpop.f32.mrf.mxu0
      %v2043 = vpop.f32.mrf.mxu0
      %v2044 = vadd.f32 0.0, %v2043
      %v2045 = vpop.f32.mrf.mxu0
      %2046 = vmatprep.mubr.bf16.mxu0 0
      %2047 = vmatmul.mubr.bf16.gmra.mxu0 %v1952
      %v2048 = vpop.f32.mrf.mxu0
      %v2049 = vadd.f32 0.0, %v2048
      %v2050 = vpop.f32.mrf.mxu0
      %v2051 = vpop.f32.mrf.mxu0
      %v2052 = vadd.f32 0.0, %v2051
      %v2053 = vpop.f32.mrf.mxu0
      %2054 = vmatprep.mubr.bf16.mxu0 0
      %2055 = vmatmul.mubr.bf16.gmra.mxu0 %v1955
      %v2056 = vpop.f32.mrf.mxu0
      %v2057 = vadd.f32 0.0, %v2056
      %v2058 = vpop.f32.mrf.mxu0
      %v2059 = vpop.f32.mrf.mxu0
      %v2060 = vadd.f32 0.0, %v2059
      %v2061 = vpop.f32.mrf.mxu0
      %2062 = vmatprep.mubr.bf16.mxu0 0
      %2063 = vmatmul.mubr.bf16.gmra.mxu0 %v1958
      %v2064 = vpop.f32.mrf.mxu0
      %v2065 = vadd.f32 0.0, %v2064
      %v2066 = vpop.f32.mrf.mxu0
      %v2067 = vpop.f32.mrf.mxu0
      %v2068 = vadd.f32 0.0, %v2067
      %v2069 = vpop.f32.mrf.mxu0
      %2070 = vmatprep.mubr.bf16.mxu0 0
      %2071 = vmatmul.mubr.bf16.gmra.mxu0 %v1961
      %v2072 = vpop.f32.mrf.mxu0
      %v2073 = vadd.f32 0.0, %v2072
      %v2074 = vpop.f32.mrf.mxu0
      %v2075 = vpop.f32.mrf.mxu0
      %v2076 = vadd.f32 0.0, %v2075
      %v2077 = vpop.f32.mrf.mxu0
      %2078 = vmatprep.mubr.bf16.mxu0 0
      %2079 = vmatmul.mubr.bf16.gmra.mxu0 %v1964
      %v2080 = vpop.f32.mrf.mxu0
      %v2081 = vadd.f32 0.0, %v2080
      %v2082 = vpop.f32.mrf.mxu0
      %v2083 = vpop.f32.mrf.mxu0
      %v2084 = vadd.f32 0.0, %v2083
      %v2085 = vpop.f32.mrf.mxu0
      %2086 = vmatprep.mubr.bf16.mxu0 0
      %2087 = vmatmul.mubr.bf16.gmra.mxu0 %v1967
      %v2088 = vpop.f32.mrf.mxu0
      %v2089 = vadd.f32 0.0, %v2088
      %v2090 = vpop.f32.mrf.mxu0
      %v2091 = vpop.f32.mrf.mxu0
      %v2092 = vadd.f32 0.0, %v2091
      %v2093 = vpop.f32.mrf.mxu0
      %2094 = vmatprep.mubr.bf16.mxu0 0
      %2095 = vmatmul.mubr.bf16.gmra.mxu0 %v1970
      %v2096 = vpop.f32.mrf.mxu0
      %v2097 = vadd.f32 0.0, %v2096
      %v2098 = vpop.f32.mrf.mxu0
      %v2099 = vpop.f32.mrf.mxu0
      %v2100 = vadd.f32 0.0, %v2099
      %v2101 = vpop.f32.mrf.mxu0
      %2102 = vmatprep.mubr.bf16.mxu0 0
      %2103 = vmatmul.mubr.bf16.gmra.mxu0 %v1973
      %v2104 = vpop.f32.mrf.mxu0
      %v2105 = vadd.f32 0.0, %v2104
      %v2106 = vpop.f32.mrf.mxu0
      %v2107 = vpop.f32.mrf.mxu0
      %v2108 = vadd.f32 0.0, %v2107
      %v2109 = vpop.f32.mrf.mxu0
      %2110 = vmatprep.mubr.bf16.mxu0 0
      %2111 = vmatmul.mubr.bf16.gmra.mxu0 %v1976
      %v2112 = vpop.f32.mrf.mxu0
      %v2113 = vadd.f32 0.0, %v2112
      %v2114 = vpop.f32.mrf.mxu0
      %v2115 = vpop.f32.mrf.mxu0
      %v2116 = vadd.f32 0.0, %v2115
      %v2117 = vpop.f32.mrf.mxu0
      %2118 = vmatprep.mubr.bf16.mxu0 0
      %2119 = vmatmul.mubr.bf16.gmra.mxu0 %v1979
      %v2120 = vpop.f32.mrf.mxu0
      %v2121 = vadd.f32 0.0, %v2120
      %v2122 = vpop.f32.mrf.mxu0
      %v2123 = vpop.f32.mrf.mxu0
      %v2124 = vadd.f32 0.0, %v2123
      %v2125 = vpop.f32.mrf.mxu0
      %2126 = vmatprep.mubr.bf16.mxu0 0
      %2127 = vmatmul.mubr.bf16.gmra.mxu0 %v1982
      %v2128 = vpop.f32.mrf.mxu0
      %v2129 = vadd.f32 0.0, %v2128
      %v2130 = vpop.f32.mrf.mxu0
      %v2131 = vpop.f32.mrf.mxu0
      %v2132 = vadd.f32 0.0, %v2131
      %v2133 = vpop.f32.mrf.mxu0
      %2134 = vmatprep.mubr.bf16.mxu0 0
      %2135 = vmatmul.mubr.bf16.gmra.mxu0 %v1985
      %v2136 = vpop.f32.mrf.mxu0
      %v2137 = vadd.f32 0.0, %v2136
      %v2138 = vpop.f32.mrf.mxu0
      %v2139 = vpop.f32.mrf.mxu0
      %v2140 = vadd.f32 0.0, %v2139
      %v2141 = vpop.f32.mrf.mxu0
      %2142 = vmatprep.mubr.bf16.mxu0 0
      %2143 = vmatmul.mubr.bf16.gmra.mxu0 %v1988
      %v2144 = vpop.f32.mrf.mxu0
      %v2145 = vadd.f32 0.0, %v2144
      %v2146 = vpop.f32.mrf.mxu0
      %v2147 = vpop.f32.mrf.mxu0
      %v2148 = vadd.f32 0.0, %v2147
      %v2149 = vpop.f32.mrf.mxu0
      %2150 = vdwg.mxu0
      %v2151 = vadd.f32 %v1764, %v2025
      %v2152 = vadd.f32 %v1765, %v2028
      %v2153 = vadd.f32 %v1766, %v2033
      %v2154 = vadd.f32 %v1767, %v2036
      %v2155 = vadd.f32 %v1768, %v2041
      %v2156 = vadd.f32 %v1769, %v2044
      %v2157 = vadd.f32 %v1770, %v2049
      %v2158 = vadd.f32 %v1771, %v2052
      %v2159 = vadd.f32 %v1772, %v2057
      %v2160 = vadd.f32 %v1773, %v2060
      %v2161 = vadd.f32 %v1774, %v2065
      %v2162 = vadd.f32 %v1775, %v2068
      %v2163 = vadd.f32 %v1776, %v2073
      %v2164 = vadd.f32 %v1777, %v2076
      %v2165 = vadd.f32 %v1778, %v2081
      %v2166 = vadd.f32 %v1779, %v2084
      %v2167 = vadd.f32 %v1780, %v2089
      %v2168 = vadd.f32 %v1781, %v2092
      %v2169 = vadd.f32 %v1782, %v2097
      %v2170 = vadd.f32 %v1783, %v2100
      %v2171 = vadd.f32 %v1784, %v2105
      %v2172 = vadd.f32 %v1785, %v2108
      %v2173 = vadd.f32 %v1786, %v2113
      %v2174 = vadd.f32 %v1787, %v2116
      %v2175 = vadd.f32 %v1788, %v2121
      %v2176 = vadd.f32 %v1789, %v2124
      %v2177 = vadd.f32 %v1790, %v2129
      %v2178 = vadd.f32 %v1791, %v2132
      %v2179 = vadd.f32 %v1792, %v2137
      %v2180 = vadd.f32 %v1793, %v2140
      %v2181 = vadd.f32 %v1794, %v2145
      %v2182 = vadd.f32 %v1795, %v2148
      %v2183 = vld [vmem:[%s1796] sm:$0xf]
      %v2184 = vld [vmem:[%s1796 + $0x4] sm:$0xf]
      %v2185 = vld [vmem:[%s1796 + $0x8] sm:$0x1]
      %v2186 = vld [vmem:[%s1796 + $0xc] sm:$0xf]
      %v2187 = vld [vmem:[%s1796 + $0x10] sm:$0xf]
      %v2188 = vld [vmem:[%s1796 + $0x14] sm:$0x1]
      %v2189 = vld [vmem:[%s1796 + $0x18] sm:$0xf]
      %v2190 = vld [vmem:[%s1796 + $0x1c] sm:$0xf]
      %v2191 = vld [vmem:[%s1796 + $0x20] sm:$0x1]
      %v2192 = vld [vmem:[%s1796 + $0x24] sm:$0xf]
      %v2193 = vld [vmem:[%s1796 + $0x28] sm:$0xf]
      %v2194 = vld [vmem:[%s1796 + $0x2c] sm:$0x1]
      %v2195 = vld [vmem:[%s1796 + $0x30] sm:$0xf]
      %v2196 = vld [vmem:[%s1796 + $0x34] sm:$0xf]
      %v2197 = vld [vmem:[%s1796 + $0x38] sm:$0x1]
      %v2198 = vld [vmem:[%s1796 + $0x3c] sm:$0xf]
      %v2199 = vld [vmem:[%s1796 + $0x40] sm:$0xf]
      %v2200 = vld [vmem:[%s1796 + $0x44] sm:$0x1]
      %v2201 = vld [vmem:[%s1796 + $0x48] sm:$0xf]
      %v2202 = vld [vmem:[%s1796 + $0x4c] sm:$0xf]
      %v2203 = vld [vmem:[%s1796 + $0x50] sm:$0x1]
      %v2204 = vld [vmem:[%s1796 + $0x54] sm:$0xf]
      %v2205 = vld [vmem:[%s1796 + $0x58] sm:$0xf]
      %v2206 = vld [vmem:[%s1796 + $0x5c] sm:$0x1]
      %v2207 = vld [vmem:[%s1796 + $0x60] sm:$0xf]
      %v2208 = vld [vmem:[%s1796 + $0x64] sm:$0xf]
      %v2209 = vld [vmem:[%s1796 + $0x68] sm:$0x1]
      %v2210 = vld [vmem:[%s1796 + $0x6c] sm:$0xf]
      %v2211 = vld [vmem:[%s1796 + $0x70] sm:$0xf]
      %v2212 = vld [vmem:[%s1796 + $0x74] sm:$0x1]
      %v2213 = vld [vmem:[%s1796 + $0x78] sm:$0xf]
      %v2214 = vld [vmem:[%s1796 + $0x7c] sm:$0xf]
      %v2215 = vld [vmem:[%s1796 + $0x80] sm:$0x1]
      %v2216 = vld [vmem:[%s1796 + $0x84] sm:$0xf]
      %v2217 = vld [vmem:[%s1796 + $0x88] sm:$0xf]
      %v2218 = vld [vmem:[%s1796 + $0x8c] sm:$0x1]
      %v2219 = vld [vmem:[%s1796 + $0x90] sm:$0xf]
      %v2220 = vld [vmem:[%s1796 + $0x94] sm:$0xf]
      %v2221 = vld [vmem:[%s1796 + $0x98] sm:$0x1]
      %v2222 = vld [vmem:[%s1796 + $0x9c] sm:$0xf]
      %v2223 = vld [vmem:[%s1796 + $0xa0] sm:$0xf]
      %v2224 = vld [vmem:[%s1796 + $0xa4] sm:$0x1]
      %v2225 = vld [vmem:[%s1796 + $0xa8] sm:$0xf]
      %v2226 = vld [vmem:[%s1796 + $0xac] sm:$0xf]
      %v2227 = vld [vmem:[%s1796 + $0xb0] sm:$0x1]
      %v2228 = vld [vmem:[%s1796 + $0xb4] sm:$0xf]
      %v2229 = vld [vmem:[%s1796 + $0xb8] sm:$0xf]
      %v2230 = vld [vmem:[%s1796 + $0xbc] sm:$0x1]
      %v2232 = vshrl.u32 %v2183, 16
      %v2234 = vrot.slane %v2232, 4
      %v2235 = vshll.u32 %v2183, 16
      %v2237 = vrot.slane %v2235, 5
      %v2238 = vor.u32 %v2234, %v2237
      %v2239 = vrot.slane %v2238, 4
      %v2241 = vshll.u32 %v2184, 16
      %v2243 = vrot.slane %v2241, 5
      %v2244 = vsel %vm322, %v2239, %v2243
      %v2245 = vshrl.u32 %v2184, 16
      %v2247 = vrot.slane %v2245, 4
      %v2248 = vor.u32 %v2247, %v2243
      %v2249 = vrot.slane %v2248, 4
      %v2251 = vshll.u32 %v2185, 16
      %v2253 = vrot.slane %v2251, 5
      %v2254 = vsel %vm322, %v2249, %v2253
      %v2256 = vshrl.u32 %v2186, 16
      %v2258 = vrot.slane %v2256, 4
      %v2259 = vshll.u32 %v2186, 16
      %v2261 = vrot.slane %v2259, 5
      %v2262 = vor.u32 %v2258, %v2261
      %v2263 = vrot.slane %v2262, 4
      %v2265 = vshll.u32 %v2187, 16
      %v2267 = vrot.slane %v2265, 5
      %v2268 = vsel %vm322, %v2263, %v2267
      %v2269 = vshrl.u32 %v2187, 16
      %v2271 = vrot.slane %v2269, 4
      %v2272 = vor.u32 %v2271, %v2267
      %v2273 = vrot.slane %v2272, 4
      %v2275 = vshll.u32 %v2188, 16
      %v2277 = vrot.slane %v2275, 5
      %v2278 = vsel %vm322, %v2273, %v2277
      %v2280 = vshrl.u32 %v2189, 16
      %v2282 = vrot.slane %v2280, 4
      %v2283 = vshll.u32 %v2189, 16
      %v2285 = vrot.slane %v2283, 5
      %v2286 = vor.u32 %v2282, %v2285
      %v2287 = vrot.slane %v2286, 4
      %v2289 = vshll.u32 %v2190, 16
      %v2291 = vrot.slane %v2289, 5
      %v2292 = vsel %vm322, %v2287, %v2291
      %v2293 = vshrl.u32 %v2190, 16
      %v2295 = vrot.slane %v2293, 4
      %v2296 = vor.u32 %v2295, %v2291
      %v2297 = vrot.slane %v2296, 4
      %v2299 = vshll.u32 %v2191, 16
      %v2301 = vrot.slane %v2299, 5
      %v2302 = vsel %vm322, %v2297, %v2301
      %v2304 = vshrl.u32 %v2192, 16
      %v2306 = vrot.slane %v2304, 4
      %v2307 = vshll.u32 %v2192, 16
      %v2309 = vrot.slane %v2307, 5
      %v2310 = vor.u32 %v2306, %v2309
      %v2311 = vrot.slane %v2310, 4
      %v2313 = vshll.u32 %v2193, 16
      %v2315 = vrot.slane %v2313, 5
      %v2316 = vsel %vm322, %v2311, %v2315
      %v2317 = vshrl.u32 %v2193, 16
      %v2319 = vrot.slane %v2317, 4
      %v2320 = vor.u32 %v2319, %v2315
      %v2321 = vrot.slane %v2320, 4
      %v2323 = vshll.u32 %v2194, 16
      %v2325 = vrot.slane %v2323, 5
      %v2326 = vsel %vm322, %v2321, %v2325
      %v2328 = vshrl.u32 %v2195, 16
      %v2330 = vrot.slane %v2328, 4
      %v2331 = vshll.u32 %v2195, 16
      %v2333 = vrot.slane %v2331, 5
      %v2334 = vor.u32 %v2330, %v2333
      %v2335 = vrot.slane %v2334, 4
      %v2337 = vshll.u32 %v2196, 16
      %v2339 = vrot.slane %v2337, 5
      %v2340 = vsel %vm322, %v2335, %v2339
      %v2341 = vshrl.u32 %v2196, 16
      %v2343 = vrot.slane %v2341, 4
      %v2344 = vor.u32 %v2343, %v2339
      %v2345 = vrot.slane %v2344, 4
      %v2347 = vshll.u32 %v2197, 16
      %v2349 = vrot.slane %v2347, 5
      %v2350 = vsel %vm322, %v2345, %v2349
      %v2352 = vshrl.u32 %v2198, 16
      %v2354 = vrot.slane %v2352, 4
      %v2355 = vshll.u32 %v2198, 16
      %v2357 = vrot.slane %v2355, 5
      %v2358 = vor.u32 %v2354, %v2357
      %v2359 = vrot.slane %v2358, 4
      %v2361 = vshll.u32 %v2199, 16
      %v2363 = vrot.slane %v2361, 5
      %v2364 = vsel %vm322, %v2359, %v2363
      %v2365 = vshrl.u32 %v2199, 16
      %v2367 = vrot.slane %v2365, 4
      %v2368 = vor.u32 %v2367, %v2363
      %v2369 = vrot.slane %v2368, 4
      %v2371 = vshll.u32 %v2200, 16
      %v2373 = vrot.slane %v2371, 5
      %v2374 = vsel %vm322, %v2369, %v2373
      %v2376 = vshrl.u32 %v2201, 16
      %v2378 = vrot.slane %v2376, 4
      %v2379 = vshll.u32 %v2201, 16
      %v2381 = vrot.slane %v2379, 5
      %v2382 = vor.u32 %v2378, %v2381
      %v2383 = vrot.slane %v2382, 4
      %v2385 = vshll.u32 %v2202, 16
      %v2387 = vrot.slane %v2385, 5
      %v2388 = vsel %vm322, %v2383, %v2387
      %v2389 = vshrl.u32 %v2202, 16
      %v2391 = vrot.slane %v2389, 4
      %v2392 = vor.u32 %v2391, %v2387
      %v2393 = vrot.slane %v2392, 4
      %v2395 = vshll.u32 %v2203, 16
      %v2397 = vrot.slane %v2395, 5
      %v2398 = vsel %vm322, %v2393, %v2397
      %v2400 = vshrl.u32 %v2204, 16
      %v2402 = vrot.slane %v2400, 4
      %v2403 = vshll.u32 %v2204, 16
      %v2405 = vrot.slane %v2403, 5
      %v2406 = vor.u32 %v2402, %v2405
      %v2407 = vrot.slane %v2406, 4
      %v2409 = vshll.u32 %v2205, 16
      %v2411 = vrot.slane %v2409, 5
      %v2412 = vsel %vm322, %v2407, %v2411
      %v2413 = vshrl.u32 %v2205, 16
      %v2415 = vrot.slane %v2413, 4
      %v2416 = vor.u32 %v2415, %v2411
      %v2417 = vrot.slane %v2416, 4
      %v2419 = vshll.u32 %v2206, 16
      %v2421 = vrot.slane %v2419, 5
      %v2422 = vsel %vm322, %v2417, %v2421
      %v2424 = vshrl.u32 %v2207, 16
      %v2426 = vrot.slane %v2424, 4
      %v2427 = vshll.u32 %v2207, 16
      %v2429 = vrot.slane %v2427, 5
      %v2430 = vor.u32 %v2426, %v2429
      %v2431 = vrot.slane %v2430, 4
      %v2433 = vshll.u32 %v2208, 16
      %v2435 = vrot.slane %v2433, 5
      %v2436 = vsel %vm322, %v2431, %v2435
      %v2437 = vshrl.u32 %v2208, 16
      %v2439 = vrot.slane %v2437, 4
      %v2440 = vor.u32 %v2439, %v2435
      %v2441 = vrot.slane %v2440, 4
      %v2443 = vshll.u32 %v2209, 16
      %v2445 = vrot.slane %v2443, 5
      %v2446 = vsel %vm322, %v2441, %v2445
      %v2448 = vshrl.u32 %v2210, 16
      %v2450 = vrot.slane %v2448, 4
      %v2451 = vshll.u32 %v2210, 16
      %v2453 = vrot.slane %v2451, 5
      %v2454 = vor.u32 %v2450, %v2453
      %v2455 = vrot.slane %v2454, 4
      %v2457 = vshll.u32 %v2211, 16
      %v2459 = vrot.slane %v2457, 5
      %v2460 = vsel %vm322, %v2455, %v2459
      %v2461 = vshrl.u32 %v2211, 16
      %v2463 = vrot.slane %v2461, 4
      %v2464 = vor.u32 %v2463, %v2459
      %v2465 = vrot.slane %v2464, 4
      %v2467 = vshll.u32 %v2212, 16
      %v2469 = vrot.slane %v2467, 5
      %v2470 = vsel %vm322, %v2465, %v2469
      %v2472 = vshrl.u32 %v2213, 16
      %v2474 = vrot.slane %v2472, 4
      %v2475 = vshll.u32 %v2213, 16
      %v2477 = vrot.slane %v2475, 5
      %v2478 = vor.u32 %v2474, %v2477
      %v2479 = vrot.slane %v2478, 4
      %v2481 = vshll.u32 %v2214, 16
      %v2483 = vrot.slane %v2481, 5
      %v2484 = vsel %vm322, %v2479, %v2483
      %v2485 = vshrl.u32 %v2214, 16
      %v2487 = vrot.slane %v2485, 4
      %v2488 = vor.u32 %v2487, %v2483
      %v2489 = vrot.slane %v2488, 4
      %v2491 = vshll.u32 %v2215, 16
      %v2493 = vrot.slane %v2491, 5
      %v2494 = vsel %vm322, %v2489, %v2493
      %v2496 = vshrl.u32 %v2216, 16
      %v2498 = vrot.slane %v2496, 4
      %v2499 = vshll.u32 %v2216, 16
      %v2501 = vrot.slane %v2499, 5
      %v2502 = vor.u32 %v2498, %v2501
      %v2503 = vrot.slane %v2502, 4
      %v2505 = vshll.u32 %v2217, 16
      %v2507 = vrot.slane %v2505, 5
      %v2508 = vsel %vm322, %v2503, %v2507
      %v2509 = vshrl.u32 %v2217, 16
      %v2511 = vrot.slane %v2509, 4
      %v2512 = vor.u32 %v2511, %v2507
      %v2513 = vrot.slane %v2512, 4
      %v2515 = vshll.u32 %v2218, 16
      %v2517 = vrot.slane %v2515, 5
      %v2518 = vsel %vm322, %v2513, %v2517
      %v2520 = vshrl.u32 %v2219, 16
      %v2522 = vrot.slane %v2520, 4
      %v2523 = vshll.u32 %v2219, 16
      %v2525 = vrot.slane %v2523, 5
      %v2526 = vor.u32 %v2522, %v2525
      %v2527 = vrot.slane %v2526, 4
      %v2529 = vshll.u32 %v2220, 16
      %v2531 = vrot.slane %v2529, 5
      %v2532 = vsel %vm322, %v2527, %v2531
      %v2533 = vshrl.u32 %v2220, 16
      %v2535 = vrot.slane %v2533, 4
      %v2536 = vor.u32 %v2535, %v2531
      %v2537 = vrot.slane %v2536, 4
      %v2539 = vshll.u32 %v2221, 16
      %v2541 = vrot.slane %v2539, 5
      %v2542 = vsel %vm322, %v2537, %v2541
      %v2544 = vshrl.u32 %v2222, 16
      %v2546 = vrot.slane %v2544, 4
      %v2547 = vshll.u32 %v2222, 16
      %v2549 = vrot.slane %v2547, 5
      %v2550 = vor.u32 %v2546, %v2549
      %v2551 = vrot.slane %v2550, 4
      %v2553 = vshll.u32 %v2223, 16
      %v2555 = vrot.slane %v2553, 5
      %v2556 = vsel %vm322, %v2551, %v2555
      %v2557 = vshrl.u32 %v2223, 16
      %v2559 = vrot.slane %v2557, 4
      %v2560 = vor.u32 %v2559, %v2555
      %v2561 = vrot.slane %v2560, 4
      %v2563 = vshll.u32 %v2224, 16
      %v2565 = vrot.slane %v2563, 5
      %v2566 = vsel %vm322, %v2561, %v2565
      %v2568 = vshrl.u32 %v2225, 16
      %v2570 = vrot.slane %v2568, 4
      %v2571 = vshll.u32 %v2225, 16
      %v2573 = vrot.slane %v2571, 5
      %v2574 = vor.u32 %v2570, %v2573
      %v2575 = vrot.slane %v2574, 4
      %v2577 = vshll.u32 %v2226, 16
      %v2579 = vrot.slane %v2577, 5
      %v2580 = vsel %vm322, %v2575, %v2579
      %v2581 = vshrl.u32 %v2226, 16
      %v2583 = vrot.slane %v2581, 4
      %v2584 = vor.u32 %v2583, %v2579
      %v2585 = vrot.slane %v2584, 4
      %v2587 = vshll.u32 %v2227, 16
      %v2589 = vrot.slane %v2587, 5
      %v2590 = vsel %vm322, %v2585, %v2589
      %v2592 = vshrl.u32 %v2228, 16
      %v2594 = vrot.slane %v2592, 4
      %v2595 = vshll.u32 %v2228, 16
      %v2597 = vrot.slane %v2595, 5
      %v2598 = vor.u32 %v2594, %v2597
      %v2599 = vrot.slane %v2598, 4
      %v2601 = vshll.u32 %v2229, 16
      %v2603 = vrot.slane %v2601, 5
      %v2604 = vsel %vm322, %v2599, %v2603
      %v2605 = vshrl.u32 %v2229, 16
      %v2607 = vrot.slane %v2605, 4
      %v2608 = vor.u32 %v2607, %v2603
      %v2609 = vrot.slane %v2608, 4
      %v2611 = vshll.u32 %v2230, 16
      %v2613 = vrot.slane %v2611, 5
      %v2614 = vsel %vm322, %v2609, %v2613
      %s2615 = scalar_lea.vmem %s248, 128
      %v2616 = vld [vmem:[%s2615] sm:$0xf]
      %v2617 = vld [vmem:[%s2615 + $0x4] sm:$0xf]
      %v2618 = vld [vmem:[%s2615 + $0x8] sm:$0xf]
      %v2619 = vld [vmem:[%s2615 + $0xc] sm:$0xf]
      %v2620 = vld [vmem:[%s2615 + $0x10] sm:$0xf]
      %v2621 = vld [vmem:[%s2615 + $0x14] sm:$0xf]
      %v2622 = vld [vmem:[%s2615 + $0x18] sm:$0xf]
      %v2623 = vld [vmem:[%s2615 + $0x1c] sm:$0xf]
      %v2624 = vunpack.c.l.b16 %v2244
      %v2625 = vunpack.c.l.b16 %v2254
      %v2626 = vunpack.c.l.b16 %v2268
      %v2627 = vunpack.c.l.b16 %v2278
      %v2628 = vunpack.c.l.b16 %v2292
      %v2629 = vunpack.c.l.b16 %v2302
      %v2630 = vunpack.c.l.b16 %v2316
      %v2631 = vunpack.c.l.b16 %v2326
      %v2632 = vunpack.c.l.b16 %v2340
      %v2633 = vunpack.c.l.b16 %v2350
      %v2634 = vunpack.c.l.b16 %v2364
      %v2635 = vunpack.c.l.b16 %v2374
      %v2636 = vunpack.c.l.b16 %v2388
      %v2637 = vunpack.c.l.b16 %v2398
      %v2638 = vunpack.c.l.b16 %v2412
      %v2639 = vunpack.c.l.b16 %v2422
      %v2640 = vunpack.c.l.b16 %v2436
      %v2641 = vunpack.c.l.b16 %v2446
      %v2642 = vunpack.c.l.b16 %v2460
      %v2643 = vunpack.c.l.b16 %v2470
      %v2644 = vunpack.c.l.b16 %v2484
      %v2645 = vunpack.c.l.b16 %v2494
      %v2646 = vunpack.c.l.b16 %v2508
      %v2647 = vunpack.c.l.b16 %v2518
      %v2648 = vunpack.c.l.b16 %v2532
      %v2649 = vunpack.c.l.b16 %v2542
      %v2650 = vunpack.c.l.b16 %v2556
      %v2651 = vunpack.c.l.b16 %v2566
      %v2652 = vunpack.c.l.b16 %v2580
      %v2653 = vunpack.c.l.b16 %v2590
      %v2654 = vunpack.c.l.b16 %v2604
      %v2655 = vunpack.c.l.b16 %v2614
      %v2656 = vpack.c.b16 %v2625, %v2624
      %v2657 = vpack.c.b16 %v2627, %v2626
      %v2658 = vpack.c.b16 %v2629, %v2628
      %v2659 = vpack.c.b16 %v2631, %v2630
      %v2660 = vpack.c.b16 %v2633, %v2632
      %v2661 = vpack.c.b16 %v2635, %v2634
      %v2662 = vpack.c.b16 %v2637, %v2636
      %v2663 = vpack.c.b16 %v2639, %v2638
      %v2664 = vpack.c.b16 %v2641, %v2640
      %v2665 = vpack.c.b16 %v2643, %v2642
      %v2666 = vpack.c.b16 %v2645, %v2644
      %v2667 = vpack.c.b16 %v2647, %v2646
      %v2668 = vpack.c.b16 %v2649, %v2648
      %v2669 = vpack.c.b16 %v2651, %v2650
      %v2670 = vpack.c.b16 %v2653, %v2652
      %v2671 = vpack.c.b16 %v2655, %v2654
      %v2680 = vunpack.c.l.b16 %v2616
      %v2681 = vunpack.c.l.b16 %v2617
      %v2682 = vunpack.c.l.b16 %v2618
      %v2683 = vunpack.c.l.b16 %v2619
      %v2684 = vunpack.c.l.b16 %v2620
      %v2685 = vunpack.c.l.b16 %v2621
      %v2686 = vunpack.c.l.b16 %v2622
      %v2687 = vunpack.c.l.b16 %v2623
      %v2688 = vpack.c.b16 %v2681, %v2680
      %v2689 = vpack.c.b16 %v2683, %v2682
      %v2690 = vpack.c.b16 %v2685, %v2684
      %v2691 = vpack.c.b16 %v2687, %v2686
      %v2697 = vsel %vm788, %v2656, 0
      %v2700 = vsel %vm788, %v2657, 0
      %v2703 = vsel %vm788, %v2658, 0
      %v2706 = vsel %vm788, %v2659, 0
      %v2709 = vsel %vm788, %v2660, 0
      %v2712 = vsel %vm788, %v2661, 0
      %v2715 = vsel %vm788, %v2662, 0
      %v2718 = vsel %vm788, %v2663, 0
      %v2721 = vsel %vm788, %v2664, 0
      %v2724 = vsel %vm788, %v2665, 0
      %v2727 = vsel %vm788, %v2666, 0
      %v2730 = vsel %vm788, %v2667, 0
      %v2733 = vsel %vm788, %v2668, 0
      %v2736 = vsel %vm788, %v2669, 0
      %v2739 = vsel %vm788, %v2670, 0
      %v2742 = vsel %vm788, %v2671, 0
      %2744 = vmatprep.subr.bf16.mxu0 0
      %2745 = vmatpush1.bf16.msra.mxu0 0
      %2746 = vmatprep.subr.bf16.mxu0 0
      %2747 = vmatpush1.bf16.msra.mxu0 0
      %2748 = vmatprep.subr.bf16.mxu0 0
      %2749 = vmatpush1.bf16.msra.mxu0 0
      %2750 = vmatprep.subr.bf16.mxu0 0
      %2751 = vmatpush1.bf16.msra.mxu0 0
      %2752 = vmatprep.subr.bf16.mxu0 0
      %2753 = vmatpush1.bf16.msra.mxu0 %v2691
      %2754 = vmatprep.subr.bf16.mxu0 0
      %2755 = vmatpush1.bf16.msra.mxu0 %v2690
      %2756 = vmatprep.subr.bf16.mxu0 0
      %2757 = vmatpush1.bf16.msra.mxu0 %v2689
      %2758 = vmatprep.subr.bf16.mxu0 0
      %2759 = vmatpush1.bf16.msra.mxu0 %v2688
      %2760 = vmatprep.subr.bf16.mxu0 0
      %2761 = vmatpush2.bf16.msra.mxu0 0
      %2762 = vmatprep.subr.bf16.mxu0 0
      %2763 = vmatpush2.bf16.msra.mxu0 0
      %2764 = vmatprep.subr.bf16.mxu0 0
      %2765 = vmatpush2.bf16.msra.mxu0 0
      %2766 = vmatprep.subr.bf16.mxu0 0
      %2767 = vmatpush2.bf16.msra.mxu0 0
      %2768 = vmatprep.subr.bf16.mxu0 0
      %2769 = vmatpush2.bf16.msra.mxu0 0
      %2770 = vmatprep.subr.bf16.mxu0 0
      %2771 = vmatpush2.bf16.msra.mxu0 0
      %2772 = vmatprep.subr.bf16.mxu0 0
      %2773 = vmatpush2.bf16.msra.mxu0 0
      %2774 = vmatprep.subr.bf16.mxu0 0
      %2775 = vmatpush2.bf16.msra.mxu0 0
      %2776 = vmatprep.mubr.bf16.mxu0 0
      %2777 = vmatmul.mubr.bf16.gmra.mxu0 %v2697
      %v2778 = vpop.f32.mrf.mxu0
      %v2779 = vadd.f32 0.0, %v2778
      %v2780 = vpop.f32.mrf.mxu0
      %v2781 = vpop.f32.mrf.mxu0
      %v2782 = vadd.f32 0.0, %v2781
      %v2783 = vpop.f32.mrf.mxu0
      %2784 = vmatprep.mubr.bf16.mxu0 0
      %2785 = vmatmul.mubr.bf16.gmra.mxu0 %v2700
      %v2786 = vpop.f32.mrf.mxu0
      %v2787 = vadd.f32 0.0, %v2786
      %v2788 = vpop.f32.mrf.mxu0
      %v2789 = vpop.f32.mrf.mxu0
      %v2790 = vadd.f32 0.0, %v2789
      %v2791 = vpop.f32.mrf.mxu0
      %2792 = vmatprep.mubr.bf16.mxu0 0
      %2793 = vmatmul.mubr.bf16.gmra.mxu0 %v2703
      %v2794 = vpop.f32.mrf.mxu0
      %v2795 = vadd.f32 0.0, %v2794
      %v2796 = vpop.f32.mrf.mxu0
      %v2797 = vpop.f32.mrf.mxu0
      %v2798 = vadd.f32 0.0, %v2797
      %v2799 = vpop.f32.mrf.mxu0
      %2800 = vmatprep.mubr.bf16.mxu0 0
      %2801 = vmatmul.mubr.bf16.gmra.mxu0 %v2706
      %v2802 = vpop.f32.mrf.mxu0
      %v2803 = vadd.f32 0.0, %v2802
      %v2804 = vpop.f32.mrf.mxu0
      %v2805 = vpop.f32.mrf.mxu0
      %v2806 = vadd.f32 0.0, %v2805
      %v2807 = vpop.f32.mrf.mxu0
      %2808 = vmatprep.mubr.bf16.mxu0 0
      %2809 = vmatmul.mubr.bf16.gmra.mxu0 %v2709
      %v2810 = vpop.f32.mrf.mxu0
      %v2811 = vadd.f32 0.0, %v2810
      %v2812 = vpop.f32.mrf.mxu0
      %v2813 = vpop.f32.mrf.mxu0
      %v2814 = vadd.f32 0.0, %v2813
      %v2815 = vpop.f32.mrf.mxu0
      %2816 = vmatprep.mubr.bf16.mxu0 0
      %2817 = vmatmul.mubr.bf16.gmra.mxu0 %v2712
      %v2818 = vpop.f32.mrf.mxu0
      %v2819 = vadd.f32 0.0, %v2818
      %v2820 = vpop.f32.mrf.mxu0
      %v2821 = vpop.f32.mrf.mxu0
      %v2822 = vadd.f32 0.0, %v2821
      %v2823 = vpop.f32.mrf.mxu0
      %2824 = vmatprep.mubr.bf16.mxu0 0
      %2825 = vmatmul.mubr.bf16.gmra.mxu0 %v2715
      %v2826 = vpop.f32.mrf.mxu0
      %v2827 = vadd.f32 0.0, %v2826
      %v2828 = vpop.f32.mrf.mxu0
      %v2829 = vpop.f32.mrf.mxu0
      %v2830 = vadd.f32 0.0, %v2829
      %v2831 = vpop.f32.mrf.mxu0
      %2832 = vmatprep.mubr.bf16.mxu0 0
      %2833 = vmatmul.mubr.bf16.gmra.mxu0 %v2718
      %v2834 = vpop.f32.mrf.mxu0
      %v2835 = vadd.f32 0.0, %v2834
      %v2836 = vpop.f32.mrf.mxu0
      %v2837 = vpop.f32.mrf.mxu0
      %v2838 = vadd.f32 0.0, %v2837
      %v2839 = vpop.f32.mrf.mxu0
      %2840 = vmatprep.mubr.bf16.mxu0 0
      %2841 = vmatmul.mubr.bf16.gmra.mxu0 %v2721
      %v2842 = vpop.f32.mrf.mxu0
      %v2843 = vadd.f32 0.0, %v2842
      %v2844 = vpop.f32.mrf.mxu0
      %v2845 = vpop.f32.mrf.mxu0
      %v2846 = vadd.f32 0.0, %v2845
      %v2847 = vpop.f32.mrf.mxu0
      %2848 = vmatprep.mubr.bf16.mxu0 0
      %2849 = vmatmul.mubr.bf16.gmra.mxu0 %v2724
      %v2850 = vpop.f32.mrf.mxu0
      %v2851 = vadd.f32 0.0, %v2850
      %v2852 = vpop.f32.mrf.mxu0
      %v2853 = vpop.f32.mrf.mxu0
      %v2854 = vadd.f32 0.0, %v2853
      %v2855 = vpop.f32.mrf.mxu0
      %2856 = vmatprep.mubr.bf16.mxu0 0
      %2857 = vmatmul.mubr.bf16.gmra.mxu0 %v2727
      %v2858 = vpop.f32.mrf.mxu0
      %v2859 = vadd.f32 0.0, %v2858
      %v2860 = vpop.f32.mrf.mxu0
      %v2861 = vpop.f32.mrf.mxu0
      %v2862 = vadd.f32 0.0, %v2861
      %v2863 = vpop.f32.mrf.mxu0
      %2864 = vmatprep.mubr.bf16.mxu0 0
      %2865 = vmatmul.mubr.bf16.gmra.mxu0 %v2730
      %v2866 = vpop.f32.mrf.mxu0
      %v2867 = vadd.f32 0.0, %v2866
      %v2868 = vpop.f32.mrf.mxu0
      %v2869 = vpop.f32.mrf.mxu0
      %v2870 = vadd.f32 0.0, %v2869
      %v2871 = vpop.f32.mrf.mxu0
      %2872 = vmatprep.mubr.bf16.mxu0 0
      %2873 = vmatmul.mubr.bf16.gmra.mxu0 %v2733
      %v2874 = vpop.f32.mrf.mxu0
      %v2875 = vadd.f32 0.0, %v2874
      %v2876 = vpop.f32.mrf.mxu0
      %v2877 = vpop.f32.mrf.mxu0
      %v2878 = vadd.f32 0.0, %v2877
      %v2879 = vpop.f32.mrf.mxu0
      %2880 = vmatprep.mubr.bf16.mxu0 0
      %2881 = vmatmul.mubr.bf16.gmra.mxu0 %v2736
      %v2882 = vpop.f32.mrf.mxu0
      %v2883 = vadd.f32 0.0, %v2882
      %v2884 = vpop.f32.mrf.mxu0
      %v2885 = vpop.f32.mrf.mxu0
      %v2886 = vadd.f32 0.0, %v2885
      %v2887 = vpop.f32.mrf.mxu0
      %2888 = vmatprep.mubr.bf16.mxu0 0
      %2889 = vmatmul.mubr.bf16.gmra.mxu0 %v2739
      %v2890 = vpop.f32.mrf.mxu0
      %v2891 = vadd.f32 0.0, %v2890
      %v2892 = vpop.f32.mrf.mxu0
      %v2893 = vpop.f32.mrf.mxu0
      %v2894 = vadd.f32 0.0, %v2893
      %v2895 = vpop.f32.mrf.mxu0
      %2896 = vmatprep.mubr.bf16.mxu0 0
      %2897 = vmatmul.mubr.bf16.gmra.mxu0 %v2742
      %v2898 = vpop.f32.mrf.mxu0
      %v2899 = vadd.f32 0.0, %v2898
      %v2900 = vpop.f32.mrf.mxu0
      %v2901 = vpop.f32.mrf.mxu0
      %v2902 = vadd.f32 0.0, %v2901
      %v2903 = vpop.f32.mrf.mxu0
      %2904 = vdwg.mxu0
      %v2905 = vadd.f32 %v2151, %v2779
      %v2906 = vadd.f32 %v2152, %v2782
      %v2907 = vadd.f32 %v2153, %v2787
      %v2908 = vadd.f32 %v2154, %v2790
      %v2909 = vadd.f32 %v2155, %v2795
      %v2910 = vadd.f32 %v2156, %v2798
      %v2911 = vadd.f32 %v2157, %v2803
      %v2912 = vadd.f32 %v2158, %v2806
      %v2913 = vadd.f32 %v2159, %v2811
      %v2914 = vadd.f32 %v2160, %v2814
      %v2915 = vadd.f32 %v2161, %v2819
      %v2916 = vadd.f32 %v2162, %v2822
      %v2917 = vadd.f32 %v2163, %v2827
      %v2918 = vadd.f32 %v2164, %v2830
      %v2919 = vadd.f32 %v2165, %v2835
      %v2920 = vadd.f32 %v2166, %v2838
      %v2921 = vadd.f32 %v2167, %v2843
      %v2922 = vadd.f32 %v2168, %v2846
      %v2923 = vadd.f32 %v2169, %v2851
      %v2924 = vadd.f32 %v2170, %v2854
      %v2925 = vadd.f32 %v2171, %v2859
      %v2926 = vadd.f32 %v2172, %v2862
      %v2927 = vadd.f32 %v2173, %v2867
      %v2928 = vadd.f32 %v2174, %v2870
      %v2929 = vadd.f32 %v2175, %v2875
      %v2930 = vadd.f32 %v2176, %v2878
      %v2931 = vadd.f32 %v2177, %v2883
      %v2932 = vadd.f32 %v2178, %v2886
      %v2933 = vadd.f32 %v2179, %v2891
      %v2934 = vadd.f32 %v2180, %v2894
      %v2935 = vadd.f32 %v2181, %v2899
      %v2936 = vadd.f32 %v2182, %v2902
      %v2937 = vld [vmem:[%s1796] sm:$0xe]
      %v2938 = vld [vmem:[%s1796 + $0xc] sm:$0xe]
      %v2939 = vld [vmem:[%s1796 + $0x18] sm:$0xe]
      %v2940 = vld [vmem:[%s1796 + $0x24] sm:$0xe]
      %v2941 = vld [vmem:[%s1796 + $0x30] sm:$0xe]
      %v2942 = vld [vmem:[%s1796 + $0x3c] sm:$0xe]
      %v2943 = vld [vmem:[%s1796 + $0x48] sm:$0xe]
      %v2944 = vld [vmem:[%s1796 + $0x54] sm:$0xe]
      %v2945 = vld [vmem:[%s1796 + $0x60] sm:$0xe]
      %v2946 = vld [vmem:[%s1796 + $0x6c] sm:$0xe]
      %v2947 = vld [vmem:[%s1796 + $0x78] sm:$0xe]
      %v2948 = vld [vmem:[%s1796 + $0x84] sm:$0xe]
      %v2949 = vld [vmem:[%s1796 + $0x90] sm:$0xe]
      %v2950 = vld [vmem:[%s1796 + $0x9c] sm:$0xe]
      %v2951 = vld [vmem:[%s1796 + $0xa8] sm:$0xe]
      %v2952 = vld [vmem:[%s1796 + $0xb4] sm:$0xe]
      %v3001 = vrot.slane %v2937, 5
      %v3002 = vrot.slane %v3001, 4
      %v3003 = vrot.slane %v2184, 5
      %v3004 = vsel %vm1361, %v3002, %v3003
      %v3005 = vrot.slane %v3003, 4
      %v3006 = vrot.slane %v2185, 5
      %v3007 = vsel %vm1361, %v3005, %v3006
      %v3008 = vrot.slane %v2938, 5
      %v3009 = vrot.slane %v3008, 4
      %v3010 = vrot.slane %v2187, 5
      %v3011 = vsel %vm1361, %v3009, %v3010
      %v3012 = vrot.slane %v3010, 4
      %v3013 = vrot.slane %v2188, 5
      %v3014 = vsel %vm1361, %v3012, %v3013
      %v3015 = vrot.slane %v2939, 5
      %v3016 = vrot.slane %v3015, 4
      %v3017 = vrot.slane %v2190, 5
      %v3018 = vsel %vm1361, %v3016, %v3017
      %v3019 = vrot.slane %v3017, 4
      %v3020 = vrot.slane %v2191, 5
      %v3021 = vsel %vm1361, %v3019, %v3020
      %v3022 = vrot.slane %v2940, 5
      %v3023 = vrot.slane %v3022, 4
      %v3024 = vrot.slane %v2193, 5
      %v3025 = vsel %vm1361, %v3023, %v3024
      %v3026 = vrot.slane %v3024, 4
      %v3027 = vrot.slane %v2194, 5
      %v3028 = vsel %vm1361, %v3026, %v3027
      %v3029 = vrot.slane %v2941, 5
      %v3030 = vrot.slane %v3029, 4
      %v3031 = vrot.slane %v2196, 5
      %v3032 = vsel %vm1361, %v3030, %v3031
      %v3033 = vrot.slane %v3031, 4
      %v3034 = vrot.slane %v2197, 5
      %v3035 = vsel %vm1361, %v3033, %v3034
      %v3036 = vrot.slane %v2942, 5
      %v3037 = vrot.slane %v3036, 4
      %v3038 = vrot.slane %v2199, 5
      %v3039 = vsel %vm1361, %v3037, %v3038
      %v3040 = vrot.slane %v3038, 4
      %v3041 = vrot.slane %v2200, 5
      %v3042 = vsel %vm1361, %v3040, %v3041
      %v3043 = vrot.slane %v2943, 5
      %v3044 = vrot.slane %v3043, 4
      %v3045 = vrot.slane %v2202, 5
      %v3046 = vsel %vm1361, %v3044, %v3045
      %v3047 = vrot.slane %v3045, 4
      %v3048 = vrot.slane %v2203, 5
      %v3049 = vsel %vm1361, %v3047, %v3048
      %v3050 = vrot.slane %v2944, 5
      %v3051 = vrot.slane %v3050, 4
      %v3052 = vrot.slane %v2205, 5
      %v3053 = vsel %vm1361, %v3051, %v3052
      %v3054 = vrot.slane %v3052, 4
      %v3055 = vrot.slane %v2206, 5
      %v3056 = vsel %vm1361, %v3054, %v3055
      %v3057 = vrot.slane %v2945, 5
      %v3058 = vrot.slane %v3057, 4
      %v3059 = vrot.slane %v2208, 5
      %v3060 = vsel %vm1361, %v3058, %v3059
      %v3061 = vrot.slane %v3059, 4
      %v3062 = vrot.slane %v2209, 5
      %v3063 = vsel %vm1361, %v3061, %v3062
      %v3064 = vrot.slane %v2946, 5
      %v3065 = vrot.slane %v3064, 4
      %v3066 = vrot.slane %v2211, 5
      %v3067 = vsel %vm1361, %v3065, %v3066
      %v3068 = vrot.slane %v3066, 4
      %v3069 = vrot.slane %v2212, 5
      %v3070 = vsel %vm1361, %v3068, %v3069
      %v3071 = vrot.slane %v2947, 5
      %v3072 = vrot.slane %v3071, 4
      %v3073 = vrot.slane %v2214, 5
      %v3074 = vsel %vm1361, %v3072, %v3073
      %v3075 = vrot.slane %v3073, 4
      %v3076 = vrot.slane %v2215, 5
      %v3077 = vsel %vm1361, %v3075, %v3076
      %v3078 = vrot.slane %v2948, 5
      %v3079 = vrot.slane %v3078, 4
      %v3080 = vrot.slane %v2217, 5
      %v3081 = vsel %vm1361, %v3079, %v3080
      %v3082 = vrot.slane %v3080, 4
      %v3083 = vrot.slane %v2218, 5
      %v3084 = vsel %vm1361, %v3082, %v3083
      %v3085 = vrot.slane %v2949, 5
      %v3086 = vrot.slane %v3085, 4
      %v3087 = vrot.slane %v2220, 5
      %v3088 = vsel %vm1361, %v3086, %v3087
      %v3089 = vrot.slane %v3087, 4
      %v3090 = vrot.slane %v2221, 5
      %v3091 = vsel %vm1361, %v3089, %v3090
      %v3092 = vrot.slane %v2950, 5
      %v3093 = vrot.slane %v3092, 4
      %v3094 = vrot.slane %v2223, 5
      %v3095 = vsel %vm1361, %v3093, %v3094
      %v3096 = vrot.slane %v3094, 4
      %v3097 = vrot.slane %v2224, 5
      %v3098 = vsel %vm1361, %v3096, %v3097
      %v3099 = vrot.slane %v2951, 5
      %v3100 = vrot.slane %v3099, 4
      %v3101 = vrot.slane %v2226, 5
      %v3102 = vsel %vm1361, %v3100, %v3101
      %v3103 = vrot.slane %v3101, 4
      %v3104 = vrot.slane %v2227, 5
      %v3105 = vsel %vm1361, %v3103, %v3104
      %v3106 = vrot.slane %v2952, 5
      %v3107 = vrot.slane %v3106, 4
      %v3108 = vrot.slane %v2229, 5
      %v3109 = vsel %vm1361, %v3107, %v3108
      %v3110 = vrot.slane %v3108, 4
      %v3111 = vrot.slane %v2230, 5
      %v3112 = vsel %vm1361, %v3110, %v3111
      %s3113 = scalar_lea.vmem %s248, 160
      %v3114 = vld [vmem:[%s3113] sm:$0xf]
      %v3115 = vld [vmem:[%s3113 + $0x4] sm:$0xf]
      %v3116 = vld [vmem:[%s3113 + $0x8] sm:$0xf]
      %v3117 = vld [vmem:[%s3113 + $0xc] sm:$0xf]
      %v3118 = vld [vmem:[%s3113 + $0x10] sm:$0xf]
      %v3119 = vld [vmem:[%s3113 + $0x14] sm:$0xf]
      %v3120 = vld [vmem:[%s3113 + $0x18] sm:$0xf]
      %v3121 = vld [vmem:[%s3113 + $0x1c] sm:$0xf]
      %v3122 = vunpack.c.l.b16 %v3004
      %v3123 = vunpack.c.l.b16 %v3007
      %v3124 = vunpack.c.l.b16 %v3011
      %v3125 = vunpack.c.l.b16 %v3014
      %v3126 = vunpack.c.l.b16 %v3018
      %v3127 = vunpack.c.l.b16 %v3021
      %v3128 = vunpack.c.l.b16 %v3025
      %v3129 = vunpack.c.l.b16 %v3028
      %v3130 = vunpack.c.l.b16 %v3032
      %v3131 = vunpack.c.l.b16 %v3035
      %v3132 = vunpack.c.l.b16 %v3039
      %v3133 = vunpack.c.l.b16 %v3042
      %v3134 = vunpack.c.l.b16 %v3046
      %v3135 = vunpack.c.l.b16 %v3049
      %v3136 = vunpack.c.l.b16 %v3053
      %v3137 = vunpack.c.l.b16 %v3056
      %v3138 = vunpack.c.l.b16 %v3060
      %v3139 = vunpack.c.l.b16 %v3063
      %v3140 = vunpack.c.l.b16 %v3067
      %v3141 = vunpack.c.l.b16 %v3070
      %v3142 = vunpack.c.l.b16 %v3074
      %v3143 = vunpack.c.l.b16 %v3077
      %v3144 = vunpack.c.l.b16 %v3081
      %v3145 = vunpack.c.l.b16 %v3084
      %v3146 = vunpack.c.l.b16 %v3088
      %v3147 = vunpack.c.l.b16 %v3091
      %v3148 = vunpack.c.l.b16 %v3095
      %v3149 = vunpack.c.l.b16 %v3098
      %v3150 = vunpack.c.l.b16 %v3102
      %v3151 = vunpack.c.l.b16 %v3105
      %v3152 = vunpack.c.l.b16 %v3109
      %v3153 = vunpack.c.l.b16 %v3112
      %v3154 = vpack.c.b16 %v3123, %v3122
      %v3155 = vpack.c.b16 %v3125, %v3124
      %v3156 = vpack.c.b16 %v3127, %v3126
      %v3157 = vpack.c.b16 %v3129, %v3128
      %v3158 = vpack.c.b16 %v3131, %v3130
      %v3159 = vpack.c.b16 %v3133, %v3132
      %v3160 = vpack.c.b16 %v3135, %v3134
      %v3161 = vpack.c.b16 %v3137, %v3136
      %v3162 = vpack.c.b16 %v3139, %v3138
      %v3163 = vpack.c.b16 %v3141, %v3140
      %v3164 = vpack.c.b16 %v3143, %v3142
      %v3165 = vpack.c.b16 %v3145, %v3144
      %v3166 = vpack.c.b16 %v3147, %v3146
      %v3167 = vpack.c.b16 %v3149, %v3148
      %v3168 = vpack.c.b16 %v3151, %v3150
      %v3169 = vpack.c.b16 %v3153, %v3152
      %v3178 = vunpack.c.l.b16 %v3114
      %v3179 = vunpack.c.l.b16 %v3115
      %v3180 = vunpack.c.l.b16 %v3116
      %v3181 = vunpack.c.l.b16 %v3117
      %v3182 = vunpack.c.l.b16 %v3118
      %v3183 = vunpack.c.l.b16 %v3119
      %v3184 = vunpack.c.l.b16 %v3120
      %v3185 = vunpack.c.l.b16 %v3121
      %v3186 = vpack.c.b16 %v3179, %v3178
      %v3187 = vpack.c.b16 %v3181, %v3180
      %v3188 = vpack.c.b16 %v3183, %v3182
      %v3189 = vpack.c.b16 %v3185, %v3184
      %v3195 = vsel %vm788, %v3154, 0
      %v3198 = vsel %vm788, %v3155, 0
      %v3201 = vsel %vm788, %v3156, 0
      %v3204 = vsel %vm788, %v3157, 0
      %v3207 = vsel %vm788, %v3158, 0
      %v3210 = vsel %vm788, %v3159, 0
      %v3213 = vsel %vm788, %v3160, 0
      %v3216 = vsel %vm788, %v3161, 0
      %v3219 = vsel %vm788, %v3162, 0
      %v3222 = vsel %vm788, %v3163, 0
      %v3225 = vsel %vm788, %v3164, 0
      %v3228 = vsel %vm788, %v3165, 0
      %v3231 = vsel %vm788, %v3166, 0
      %v3234 = vsel %vm788, %v3167, 0
      %v3237 = vsel %vm788, %v3168, 0
      %v3240 = vsel %vm788, %v3169, 0
      %3242 = vmatprep.subr.bf16.mxu0 0
      %3243 = vmatpush1.bf16.msra.mxu0 0
      %3244 = vmatprep.subr.bf16.mxu0 0
      %3245 = vmatpush1.bf16.msra.mxu0 0
      %3246 = vmatprep.subr.bf16.mxu0 0
      %3247 = vmatpush1.bf16.msra.mxu0 0
      %3248 = vmatprep.subr.bf16.mxu0 0
      %3249 = vmatpush1.bf16.msra.mxu0 0
      %3250 = vmatprep.subr.bf16.mxu0 0
      %3251 = vmatpush1.bf16.msra.mxu0 %v3189
      %3252 = vmatprep.subr.bf16.mxu0 0
      %3253 = vmatpush1.bf16.msra.mxu0 %v3188
      %3254 = vmatprep.subr.bf16.mxu0 0
      %3255 = vmatpush1.bf16.msra.mxu0 %v3187
      %3256 = vmatprep.subr.bf16.mxu0 0
      %3257 = vmatpush1.bf16.msra.mxu0 %v3186
      %3258 = vmatprep.subr.bf16.mxu0 0
      %3259 = vmatpush2.bf16.msra.mxu0 0
      %3260 = vmatprep.subr.bf16.mxu0 0
      %3261 = vmatpush2.bf16.msra.mxu0 0
      %3262 = vmatprep.subr.bf16.mxu0 0
      %3263 = vmatpush2.bf16.msra.mxu0 0
      %3264 = vmatprep.subr.bf16.mxu0 0
      %3265 = vmatpush2.bf16.msra.mxu0 0
      %3266 = vmatprep.subr.bf16.mxu0 0
      %3267 = vmatpush2.bf16.msra.mxu0 0
      %3268 = vmatprep.subr.bf16.mxu0 0
      %3269 = vmatpush2.bf16.msra.mxu0 0
      %3270 = vmatprep.subr.bf16.mxu0 0
      %3271 = vmatpush2.bf16.msra.mxu0 0
      %3272 = vmatprep.subr.bf16.mxu0 0
      %3273 = vmatpush2.bf16.msra.mxu0 0
      %3274 = vmatprep.mubr.bf16.mxu0 0
      %3275 = vmatmul.mubr.bf16.gmra.mxu0 %v3195
      %v3276 = vpop.f32.mrf.mxu0
      %v3277 = vadd.f32 0.0, %v3276
      %v3278 = vpop.f32.mrf.mxu0
      %v3279 = vpop.f32.mrf.mxu0
      %v3280 = vadd.f32 0.0, %v3279
      %v3281 = vpop.f32.mrf.mxu0
      %3282 = vmatprep.mubr.bf16.mxu0 0
      %3283 = vmatmul.mubr.bf16.gmra.mxu0 %v3198
      %v3284 = vpop.f32.mrf.mxu0
      %v3285 = vadd.f32 0.0, %v3284
      %v3286 = vpop.f32.mrf.mxu0
      %v3287 = vpop.f32.mrf.mxu0
      %v3288 = vadd.f32 0.0, %v3287
      %v3289 = vpop.f32.mrf.mxu0
      %3290 = vmatprep.mubr.bf16.mxu0 0
      %3291 = vmatmul.mubr.bf16.gmra.mxu0 %v3201
      %v3292 = vpop.f32.mrf.mxu0
      %v3293 = vadd.f32 0.0, %v3292
      %v3294 = vpop.f32.mrf.mxu0
      %v3295 = vpop.f32.mrf.mxu0
      %v3296 = vadd.f32 0.0, %v3295
      %v3297 = vpop.f32.mrf.mxu0
      %3298 = vmatprep.mubr.bf16.mxu0 0
      %3299 = vmatmul.mubr.bf16.gmra.mxu0 %v3204
      %v3300 = vpop.f32.mrf.mxu0
      %v3301 = vadd.f32 0.0, %v3300
      %v3302 = vpop.f32.mrf.mxu0
      %v3303 = vpop.f32.mrf.mxu0
      %v3304 = vadd.f32 0.0, %v3303
      %v3305 = vpop.f32.mrf.mxu0
      %3306 = vmatprep.mubr.bf16.mxu0 0
      %3307 = vmatmul.mubr.bf16.gmra.mxu0 %v3207
      %v3308 = vpop.f32.mrf.mxu0
      %v3309 = vadd.f32 0.0, %v3308
      %v3310 = vpop.f32.mrf.mxu0
      %v3311 = vpop.f32.mrf.mxu0
      %v3312 = vadd.f32 0.0, %v3311
      %v3313 = vpop.f32.mrf.mxu0
      %3314 = vmatprep.mubr.bf16.mxu0 0
      %3315 = vmatmul.mubr.bf16.gmra.mxu0 %v3210
      %v3316 = vpop.f32.mrf.mxu0
      %v3317 = vadd.f32 0.0, %v3316
      %v3318 = vpop.f32.mrf.mxu0
      %v3319 = vpop.f32.mrf.mxu0
      %v3320 = vadd.f32 0.0, %v3319
      %v3321 = vpop.f32.mrf.mxu0
      %3322 = vmatprep.mubr.bf16.mxu0 0
      %3323 = vmatmul.mubr.bf16.gmra.mxu0 %v3213
      %v3324 = vpop.f32.mrf.mxu0
      %v3325 = vadd.f32 0.0, %v3324
      %v3326 = vpop.f32.mrf.mxu0
      %v3327 = vpop.f32.mrf.mxu0
      %v3328 = vadd.f32 0.0, %v3327
      %v3329 = vpop.f32.mrf.mxu0
      %3330 = vmatprep.mubr.bf16.mxu0 0
      %3331 = vmatmul.mubr.bf16.gmra.mxu0 %v3216
      %v3332 = vpop.f32.mrf.mxu0
      %v3333 = vadd.f32 0.0, %v3332
      %v3334 = vpop.f32.mrf.mxu0
      %v3335 = vpop.f32.mrf.mxu0
      %v3336 = vadd.f32 0.0, %v3335
      %v3337 = vpop.f32.mrf.mxu0
      %3338 = vmatprep.mubr.bf16.mxu0 0
      %3339 = vmatmul.mubr.bf16.gmra.mxu0 %v3219
      %v3340 = vpop.f32.mrf.mxu0
      %v3341 = vadd.f32 0.0, %v3340
      %v3342 = vpop.f32.mrf.mxu0
      %v3343 = vpop.f32.mrf.mxu0
      %v3344 = vadd.f32 0.0, %v3343
      %v3345 = vpop.f32.mrf.mxu0
      %3346 = vmatprep.mubr.bf16.mxu0 0
      %3347 = vmatmul.mubr.bf16.gmra.mxu0 %v3222
      %v3348 = vpop.f32.mrf.mxu0
      %v3349 = vadd.f32 0.0, %v3348
      %v3350 = vpop.f32.mrf.mxu0
      %v3351 = vpop.f32.mrf.mxu0
      %v3352 = vadd.f32 0.0, %v3351
      %v3353 = vpop.f32.mrf.mxu0
      %3354 = vmatprep.mubr.bf16.mxu0 0
      %3355 = vmatmul.mubr.bf16.gmra.mxu0 %v3225
      %v3356 = vpop.f32.mrf.mxu0
      %v3357 = vadd.f32 0.0, %v3356
      %v3358 = vpop.f32.mrf.mxu0
      %v3359 = vpop.f32.mrf.mxu0
      %v3360 = vadd.f32 0.0, %v3359
      %v3361 = vpop.f32.mrf.mxu0
      %3362 = vmatprep.mubr.bf16.mxu0 0
      %3363 = vmatmul.mubr.bf16.gmra.mxu0 %v3228
      %v3364 = vpop.f32.mrf.mxu0
      %v3365 = vadd.f32 0.0, %v3364
      %v3366 = vpop.f32.mrf.mxu0
      %v3367 = vpop.f32.mrf.mxu0
      %v3368 = vadd.f32 0.0, %v3367
      %v3369 = vpop.f32.mrf.mxu0
      %3370 = vmatprep.mubr.bf16.mxu0 0
      %3371 = vmatmul.mubr.bf16.gmra.mxu0 %v3231
      %v3372 = vpop.f32.mrf.mxu0
      %v3373 = vadd.f32 0.0, %v3372
      %v3374 = vpop.f32.mrf.mxu0
      %v3375 = vpop.f32.mrf.mxu0
      %v3376 = vadd.f32 0.0, %v3375
      %v3377 = vpop.f32.mrf.mxu0
      %3378 = vmatprep.mubr.bf16.mxu0 0
      %3379 = vmatmul.mubr.bf16.gmra.mxu0 %v3234
      %v3380 = vpop.f32.mrf.mxu0
      %v3381 = vadd.f32 0.0, %v3380
      %v3382 = vpop.f32.mrf.mxu0
      %v3383 = vpop.f32.mrf.mxu0
      %v3384 = vadd.f32 0.0, %v3383
      %v3385 = vpop.f32.mrf.mxu0
      %3386 = vmatprep.mubr.bf16.mxu0 0
      %3387 = vmatmul.mubr.bf16.gmra.mxu0 %v3237
      %v3388 = vpop.f32.mrf.mxu0
      %v3389 = vadd.f32 0.0, %v3388
      %v3390 = vpop.f32.mrf.mxu0
      %v3391 = vpop.f32.mrf.mxu0
      %v3392 = vadd.f32 0.0, %v3391
      %v3393 = vpop.f32.mrf.mxu0
      %3394 = vmatprep.mubr.bf16.mxu0 0
      %3395 = vmatmul.mubr.bf16.gmra.mxu0 %v3240
      %v3396 = vpop.f32.mrf.mxu0
      %v3397 = vadd.f32 0.0, %v3396
      %v3398 = vpop.f32.mrf.mxu0
      %v3399 = vpop.f32.mrf.mxu0
      %v3400 = vadd.f32 0.0, %v3399
      %v3401 = vpop.f32.mrf.mxu0
      %3402 = vdwg.mxu0
      %v3403 = vadd.f32 %v2905, %v3277
      %v3404 = vadd.f32 %v2906, %v3280
      %v3405 = vadd.f32 %v2907, %v3285
      %v3406 = vadd.f32 %v2908, %v3288
      %v3407 = vadd.f32 %v2909, %v3293
      %v3408 = vadd.f32 %v2910, %v3296
      %v3409 = vadd.f32 %v2911, %v3301
      %v3410 = vadd.f32 %v2912, %v3304
      %v3411 = vadd.f32 %v2913, %v3309
      %v3412 = vadd.f32 %v2914, %v3312
      %v3413 = vadd.f32 %v2915, %v3317
      %v3414 = vadd.f32 %v2916, %v3320
      %v3415 = vadd.f32 %v2917, %v3325
      %v3416 = vadd.f32 %v2918, %v3328
      %v3417 = vadd.f32 %v2919, %v3333
      %v3418 = vadd.f32 %v2920, %v3336
      %v3419 = vadd.f32 %v2921, %v3341
      %v3420 = vadd.f32 %v2922, %v3344
      %v3421 = vadd.f32 %v2923, %v3349
      %v3422 = vadd.f32 %v2924, %v3352
      %v3423 = vadd.f32 %v2925, %v3357
      %v3424 = vadd.f32 %v2926, %v3360
      %v3425 = vadd.f32 %v2927, %v3365
      %v3426 = vadd.f32 %v2928, %v3368
      %v3427 = vadd.f32 %v2929, %v3373
      %v3428 = vadd.f32 %v2930, %v3376
      %v3429 = vadd.f32 %v2931, %v3381
      %v3430 = vadd.f32 %v2932, %v3384
      %v3431 = vadd.f32 %v2933, %v3389
      %v3432 = vadd.f32 %v2934, %v3392
      %v3433 = vadd.f32 %v2935, %v3397
      %v3434 = vadd.f32 %v2936, %v3400
      %s3435 = scalar_lea.vmem %s244, 24
      %v3436 = vld [vmem:[%s3435] sm:$0xf]
      %v3437 = vld [vmem:[%s3435 + $0x4] sm:$0xf]
      %v3438 = vld [vmem:[%s3435 + $0xc] sm:$0xf]
      %v3439 = vld [vmem:[%s3435 + $0x10] sm:$0xf]
      %v3440 = vld [vmem:[%s3435 + $0x18] sm:$0xf]
      %v3441 = vld [vmem:[%s3435 + $0x1c] sm:$0xf]
      %v3442 = vld [vmem:[%s3435 + $0x24] sm:$0xf]
      %v3443 = vld [vmem:[%s3435 + $0x28] sm:$0xf]
      %v3444 = vld [vmem:[%s3435 + $0x30] sm:$0xf]
      %v3445 = vld [vmem:[%s3435 + $0x34] sm:$0xf]
      %v3446 = vld [vmem:[%s3435 + $0x3c] sm:$0xf]
      %v3447 = vld [vmem:[%s3435 + $0x40] sm:$0xf]
      %v3448 = vld [vmem:[%s3435 + $0x48] sm:$0xf]
      %v3449 = vld [vmem:[%s3435 + $0x4c] sm:$0xf]
      %v3450 = vld [vmem:[%s3435 + $0x54] sm:$0xf]
      %v3451 = vld [vmem:[%s3435 + $0x58] sm:$0xf]
      %v3452 = vld [vmem:[%s3435 + $0x60] sm:$0xf]
      %v3453 = vld [vmem:[%s3435 + $0x64] sm:$0xf]
      %v3454 = vld [vmem:[%s3435 + $0x6c] sm:$0xf]
      %v3455 = vld [vmem:[%s3435 + $0x70] sm:$0xf]
      %v3456 = vld [vmem:[%s3435 + $0x78] sm:$0xf]
      %v3457 = vld [vmem:[%s3435 + $0x7c] sm:$0xf]
      %v3458 = vld [vmem:[%s3435 + $0x84] sm:$0xf]
      %v3459 = vld [vmem:[%s3435 + $0x88] sm:$0xf]
      %v3460 = vld [vmem:[%s3435 + $0x90] sm:$0xf]
      %v3461 = vld [vmem:[%s3435 + $0x94] sm:$0xf]
      %v3462 = vld [vmem:[%s3435 + $0x9c] sm:$0xf]
      %v3463 = vld [vmem:[%s3435 + $0xa0] sm:$0xf]
      %v3464 = vld [vmem:[%s3435 + $0xa8] sm:$0xf]
      %v3465 = vld [vmem:[%s3435 + $0xac] sm:$0xf]
      %v3466 = vld [vmem:[%s3435 + $0xb4] sm:$0xf]
      %v3467 = vld [vmem:[%s3435 + $0xb8] sm:$0xf]
      %s3468 = scalar_lea.vmem %s248, 192
      %v3469 = vld [vmem:[%s3468] sm:$0xf]
      %v3470 = vld [vmem:[%s3468 + $0x4] sm:$0xf]
      %v3471 = vld [vmem:[%s3468 + $0x8] sm:$0xf]
      %v3472 = vld [vmem:[%s3468 + $0xc] sm:$0xf]
      %v3473 = vld [vmem:[%s3468 + $0x10] sm:$0xf]
      %v3474 = vld [vmem:[%s3468 + $0x14] sm:$0xf]
      %v3475 = vld [vmem:[%s3468 + $0x18] sm:$0xf]
      %v3476 = vld [vmem:[%s3468 + $0x1c] sm:$0xf]
      %v3509 = vunpack.c.l.b16 %v3436
      %v3510 = vunpack.c.l.b16 %v3437
      %v3511 = vunpack.c.l.b16 %v3438
      %v3512 = vunpack.c.l.b16 %v3439
      %v3513 = vunpack.c.l.b16 %v3440
      %v3514 = vunpack.c.l.b16 %v3441
      %v3515 = vunpack.c.l.b16 %v3442
      %v3516 = vunpack.c.l.b16 %v3443
      %v3517 = vunpack.c.l.b16 %v3444
      %v3518 = vunpack.c.l.b16 %v3445
      %v3519 = vunpack.c.l.b16 %v3446
      %v3520 = vunpack.c.l.b16 %v3447
      %v3521 = vunpack.c.l.b16 %v3448
      %v3522 = vunpack.c.l.b16 %v3449
      %v3523 = vunpack.c.l.b16 %v3450
      %v3524 = vunpack.c.l.b16 %v3451
      %v3525 = vunpack.c.l.b16 %v3452
      %v3526 = vunpack.c.l.b16 %v3453
      %v3527 = vunpack.c.l.b16 %v3454
      %v3528 = vunpack.c.l.b16 %v3455
      %v3529 = vunpack.c.l.b16 %v3456
      %v3530 = vunpack.c.l.b16 %v3457
      %v3531 = vunpack.c.l.b16 %v3458
      %v3532 = vunpack.c.l.b16 %v3459
      %v3533 = vunpack.c.l.b16 %v3460
      %v3534 = vunpack.c.l.b16 %v3461
      %v3535 = vunpack.c.l.b16 %v3462
      %v3536 = vunpack.c.l.b16 %v3463
      %v3537 = vunpack.c.l.b16 %v3464
      %v3538 = vunpack.c.l.b16 %v3465
      %v3539 = vunpack.c.l.b16 %v3466
      %v3540 = vunpack.c.l.b16 %v3467
      %v3541 = vpack.c.b16 %v3510, %v3509
      %v3542 = vpack.c.b16 %v3512, %v3511
      %v3543 = vpack.c.b16 %v3514, %v3513
      %v3544 = vpack.c.b16 %v3516, %v3515
      %v3545 = vpack.c.b16 %v3518, %v3517
      %v3546 = vpack.c.b16 %v3520, %v3519
      %v3547 = vpack.c.b16 %v3522, %v3521
      %v3548 = vpack.c.b16 %v3524, %v3523
      %v3549 = vpack.c.b16 %v3526, %v3525
      %v3550 = vpack.c.b16 %v3528, %v3527
      %v3551 = vpack.c.b16 %v3530, %v3529
      %v3552 = vpack.c.b16 %v3532, %v3531
      %v3553 = vpack.c.b16 %v3534, %v3533
      %v3554 = vpack.c.b16 %v3536, %v3535
      %v3555 = vpack.c.b16 %v3538, %v3537
      %v3556 = vpack.c.b16 %v3540, %v3539
      %v3565 = vunpack.c.l.b16 %v3469
      %v3566 = vunpack.c.l.b16 %v3470
      %v3567 = vunpack.c.l.b16 %v3471
      %v3568 = vunpack.c.l.b16 %v3472
      %v3569 = vunpack.c.l.b16 %v3473
      %v3570 = vunpack.c.l.b16 %v3474
      %v3571 = vunpack.c.l.b16 %v3475
      %v3572 = vunpack.c.l.b16 %v3476
      %v3573 = vpack.c.b16 %v3566, %v3565
      %v3574 = vpack.c.b16 %v3568, %v3567
      %v3575 = vpack.c.b16 %v3570, %v3569
      %v3576 = vpack.c.b16 %v3572, %v3571
      %v3582 = vsel %vm788, %v3541, 0
      %v3585 = vsel %vm788, %v3542, 0
      %v3588 = vsel %vm788, %v3543, 0
      %v3591 = vsel %vm788, %v3544, 0
      %v3594 = vsel %vm788, %v3545, 0
      %v3597 = vsel %vm788, %v3546, 0
      %v3600 = vsel %vm788, %v3547, 0
      %v3603 = vsel %vm788, %v3548, 0
      %v3606 = vsel %vm788, %v3549, 0
      %v3609 = vsel %vm788, %v3550, 0
      %v3612 = vsel %vm788, %v3551, 0
      %v3615 = vsel %vm788, %v3552, 0
      %v3618 = vsel %vm788, %v3553, 0
      %v3621 = vsel %vm788, %v3554, 0
      %v3624 = vsel %vm788, %v3555, 0
      %v3627 = vsel %vm788, %v3556, 0
      %3629 = vmatprep.subr.bf16.mxu0 0
      %3630 = vmatpush1.bf16.msra.mxu0 0
      %3631 = vmatprep.subr.bf16.mxu0 0
      %3632 = vmatpush1.bf16.msra.mxu0 0
      %3633 = vmatprep.subr.bf16.mxu0 0
      %3634 = vmatpush1.bf16.msra.mxu0 0
      %3635 = vmatprep.subr.bf16.mxu0 0
      %3636 = vmatpush1.bf16.msra.mxu0 0
      %3637 = vmatprep.subr.bf16.mxu0 0
      %3638 = vmatpush1.bf16.msra.mxu0 %v3576
      %3639 = vmatprep.subr.bf16.mxu0 0
      %3640 = vmatpush1.bf16.msra.mxu0 %v3575
      %3641 = vmatprep.subr.bf16.mxu0 0
      %3642 = vmatpush1.bf16.msra.mxu0 %v3574
      %3643 = vmatprep.subr.bf16.mxu0 0
      %3644 = vmatpush1.bf16.msra.mxu0 %v3573
      %3645 = vmatprep.subr.bf16.mxu0 0
      %3646 = vmatpush2.bf16.msra.mxu0 0
      %3647 = vmatprep.subr.bf16.mxu0 0
      %3648 = vmatpush2.bf16.msra.mxu0 0
      %3649 = vmatprep.subr.bf16.mxu0 0
      %3650 = vmatpush2.bf16.msra.mxu0 0
      %3651 = vmatprep.subr.bf16.mxu0 0
      %3652 = vmatpush2.bf16.msra.mxu0 0
      %3653 = vmatprep.subr.bf16.mxu0 0
      %3654 = vmatpush2.bf16.msra.mxu0 0
      %3655 = vmatprep.subr.bf16.mxu0 0
      %3656 = vmatpush2.bf16.msra.mxu0 0
      %3657 = vmatprep.subr.bf16.mxu0 0
      %3658 = vmatpush2.bf16.msra.mxu0 0
      %3659 = vmatprep.subr.bf16.mxu0 0
      %3660 = vmatpush2.bf16.msra.mxu0 0
      %3661 = vmatprep.mubr.bf16.mxu0 0
      %3662 = vmatmul.mubr.bf16.gmra.mxu0 %v3582
      %v3663 = vpop.f32.mrf.mxu0
      %v3664 = vadd.f32 0.0, %v3663
      %v3665 = vpop.f32.mrf.mxu0
      %v3666 = vpop.f32.mrf.mxu0
      %v3667 = vadd.f32 0.0, %v3666
      %v3668 = vpop.f32.mrf.mxu0
      %3669 = vmatprep.mubr.bf16.mxu0 0
      %3670 = vmatmul.mubr.bf16.gmra.mxu0 %v3585
      %v3671 = vpop.f32.mrf.mxu0
      %v3672 = vadd.f32 0.0, %v3671
      %v3673 = vpop.f32.mrf.mxu0
      %v3674 = vpop.f32.mrf.mxu0
      %v3675 = vadd.f32 0.0, %v3674
      %v3676 = vpop.f32.mrf.mxu0
      %3677 = vmatprep.mubr.bf16.mxu0 0
      %3678 = vmatmul.mubr.bf16.gmra.mxu0 %v3588
      %v3679 = vpop.f32.mrf.mxu0
      %v3680 = vadd.f32 0.0, %v3679
      %v3681 = vpop.f32.mrf.mxu0
      %v3682 = vpop.f32.mrf.mxu0
      %v3683 = vadd.f32 0.0, %v3682
      %v3684 = vpop.f32.mrf.mxu0
      %3685 = vmatprep.mubr.bf16.mxu0 0
      %3686 = vmatmul.mubr.bf16.gmra.mxu0 %v3591
      %v3687 = vpop.f32.mrf.mxu0
      %v3688 = vadd.f32 0.0, %v3687
      %v3689 = vpop.f32.mrf.mxu0
      %v3690 = vpop.f32.mrf.mxu0
      %v3691 = vadd.f32 0.0, %v3690
      %v3692 = vpop.f32.mrf.mxu0
      %3693 = vmatprep.mubr.bf16.mxu0 0
      %3694 = vmatmul.mubr.bf16.gmra.mxu0 %v3594
      %v3695 = vpop.f32.mrf.mxu0
      %v3696 = vadd.f32 0.0, %v3695
      %v3697 = vpop.f32.mrf.mxu0
      %v3698 = vpop.f32.mrf.mxu0
      %v3699 = vadd.f32 0.0, %v3698
      %v3700 = vpop.f32.mrf.mxu0
      %3701 = vmatprep.mubr.bf16.mxu0 0
      %3702 = vmatmul.mubr.bf16.gmra.mxu0 %v3597
      %v3703 = vpop.f32.mrf.mxu0
      %v3704 = vadd.f32 0.0, %v3703
      %v3705 = vpop.f32.mrf.mxu0
      %v3706 = vpop.f32.mrf.mxu0
      %v3707 = vadd.f32 0.0, %v3706
      %v3708 = vpop.f32.mrf.mxu0
      %3709 = vmatprep.mubr.bf16.mxu0 0
      %3710 = vmatmul.mubr.bf16.gmra.mxu0 %v3600
      %v3711 = vpop.f32.mrf.mxu0
      %v3712 = vadd.f32 0.0, %v3711
      %v3713 = vpop.f32.mrf.mxu0
      %v3714 = vpop.f32.mrf.mxu0
      %v3715 = vadd.f32 0.0, %v3714
      %v3716 = vpop.f32.mrf.mxu0
      %3717 = vmatprep.mubr.bf16.mxu0 0
      %3718 = vmatmul.mubr.bf16.gmra.mxu0 %v3603
      %v3719 = vpop.f32.mrf.mxu0
      %v3720 = vadd.f32 0.0, %v3719
      %v3721 = vpop.f32.mrf.mxu0
      %v3722 = vpop.f32.mrf.mxu0
      %v3723 = vadd.f32 0.0, %v3722
      %v3724 = vpop.f32.mrf.mxu0
      %3725 = vmatprep.mubr.bf16.mxu0 0
      %3726 = vmatmul.mubr.bf16.gmra.mxu0 %v3606
      %v3727 = vpop.f32.mrf.mxu0
      %v3728 = vadd.f32 0.0, %v3727
      %v3729 = vpop.f32.mrf.mxu0
      %v3730 = vpop.f32.mrf.mxu0
      %v3731 = vadd.f32 0.0, %v3730
      %v3732 = vpop.f32.mrf.mxu0
      %3733 = vmatprep.mubr.bf16.mxu0 0
      %3734 = vmatmul.mubr.bf16.gmra.mxu0 %v3609
      %v3735 = vpop.f32.mrf.mxu0
      %v3736 = vadd.f32 0.0, %v3735
      %v3737 = vpop.f32.mrf.mxu0
      %v3738 = vpop.f32.mrf.mxu0
      %v3739 = vadd.f32 0.0, %v3738
      %v3740 = vpop.f32.mrf.mxu0
      %3741 = vmatprep.mubr.bf16.mxu0 0
      %3742 = vmatmul.mubr.bf16.gmra.mxu0 %v3612
      %v3743 = vpop.f32.mrf.mxu0
      %v3744 = vadd.f32 0.0, %v3743
      %v3745 = vpop.f32.mrf.mxu0
      %v3746 = vpop.f32.mrf.mxu0
      %v3747 = vadd.f32 0.0, %v3746
      %v3748 = vpop.f32.mrf.mxu0
      %3749 = vmatprep.mubr.bf16.mxu0 0
      %3750 = vmatmul.mubr.bf16.gmra.mxu0 %v3615
      %v3751 = vpop.f32.mrf.mxu0
      %v3752 = vadd.f32 0.0, %v3751
      %v3753 = vpop.f32.mrf.mxu0
      %v3754 = vpop.f32.mrf.mxu0
      %v3755 = vadd.f32 0.0, %v3754
      %v3756 = vpop.f32.mrf.mxu0
      %3757 = vmatprep.mubr.bf16.mxu0 0
      %3758 = vmatmul.mubr.bf16.gmra.mxu0 %v3618
      %v3759 = vpop.f32.mrf.mxu0
      %v3760 = vadd.f32 0.0, %v3759
      %v3761 = vpop.f32.mrf.mxu0
      %v3762 = vpop.f32.mrf.mxu0
      %v3763 = vadd.f32 0.0, %v3762
      %v3764 = vpop.f32.mrf.mxu0
      %3765 = vmatprep.mubr.bf16.mxu0 0
      %3766 = vmatmul.mubr.bf16.gmra.mxu0 %v3621
      %v3767 = vpop.f32.mrf.mxu0
      %v3768 = vadd.f32 0.0, %v3767
      %v3769 = vpop.f32.mrf.mxu0
      %v3770 = vpop.f32.mrf.mxu0
      %v3771 = vadd.f32 0.0, %v3770
      %v3772 = vpop.f32.mrf.mxu0
      %3773 = vmatprep.mubr.bf16.mxu0 0
      %3774 = vmatmul.mubr.bf16.gmra.mxu0 %v3624
      %v3775 = vpop.f32.mrf.mxu0
      %v3776 = vadd.f32 0.0, %v3775
      %v3777 = vpop.f32.mrf.mxu0
      %v3778 = vpop.f32.mrf.mxu0
      %v3779 = vadd.f32 0.0, %v3778
      %v3780 = vpop.f32.mrf.mxu0
      %3781 = vmatprep.mubr.bf16.mxu0 0
      %3782 = vmatmul.mubr.bf16.gmra.mxu0 %v3627
      %v3783 = vpop.f32.mrf.mxu0
      %v3784 = vadd.f32 0.0, %v3783
      %v3785 = vpop.f32.mrf.mxu0
      %v3786 = vpop.f32.mrf.mxu0
      %v3787 = vadd.f32 0.0, %v3786
      %v3788 = vpop.f32.mrf.mxu0
      %3789 = vdwg.mxu0
      %v3790 = vadd.f32 %v3403, %v3664
      %v3791 = vadd.f32 %v3404, %v3667
      %v3792 = vadd.f32 %v3405, %v3672
      %v3793 = vadd.f32 %v3406, %v3675
      %v3794 = vadd.f32 %v3407, %v3680
      %v3795 = vadd.f32 %v3408, %v3683
      %v3796 = vadd.f32 %v3409, %v3688
      %v3797 = vadd.f32 %v3410, %v3691
      %v3798 = vadd.f32 %v3411, %v3696
      %v3799 = vadd.f32 %v3412, %v3699
      %v3800 = vadd.f32 %v3413, %v3704
      %v3801 = vadd.f32 %v3414, %v3707
      %v3802 = vadd.f32 %v3415, %v3712
      %v3803 = vadd.f32 %v3416, %v3715
      %v3804 = vadd.f32 %v3417, %v3720
      %v3805 = vadd.f32 %v3418, %v3723
      %v3806 = vadd.f32 %v3419, %v3728
      %v3807 = vadd.f32 %v3420, %v3731
      %v3808 = vadd.f32 %v3421, %v3736
      %v3809 = vadd.f32 %v3422, %v3739
      %v3810 = vadd.f32 %v3423, %v3744
      %v3811 = vadd.f32 %v3424, %v3747
      %v3812 = vadd.f32 %v3425, %v3752
      %v3813 = vadd.f32 %v3426, %v3755
      %v3814 = vadd.f32 %v3427, %v3760
      %v3815 = vadd.f32 %v3428, %v3763
      %v3816 = vadd.f32 %v3429, %v3768
      %v3817 = vadd.f32 %v3430, %v3771
      %v3818 = vadd.f32 %v3431, %v3776
      %v3819 = vadd.f32 %v3432, %v3779
      %v3820 = vadd.f32 %v3433, %v3784
      %v3821 = vadd.f32 %v3434, %v3787
      %v3822 = vld [vmem:[%s3435] sm:$0xf]
      %v3823 = vld [vmem:[%s3435 + $0x4] sm:$0xf]
      %v3824 = vld [vmem:[%s3435 + $0x8] sm:$0x1]
      %v3825 = vld [vmem:[%s3435 + $0xc] sm:$0xf]
      %v3826 = vld [vmem:[%s3435 + $0x10] sm:$0xf]
      %v3827 = vld [vmem:[%s3435 + $0x14] sm:$0x1]
      %v3828 = vld [vmem:[%s3435 + $0x18] sm:$0xf]
      %v3829 = vld [vmem:[%s3435 + $0x1c] sm:$0xf]
      %v3830 = vld [vmem:[%s3435 + $0x20] sm:$0x1]
      %v3831 = vld [vmem:[%s3435 + $0x24] sm:$0xf]
      %v3832 = vld [vmem:[%s3435 + $0x28] sm:$0xf]
      %v3833 = vld [vmem:[%s3435 + $0x2c] sm:$0x1]
      %v3834 = vld [vmem:[%s3435 + $0x30] sm:$0xf]
      %v3835 = vld [vmem:[%s3435 + $0x34] sm:$0xf]
      %v3836 = vld [vmem:[%s3435 + $0x38] sm:$0x1]
      %v3837 = vld [vmem:[%s3435 + $0x3c] sm:$0xf]
      %v3838 = vld [vmem:[%s3435 + $0x40] sm:$0xf]
      %v3839 = vld [vmem:[%s3435 + $0x44] sm:$0x1]
      %v3840 = vld [vmem:[%s3435 + $0x48] sm:$0xf]
      %v3841 = vld [vmem:[%s3435 + $0x4c] sm:$0xf]
      %v3842 = vld [vmem:[%s3435 + $0x50] sm:$0x1]
      %v3843 = vld [vmem:[%s3435 + $0x54] sm:$0xf]
      %v3844 = vld [vmem:[%s3435 + $0x58] sm:$0xf]
      %v3845 = vld [vmem:[%s3435 + $0x5c] sm:$0x1]
      %v3846 = vld [vmem:[%s3435 + $0x60] sm:$0xf]
      %v3847 = vld [vmem:[%s3435 + $0x64] sm:$0xf]
      %v3848 = vld [vmem:[%s3435 + $0x68] sm:$0x1]
      %v3849 = vld [vmem:[%s3435 + $0x6c] sm:$0xf]
      %v3850 = vld [vmem:[%s3435 + $0x70] sm:$0xf]
      %v3851 = vld [vmem:[%s3435 + $0x74] sm:$0x1]
      %v3852 = vld [vmem:[%s3435 + $0x78] sm:$0xf]
      %v3853 = vld [vmem:[%s3435 + $0x7c] sm:$0xf]
      %v3854 = vld [vmem:[%s3435 + $0x80] sm:$0x1]
      %v3855 = vld [vmem:[%s3435 + $0x84] sm:$0xf]
      %v3856 = vld [vmem:[%s3435 + $0x88] sm:$0xf]
      %v3857 = vld [vmem:[%s3435 + $0x8c] sm:$0x1]
      %v3858 = vld [vmem:[%s3435 + $0x90] sm:$0xf]
      %v3859 = vld [vmem:[%s3435 + $0x94] sm:$0xf]
      %v3860 = vld [vmem:[%s3435 + $0x98] sm:$0x1]
      %v3861 = vld [vmem:[%s3435 + $0x9c] sm:$0xf]
      %v3862 = vld [vmem:[%s3435 + $0xa0] sm:$0xf]
      %v3863 = vld [vmem:[%s3435 + $0xa4] sm:$0x1]
      %v3864 = vld [vmem:[%s3435 + $0xa8] sm:$0xf]
      %v3865 = vld [vmem:[%s3435 + $0xac] sm:$0xf]
      %v3866 = vld [vmem:[%s3435 + $0xb0] sm:$0x1]
      %v3867 = vld [vmem:[%s3435 + $0xb4] sm:$0xf]
      %v3868 = vld [vmem:[%s3435 + $0xb8] sm:$0xf]
      %v3869 = vld [vmem:[%s3435 + $0xbc] sm:$0x1]
      %v3871 = vshrl.u32 %v3822, 16
      %v3873 = vrot.slane %v3871, 4
      %v3874 = vshll.u32 %v3822, 16
      %v3876 = vrot.slane %v3874, 5
      %v3877 = vor.u32 %v3873, %v3876
      %v3878 = vrot.slane %v3877, 4
      %v3880 = vshll.u32 %v3823, 16
      %v3882 = vrot.slane %v3880, 5
      %v3883 = vsel %vm322, %v3878, %v3882
      %v3884 = vshrl.u32 %v3823, 16
      %v3886 = vrot.slane %v3884, 4
      %v3887 = vor.u32 %v3886, %v3882
      %v3888 = vrot.slane %v3887, 4
      %v3890 = vshll.u32 %v3824, 16
      %v3892 = vrot.slane %v3890, 5
      %v3893 = vsel %vm322, %v3888, %v3892
      %v3895 = vshrl.u32 %v3825, 16
      %v3897 = vrot.slane %v3895, 4
      %v3898 = vshll.u32 %v3825, 16
      %v3900 = vrot.slane %v3898, 5
      %v3901 = vor.u32 %v3897, %v3900
      %v3902 = vrot.slane %v3901, 4
      %v3904 = vshll.u32 %v3826, 16
      %v3906 = vrot.slane %v3904, 5
      %v3907 = vsel %vm322, %v3902, %v3906
      %v3908 = vshrl.u32 %v3826, 16
      %v3910 = vrot.slane %v3908, 4
      %v3911 = vor.u32 %v3910, %v3906
      %v3912 = vrot.slane %v3911, 4
      %v3914 = vshll.u32 %v3827, 16
      %v3916 = vrot.slane %v3914, 5
      %v3917 = vsel %vm322, %v3912, %v3916
      %v3919 = vshrl.u32 %v3828, 16
      %v3921 = vrot.slane %v3919, 4
      %v3922 = vshll.u32 %v3828, 16
      %v3924 = vrot.slane %v3922, 5
      %v3925 = vor.u32 %v3921, %v3924
      %v3926 = vrot.slane %v3925, 4
      %v3928 = vshll.u32 %v3829, 16
      %v3930 = vrot.slane %v3928, 5
      %v3931 = vsel %vm322, %v3926, %v3930
      %v3932 = vshrl.u32 %v3829, 16
      %v3934 = vrot.slane %v3932, 4
      %v3935 = vor.u32 %v3934, %v3930
      %v3936 = vrot.slane %v3935, 4
      %v3938 = vshll.u32 %v3830, 16
      %v3940 = vrot.slane %v3938, 5
      %v3941 = vsel %vm322, %v3936, %v3940
      %v3943 = vshrl.u32 %v3831, 16
      %v3945 = vrot.slane %v3943, 4
      %v3946 = vshll.u32 %v3831, 16
      %v3948 = vrot.slane %v3946, 5
      %v3949 = vor.u32 %v3945, %v3948
      %v3950 = vrot.slane %v3949, 4
      %v3952 = vshll.u32 %v3832, 16
      %v3954 = vrot.slane %v3952, 5
      %v3955 = vsel %vm322, %v3950, %v3954
      %v3956 = vshrl.u32 %v3832, 16
      %v3958 = vrot.slane %v3956, 4
      %v3959 = vor.u32 %v3958, %v3954
      %v3960 = vrot.slane %v3959, 4
      %v3962 = vshll.u32 %v3833, 16
      %v3964 = vrot.slane %v3962, 5
      %v3965 = vsel %vm322, %v3960, %v3964
      %v3967 = vshrl.u32 %v3834, 16
      %v3969 = vrot.slane %v3967, 4
      %v3970 = vshll.u32 %v3834, 16
      %v3972 = vrot.slane %v3970, 5
      %v3973 = vor.u32 %v3969, %v3972
      %v3974 = vrot.slane %v3973, 4
      %v3976 = vshll.u32 %v3835, 16
      %v3978 = vrot.slane %v3976, 5
      %v3979 = vsel %vm322, %v3974, %v3978
      %v3980 = vshrl.u32 %v3835, 16
      %v3982 = vrot.slane %v3980, 4
      %v3983 = vor.u32 %v3982, %v3978
      %v3984 = vrot.slane %v3983, 4
      %v3986 = vshll.u32 %v3836, 16
      %v3988 = vrot.slane %v3986, 5
      %v3989 = vsel %vm322, %v3984, %v3988
      %v3991 = vshrl.u32 %v3837, 16
      %v3993 = vrot.slane %v3991, 4
      %v3994 = vshll.u32 %v3837, 16
      %v3996 = vrot.slane %v3994, 5
      %v3997 = vor.u32 %v3993, %v3996
      %v3998 = vrot.slane %v3997, 4
      %v4000 = vshll.u32 %v3838, 16
      %v4002 = vrot.slane %v4000, 5
      %v4003 = vsel %vm322, %v3998, %v4002
      %v4004 = vshrl.u32 %v3838, 16
      %v4006 = vrot.slane %v4004, 4
      %v4007 = vor.u32 %v4006, %v4002
      %v4008 = vrot.slane %v4007, 4
      %v4010 = vshll.u32 %v3839, 16
      %v4012 = vrot.slane %v4010, 5
      %v4013 = vsel %vm322, %v4008, %v4012
      %v4015 = vshrl.u32 %v3840, 16
      %v4017 = vrot.slane %v4015, 4
      %v4018 = vshll.u32 %v3840, 16
      %v4020 = vrot.slane %v4018, 5
      %v4021 = vor.u32 %v4017, %v4020
      %v4022 = vrot.slane %v4021, 4
      %v4024 = vshll.u32 %v3841, 16
      %v4026 = vrot.slane %v4024, 5
      %v4027 = vsel %vm322, %v4022, %v4026
      %v4028 = vshrl.u32 %v3841, 16
      %v4030 = vrot.slane %v4028, 4
      %v4031 = vor.u32 %v4030, %v4026
      %v4032 = vrot.slane %v4031, 4
      %v4034 = vshll.u32 %v3842, 16
      %v4036 = vrot.slane %v4034, 5
      %v4037 = vsel %vm322, %v4032, %v4036
      %v4039 = vshrl.u32 %v3843, 16
      %v4041 = vrot.slane %v4039, 4
      %v4042 = vshll.u32 %v3843, 16
      %v4044 = vrot.slane %v4042, 5
      %v4045 = vor.u32 %v4041, %v4044
      %v4046 = vrot.slane %v4045, 4
      %v4048 = vshll.u32 %v3844, 16
      %v4050 = vrot.slane %v4048, 5
      %v4051 = vsel %vm322, %v4046, %v4050
      %v4052 = vshrl.u32 %v3844, 16
      %v4054 = vrot.slane %v4052, 4
      %v4055 = vor.u32 %v4054, %v4050
      %v4056 = vrot.slane %v4055, 4
      %v4058 = vshll.u32 %v3845, 16
      %v4060 = vrot.slane %v4058, 5
      %v4061 = vsel %vm322, %v4056, %v4060
      %v4063 = vshrl.u32 %v3846, 16
      %v4065 = vrot.slane %v4063, 4
      %v4066 = vshll.u32 %v3846, 16
      %v4068 = vrot.slane %v4066, 5
      %v4069 = vor.u32 %v4065, %v4068
      %v4070 = vrot.slane %v4069, 4
      %v4072 = vshll.u32 %v3847, 16
      %v4074 = vrot.slane %v4072, 5
      %v4075 = vsel %vm322, %v4070, %v4074
      %v4076 = vshrl.u32 %v3847, 16
      %v4078 = vrot.slane %v4076, 4
      %v4079 = vor.u32 %v4078, %v4074
      %v4080 = vrot.slane %v4079, 4
      %v4082 = vshll.u32 %v3848, 16
      %v4084 = vrot.slane %v4082, 5
      %v4085 = vsel %vm322, %v4080, %v4084
      %v4087 = vshrl.u32 %v3849, 16
      %v4089 = vrot.slane %v4087, 4
      %v4090 = vshll.u32 %v3849, 16
      %v4092 = vrot.slane %v4090, 5
      %v4093 = vor.u32 %v4089, %v4092
      %v4094 = vrot.slane %v4093, 4
      %v4096 = vshll.u32 %v3850, 16
      %v4098 = vrot.slane %v4096, 5
      %v4099 = vsel %vm322, %v4094, %v4098
      %v4100 = vshrl.u32 %v3850, 16
      %v4102 = vrot.slane %v4100, 4
      %v4103 = vor.u32 %v4102, %v4098
      %v4104 = vrot.slane %v4103, 4
      %v4106 = vshll.u32 %v3851, 16
      %v4108 = vrot.slane %v4106, 5
      %v4109 = vsel %vm322, %v4104, %v4108
      %v4111 = vshrl.u32 %v3852, 16
      %v4113 = vrot.slane %v4111, 4
      %v4114 = vshll.u32 %v3852, 16
      %v4116 = vrot.slane %v4114, 5
      %v4117 = vor.u32 %v4113, %v4116
      %v4118 = vrot.slane %v4117, 4
      %v4120 = vshll.u32 %v3853, 16
      %v4122 = vrot.slane %v4120, 5
      %v4123 = vsel %vm322, %v4118, %v4122
      %v4124 = vshrl.u32 %v3853, 16
      %v4126 = vrot.slane %v4124, 4
      %v4127 = vor.u32 %v4126, %v4122
      %v4128 = vrot.slane %v4127, 4
      %v4130 = vshll.u32 %v3854, 16
      %v4132 = vrot.slane %v4130, 5
      %v4133 = vsel %vm322, %v4128, %v4132
      %v4135 = vshrl.u32 %v3855, 16
      %v4137 = vrot.slane %v4135, 4
      %v4138 = vshll.u32 %v3855, 16
      %v4140 = vrot.slane %v4138, 5
      %v4141 = vor.u32 %v4137, %v4140
      %v4142 = vrot.slane %v4141, 4
      %v4144 = vshll.u32 %v3856, 16
      %v4146 = vrot.slane %v4144, 5
      %v4147 = vsel %vm322, %v4142, %v4146
      %v4148 = vshrl.u32 %v3856, 16
      %v4150 = vrot.slane %v4148, 4
      %v4151 = vor.u32 %v4150, %v4146
      %v4152 = vrot.slane %v4151, 4
      %v4154 = vshll.u32 %v3857, 16
      %v4156 = vrot.slane %v4154, 5
      %v4157 = vsel %vm322, %v4152, %v4156
      %v4159 = vshrl.u32 %v3858, 16
      %v4161 = vrot.slane %v4159, 4
      %v4162 = vshll.u32 %v3858, 16
      %v4164 = vrot.slane %v4162, 5
      %v4165 = vor.u32 %v4161, %v4164
      %v4166 = vrot.slane %v4165, 4
      %v4168 = vshll.u32 %v3859, 16
      %v4170 = vrot.slane %v4168, 5
      %v4171 = vsel %vm322, %v4166, %v4170
      %v4172 = vshrl.u32 %v3859, 16
      %v4174 = vrot.slane %v4172, 4
      %v4175 = vor.u32 %v4174, %v4170
      %v4176 = vrot.slane %v4175, 4
      %v4178 = vshll.u32 %v3860, 16
      %v4180 = vrot.slane %v4178, 5
      %v4181 = vsel %vm322, %v4176, %v4180
      %v4183 = vshrl.u32 %v3861, 16
      %v4185 = vrot.slane %v4183, 4
      %v4186 = vshll.u32 %v3861, 16
      %v4188 = vrot.slane %v4186, 5
      %v4189 = vor.u32 %v4185, %v4188
      %v4190 = vrot.slane %v4189, 4
      %v4192 = vshll.u32 %v3862, 16
      %v4194 = vrot.slane %v4192, 5
      %v4195 = vsel %vm322, %v4190, %v4194
      %v4196 = vshrl.u32 %v3862, 16
      %v4198 = vrot.slane %v4196, 4
      %v4199 = vor.u32 %v4198, %v4194
      %v4200 = vrot.slane %v4199, 4
      %v4202 = vshll.u32 %v3863, 16
      %v4204 = vrot.slane %v4202, 5
      %v4205 = vsel %vm322, %v4200, %v4204
      %v4207 = vshrl.u32 %v3864, 16
      %v4209 = vrot.slane %v4207, 4
      %v4210 = vshll.u32 %v3864, 16
      %v4212 = vrot.slane %v4210, 5
      %v4213 = vor.u32 %v4209, %v4212
      %v4214 = vrot.slane %v4213, 4
      %v4216 = vshll.u32 %v3865, 16
      %v4218 = vrot.slane %v4216, 5
      %v4219 = vsel %vm322, %v4214, %v4218
      %v4220 = vshrl.u32 %v3865, 16
      %v4222 = vrot.slane %v4220, 4
      %v4223 = vor.u32 %v4222, %v4218
      %v4224 = vrot.slane %v4223, 4
      %v4226 = vshll.u32 %v3866, 16
      %v4228 = vrot.slane %v4226, 5
      %v4229 = vsel %vm322, %v4224, %v4228
      %v4231 = vshrl.u32 %v3867, 16
      %v4233 = vrot.slane %v4231, 4
      %v4234 = vshll.u32 %v3867, 16
      %v4236 = vrot.slane %v4234, 5
      %v4237 = vor.u32 %v4233, %v4236
      %v4238 = vrot.slane %v4237, 4
      %v4240 = vshll.u32 %v3868, 16
      %v4242 = vrot.slane %v4240, 5
      %v4243 = vsel %vm322, %v4238, %v4242
      %v4244 = vshrl.u32 %v3868, 16
      %v4246 = vrot.slane %v4244, 4
      %v4247 = vor.u32 %v4246, %v4242
      %v4248 = vrot.slane %v4247, 4
      %v4250 = vshll.u32 %v3869, 16
      %v4252 = vrot.slane %v4250, 5
      %v4253 = vsel %vm322, %v4248, %v4252
      %s4254 = scalar_lea.vmem %s248, 224
      %v4255 = vld [vmem:[%s4254] sm:$0xf]
      %v4256 = vld [vmem:[%s4254 + $0x4] sm:$0xf]
      %v4257 = vld [vmem:[%s4254 + $0x8] sm:$0xf]
      %v4258 = vld [vmem:[%s4254 + $0xc] sm:$0xf]
      %v4259 = vld [vmem:[%s4254 + $0x10] sm:$0xf]
      %v4260 = vld [vmem:[%s4254 + $0x14] sm:$0xf]
      %v4261 = vld [vmem:[%s4254 + $0x18] sm:$0xf]
      %v4262 = vld [vmem:[%s4254 + $0x1c] sm:$0xf]
      %v4263 = vunpack.c.l.b16 %v3883
      %v4264 = vunpack.c.l.b16 %v3893
      %v4265 = vunpack.c.l.b16 %v3907
      %v4266 = vunpack.c.l.b16 %v3917
      %v4267 = vunpack.c.l.b16 %v3931
      %v4268 = vunpack.c.l.b16 %v3941
      %v4269 = vunpack.c.l.b16 %v3955
      %v4270 = vunpack.c.l.b16 %v3965
      %v4271 = vunpack.c.l.b16 %v3979
      %v4272 = vunpack.c.l.b16 %v3989
      %v4273 = vunpack.c.l.b16 %v4003
      %v4274 = vunpack.c.l.b16 %v4013
      %v4275 = vunpack.c.l.b16 %v4027
      %v4276 = vunpack.c.l.b16 %v4037
      %v4277 = vunpack.c.l.b16 %v4051
      %v4278 = vunpack.c.l.b16 %v4061
      %v4279 = vunpack.c.l.b16 %v4075
      %v4280 = vunpack.c.l.b16 %v4085
      %v4281 = vunpack.c.l.b16 %v4099
      %v4282 = vunpack.c.l.b16 %v4109
      %v4283 = vunpack.c.l.b16 %v4123
      %v4284 = vunpack.c.l.b16 %v4133
      %v4285 = vunpack.c.l.b16 %v4147
      %v4286 = vunpack.c.l.b16 %v4157
      %v4287 = vunpack.c.l.b16 %v4171
      %v4288 = vunpack.c.l.b16 %v4181
      %v4289 = vunpack.c.l.b16 %v4195
      %v4290 = vunpack.c.l.b16 %v4205
      %v4291 = vunpack.c.l.b16 %v4219
      %v4292 = vunpack.c.l.b16 %v4229
      %v4293 = vunpack.c.l.b16 %v4243
      %v4294 = vunpack.c.l.b16 %v4253
      %v4295 = vpack.c.b16 %v4264, %v4263
      %v4296 = vpack.c.b16 %v4266, %v4265
      %v4297 = vpack.c.b16 %v4268, %v4267
      %v4298 = vpack.c.b16 %v4270, %v4269
      %v4299 = vpack.c.b16 %v4272, %v4271
      %v4300 = vpack.c.b16 %v4274, %v4273
      %v4301 = vpack.c.b16 %v4276, %v4275
      %v4302 = vpack.c.b16 %v4278, %v4277
      %v4303 = vpack.c.b16 %v4280, %v4279
      %v4304 = vpack.c.b16 %v4282, %v4281
      %v4305 = vpack.c.b16 %v4284, %v4283
      %v4306 = vpack.c.b16 %v4286, %v4285
      %v4307 = vpack.c.b16 %v4288, %v4287
      %v4308 = vpack.c.b16 %v4290, %v4289
      %v4309 = vpack.c.b16 %v4292, %v4291
      %v4310 = vpack.c.b16 %v4294, %v4293
      %v4319 = vunpack.c.l.b16 %v4255
      %v4320 = vunpack.c.l.b16 %v4256
      %v4321 = vunpack.c.l.b16 %v4257
      %v4322 = vunpack.c.l.b16 %v4258
      %v4323 = vunpack.c.l.b16 %v4259
      %v4324 = vunpack.c.l.b16 %v4260
      %v4325 = vunpack.c.l.b16 %v4261
      %v4326 = vunpack.c.l.b16 %v4262
      %v4327 = vpack.c.b16 %v4320, %v4319
      %v4328 = vpack.c.b16 %v4322, %v4321
      %v4329 = vpack.c.b16 %v4324, %v4323
      %v4330 = vpack.c.b16 %v4326, %v4325
      %v4336 = vsel %vm788, %v4295, 0
      %v4339 = vsel %vm788, %v4296, 0
      %v4342 = vsel %vm788, %v4297, 0
      %v4345 = vsel %vm788, %v4298, 0
      %v4348 = vsel %vm788, %v4299, 0
      %v4351 = vsel %vm788, %v4300, 0
      %v4354 = vsel %vm788, %v4301, 0
      %v4357 = vsel %vm788, %v4302, 0
      %v4360 = vsel %vm788, %v4303, 0
      %v4363 = vsel %vm788, %v4304, 0
      %v4366 = vsel %vm788, %v4305, 0
      %v4369 = vsel %vm788, %v4306, 0
      %v4372 = vsel %vm788, %v4307, 0
      %v4375 = vsel %vm788, %v4308, 0
      %v4378 = vsel %vm788, %v4309, 0
      %v4381 = vsel %vm788, %v4310, 0
      %4383 = vmatprep.subr.bf16.mxu0 0
      %4384 = vmatpush1.bf16.msra.mxu0 0
      %4385 = vmatprep.subr.bf16.mxu0 0
      %4386 = vmatpush1.bf16.msra.mxu0 0
      %4387 = vmatprep.subr.bf16.mxu0 0
      %4388 = vmatpush1.bf16.msra.mxu0 0
      %4389 = vmatprep.subr.bf16.mxu0 0
      %4390 = vmatpush1.bf16.msra.mxu0 0
      %4391 = vmatprep.subr.bf16.mxu0 0
      %4392 = vmatpush1.bf16.msra.mxu0 %v4330
      %4393 = vmatprep.subr.bf16.mxu0 0
      %4394 = vmatpush1.bf16.msra.mxu0 %v4329
      %4395 = vmatprep.subr.bf16.mxu0 0
      %4396 = vmatpush1.bf16.msra.mxu0 %v4328
      %4397 = vmatprep.subr.bf16.mxu0 0
      %4398 = vmatpush1.bf16.msra.mxu0 %v4327
      %4399 = vmatprep.subr.bf16.mxu0 0
      %4400 = vmatpush2.bf16.msra.mxu0 0
      %4401 = vmatprep.subr.bf16.mxu0 0
      %4402 = vmatpush2.bf16.msra.mxu0 0
      %4403 = vmatprep.subr.bf16.mxu0 0
      %4404 = vmatpush2.bf16.msra.mxu0 0
      %4405 = vmatprep.subr.bf16.mxu0 0
      %4406 = vmatpush2.bf16.msra.mxu0 0
      %4407 = vmatprep.subr.bf16.mxu0 0
      %4408 = vmatpush2.bf16.msra.mxu0 0
      %4409 = vmatprep.subr.bf16.mxu0 0
      %4410 = vmatpush2.bf16.msra.mxu0 0
      %4411 = vmatprep.subr.bf16.mxu0 0
      %4412 = vmatpush2.bf16.msra.mxu0 0
      %4413 = vmatprep.subr.bf16.mxu0 0
      %4414 = vmatpush2.bf16.msra.mxu0 0
      %4415 = vmatprep.mubr.bf16.mxu0 0
      %4416 = vmatmul.mubr.bf16.gmra.mxu0 %v4336
      %v4417 = vpop.f32.mrf.mxu0
      %v4418 = vadd.f32 0.0, %v4417
      %v4419 = vpop.f32.mrf.mxu0
      %v4420 = vpop.f32.mrf.mxu0
      %v4421 = vadd.f32 0.0, %v4420
      %v4422 = vpop.f32.mrf.mxu0
      %4423 = vmatprep.mubr.bf16.mxu0 0
      %4424 = vmatmul.mubr.bf16.gmra.mxu0 %v4339
      %v4425 = vpop.f32.mrf.mxu0
      %v4426 = vadd.f32 0.0, %v4425
      %v4427 = vpop.f32.mrf.mxu0
      %v4428 = vpop.f32.mrf.mxu0
      %v4429 = vadd.f32 0.0, %v4428
      %v4430 = vpop.f32.mrf.mxu0
      %4431 = vmatprep.mubr.bf16.mxu0 0
      %4432 = vmatmul.mubr.bf16.gmra.mxu0 %v4342
      %v4433 = vpop.f32.mrf.mxu0
      %v4434 = vadd.f32 0.0, %v4433
      %v4435 = vpop.f32.mrf.mxu0
      %v4436 = vpop.f32.mrf.mxu0
      %v4437 = vadd.f32 0.0, %v4436
      %v4438 = vpop.f32.mrf.mxu0
      %4439 = vmatprep.mubr.bf16.mxu0 0
      %4440 = vmatmul.mubr.bf16.gmra.mxu0 %v4345
      %v4441 = vpop.f32.mrf.mxu0
      %v4442 = vadd.f32 0.0, %v4441
      %v4443 = vpop.f32.mrf.mxu0
      %v4444 = vpop.f32.mrf.mxu0
      %v4445 = vadd.f32 0.0, %v4444
      %v4446 = vpop.f32.mrf.mxu0
      %4447 = vmatprep.mubr.bf16.mxu0 0
      %4448 = vmatmul.mubr.bf16.gmra.mxu0 %v4348
      %v4449 = vpop.f32.mrf.mxu0
      %v4450 = vadd.f32 0.0, %v4449
      %v4451 = vpop.f32.mrf.mxu0
      %v4452 = vpop.f32.mrf.mxu0
      %v4453 = vadd.f32 0.0, %v4452
      %v4454 = vpop.f32.mrf.mxu0
      %4455 = vmatprep.mubr.bf16.mxu0 0
      %4456 = vmatmul.mubr.bf16.gmra.mxu0 %v4351
      %v4457 = vpop.f32.mrf.mxu0
      %v4458 = vadd.f32 0.0, %v4457
      %v4459 = vpop.f32.mrf.mxu0
      %v4460 = vpop.f32.mrf.mxu0
      %v4461 = vadd.f32 0.0, %v4460
      %v4462 = vpop.f32.mrf.mxu0
      %4463 = vmatprep.mubr.bf16.mxu0 0
      %4464 = vmatmul.mubr.bf16.gmra.mxu0 %v4354
      %v4465 = vpop.f32.mrf.mxu0
      %v4466 = vadd.f32 0.0, %v4465
      %v4467 = vpop.f32.mrf.mxu0
      %v4468 = vpop.f32.mrf.mxu0
      %v4469 = vadd.f32 0.0, %v4468
      %v4470 = vpop.f32.mrf.mxu0
      %4471 = vmatprep.mubr.bf16.mxu0 0
      %4472 = vmatmul.mubr.bf16.gmra.mxu0 %v4357
      %v4473 = vpop.f32.mrf.mxu0
      %v4474 = vadd.f32 0.0, %v4473
      %v4475 = vpop.f32.mrf.mxu0
      %v4476 = vpop.f32.mrf.mxu0
      %v4477 = vadd.f32 0.0, %v4476
      %v4478 = vpop.f32.mrf.mxu0
      %4479 = vmatprep.mubr.bf16.mxu0 0
      %4480 = vmatmul.mubr.bf16.gmra.mxu0 %v4360
      %v4481 = vpop.f32.mrf.mxu0
      %v4482 = vadd.f32 0.0, %v4481
      %v4483 = vpop.f32.mrf.mxu0
      %v4484 = vpop.f32.mrf.mxu0
      %v4485 = vadd.f32 0.0, %v4484
      %v4486 = vpop.f32.mrf.mxu0
      %4487 = vmatprep.mubr.bf16.mxu0 0
      %4488 = vmatmul.mubr.bf16.gmra.mxu0 %v4363
      %v4489 = vpop.f32.mrf.mxu0
      %v4490 = vadd.f32 0.0, %v4489
      %v4491 = vpop.f32.mrf.mxu0
      %v4492 = vpop.f32.mrf.mxu0
      %v4493 = vadd.f32 0.0, %v4492
      %v4494 = vpop.f32.mrf.mxu0
      %4495 = vmatprep.mubr.bf16.mxu0 0
      %4496 = vmatmul.mubr.bf16.gmra.mxu0 %v4366
      %v4497 = vpop.f32.mrf.mxu0
      %v4498 = vadd.f32 0.0, %v4497
      %v4499 = vpop.f32.mrf.mxu0
      %v4500 = vpop.f32.mrf.mxu0
      %v4501 = vadd.f32 0.0, %v4500
      %v4502 = vpop.f32.mrf.mxu0
      %4503 = vmatprep.mubr.bf16.mxu0 0
      %4504 = vmatmul.mubr.bf16.gmra.mxu0 %v4369
      %v4505 = vpop.f32.mrf.mxu0
      %v4506 = vadd.f32 0.0, %v4505
      %v4507 = vpop.f32.mrf.mxu0
      %v4508 = vpop.f32.mrf.mxu0
      %v4509 = vadd.f32 0.0, %v4508
      %v4510 = vpop.f32.mrf.mxu0
      %4511 = vmatprep.mubr.bf16.mxu0 0
      %4512 = vmatmul.mubr.bf16.gmra.mxu0 %v4372
      %v4513 = vpop.f32.mrf.mxu0
      %v4514 = vadd.f32 0.0, %v4513
      %v4515 = vpop.f32.mrf.mxu0
      %v4516 = vpop.f32.mrf.mxu0
      %v4517 = vadd.f32 0.0, %v4516
      %v4518 = vpop.f32.mrf.mxu0
      %4519 = vmatprep.mubr.bf16.mxu0 0
      %4520 = vmatmul.mubr.bf16.gmra.mxu0 %v4375
      %v4521 = vpop.f32.mrf.mxu0
      %v4522 = vadd.f32 0.0, %v4521
      %v4523 = vpop.f32.mrf.mxu0
      %v4524 = vpop.f32.mrf.mxu0
      %v4525 = vadd.f32 0.0, %v4524
      %v4526 = vpop.f32.mrf.mxu0
      %4527 = vmatprep.mubr.bf16.mxu0 0
      %4528 = vmatmul.mubr.bf16.gmra.mxu0 %v4378
      %v4529 = vpop.f32.mrf.mxu0
      %v4530 = vadd.f32 0.0, %v4529
      %v4531 = vpop.f32.mrf.mxu0
      %v4532 = vpop.f32.mrf.mxu0
      %v4533 = vadd.f32 0.0, %v4532
      %v4534 = vpop.f32.mrf.mxu0
      %4535 = vmatprep.mubr.bf16.mxu0 0
      %4536 = vmatmul.mubr.bf16.gmra.mxu0 %v4381
      %v4537 = vpop.f32.mrf.mxu0
      %v4538 = vadd.f32 0.0, %v4537
      %v4539 = vpop.f32.mrf.mxu0
      %v4540 = vpop.f32.mrf.mxu0
      %v4541 = vadd.f32 0.0, %v4540
      %v4542 = vpop.f32.mrf.mxu0
      %4543 = vdwg.mxu0
      %v4544 = vadd.f32 %v3790, %v4418
      %v4545 = vadd.f32 %v3791, %v4421
      %v4546 = vadd.f32 %v3792, %v4426
      %v4547 = vadd.f32 %v3793, %v4429
      %v4548 = vadd.f32 %v3794, %v4434
      %v4549 = vadd.f32 %v3795, %v4437
      %v4550 = vadd.f32 %v3796, %v4442
      %v4551 = vadd.f32 %v3797, %v4445
      %v4552 = vadd.f32 %v3798, %v4450
      %v4553 = vadd.f32 %v3799, %v4453
      %v4554 = vadd.f32 %v3800, %v4458
      %v4555 = vadd.f32 %v3801, %v4461
      %v4556 = vadd.f32 %v3802, %v4466
      %v4557 = vadd.f32 %v3803, %v4469
      %v4558 = vadd.f32 %v3804, %v4474
      %v4559 = vadd.f32 %v3805, %v4477
      %v4560 = vadd.f32 %v3806, %v4482
      %v4561 = vadd.f32 %v3807, %v4485
      %v4562 = vadd.f32 %v3808, %v4490
      %v4563 = vadd.f32 %v3809, %v4493
      %v4564 = vadd.f32 %v3810, %v4498
      %v4565 = vadd.f32 %v3811, %v4501
      %v4566 = vadd.f32 %v3812, %v4506
      %v4567 = vadd.f32 %v3813, %v4509
      %v4568 = vadd.f32 %v3814, %v4514
      %v4569 = vadd.f32 %v3815, %v4517
      %v4570 = vadd.f32 %v3816, %v4522
      %v4571 = vadd.f32 %v3817, %v4525
      %v4572 = vadd.f32 %v3818, %v4530
      %v4573 = vadd.f32 %v3819, %v4533
      %v4574 = vadd.f32 %v3820, %v4538
      %v4575 = vadd.f32 %v3821, %v4541
      %v4576 = vld [vmem:[%s3435] sm:$0xe]
      %v4577 = vld [vmem:[%s3435 + $0xc] sm:$0xe]
      %v4578 = vld [vmem:[%s3435 + $0x18] sm:$0xe]
      %v4579 = vld [vmem:[%s3435 + $0x24] sm:$0xe]
      %v4580 = vld [vmem:[%s3435 + $0x30] sm:$0xe]
      %v4581 = vld [vmem:[%s3435 + $0x3c] sm:$0xe]
      %v4582 = vld [vmem:[%s3435 + $0x48] sm:$0xe]
      %v4583 = vld [vmem:[%s3435 + $0x54] sm:$0xe]
      %v4584 = vld [vmem:[%s3435 + $0x60] sm:$0xe]
      %v4585 = vld [vmem:[%s3435 + $0x6c] sm:$0xe]
      %v4586 = vld [vmem:[%s3435 + $0x78] sm:$0xe]
      %v4587 = vld [vmem:[%s3435 + $0x84] sm:$0xe]
      %v4588 = vld [vmem:[%s3435 + $0x90] sm:$0xe]
      %v4589 = vld [vmem:[%s3435 + $0x9c] sm:$0xe]
      %v4590 = vld [vmem:[%s3435 + $0xa8] sm:$0xe]
      %v4591 = vld [vmem:[%s3435 + $0xb4] sm:$0xe]
      %v4640 = vrot.slane %v4576, 5
      %v4641 = vrot.slane %v4640, 4
      %v4642 = vrot.slane %v3823, 5
      %v4643 = vsel %vm1361, %v4641, %v4642
      %v4644 = vrot.slane %v4642, 4
      %v4645 = vrot.slane %v3824, 5
      %v4646 = vsel %vm1361, %v4644, %v4645
      %v4647 = vrot.slane %v4577, 5
      %v4648 = vrot.slane %v4647, 4
      %v4649 = vrot.slane %v3826, 5
      %v4650 = vsel %vm1361, %v4648, %v4649
      %v4651 = vrot.slane %v4649, 4
      %v4652 = vrot.slane %v3827, 5
      %v4653 = vsel %vm1361, %v4651, %v4652
      %v4654 = vrot.slane %v4578, 5
      %v4655 = vrot.slane %v4654, 4
      %v4656 = vrot.slane %v3829, 5
      %v4657 = vsel %vm1361, %v4655, %v4656
      %v4658 = vrot.slane %v4656, 4
      %v4659 = vrot.slane %v3830, 5
      %v4660 = vsel %vm1361, %v4658, %v4659
      %v4661 = vrot.slane %v4579, 5
      %v4662 = vrot.slane %v4661, 4
      %v4663 = vrot.slane %v3832, 5
      %v4664 = vsel %vm1361, %v4662, %v4663
      %v4665 = vrot.slane %v4663, 4
      %v4666 = vrot.slane %v3833, 5
      %v4667 = vsel %vm1361, %v4665, %v4666
      %v4668 = vrot.slane %v4580, 5
      %v4669 = vrot.slane %v4668, 4
      %v4670 = vrot.slane %v3835, 5
      %v4671 = vsel %vm1361, %v4669, %v4670
      %v4672 = vrot.slane %v4670, 4
      %v4673 = vrot.slane %v3836, 5
      %v4674 = vsel %vm1361, %v4672, %v4673
      %v4675 = vrot.slane %v4581, 5
      %v4676 = vrot.slane %v4675, 4
      %v4677 = vrot.slane %v3838, 5
      %v4678 = vsel %vm1361, %v4676, %v4677
      %v4679 = vrot.slane %v4677, 4
      %v4680 = vrot.slane %v3839, 5
      %v4681 = vsel %vm1361, %v4679, %v4680
      %v4682 = vrot.slane %v4582, 5
      %v4683 = vrot.slane %v4682, 4
      %v4684 = vrot.slane %v3841, 5
      %v4685 = vsel %vm1361, %v4683, %v4684
      %v4686 = vrot.slane %v4684, 4
      %v4687 = vrot.slane %v3842, 5
      %v4688 = vsel %vm1361, %v4686, %v4687
      %v4689 = vrot.slane %v4583, 5
      %v4690 = vrot.slane %v4689, 4
      %v4691 = vrot.slane %v3844, 5
      %v4692 = vsel %vm1361, %v4690, %v4691
      %v4693 = vrot.slane %v4691, 4
      %v4694 = vrot.slane %v3845, 5
      %v4695 = vsel %vm1361, %v4693, %v4694
      %v4696 = vrot.slane %v4584, 5
      %v4697 = vrot.slane %v4696, 4
      %v4698 = vrot.slane %v3847, 5
      %v4699 = vsel %vm1361, %v4697, %v4698
      %v4700 = vrot.slane %v4698, 4
      %v4701 = vrot.slane %v3848, 5
      %v4702 = vsel %vm1361, %v4700, %v4701
      %v4703 = vrot.slane %v4585, 5
      %v4704 = vrot.slane %v4703, 4
      %v4705 = vrot.slane %v3850, 5
      %v4706 = vsel %vm1361, %v4704, %v4705
      %v4707 = vrot.slane %v4705, 4
      %v4708 = vrot.slane %v3851, 5
      %v4709 = vsel %vm1361, %v4707, %v4708
      %v4710 = vrot.slane %v4586, 5
      %v4711 = vrot.slane %v4710, 4
      %v4712 = vrot.slane %v3853, 5
      %v4713 = vsel %vm1361, %v4711, %v4712
      %v4714 = vrot.slane %v4712, 4
      %v4715 = vrot.slane %v3854, 5
      %v4716 = vsel %vm1361, %v4714, %v4715
      %v4717 = vrot.slane %v4587, 5
      %v4718 = vrot.slane %v4717, 4
      %v4719 = vrot.slane %v3856, 5
      %v4720 = vsel %vm1361, %v4718, %v4719
      %v4721 = vrot.slane %v4719, 4
      %v4722 = vrot.slane %v3857, 5
      %v4723 = vsel %vm1361, %v4721, %v4722
      %v4724 = vrot.slane %v4588, 5
      %v4725 = vrot.slane %v4724, 4
      %v4726 = vrot.slane %v3859, 5
      %v4727 = vsel %vm1361, %v4725, %v4726
      %v4728 = vrot.slane %v4726, 4
      %v4729 = vrot.slane %v3860, 5
      %v4730 = vsel %vm1361, %v4728, %v4729
      %v4731 = vrot.slane %v4589, 5
      %v4732 = vrot.slane %v4731, 4
      %v4733 = vrot.slane %v3862, 5
      %v4734 = vsel %vm1361, %v4732, %v4733
      %v4735 = vrot.slane %v4733, 4
      %v4736 = vrot.slane %v3863, 5
      %v4737 = vsel %vm1361, %v4735, %v4736
      %v4738 = vrot.slane %v4590, 5
      %v4739 = vrot.slane %v4738, 4
      %v4740 = vrot.slane %v3865, 5
      %v4741 = vsel %vm1361, %v4739, %v4740
      %v4742 = vrot.slane %v4740, 4
      %v4743 = vrot.slane %v3866, 5
      %v4744 = vsel %vm1361, %v4742, %v4743
      %v4745 = vrot.slane %v4591, 5
      %v4746 = vrot.slane %v4745, 4
      %v4747 = vrot.slane %v3868, 5
      %v4748 = vsel %vm1361, %v4746, %v4747
      %v4749 = vrot.slane %v4747, 4
      %v4750 = vrot.slane %v3869, 5
      %v4751 = vsel %vm1361, %v4749, %v4750
      %s4752 = scalar_lea.vmem %s248, 256
      %v4753 = vld [vmem:[%s4752] sm:$0xf]
      %v4754 = vld [vmem:[%s4752 + $0x4] sm:$0xf]
      %v4755 = vld [vmem:[%s4752 + $0x8] sm:$0xf]
      %v4756 = vld [vmem:[%s4752 + $0xc] sm:$0xf]
      %v4757 = vld [vmem:[%s4752 + $0x10] sm:$0xf]
      %v4758 = vld [vmem:[%s4752 + $0x14] sm:$0xf]
      %v4759 = vld [vmem:[%s4752 + $0x18] sm:$0xf]
      %v4760 = vld [vmem:[%s4752 + $0x1c] sm:$0xf]
      %v4761 = vunpack.c.l.b16 %v4643
      %v4762 = vunpack.c.l.b16 %v4646
      %v4763 = vunpack.c.l.b16 %v4650
      %v4764 = vunpack.c.l.b16 %v4653
      %v4765 = vunpack.c.l.b16 %v4657
      %v4766 = vunpack.c.l.b16 %v4660
      %v4767 = vunpack.c.l.b16 %v4664
      %v4768 = vunpack.c.l.b16 %v4667
      %v4769 = vunpack.c.l.b16 %v4671
      %v4770 = vunpack.c.l.b16 %v4674
      %v4771 = vunpack.c.l.b16 %v4678
      %v4772 = vunpack.c.l.b16 %v4681
      %v4773 = vunpack.c.l.b16 %v4685
      %v4774 = vunpack.c.l.b16 %v4688
      %v4775 = vunpack.c.l.b16 %v4692
      %v4776 = vunpack.c.l.b16 %v4695
      %v4777 = vunpack.c.l.b16 %v4699
      %v4778 = vunpack.c.l.b16 %v4702
      %v4779 = vunpack.c.l.b16 %v4706
      %v4780 = vunpack.c.l.b16 %v4709
      %v4781 = vunpack.c.l.b16 %v4713
      %v4782 = vunpack.c.l.b16 %v4716
      %v4783 = vunpack.c.l.b16 %v4720
      %v4784 = vunpack.c.l.b16 %v4723
      %v4785 = vunpack.c.l.b16 %v4727
      %v4786 = vunpack.c.l.b16 %v4730
      %v4787 = vunpack.c.l.b16 %v4734
      %v4788 = vunpack.c.l.b16 %v4737
      %v4789 = vunpack.c.l.b16 %v4741
      %v4790 = vunpack.c.l.b16 %v4744
      %v4791 = vunpack.c.l.b16 %v4748
      %v4792 = vunpack.c.l.b16 %v4751
      %v4793 = vpack.c.b16 %v4762, %v4761
      %v4794 = vpack.c.b16 %v4764, %v4763
      %v4795 = vpack.c.b16 %v4766, %v4765
      %v4796 = vpack.c.b16 %v4768, %v4767
      %v4797 = vpack.c.b16 %v4770, %v4769
      %v4798 = vpack.c.b16 %v4772, %v4771
      %v4799 = vpack.c.b16 %v4774, %v4773
      %v4800 = vpack.c.b16 %v4776, %v4775
      %v4801 = vpack.c.b16 %v4778, %v4777
      %v4802 = vpack.c.b16 %v4780, %v4779
      %v4803 = vpack.c.b16 %v4782, %v4781
      %v4804 = vpack.c.b16 %v4784, %v4783
      %v4805 = vpack.c.b16 %v4786, %v4785
      %v4806 = vpack.c.b16 %v4788, %v4787
      %v4807 = vpack.c.b16 %v4790, %v4789
      %v4808 = vpack.c.b16 %v4792, %v4791
      %v4817 = vunpack.c.l.b16 %v4753
      %v4818 = vunpack.c.l.b16 %v4754
      %v4819 = vunpack.c.l.b16 %v4755
      %v4820 = vunpack.c.l.b16 %v4756
      %v4821 = vunpack.c.l.b16 %v4757
      %v4822 = vunpack.c.l.b16 %v4758
      %v4823 = vunpack.c.l.b16 %v4759
      %v4824 = vunpack.c.l.b16 %v4760
      %v4825 = vpack.c.b16 %v4818, %v4817
      %v4826 = vpack.c.b16 %v4820, %v4819
      %v4827 = vpack.c.b16 %v4822, %v4821
      %v4828 = vpack.c.b16 %v4824, %v4823
      %v4834 = vsel %vm788, %v4793, 0
      %v4837 = vsel %vm788, %v4794, 0
      %v4840 = vsel %vm788, %v4795, 0
      %v4843 = vsel %vm788, %v4796, 0
      %v4846 = vsel %vm788, %v4797, 0
      %v4849 = vsel %vm788, %v4798, 0
      %v4852 = vsel %vm788, %v4799, 0
      %v4855 = vsel %vm788, %v4800, 0
      %v4858 = vsel %vm788, %v4801, 0
      %v4861 = vsel %vm788, %v4802, 0
      %v4864 = vsel %vm788, %v4803, 0
      %v4867 = vsel %vm788, %v4804, 0
      %v4870 = vsel %vm788, %v4805, 0
      %v4873 = vsel %vm788, %v4806, 0
      %v4876 = vsel %vm788, %v4807, 0
      %v4879 = vsel %vm788, %v4808, 0
      %4881 = vmatprep.subr.bf16.mxu0 0
      %4882 = vmatpush1.bf16.msra.mxu0 0
      %4883 = vmatprep.subr.bf16.mxu0 0
      %4884 = vmatpush1.bf16.msra.mxu0 0
      %4885 = vmatprep.subr.bf16.mxu0 0
      %4886 = vmatpush1.bf16.msra.mxu0 0
      %4887 = vmatprep.subr.bf16.mxu0 0
      %4888 = vmatpush1.bf16.msra.mxu0 0
      %4889 = vmatprep.subr.bf16.mxu0 0
      %4890 = vmatpush1.bf16.msra.mxu0 %v4828
      %4891 = vmatprep.subr.bf16.mxu0 0
      %4892 = vmatpush1.bf16.msra.mxu0 %v4827
      %4893 = vmatprep.subr.bf16.mxu0 0
      %4894 = vmatpush1.bf16.msra.mxu0 %v4826
      %4895 = vmatprep.subr.bf16.mxu0 0
      %4896 = vmatpush1.bf16.msra.mxu0 %v4825
      %4897 = vmatprep.subr.bf16.mxu0 0
      %4898 = vmatpush2.bf16.msra.mxu0 0
      %4899 = vmatprep.subr.bf16.mxu0 0
      %4900 = vmatpush2.bf16.msra.mxu0 0
      %4901 = vmatprep.subr.bf16.mxu0 0
      %4902 = vmatpush2.bf16.msra.mxu0 0
      %4903 = vmatprep.subr.bf16.mxu0 0
      %4904 = vmatpush2.bf16.msra.mxu0 0
      %4905 = vmatprep.subr.bf16.mxu0 0
      %4906 = vmatpush2.bf16.msra.mxu0 0
      %4907 = vmatprep.subr.bf16.mxu0 0
      %4908 = vmatpush2.bf16.msra.mxu0 0
      %4909 = vmatprep.subr.bf16.mxu0 0
      %4910 = vmatpush2.bf16.msra.mxu0 0
      %4911 = vmatprep.subr.bf16.mxu0 0
      %4912 = vmatpush2.bf16.msra.mxu0 0
      %4913 = vmatprep.mubr.bf16.mxu0 0
      %4914 = vmatmul.mubr.bf16.gmra.mxu0 %v4834
      %v4915 = vpop.f32.mrf.mxu0
      %v4916 = vadd.f32 0.0, %v4915
      %v4917 = vpop.f32.mrf.mxu0
      %v4918 = vpop.f32.mrf.mxu0
      %v4919 = vadd.f32 0.0, %v4918
      %v4920 = vpop.f32.mrf.mxu0
      %4921 = vmatprep.mubr.bf16.mxu0 0
      %4922 = vmatmul.mubr.bf16.gmra.mxu0 %v4837
      %v4923 = vpop.f32.mrf.mxu0
      %v4924 = vadd.f32 0.0, %v4923
      %v4925 = vpop.f32.mrf.mxu0
      %v4926 = vpop.f32.mrf.mxu0
      %v4927 = vadd.f32 0.0, %v4926
      %v4928 = vpop.f32.mrf.mxu0
      %4929 = vmatprep.mubr.bf16.mxu0 0
      %4930 = vmatmul.mubr.bf16.gmra.mxu0 %v4840
      %v4931 = vpop.f32.mrf.mxu0
      %v4932 = vadd.f32 0.0, %v4931
      %v4933 = vpop.f32.mrf.mxu0
      %v4934 = vpop.f32.mrf.mxu0
      %v4935 = vadd.f32 0.0, %v4934
      %v4936 = vpop.f32.mrf.mxu0
      %4937 = vmatprep.mubr.bf16.mxu0 0
      %4938 = vmatmul.mubr.bf16.gmra.mxu0 %v4843
      %v4939 = vpop.f32.mrf.mxu0
      %v4940 = vadd.f32 0.0, %v4939
      %v4941 = vpop.f32.mrf.mxu0
      %v4942 = vpop.f32.mrf.mxu0
      %v4943 = vadd.f32 0.0, %v4942
      %v4944 = vpop.f32.mrf.mxu0
      %4945 = vmatprep.mubr.bf16.mxu0 0
      %4946 = vmatmul.mubr.bf16.gmra.mxu0 %v4846
      %v4947 = vpop.f32.mrf.mxu0
      %v4948 = vadd.f32 0.0, %v4947
      %v4949 = vpop.f32.mrf.mxu0
      %v4950 = vpop.f32.mrf.mxu0
      %v4951 = vadd.f32 0.0, %v4950
      %v4952 = vpop.f32.mrf.mxu0
      %4953 = vmatprep.mubr.bf16.mxu0 0
      %4954 = vmatmul.mubr.bf16.gmra.mxu0 %v4849
      %v4955 = vpop.f32.mrf.mxu0
      %v4956 = vadd.f32 0.0, %v4955
      %v4957 = vpop.f32.mrf.mxu0
      %v4958 = vpop.f32.mrf.mxu0
      %v4959 = vadd.f32 0.0, %v4958
      %v4960 = vpop.f32.mrf.mxu0
      %4961 = vmatprep.mubr.bf16.mxu0 0
      %4962 = vmatmul.mubr.bf16.gmra.mxu0 %v4852
      %v4963 = vpop.f32.mrf.mxu0
      %v4964 = vadd.f32 0.0, %v4963
      %v4965 = vpop.f32.mrf.mxu0
      %v4966 = vpop.f32.mrf.mxu0
      %v4967 = vadd.f32 0.0, %v4966
      %v4968 = vpop.f32.mrf.mxu0
      %4969 = vmatprep.mubr.bf16.mxu0 0
      %4970 = vmatmul.mubr.bf16.gmra.mxu0 %v4855
      %v4971 = vpop.f32.mrf.mxu0
      %v4972 = vadd.f32 0.0, %v4971
      %v4973 = vpop.f32.mrf.mxu0
      %v4974 = vpop.f32.mrf.mxu0
      %v4975 = vadd.f32 0.0, %v4974
      %v4976 = vpop.f32.mrf.mxu0
      %4977 = vmatprep.mubr.bf16.mxu0 0
      %4978 = vmatmul.mubr.bf16.gmra.mxu0 %v4858
      %v4979 = vpop.f32.mrf.mxu0
      %v4980 = vadd.f32 0.0, %v4979
      %v4981 = vpop.f32.mrf.mxu0
      %v4982 = vpop.f32.mrf.mxu0
      %v4983 = vadd.f32 0.0, %v4982
      %v4984 = vpop.f32.mrf.mxu0
      %4985 = vmatprep.mubr.bf16.mxu0 0
      %4986 = vmatmul.mubr.bf16.gmra.mxu0 %v4861
      %v4987 = vpop.f32.mrf.mxu0
      %v4988 = vadd.f32 0.0, %v4987
      %v4989 = vpop.f32.mrf.mxu0
      %v4990 = vpop.f32.mrf.mxu0
      %v4991 = vadd.f32 0.0, %v4990
      %v4992 = vpop.f32.mrf.mxu0
      %4993 = vmatprep.mubr.bf16.mxu0 0
      %4994 = vmatmul.mubr.bf16.gmra.mxu0 %v4864
      %v4995 = vpop.f32.mrf.mxu0
      %v4996 = vadd.f32 0.0, %v4995
      %v4997 = vpop.f32.mrf.mxu0
      %v4998 = vpop.f32.mrf.mxu0
      %v4999 = vadd.f32 0.0, %v4998
      %v5000 = vpop.f32.mrf.mxu0
      %5001 = vmatprep.mubr.bf16.mxu0 0
      %5002 = vmatmul.mubr.bf16.gmra.mxu0 %v4867
      %v5003 = vpop.f32.mrf.mxu0
      %v5004 = vadd.f32 0.0, %v5003
      %v5005 = vpop.f32.mrf.mxu0
      %v5006 = vpop.f32.mrf.mxu0
      %v5007 = vadd.f32 0.0, %v5006
      %v5008 = vpop.f32.mrf.mxu0
      %5009 = vmatprep.mubr.bf16.mxu0 0
      %5010 = vmatmul.mubr.bf16.gmra.mxu0 %v4870
      %v5011 = vpop.f32.mrf.mxu0
      %v5012 = vadd.f32 0.0, %v5011
      %v5013 = vpop.f32.mrf.mxu0
      %v5014 = vpop.f32.mrf.mxu0
      %v5015 = vadd.f32 0.0, %v5014
      %v5016 = vpop.f32.mrf.mxu0
      %5017 = vmatprep.mubr.bf16.mxu0 0
      %5018 = vmatmul.mubr.bf16.gmra.mxu0 %v4873
      %v5019 = vpop.f32.mrf.mxu0
      %v5020 = vadd.f32 0.0, %v5019
      %v5021 = vpop.f32.mrf.mxu0
      %v5022 = vpop.f32.mrf.mxu0
      %v5023 = vadd.f32 0.0, %v5022
      %v5024 = vpop.f32.mrf.mxu0
      %5025 = vmatprep.mubr.bf16.mxu0 0
      %5026 = vmatmul.mubr.bf16.gmra.mxu0 %v4876
      %v5027 = vpop.f32.mrf.mxu0
      %v5028 = vadd.f32 0.0, %v5027
      %v5029 = vpop.f32.mrf.mxu0
      %v5030 = vpop.f32.mrf.mxu0
      %v5031 = vadd.f32 0.0, %v5030
      %v5032 = vpop.f32.mrf.mxu0
      %5033 = vmatprep.mubr.bf16.mxu0 0
      %5034 = vmatmul.mubr.bf16.gmra.mxu0 %v4879
      %v5035 = vpop.f32.mrf.mxu0
      %v5036 = vadd.f32 0.0, %v5035
      %v5037 = vpop.f32.mrf.mxu0
      %v5038 = vpop.f32.mrf.mxu0
      %v5039 = vadd.f32 0.0, %v5038
      %v5040 = vpop.f32.mrf.mxu0
      %5041 = vdwg.mxu0
      %v5042 = vadd.f32 %v4544, %v4916
      %v5043 = vadd.f32 %v4545, %v4919
      %v5044 = vadd.f32 %v4546, %v4924
      %v5045 = vadd.f32 %v4547, %v4927
      %v5046 = vadd.f32 %v4548, %v4932
      %v5047 = vadd.f32 %v4549, %v4935
      %v5048 = vadd.f32 %v4550, %v4940
      %v5049 = vadd.f32 %v4551, %v4943
      %v5050 = vadd.f32 %v4552, %v4948
      %v5051 = vadd.f32 %v4553, %v4951
      %v5052 = vadd.f32 %v4554, %v4956
      %v5053 = vadd.f32 %v4555, %v4959
      %v5054 = vadd.f32 %v4556, %v4964
      %v5055 = vadd.f32 %v4557, %v4967
      %v5056 = vadd.f32 %v4558, %v4972
      %v5057 = vadd.f32 %v4559, %v4975
      %v5058 = vadd.f32 %v4560, %v4980
      %v5059 = vadd.f32 %v4561, %v4983
      %v5060 = vadd.f32 %v4562, %v4988
      %v5061 = vadd.f32 %v4563, %v4991
      %v5062 = vadd.f32 %v4564, %v4996
      %v5063 = vadd.f32 %v4565, %v4999
      %v5064 = vadd.f32 %v4566, %v5004
      %v5065 = vadd.f32 %v4567, %v5007
      %v5066 = vadd.f32 %v4568, %v5012
      %v5067 = vadd.f32 %v4569, %v5015
      %v5068 = vadd.f32 %v4570, %v5020
      %v5069 = vadd.f32 %v4571, %v5023
      %v5070 = vadd.f32 %v4572, %v5028
      %v5071 = vadd.f32 %v4573, %v5031
      %v5072 = vadd.f32 %v4574, %v5036
      %v5073 = vadd.f32 %v4575, %v5039
      %v5074 = vld [vmem:[%s251] sm:$0x1]
      %v5076 = vlaneseq
      %v5077 = vshrl.u32 %v5076, 7
      %v5078 = vsub.s32 0, %v5077
      %v5079 = vrot.slane %v5074, %v5078
      %v5081 = vadd.f32 %v5042, %v5079
      %v5082 = vadd.f32 %v5043, %v5079
      %v5083 = vadd.f32 %v5044, %v5079
      %v5084 = vadd.f32 %v5045, %v5079
      %v5085 = vadd.f32 %v5046, %v5079
      %v5086 = vadd.f32 %v5047, %v5079
      %v5087 = vadd.f32 %v5048, %v5079
      %v5088 = vadd.f32 %v5049, %v5079
      %v5089 = vadd.f32 %v5050, %v5079
      %v5090 = vadd.f32 %v5051, %v5079
      %v5091 = vadd.f32 %v5052, %v5079
      %v5092 = vadd.f32 %v5053, %v5079
      %v5093 = vadd.f32 %v5054, %v5079
      %v5094 = vadd.f32 %v5055, %v5079
      %v5095 = vadd.f32 %v5056, %v5079
      %v5096 = vadd.f32 %v5057, %v5079
      %v5097 = vadd.f32 %v5058, %v5079
      %v5098 = vadd.f32 %v5059, %v5079
      %v5099 = vadd.f32 %v5060, %v5079
      %v5100 = vadd.f32 %v5061, %v5079
      %v5101 = vadd.f32 %v5062, %v5079
      %v5102 = vadd.f32 %v5063, %v5079
      %v5103 = vadd.f32 %v5064, %v5079
      %v5104 = vadd.f32 %v5065, %v5079
      %v5105 = vadd.f32 %v5066, %v5079
      %v5106 = vadd.f32 %v5067, %v5079
      %v5107 = vadd.f32 %v5068, %v5079
      %v5108 = vadd.f32 %v5069, %v5079
      %v5109 = vadd.f32 %v5070, %v5079
      %v5110 = vadd.f32 %v5071, %v5079
      %v5111 = vadd.f32 %v5072, %v5079
      %v5112 = vadd.f32 %v5073, %v5079
      %vm5113 = vcmp.ge.f32.partialorder %v5081, 0.0
      %vm5114 = vcmp.ge.f32.partialorder %v5082, 0.0
      %vm5115 = vcmp.ge.f32.partialorder %v5083, 0.0
      %vm5116 = vcmp.ge.f32.partialorder %v5084, 0.0
      %vm5117 = vcmp.ge.f32.partialorder %v5085, 0.0
      %vm5118 = vcmp.ge.f32.partialorder %v5086, 0.0
      %vm5119 = vcmp.ge.f32.partialorder %v5087, 0.0
      %vm5120 = vcmp.ge.f32.partialorder %v5088, 0.0
      %vm5121 = vcmp.ge.f32.partialorder %v5089, 0.0
      %vm5122 = vcmp.ge.f32.partialorder %v5090, 0.0
      %vm5123 = vcmp.ge.f32.partialorder %v5091, 0.0
      %vm5124 = vcmp.ge.f32.partialorder %v5092, 0.0
      %vm5125 = vcmp.ge.f32.partialorder %v5093, 0.0
      %vm5126 = vcmp.ge.f32.partialorder %v5094, 0.0
      %vm5127 = vcmp.ge.f32.partialorder %v5095, 0.0
      %vm5128 = vcmp.ge.f32.partialorder %v5096, 0.0
      %vm5129 = vcmp.ge.f32.partialorder %v5097, 0.0
      %vm5130 = vcmp.ge.f32.partialorder %v5098, 0.0
      %vm5131 = vcmp.ge.f32.partialorder %v5099, 0.0
      %vm5132 = vcmp.ge.f32.partialorder %v5100, 0.0
      %vm5133 = vcmp.ge.f32.partialorder %v5101, 0.0
      %vm5134 = vcmp.ge.f32.partialorder %v5102, 0.0
      %vm5135 = vcmp.ge.f32.partialorder %v5103, 0.0
      %vm5136 = vcmp.ge.f32.partialorder %v5104, 0.0
      %vm5137 = vcmp.ge.f32.partialorder %v5105, 0.0
      %vm5138 = vcmp.ge.f32.partialorder %v5106, 0.0
      %vm5139 = vcmp.ge.f32.partialorder %v5107, 0.0
      %vm5140 = vcmp.ge.f32.partialorder %v5108, 0.0
      %vm5141 = vcmp.ge.f32.partialorder %v5109, 0.0
      %vm5142 = vcmp.ge.f32.partialorder %v5110, 0.0
      %vm5143 = vcmp.ge.f32.partialorder %v5111, 0.0
      %vm5144 = vcmp.ge.f32.partialorder %v5112, 0.0
      %v5145 = vld [vmem:[%s254] sm:$0x1]
      %v5147 = vlaneseq
      %v5148 = vshrl.u32 %v5147, 7
      %v5149 = vsub.s32 0, %v5148
      %v5150 = vrot.slane %v5145, %v5149
      %v5152 = vmul.f32 %v5081, %v5150
      %v5153 = vmul.f32 %v5082, %v5150
      %v5154 = vmul.f32 %v5083, %v5150
      %v5155 = vmul.f32 %v5084, %v5150
      %v5156 = vmul.f32 %v5085, %v5150
      %v5157 = vmul.f32 %v5086, %v5150
      %v5158 = vmul.f32 %v5087, %v5150
      %v5159 = vmul.f32 %v5088, %v5150
      %v5160 = vmul.f32 %v5089, %v5150
      %v5161 = vmul.f32 %v5090, %v5150
      %v5162 = vmul.f32 %v5091, %v5150
      %v5163 = vmul.f32 %v5092, %v5150
      %v5164 = vmul.f32 %v5093, %v5150
      %v5165 = vmul.f32 %v5094, %v5150
      %v5166 = vmul.f32 %v5095, %v5150
      %v5167 = vmul.f32 %v5096, %v5150
      %v5168 = vmul.f32 %v5097, %v5150
      %v5169 = vmul.f32 %v5098, %v5150
      %v5170 = vmul.f32 %v5099, %v5150
      %v5171 = vmul.f32 %v5100, %v5150
      %v5172 = vmul.f32 %v5101, %v5150
      %v5173 = vmul.f32 %v5102, %v5150
      %v5174 = vmul.f32 %v5103, %v5150
      %v5175 = vmul.f32 %v5104, %v5150
      %v5176 = vmul.f32 %v5105, %v5150
      %v5177 = vmul.f32 %v5106, %v5150
      %v5178 = vmul.f32 %v5107, %v5150
      %v5179 = vmul.f32 %v5108, %v5150
      %v5180 = vmul.f32 %v5109, %v5150
      %v5181 = vmul.f32 %v5110, %v5150
      %v5182 = vmul.f32 %v5111, %v5150
      %v5183 = vmul.f32 %v5112, %v5150
      %v5184 = vsel %vm5113, %v5081, %v5152
      %v5185 = vsel %vm5114, %v5082, %v5153
      %v5186 = vsel %vm5115, %v5083, %v5154
      %v5187 = vsel %vm5116, %v5084, %v5155
      %v5188 = vsel %vm5117, %v5085, %v5156
      %v5189 = vsel %vm5118, %v5086, %v5157
      %v5190 = vsel %vm5119, %v5087, %v5158
      %v5191 = vsel %vm5120, %v5088, %v5159
      %v5192 = vsel %vm5121, %v5089, %v5160
      %v5193 = vsel %vm5122, %v5090, %v5161
      %v5194 = vsel %vm5123, %v5091, %v5162
      %v5195 = vsel %vm5124, %v5092, %v5163
      %v5196 = vsel %vm5125, %v5093, %v5164
      %v5197 = vsel %vm5126, %v5094, %v5165
      %v5198 = vsel %vm5127, %v5095, %v5166
      %v5199 = vsel %vm5128, %v5096, %v5167
      %v5200 = vsel %vm5129, %v5097, %v5168
      %v5201 = vsel %vm5130, %v5098, %v5169
      %v5202 = vsel %vm5131, %v5099, %v5170
      %v5203 = vsel %vm5132, %v5100, %v5171
      %v5204 = vsel %vm5133, %v5101, %v5172
      %v5205 = vsel %vm5134, %v5102, %v5173
      %v5206 = vsel %vm5135, %v5103, %v5174
      %v5207 = vsel %vm5136, %v5104, %v5175
      %v5208 = vsel %vm5137, %v5105, %v5176
      %v5209 = vsel %vm5138, %v5106, %v5177
      %v5210 = vsel %vm5139, %v5107, %v5178
      %v5211 = vsel %vm5140, %v5108, %v5179
      %v5212 = vsel %vm5141, %v5109, %v5180
      %v5213 = vsel %vm5142, %v5110, %v5181
      %v5214 = vsel %vm5143, %v5111, %v5182
      %v5215 = vsel %vm5144, %v5112, %v5183
      %5216 = vst [vmem:[%s262] sm:$0xf] 0
      %5217 = vst [vmem:[%s262 + $0x4] sm:$0xf] 0
      %5218 = vst [vmem:[%s262 + $0x8] sm:$0x1] 0
      %5219 = vst [vmem:[%s262 + $0xc] sm:$0xf] 0
      %5220 = vst [vmem:[%s262 + $0x10] sm:$0xf] 0
      %5221 = vst [vmem:[%s262 + $0x14] sm:$0x1] 0
      %5222 = vst [vmem:[%s262 + $0x18] sm:$0xf] 0
      %5223 = vst [vmem:[%s262 + $0x1c] sm:$0xf] 0
      %5224 = vst [vmem:[%s262 + $0x20] sm:$0x1] 0
      %5225 = vst [vmem:[%s262 + $0x24] sm:$0xf] 0
      %5226 = vst [vmem:[%s262 + $0x28] sm:$0xf] 0
      %5227 = vst [vmem:[%s262 + $0x2c] sm:$0x1] 0
      %5228 = vst [vmem:[%s262 + $0x30] sm:$0xf] 0
      %5229 = vst [vmem:[%s262 + $0x34] sm:$0xf] 0
      %5230 = vst [vmem:[%s262 + $0x38] sm:$0x1] 0
      %5231 = vst [vmem:[%s262 + $0x3c] sm:$0xf] 0
      %5232 = vst [vmem:[%s262 + $0x40] sm:$0xf] 0
      %5233 = vst [vmem:[%s262 + $0x44] sm:$0x1] 0
      %5234 = vst [vmem:[%s262 + $0x48] sm:$0xf] 0
      %5235 = vst [vmem:[%s262 + $0x4c] sm:$0xf] 0
      %5236 = vst [vmem:[%s262 + $0x50] sm:$0x1] 0
      %5237 = vst [vmem:[%s262 + $0x54] sm:$0xf] 0
      %5238 = vst [vmem:[%s262 + $0x58] sm:$0xf] 0
      %5239 = vst [vmem:[%s262 + $0x5c] sm:$0x1] 0
      %5240 = vst [vmem:[%s262 + $0x60] sm:$0xf] 0
      %5241 = vst [vmem:[%s262 + $0x64] sm:$0xf] 0
      %5242 = vst [vmem:[%s262 + $0x68] sm:$0x1] 0
      %5243 = vst [vmem:[%s262 + $0x6c] sm:$0xf] 0
      %5244 = vst [vmem:[%s262 + $0x70] sm:$0xf] 0
      %5245 = vst [vmem:[%s262 + $0x74] sm:$0x1] 0
      %5246 = vst [vmem:[%s262 + $0x78] sm:$0xf] 0
      %5247 = vst [vmem:[%s262 + $0x7c] sm:$0xf] 0
      %5248 = vst [vmem:[%s262 + $0x80] sm:$0x1] 0
      %5249 = vst [vmem:[%s262 + $0x84] sm:$0xf] 0
      %5250 = vst [vmem:[%s262 + $0x88] sm:$0xf] 0
      %5251 = vst [vmem:[%s262 + $0x8c] sm:$0x1] 0
      %5252 = vst [vmem:[%s262 + $0x90] sm:$0xf] 0
      %5253 = vst [vmem:[%s262 + $0x94] sm:$0xf] 0
      %5254 = vst [vmem:[%s262 + $0x98] sm:$0x1] 0
      %5255 = vst [vmem:[%s262 + $0x9c] sm:$0xf] 0
      %5256 = vst [vmem:[%s262 + $0xa0] sm:$0xf] 0
      %5257 = vst [vmem:[%s262 + $0xa4] sm:$0x1] 0
      %5258 = vst [vmem:[%s262 + $0xa8] sm:$0xf] 0
      %5259 = vst [vmem:[%s262 + $0xac] sm:$0xf] 0
      %5260 = vst [vmem:[%s262 + $0xb0] sm:$0x1] 0
      %5261 = vst [vmem:[%s262 + $0xb4] sm:$0xf] 0
      %5262 = vst [vmem:[%s262 + $0xb8] sm:$0xf] 0
      %5263 = vst [vmem:[%s262 + $0xbc] sm:$0x1] 0
      %5264 = vst [vmem:[%s262 + $0xc0] sm:$0xf] 0
      %5265 = vst [vmem:[%s262 + $0xc4] sm:$0xf] 0
      %5266 = vst [vmem:[%s262 + $0xc8] sm:$0x1] 0
      %5267 = vst [vmem:[%s262 + $0xcc] sm:$0xf] 0
      %5268 = vst [vmem:[%s262 + $0xd0] sm:$0xf] 0
      %5269 = vst [vmem:[%s262 + $0xd4] sm:$0x1] 0
      %v5270 = vpack.c.bf16 %v5185, %v5184
      %v5271 = vpack.c.bf16 %v5187, %v5186
      %v5272 = vpack.c.bf16 %v5189, %v5188
      %v5273 = vpack.c.bf16 %v5191, %v5190
      %v5274 = vpack.c.bf16 %v5193, %v5192
      %v5275 = vpack.c.bf16 %v5195, %v5194
      %v5276 = vpack.c.bf16 %v5197, %v5196
      %v5277 = vpack.c.bf16 %v5199, %v5198
      %v5278 = vpack.c.bf16 %v5201, %v5200
      %v5279 = vpack.c.bf16 %v5203, %v5202
      %v5280 = vpack.c.bf16 %v5205, %v5204
      %v5281 = vpack.c.bf16 %v5207, %v5206
      %v5282 = vpack.c.bf16 %v5209, %v5208
      %v5283 = vpack.c.bf16 %v5211, %v5210
      %v5284 = vpack.c.bf16 %v5213, %v5212
      %v5285 = vpack.c.bf16 %v5215, %v5214
      %v5302 = vunpack.c.l.b16 %v5270
      %v5303 = vunpack.c.h.b16 %v5270
      %v5304 = vunpack.c.l.b16 %v5271
      %v5305 = vunpack.c.h.b16 %v5271
      %v5306 = vunpack.c.l.b16 %v5272
      %v5307 = vunpack.c.h.b16 %v5272
      %v5308 = vunpack.c.l.b16 %v5273
      %v5309 = vunpack.c.h.b16 %v5273
      %v5310 = vunpack.c.l.b16 %v5274
      %v5311 = vunpack.c.h.b16 %v5274
      %v5312 = vunpack.c.l.b16 %v5275
      %v5313 = vunpack.c.h.b16 %v5275
      %v5314 = vunpack.c.l.b16 %v5276
      %v5315 = vunpack.c.h.b16 %v5276
      %v5316 = vunpack.c.l.b16 %v5277
      %v5317 = vunpack.c.h.b16 %v5277
      %v5318 = vunpack.c.l.b16 %v5278
      %v5319 = vunpack.c.h.b16 %v5278
      %v5320 = vunpack.c.l.b16 %v5279
      %v5321 = vunpack.c.h.b16 %v5279
      %v5322 = vunpack.c.l.b16 %v5280
      %v5323 = vunpack.c.h.b16 %v5280
      %v5324 = vunpack.c.l.b16 %v5281
      %v5325 = vunpack.c.h.b16 %v5281
      %v5326 = vunpack.c.l.b16 %v5282
      %v5327 = vunpack.c.h.b16 %v5282
      %v5328 = vunpack.c.l.b16 %v5283
      %v5329 = vunpack.c.h.b16 %v5283
      %v5330 = vunpack.c.l.b16 %v5284
      %v5331 = vunpack.c.h.b16 %v5284
      %v5332 = vunpack.c.l.b16 %v5285
      %v5333 = vunpack.c.h.b16 %v5285
      %v5334 = vpack.c.b16 %v5302, %v5302
      %v5335 = vpack.c.b16 %v5303, %v5303
      %v5336 = vpack.c.b16 %v5304, %v5304
      %v5337 = vpack.c.b16 %v5305, %v5305
      %v5338 = vpack.c.b16 %v5306, %v5306
      %v5339 = vpack.c.b16 %v5307, %v5307
      %v5340 = vpack.c.b16 %v5308, %v5308
      %v5341 = vpack.c.b16 %v5309, %v5309
      %v5342 = vpack.c.b16 %v5310, %v5310
      %v5343 = vpack.c.b16 %v5311, %v5311
      %v5344 = vpack.c.b16 %v5312, %v5312
      %v5345 = vpack.c.b16 %v5313, %v5313
      %v5346 = vpack.c.b16 %v5314, %v5314
      %v5347 = vpack.c.b16 %v5315, %v5315
      %v5348 = vpack.c.b16 %v5316, %v5316
      %v5349 = vpack.c.b16 %v5317, %v5317
      %v5350 = vpack.c.b16 %v5318, %v5318
      %v5351 = vpack.c.b16 %v5319, %v5319
      %v5352 = vpack.c.b16 %v5320, %v5320
      %v5353 = vpack.c.b16 %v5321, %v5321
      %v5354 = vpack.c.b16 %v5322, %v5322
      %v5355 = vpack.c.b16 %v5323, %v5323
      %v5356 = vpack.c.b16 %v5324, %v5324
      %v5357 = vpack.c.b16 %v5325, %v5325
      %v5358 = vpack.c.b16 %v5326, %v5326
      %v5359 = vpack.c.b16 %v5327, %v5327
      %v5360 = vpack.c.b16 %v5328, %v5328
      %v5361 = vpack.c.b16 %v5329, %v5329
      %v5362 = vpack.c.b16 %v5330, %v5330
      %v5363 = vpack.c.b16 %v5331, %v5331
      %v5364 = vpack.c.b16 %v5332, %v5332
      %v5365 = vpack.c.b16 %v5333, %v5333
      %vm5366 = vsmask.f32 256
      %vm5367 = vsmask.f32 4368
      %vm5368 = vmor %vm5366, %vm5367
      %v5370 = vshrl.u32 %v5334, 16
      %v5372 = vrot.slane %v5370, 7
      %v5373 = vshll.u32 %v5334, 16
      %v5375 = vor.u32 %v5372, %v5373
      %v5376 = vrot.slane %v5372, 4
      %v5378 = vshrl.u32 %v5335, 16
      %v5380 = vrot.slane %v5378, 7
      %v5381 = vshll.u32 %v5335, 16
      %v5383 = vor.u32 %v5380, %v5381
      %v5384 = vsel %vm5368, %v5376, %v5383
      %v5385 = vrot.slane %v5380, 4
      %v5387 = vshrl.u32 %v5336, 16
      %v5389 = vrot.slane %v5387, 7
      %v5390 = vshll.u32 %v5336, 16
      %v5392 = vor.u32 %v5389, %v5390
      %v5393 = vrot.slane %v5389, 4
      %v5395 = vshrl.u32 %v5337, 16
      %v5397 = vrot.slane %v5395, 7
      %v5398 = vshll.u32 %v5337, 16
      %v5400 = vor.u32 %v5397, %v5398
      %v5401 = vsel %vm5368, %v5393, %v5400
      %v5402 = vrot.slane %v5397, 4
      %v5404 = vshrl.u32 %v5338, 16
      %v5406 = vrot.slane %v5404, 7
      %v5407 = vshll.u32 %v5338, 16
      %v5409 = vor.u32 %v5406, %v5407
      %v5410 = vrot.slane %v5406, 4
      %v5412 = vshrl.u32 %v5339, 16
      %v5414 = vrot.slane %v5412, 7
      %v5415 = vshll.u32 %v5339, 16
      %v5417 = vor.u32 %v5414, %v5415
      %v5418 = vsel %vm5368, %v5410, %v5417
      %v5419 = vrot.slane %v5414, 4
      %v5421 = vshrl.u32 %v5340, 16
      %v5423 = vrot.slane %v5421, 7
      %v5424 = vshll.u32 %v5340, 16
      %v5426 = vor.u32 %v5423, %v5424
      %v5427 = vrot.slane %v5423, 4
      %v5429 = vshrl.u32 %v5341, 16
      %v5431 = vrot.slane %v5429, 7
      %v5432 = vshll.u32 %v5341, 16
      %v5434 = vor.u32 %v5431, %v5432
      %v5435 = vsel %vm5368, %v5427, %v5434
      %v5436 = vrot.slane %v5431, 4
      %v5438 = vshrl.u32 %v5342, 16
      %v5440 = vrot.slane %v5438, 7
      %v5441 = vshll.u32 %v5342, 16
      %v5443 = vor.u32 %v5440, %v5441
      %v5444 = vrot.slane %v5440, 4
      %v5446 = vshrl.u32 %v5343, 16
      %v5448 = vrot.slane %v5446, 7
      %v5449 = vshll.u32 %v5343, 16
      %v5451 = vor.u32 %v5448, %v5449
      %v5452 = vsel %vm5368, %v5444, %v5451
      %v5453 = vrot.slane %v5448, 4
      %v5455 = vshrl.u32 %v5344, 16
      %v5457 = vrot.slane %v5455, 7
      %v5458 = vshll.u32 %v5344, 16
      %v5460 = vor.u32 %v5457, %v5458
      %v5461 = vrot.slane %v5457, 4
      %v5463 = vshrl.u32 %v5345, 16
      %v5465 = vrot.slane %v5463, 7
      %v5466 = vshll.u32 %v5345, 16
      %v5468 = vor.u32 %v5465, %v5466
      %v5469 = vsel %vm5368, %v5461, %v5468
      %v5470 = vrot.slane %v5465, 4
      %v5472 = vshrl.u32 %v5346, 16
      %v5474 = vrot.slane %v5472, 7
      %v5475 = vshll.u32 %v5346, 16
      %v5477 = vor.u32 %v5474, %v5475
      %v5478 = vrot.slane %v5474, 4
      %v5480 = vshrl.u32 %v5347, 16
      %v5482 = vrot.slane %v5480, 7
      %v5483 = vshll.u32 %v5347, 16
      %v5485 = vor.u32 %v5482, %v5483
      %v5486 = vsel %vm5368, %v5478, %v5485
      %v5487 = vrot.slane %v5482, 4
      %v5489 = vshrl.u32 %v5348, 16
      %v5491 = vrot.slane %v5489, 7
      %v5492 = vshll.u32 %v5348, 16
      %v5494 = vor.u32 %v5491, %v5492
      %v5495 = vrot.slane %v5491, 4
      %v5497 = vshrl.u32 %v5349, 16
      %v5499 = vrot.slane %v5497, 7
      %v5500 = vshll.u32 %v5349, 16
      %v5502 = vor.u32 %v5499, %v5500
      %v5503 = vsel %vm5368, %v5495, %v5502
      %v5504 = vrot.slane %v5499, 4
      %v5506 = vshrl.u32 %v5350, 16
      %v5508 = vrot.slane %v5506, 7
      %v5509 = vshll.u32 %v5350, 16
      %v5511 = vor.u32 %v5508, %v5509
      %v5512 = vrot.slane %v5508, 4
      %v5514 = vshrl.u32 %v5351, 16
      %v5516 = vrot.slane %v5514, 7
      %v5517 = vshll.u32 %v5351, 16
      %v5519 = vor.u32 %v5516, %v5517
      %v5520 = vsel %vm5368, %v5512, %v5519
      %v5521 = vrot.slane %v5516, 4
      %v5523 = vshrl.u32 %v5352, 16
      %v5525 = vrot.slane %v5523, 7
      %v5526 = vshll.u32 %v5352, 16
      %v5528 = vor.u32 %v5525, %v5526
      %v5529 = vrot.slane %v5525, 4
      %v5531 = vshrl.u32 %v5353, 16
      %v5533 = vrot.slane %v5531, 7
      %v5534 = vshll.u32 %v5353, 16
      %v5536 = vor.u32 %v5533, %v5534
      %v5537 = vsel %vm5368, %v5529, %v5536
      %v5538 = vrot.slane %v5533, 4
      %v5540 = vshrl.u32 %v5354, 16
      %v5542 = vrot.slane %v5540, 7
      %v5543 = vshll.u32 %v5354, 16
      %v5545 = vor.u32 %v5542, %v5543
      %v5546 = vrot.slane %v5542, 4
      %v5548 = vshrl.u32 %v5355, 16
      %v5550 = vrot.slane %v5548, 7
      %v5551 = vshll.u32 %v5355, 16
      %v5553 = vor.u32 %v5550, %v5551
      %v5554 = vsel %vm5368, %v5546, %v5553
      %v5555 = vrot.slane %v5550, 4
      %v5557 = vshrl.u32 %v5356, 16
      %v5559 = vrot.slane %v5557, 7
      %v5560 = vshll.u32 %v5356, 16
      %v5562 = vor.u32 %v5559, %v5560
      %v5563 = vrot.slane %v5559, 4
      %v5565 = vshrl.u32 %v5357, 16
      %v5567 = vrot.slane %v5565, 7
      %v5568 = vshll.u32 %v5357, 16
      %v5570 = vor.u32 %v5567, %v5568
      %v5571 = vsel %vm5368, %v5563, %v5570
      %v5572 = vrot.slane %v5567, 4
      %v5574 = vshrl.u32 %v5358, 16
      %v5576 = vrot.slane %v5574, 7
      %v5577 = vshll.u32 %v5358, 16
      %v5579 = vor.u32 %v5576, %v5577
      %v5580 = vrot.slane %v5576, 4
      %v5582 = vshrl.u32 %v5359, 16
      %v5584 = vrot.slane %v5582, 7
      %v5585 = vshll.u32 %v5359, 16
      %v5587 = vor.u32 %v5584, %v5585
      %v5588 = vsel %vm5368, %v5580, %v5587
      %v5589 = vrot.slane %v5584, 4
      %v5591 = vshrl.u32 %v5360, 16
      %v5593 = vrot.slane %v5591, 7
      %v5594 = vshll.u32 %v5360, 16
      %v5596 = vor.u32 %v5593, %v5594
      %v5597 = vrot.slane %v5593, 4
      %v5599 = vshrl.u32 %v5361, 16
      %v5601 = vrot.slane %v5599, 7
      %v5602 = vshll.u32 %v5361, 16
      %v5604 = vor.u32 %v5601, %v5602
      %v5605 = vsel %vm5368, %v5597, %v5604
      %v5606 = vrot.slane %v5601, 4
      %v5608 = vshrl.u32 %v5362, 16
      %v5610 = vrot.slane %v5608, 7
      %v5611 = vshll.u32 %v5362, 16
      %v5613 = vor.u32 %v5610, %v5611
      %v5614 = vrot.slane %v5610, 4
      %v5616 = vshrl.u32 %v5363, 16
      %v5618 = vrot.slane %v5616, 7
      %v5619 = vshll.u32 %v5363, 16
      %v5621 = vor.u32 %v5618, %v5619
      %v5622 = vsel %vm5368, %v5614, %v5621
      %v5623 = vrot.slane %v5618, 4
      %v5625 = vshrl.u32 %v5364, 16
      %v5627 = vrot.slane %v5625, 7
      %v5628 = vshll.u32 %v5364, 16
      %v5630 = vor.u32 %v5627, %v5628
      %v5631 = vrot.slane %v5627, 4
      %v5633 = vshrl.u32 %v5365, 16
      %v5635 = vrot.slane %v5633, 7
      %v5636 = vshll.u32 %v5365, 16
      %v5638 = vor.u32 %v5635, %v5636
      %v5639 = vsel %vm5368, %v5631, %v5638
      %v5640 = vrot.slane %v5635, 4
      %s5689 = scalar_lea.vmem %s262, 12
      %vm5690 = vcmask 1043456
      %vm5691 = vsmask.f32 7938
      %vm5692 = vmand %vm5690, %vm5691
      %v5693 = vld [vmem:[%s5689] sm:$0xf]
      %v5694 = vsel %vm5692, %v5375, %v5693
      %5695 = vst [vmem:[%s5689] sm:$0xf] %v5694
      %5696 = vst [vmem:[%s5689 + $0x4] sm:$0xf] %v5384
      %vm5697 = vcmask 1040384
      %vm5698 = vmand %vm5697, %vm5366
      %v5699 = vld [vmem:[%s5689 + $0x8] sm:$0x1]
      %v5700 = vsel %vm5698, %v5385, %v5699
      %5701 = vst [vmem:[%s5689 + $0x8] sm:$0x1] %v5700
      %v5702 = vld [vmem:[%s5689 + $0xc] sm:$0xf]
      %v5703 = vsel %vm5692, %v5392, %v5702
      %5704 = vst [vmem:[%s5689 + $0xc] sm:$0xf] %v5703
      %5705 = vst [vmem:[%s5689 + $0x10] sm:$0xf] %v5401
      %v5706 = vld [vmem:[%s5689 + $0x14] sm:$0x1]
      %v5707 = vsel %vm5698, %v5402, %v5706
      %5708 = vst [vmem:[%s5689 + $0x14] sm:$0x1] %v5707
      %v5709 = vld [vmem:[%s5689 + $0x18] sm:$0xf]
      %v5710 = vsel %vm5692, %v5409, %v5709
      %5711 = vst [vmem:[%s5689 + $0x18] sm:$0xf] %v5710
      %5712 = vst [vmem:[%s5689 + $0x1c] sm:$0xf] %v5418
      %v5713 = vld [vmem:[%s5689 + $0x20] sm:$0x1]
      %v5714 = vsel %vm5698, %v5419, %v5713
      %5715 = vst [vmem:[%s5689 + $0x20] sm:$0x1] %v5714
      %v5716 = vld [vmem:[%s5689 + $0x24] sm:$0xf]
      %v5717 = vsel %vm5692, %v5426, %v5716
      %5718 = vst [vmem:[%s5689 + $0x24] sm:$0xf] %v5717
      %5719 = vst [vmem:[%s5689 + $0x28] sm:$0xf] %v5435
      %v5720 = vld [vmem:[%s5689 + $0x2c] sm:$0x1]
      %v5721 = vsel %vm5698, %v5436, %v5720
      %5722 = vst [vmem:[%s5689 + $0x2c] sm:$0x1] %v5721
      %v5723 = vld [vmem:[%s5689 + $0x30] sm:$0xf]
      %v5724 = vsel %vm5692, %v5443, %v5723
      %5725 = vst [vmem:[%s5689 + $0x30] sm:$0xf] %v5724
      %5726 = vst [vmem:[%s5689 + $0x34] sm:$0xf] %v5452
      %v5727 = vld [vmem:[%s5689 + $0x38] sm:$0x1]
      %v5728 = vsel %vm5698, %v5453, %v5727
      %5729 = vst [vmem:[%s5689 + $0x38] sm:$0x1] %v5728
      %v5730 = vld [vmem:[%s5689 + $0x3c] sm:$0xf]
      %v5731 = vsel %vm5692, %v5460, %v5730
      %5732 = vst [vmem:[%s5689 + $0x3c] sm:$0xf] %v5731
      %5733 = vst [vmem:[%s5689 + $0x40] sm:$0xf] %v5469
      %v5734 = vld [vmem:[%s5689 + $0x44] sm:$0x1]
      %v5735 = vsel %vm5698, %v5470, %v5734
      %5736 = vst [vmem:[%s5689 + $0x44] sm:$0x1] %v5735
      %v5737 = vld [vmem:[%s5689 + $0x48] sm:$0xf]
      %v5738 = vsel %vm5692, %v5477, %v5737
      %5739 = vst [vmem:[%s5689 + $0x48] sm:$0xf] %v5738
      %5740 = vst [vmem:[%s5689 + $0x4c] sm:$0xf] %v5486
      %v5741 = vld [vmem:[%s5689 + $0x50] sm:$0x1]
      %v5742 = vsel %vm5698, %v5487, %v5741
      %5743 = vst [vmem:[%s5689 + $0x50] sm:$0x1] %v5742
      %v5744 = vld [vmem:[%s5689 + $0x54] sm:$0xf]
      %v5745 = vsel %vm5692, %v5494, %v5744
      %5746 = vst [vmem:[%s5689 + $0x54] sm:$0xf] %v5745
      %5747 = vst [vmem:[%s5689 + $0x58] sm:$0xf] %v5503
      %v5748 = vld [vmem:[%s5689 + $0x5c] sm:$0x1]
      %v5749 = vsel %vm5698, %v5504, %v5748
      %5750 = vst [vmem:[%s5689 + $0x5c] sm:$0x1] %v5749
      %v5751 = vld [vmem:[%s5689 + $0x60] sm:$0xf]
      %v5752 = vsel %vm5692, %v5511, %v5751
      %5753 = vst [vmem:[%s5689 + $0x60] sm:$0xf] %v5752
      %5754 = vst [vmem:[%s5689 + $0x64] sm:$0xf] %v5520
      %v5755 = vld [vmem:[%s5689 + $0x68] sm:$0x1]
      %v5756 = vsel %vm5698, %v5521, %v5755
      %5757 = vst [vmem:[%s5689 + $0x68] sm:$0x1] %v5756
      %v5758 = vld [vmem:[%s5689 + $0x6c] sm:$0xf]
      %v5759 = vsel %vm5692, %v5528, %v5758
      %5760 = vst [vmem:[%s5689 + $0x6c] sm:$0xf] %v5759
      %5761 = vst [vmem:[%s5689 + $0x70] sm:$0xf] %v5537
      %v5762 = vld [vmem:[%s5689 + $0x74] sm:$0x1]
      %v5763 = vsel %vm5698, %v5538, %v5762
      %5764 = vst [vmem:[%s5689 + $0x74] sm:$0x1] %v5763
      %v5765 = vld [vmem:[%s5689 + $0x78] sm:$0xf]
      %v5766 = vsel %vm5692, %v5545, %v5765
      %5767 = vst [vmem:[%s5689 + $0x78] sm:$0xf] %v5766
      %5768 = vst [vmem:[%s5689 + $0x7c] sm:$0xf] %v5554
      %v5769 = vld [vmem:[%s5689 + $0x80] sm:$0x1]
      %v5770 = vsel %vm5698, %v5555, %v5769
      %5771 = vst [vmem:[%s5689 + $0x80] sm:$0x1] %v5770
      %v5772 = vld [vmem:[%s5689 + $0x84] sm:$0xf]
      %v5773 = vsel %vm5692, %v5562, %v5772
      %5774 = vst [vmem:[%s5689 + $0x84] sm:$0xf] %v5773
      %5775 = vst [vmem:[%s5689 + $0x88] sm:$0xf] %v5571
      %v5776 = vld [vmem:[%s5689 + $0x8c] sm:$0x1]
      %v5777 = vsel %vm5698, %v5572, %v5776
      %5778 = vst [vmem:[%s5689 + $0x8c] sm:$0x1] %v5777
      %v5779 = vld [vmem:[%s5689 + $0x90] sm:$0xf]
      %v5780 = vsel %vm5692, %v5579, %v5779
      %5781 = vst [vmem:[%s5689 + $0x90] sm:$0xf] %v5780
      %5782 = vst [vmem:[%s5689 + $0x94] sm:$0xf] %v5588
      %v5783 = vld [vmem:[%s5689 + $0x98] sm:$0x1]
      %v5784 = vsel %vm5698, %v5589, %v5783
      %5785 = vst [vmem:[%s5689 + $0x98] sm:$0x1] %v5784
      %v5786 = vld [vmem:[%s5689 + $0x9c] sm:$0xf]
      %v5787 = vsel %vm5692, %v5596, %v5786
      %5788 = vst [vmem:[%s5689 + $0x9c] sm:$0xf] %v5787
      %5789 = vst [vmem:[%s5689 + $0xa0] sm:$0xf] %v5605
      %v5790 = vld [vmem:[%s5689 + $0xa4] sm:$0x1]
      %v5791 = vsel %vm5698, %v5606, %v5790
      %5792 = vst [vmem:[%s5689 + $0xa4] sm:$0x1] %v5791
      %v5793 = vld [vmem:[%s5689 + $0xa8] sm:$0xf]
      %v5794 = vsel %vm5692, %v5613, %v5793
      %5795 = vst [vmem:[%s5689 + $0xa8] sm:$0xf] %v5794
      %5796 = vst [vmem:[%s5689 + $0xac] sm:$0xf] %v5622
      %v5797 = vld [vmem:[%s5689 + $0xb0] sm:$0x1]
      %v5798 = vsel %vm5698, %v5623, %v5797
      %5799 = vst [vmem:[%s5689 + $0xb0] sm:$0x1] %v5798
      %v5800 = vld [vmem:[%s5689 + $0xb4] sm:$0xf]
      %v5801 = vsel %vm5692, %v5630, %v5800
      %5802 = vst [vmem:[%s5689 + $0xb4] sm:$0xf] %v5801
      %5803 = vst [vmem:[%s5689 + $0xb8] sm:$0xf] %v5639
      %v5804 = vld [vmem:[%s5689 + $0xbc] sm:$0x1]
      %v5805 = vsel %vm5698, %v5640, %v5804
      %5806 = vst [vmem:[%s5689 + $0xbc] sm:$0x1] %v5805
      %p5807 = scmp.lt.s32.totalorder %s20, 1
      %s5808 = scalar_select %p5807, %s20, 1
      %p5809 = scmp.lt.s32.totalorder %s19, 0
      %s5810 = scalar_select %p5809, %s19, 0
      %s5811 = smul.addr %s5808, 54
      %s5812 = sadd.s32 %s5810, %s5811
      %s5813 = smul.addr %s5812, 4
      %s5814 = scalar_lea.vmem %s4, %s5813
      // Predicated region
      $region37: #{bottleneck_ir_forward.2} parent=35 // pred_check
        %p5815 = pneg %p151
      $region38: #{bottleneck_ir_forward.2} parent=35 // pred_check_branch
        %5817 = sbr.rel (%p5815) target = $region40
      $region39: #{bottleneck_ir_forward.2} parent=35 // pred_region
        _
      $region40: #{bottleneck_ir_forward.2} parent=35 // pred_fallthru
        _
    $region36: #{bottleneck_ir_forward.2} parent=5 // pred_fallthru
      _
    %p5818 = scmp.le.s32.totalorder 2, %s10
    // Predicated region
    $region41: #{bottleneck_ir_forward.2} parent=5 // pred_check
      %p5819 = pneg %p5818
    $region42: #{bottleneck_ir_forward.2} parent=5 // pred_check_branch
      %5821 = sbr.rel (%p5819) target = $region44
    $region43: #{bottleneck_ir_forward.2} parent=5 // pred_region
      %s5822 = ssub.s32 %s10, 2
      // Predicated region
      $region45: #{bottleneck_ir_forward.2} parent=43 // pred_check
        %p5823 = pneg %p157
      $region46: #{bottleneck_ir_forward.2} parent=43 // pred_check_branch
        %5825 = sbr.rel (%p5823) target = $region48
      $region47: #{bottleneck_ir_forward.2} parent=43 // pred_region
        %p5826 = scmp.lt.s32.totalorder %s22, 1
        %s5827 = scalar_select %p5826, %s22, 1
        %p5828 = scmp.lt.s32.totalorder %s21, 0
        %s5829 = scalar_select %p5828, %s21, 0
        %s5830 = smul.addr %s5827, 54
        %s5831 = sadd.s32 %s5829, %s5830
        %s5832 = smul.addr %s5831, 4
        %s5833 = scalar_lea.vmem %s4, %s5832
      $region48: #{bottleneck_ir_forward.2} parent=43 // pred_fallthru
        _
    $region44: #{bottleneck_ir_forward.2} parent=5 // pred_fallthru
      _
  $region6: #{bottleneck_ir_forward.2} parent=0 // loop_footer
    %s14 = sadd.s32 1, %s10
  $region7: #{bottleneck_ir_forward.2} parent=0 // loop_footer_branch
    %9 = sbr.rel target = $region3
  $region8: #{bottleneck_ir_forward.2} parent=0 // loop_exit
    _

</llo_original>
